<compile_context>
chip_gen: v5e
topology: v5e:2x2
jax: 0.10.0
libtpu: 0.0.40
codegen_flags: <defaults>
</compile_context>

<pallas_src>
import functools

import jax
import jax.numpy as jnp
from jax import lax
from jax.experimental import pallas as pl
from jax.experimental.pallas import tpu as pltpu

_W_OFF = 16  # sublane-aligned offset of the image inside the conv2 scratch


# ----------------------------- Pallas kernel -------------------------------

def _conv_block_kernel(x_ref, w1_ref, b1_ref, w2_ref, b2_ref, *rest,
                       ho, wo, stride, mode, cin, cp):
    """Fused ConvBlock for one batch sample.

    x_ref : (H+2, W+2, Cin)            bf16  spatially zero-padded NHWC input
    w1_ref: (9, Cin, Cp)               bf16  conv1 weights (BN1 scale folded)
    b1_ref: (1, Cp)                    f32   folded BN1 bias
    w2_ref: (9, Cp, Cp)                bf16  conv2 weights (BN2 scale folded)
    b2_ref: (1, Cp)                    f32   folded BN2 bias
    [ws_ref: (Cin, Cp) bf16, bs_ref: (1, Cp) f32]   when mode == "project"
    o_ref : (Ho, Wo, Cp)               f32   lane-dense output
    y_scr : (Ho+2, Wo+_W_OFF+2, Cp)    bf16  VMEM scratch (conv1 out + halo)
    """
    if mode == "project":
        ws_ref, bs_ref, o_ref, y_scr = rest
    else:
        o_ref, y_scr = rest

    span_h = (ho - 1) * stride + 1
    span_w = (wo - 1) * stride + 1

    def x_tap(dy, dx):
        v = x_ref[dy:dy + span_h, dx:dx + span_w, :]
        if stride > 1:
            v = v[::stride, ::stride, :]
        return v.reshape(ho * wo, cin)

    # ---- conv1: 3x3(stride) + folded BN1 + ReLU -> zero-padded VMEM scratch
    acc1 = jnp.zeros((ho * wo, cp), jnp.float32)
    for dy in range(3):
        for dx in range(3):
            acc1 = acc1 + jnp.dot(x_tap(dy, dx), w1_ref[dy * 3 + dx],
                                  preferred_element_type=jnp.float32)
    y1 = jnp.maximum(acc1 + b1_ref[...], 0.0)

    y_scr[...] = jnp.zeros(y_scr.shape, y_scr.dtype)            # zero halo
    y_scr[1:ho + 1, _W_OFF:_W_OFF + wo, :] = (
        y1.reshape(ho, wo, cp).astype(y_scr.dtype))

    # ---- conv2: 3x3(stride 1) + folded BN2
    acc2 = jnp.zeros((ho * wo, cp), jnp.float32)
    for dy in range(3):
        for dx in range(3):
            c0 = _W_OFF - 1 + dx
            yt = y_scr[dy:dy + ho, c0:c0 + wo, :].reshape(ho * wo, cp)
            acc2 = acc2 + jnp.dot(yt, w2_ref[dy * 3 + dx],
                                  preferred_element_type=jnp.float32)
    acc2 = acc2 + b2_ref[...]

    # ---- shortcut + residual add
    if mode == "project":          # 1x1 conv(stride) + folded BN_s
        xs = x_tap(1, 1)
        acc2 = (acc2
                + jnp.dot(xs, ws_ref[...], preferred_element_type=jnp.float32)
                + bs_ref[...])
    elif mode == "identity":       # Cin == Cout (stride must be 1)
        xs = x_tap(1, 1).astype(jnp.float32)
        acc2 = acc2 + jnp.pad(xs, ((0, 0), (0, cp - cin)))

    # ---- final ReLU, lane-dense store
    o_ref[...] = jnp.maximum(acc2, 0.0).reshape(ho, wo, cp).astype(o_ref.dtype)


# ------------------------------ JAX wrapper ---------------------------------

def _fold_bn(gamma, beta, mean, var, eps=1e-5):
    scale = gamma / jnp.sqrt(var + eps)
    return scale, beta - mean * scale


def _prep_conv_w(w_oihw, scale, cp, cin_pad=None):
    """OIHW weights -> (kh*kw, Cin[_pad], Cp) bf16 with BN scale folded in."""
    o, i, kh, kw = w_oihw.shape
    w = jnp.transpose(w_oihw, (2, 3, 1, 0)) * scale[None, None, None, :]
    if cin_pad is not None and cin_pad > i:
        w = jnp.pad(w, ((0, 0), (0, 0), (0, cin_pad - i), (0, 0)))
    w = jnp.pad(w, ((0, 0), (0, 0), (0, 0), (0, cp - o)))
    return w.reshape(kh * kw, w.shape[2], cp).astype(jnp.bfloat16)


def _pad_bias(b, cp):
    return jnp.pad(b, (0, cp - b.shape[0])).reshape(1, cp).astype(jnp.float32)


def _vmem_bytes(shape, dtype):
    """Rough tile-padded VMEM footprint of one block."""
    itemsize = jnp.dtype(dtype).itemsize
    sub = {4: 8, 2: 16, 1: 32}.get(itemsize, 8)
    s = [int(d) for d in shape]
    if len(s) >= 1:
        s[-1] = -(-s[-1] // 128) * 128
    if len(s) >= 2:
        s[-2] = -(-s[-2] // sub) * sub
    n = 1
    for d in s:
        n *= d
    return n * itemsize


def conv_block_forward(x_nchw, params, stride=1, res=True):
    N, cin, H, W = x_nchw.shape
    cout = params["w1"].shape[0]
    cp = -(-cout // 128) * 128                       # lane-dense out channels
    hp, wp = H + 2, W + 2
    ho = (H + 2 - 3) // stride + 1
    wo = (W + 2 - 3) // stride + 1

    s1, b1 = _fold_bn(*params["bn1"])
    s2, b2 = _fold_bn(*params["bn2"])
    w1 = _prep_conv_w(params["w1"], s1, cp)               # (9, Cin, Cp)
    w2 = _prep_conv_w(params["w2"], s2, cp, cin_pad=cp)   # (9, Cp,  Cp)
    b1p, b2p = _pad_bias(b1, cp), _pad_bias(b2, cp)

    if res and cin != cout:
        mode = "project"
    elif res:
        mode = "identity"
    else:
        mode = "none"

    # NCHW -> NHWC, zero-pad spatially for the 3x3, cast to bf16 for MXU/DMA.
    x = jnp.transpose(x_nchw, (0, 2, 3, 1))
    x_pad = jnp.pad(x, ((0, 0), (1, 1), (1, 1), (0, 0))).astype(jnp.bfloat16)

    in_specs = [
        pl.BlockSpec((None, hp, wp, cin), lambda n: (n, 0, 0, 0)),
        pl.BlockSpec((9, cin, cp), lambda n: (0, 0, 0)),
        pl.BlockSpec((1, cp), lambda n: (0, 0)),
        pl.BlockSpec((9, cp, cp), lambda n: (0, 0, 0)),
        pl.BlockSpec((1, cp), lambda n: (0, 0)),
    ]
    args = [x_pad, w1, b1p, w2, b2p]
    if mode == "project":
        ss, bs = _fold_bn(*params["bn_s"])
        ws = _prep_conv_w(params["ws"], ss, cp)[0]        # (Cin, Cp)
        in_specs += [pl.BlockSpec((cin, cp), lambda n: (0, 0)),
                     pl.BlockSpec((1, cp), lambda n: (0, 0))]
        args += [ws, _pad_bias(bs, cp)]

    scratch_shape = (ho + 2, wo + _W_OFF + 2, cp)

    # Explicit VMEM budget: double-buffered blocks + scratch, with headroom.
    block_bytes = [
        _vmem_bytes((hp, wp, cin), jnp.bfloat16),
        _vmem_bytes((9, cin, cp), jnp.bfloat16),
        _vmem_bytes((1, cp), jnp.float32),
        _vmem_bytes((9, cp, cp), jnp.bfloat16),
        _vmem_bytes((1, cp), jnp.float32),
        _vmem_bytes((ho, wo, cp), jnp.float32),           # output block
    ]
    if mode == "project":
        block_bytes += [_vmem_bytes((cin, cp), jnp.bfloat16),
                        _vmem_bytes((1, cp), jnp.float32)]
    vmem_est = 2 * sum(block_bytes) + _vmem_bytes(scratch_shape, jnp.bfloat16)
    vmem_limit = int(min(max(4 * vmem_est, 32 * 1024 * 1024),
                         48 * 1024 * 1024))               # fits v7x's 64 MiB

    kernel = functools.partial(_conv_block_kernel, ho=ho, wo=wo,
                               stride=stride, mode=mode, cin=cin, cp=cp)

    out = pl.pallas_call(
        kernel,
        out_shape=jax.ShapeDtypeStruct((N, ho, wo, cp), jnp.float32),
        grid=(N,),
        in_specs=in_specs,
        out_specs=pl.BlockSpec((None, ho, wo, cp), lambda n: (n, 0, 0, 0)),
        scratch_shapes=[pltpu.VMEM(scratch_shape, jnp.bfloat16)],
        compiler_params=pltpu.CompilerParams(
            dimension_semantics=("parallel",),
            vmem_limit_bytes=vmem_limit),
    )(*args)

    # drop lane padding, NHWC -> NCHW
    return jnp.transpose(out[..., :cout], (0, 3, 1, 2))


# --------------------------- reference (lax conv) ----------------------------

def _conv_ref(x, w, stride, pad):
    return lax.conv_general_dilated(
        x, w, (stride, stride), ((pad, pad), (pad, pad)),
        dimension_numbers=("NCHW", "OIHW", "NCHW"))


def _bn_ref(x, gamma, beta, mean, var, eps=1e-5):
    g = gamma.reshape(1, -1, 1, 1)
    b = beta.reshape(1, -1, 1, 1)
    m = mean.reshape(1, -1, 1, 1)
    v = var.reshape(1, -1, 1, 1)
    return (x - m) / jnp.sqrt(v + eps) * g + b


def conv_block_ref(x, params, stride=1, res=True):
    y = _conv_ref(x, params["w1"], stride, 1)
    y = jnp.maximum(_bn_ref(y, *params["bn1"]), 0.0)
    y = _conv_ref(y, params["w2"], 1, 1)
    y = _bn_ref(y, *params["bn2"])
    if res:
        cin, cout = x.shape[1], y.shape[1]
        if cin != cout:
            sc = _bn_ref(_conv_ref(x, params["ws"], stride, 0), *params["bn_s"])
        else:
            sc = x[:, :, ::stride, ::stride]
        y = y + sc
    return jnp.maximum(y, 0.0)


# --------------------------------- main --------------------------------------

if __name__ == "__main__":
    key = jax.random.PRNGKey(0)
    ks = jax.random.split(key, 8)
    N, Cin, Cout, H, W = 2, 4, 8, 16, 16
    stride = 1

    x = jax.random.normal(ks[0], (N, Cin, H, W), jnp.float32)

    def bn_params(k, c):
        k1, k2, k3, k4 = jax.random.split(k, 4)
        gamma = 1.0 + 0.1 * jax.random.normal(k1, (c,), jnp.float32)
        beta = 0.1 * jax.random.normal(k2, (c,), jnp.float32)
        mean = 0.05 * jax.random.normal(k3, (c,), jnp.float32)
        var = 1.0 + 0.1 * jax.random.uniform(k4, (c,), jnp.float32)
        return (gamma, beta, mean, var)

    params = {
        "w1": 0.1 * jax.random.normal(ks[1], (Cout, Cin, 3, 3), jnp.float32),
        "w2": 0.1 * jax.random.normal(ks[2], (Cout, Cout, 3, 3), jnp.float32),
        "ws": 0.1 * jax.random.normal(ks[3], (Cout, Cin, 1, 1), jnp.float32),
        "bn1": bn_params(ks[4], Cout),
        "bn2": bn_params(ks[5], Cout),
        "bn_s": bn_params(ks[6], Cout),
    }

    fwd = jax.jit(functools.partial(conv_block_forward, stride=stride, res=True))
    out = jax.block_until_ready(fwd(x, params))

    ref = conv_block_ref(x, params, stride=stride, res=True)
    assert out.shape == ref.shape == (N, Cout, H // stride, W // stride)
    max_err = float(jnp.max(jnp.abs(out - ref)))
    # bf16 matmul operands (f32 accumulation) -> loosened tolerance vs f32 ref.
    assert jnp.allclose(out, ref, rtol=5e-2, atol=5e-2), f"max_err={max_err}"

    print("KERNEL_OK")
</pallas_src>

<mosaic_0001>
module attributes {stable_mosaic.version = 11 : i64} {
  func.func @_conv_block_kernel(%arg0: i32, %arg1: memref<1x18x18x4xbf16, #tpu.memory_space<vmem>>, %arg2: memref<9x4x128xbf16, #tpu.memory_space<vmem>>, %arg3: memref<1x128xf32, #tpu.memory_space<vmem>>, %arg4: memref<9x128x128xbf16, #tpu.memory_space<vmem>>, %arg5: memref<1x128xf32, #tpu.memory_space<vmem>>, %arg6: memref<4x128xbf16, #tpu.memory_space<vmem>>, %arg7: memref<1x128xf32, #tpu.memory_space<vmem>>, %arg8: memref<1x16x16x128xf32, #tpu.memory_space<vmem>>, %arg9: memref<18x34x128xbf16, #tpu.memory_space<vmem>>) attributes {dimension_semantics = [#tpu.dimension_semantics<parallel>], iteration_bounds = array<i64: 2>, scalar_prefetch = 0 : i64, scratch_operands = 1 : i64, tpu.core_type = #tpu.core_type<tc>, window_params = [{transform_indices = @transform_0, window_bounds = array<i64: 1, 18, 18, 4>}, {pipeline_mode = #tpu.pipeline_mode<synchronous>, transform_indices = @transform_1, window_bounds = array<i64: 9, 4, 128>}, {pipeline_mode = #tpu.pipeline_mode<synchronous>, transform_indices = @transform_2, window_bounds = array<i64: 1, 128>}, {pipeline_mode = #tpu.pipeline_mode<synchronous>, transform_indices = @transform_3, window_bounds = array<i64: 9, 128, 128>}, {pipeline_mode = #tpu.pipeline_mode<synchronous>, transform_indices = @transform_4, window_bounds = array<i64: 1, 128>}, {pipeline_mode = #tpu.pipeline_mode<synchronous>, transform_indices = @transform_5, window_bounds = array<i64: 4, 128>}, {pipeline_mode = #tpu.pipeline_mode<synchronous>, transform_indices = @transform_6, window_bounds = array<i64: 1, 128>}, {transform_indices = @transform_7, window_bounds = array<i64: 1, 16, 16, 128>}]} {
    %cst = arith.constant 0.000000e+00 : f32
    %0 = vector.broadcast %cst : f32 to vector<256x128xf32>
    %c0 = arith.constant 0 : index
    %c0_0 = arith.constant 0 : index
    %c0_1 = arith.constant 0 : index
    %c0_2 = arith.constant 0 : index
    %1 = vector.load %arg1[%c0, %c0_0, %c0_1, %c0_2] : memref<1x18x18x4xbf16, #tpu.memory_space<vmem>>, vector<1x16x16x4xbf16>
    %2 = vector.shape_cast %1 : vector<1x16x16x4xbf16> to vector<16x16x4xbf16>
    %3 = vector.shape_cast %2 : vector<16x16x4xbf16> to vector<256x4xbf16>
    %c0_3 = arith.constant 0 : index
    %c0_4 = arith.constant 0 : index
    %c0_5 = arith.constant 0 : index
    %4 = vector.load %arg2[%c0_3, %c0_4, %c0_5] : memref<9x4x128xbf16, #tpu.memory_space<vmem>>, vector<1x4x128xbf16>
    %5 = vector.shape_cast %4 : vector<1x4x128xbf16> to vector<4x128xbf16>
    %cst_6 = arith.constant dense<0.000000e+00> : vector<256x128xf32>
    %6 = tpu.matmul %3, %5, %cst_6 {dimension_numbers = #tpu.dot_dimension_numbers<[1], [0], [0], [1], [0, 0, 1, 1], [], []>} : vector<256x4xbf16>, vector<4x128xbf16>, vector<256x128xf32> -> vector<256x128xf32>
    %7 = arith.addf %0, %6 : vector<256x128xf32>
    %c0_7 = arith.constant 0 : index
    %c0_8 = arith.constant 0 : index
    %c1 = arith.constant 1 : index
    %c0_9 = arith.constant 0 : index
    %8 = vector.load %arg1[%c0_7, %c0_8, %c1, %c0_9] : memref<1x18x18x4xbf16, #tpu.memory_space<vmem>>, vector<1x16x16x4xbf16>
    %9 = vector.shape_cast %8 : vector<1x16x16x4xbf16> to vector<16x16x4xbf16>
    %10 = vector.shape_cast %9 : vector<16x16x4xbf16> to vector<256x4xbf16>
    %c1_10 = arith.constant 1 : index
    %c0_11 = arith.constant 0 : index
    %c0_12 = arith.constant 0 : index
    %11 = vector.load %arg2[%c1_10, %c0_11, %c0_12] : memref<9x4x128xbf16, #tpu.memory_space<vmem>>, vector<1x4x128xbf16>
    %12 = vector.shape_cast %11 : vector<1x4x128xbf16> to vector<4x128xbf16>
    %cst_13 = arith.constant dense<0.000000e+00> : vector<256x128xf32>
    %13 = tpu.matmul %10, %12, %cst_13 {dimension_numbers = #tpu.dot_dimension_numbers<[1], [0], [0], [1], [0, 0, 1, 1], [], []>} : vector<256x4xbf16>, vector<4x128xbf16>, vector<256x128xf32> -> vector<256x128xf32>
    %14 = arith.addf %7, %13 : vector<256x128xf32>
    %c0_14 = arith.constant 0 : index
    %c0_15 = arith.constant 0 : index
    %c2 = arith.constant 2 : index
    %c0_16 = arith.constant 0 : index
    %15 = vector.load %arg1[%c0_14, %c0_15, %c2, %c0_16] : memref<1x18x18x4xbf16, #tpu.memory_space<vmem>>, vector<1x16x16x4xbf16>
    %16 = vector.shape_cast %15 : vector<1x16x16x4xbf16> to vector<16x16x4xbf16>
    %17 = vector.shape_cast %16 : vector<16x16x4xbf16> to vector<256x4xbf16>
    %c2_17 = arith.constant 2 : index
    %c0_18 = arith.constant 0 : index
    %c0_19 = arith.constant 0 : index
    %18 = vector.load %arg2[%c2_17, %c0_18, %c0_19] : memref<9x4x128xbf16, #tpu.memory_space<vmem>>, vector<1x4x128xbf16>
    %19 = vector.shape_cast %18 : vector<1x4x128xbf16> to vector<4x128xbf16>
    %cst_20 = arith.constant dense<0.000000e+00> : vector<256x128xf32>
    %20 = tpu.matmul %17, %19, %cst_20 {dimension_numbers = #tpu.dot_dimension_numbers<[1], [0], [0], [1], [0, 0, 1, 1], [], []>} : vector<256x4xbf16>, vector<4x128xbf16>, vector<256x128xf32> -> vector<256x128xf32>
    %21 = arith.addf %14, %20 : vector<256x128xf32>
    %c0_21 = arith.constant 0 : index
    %c1_22 = arith.constant 1 : index
    %c0_23 = arith.constant 0 : index
    %c0_24 = arith.constant 0 : index
    %22 = vector.load %arg1[%c0_21, %c1_22, %c0_23, %c0_24] : memref<1x18x18x4xbf16, #tpu.memory_space<vmem>>, vector<1x16x16x4xbf16>
    %23 = vector.shape_cast %22 : vector<1x16x16x4xbf16> to vector<16x16x4xbf16>
    %24 = vector.shape_cast %23 : vector<16x16x4xbf16> to vector<256x4xbf16>
    %c3 = arith.constant 3 : index
    %c0_25 = arith.constant 0 : index
    %c0_26 = arith.constant 0 : index
    %25 = vector.load %arg2[%c3, %c0_25, %c0_26] : memref<9x4x128xbf16, #tpu.memory_space<vmem>>, vector<1x4x128xbf16>
    %26 = vector.shape_cast %25 : vector<1x4x128xbf16> to vector<4x128xbf16>
    %cst_27 = arith.constant dense<0.000000e+00> : vector<256x128xf32>
    %27 = tpu.matmul %24, %26, %cst_27 {dimension_numbers = #tpu.dot_dimension_numbers<[1], [0], [0], [1], [0, 0, 1, 1], [], []>} : vector<256x4xbf16>, vector<4x128xbf16>, vector<256x128xf32> -> vector<256x128xf32>
    %28 = arith.addf %21, %27 : vector<256x128xf32>
    %c0_28 = arith.constant 0 : index
    %c1_29 = arith.constant 1 : index
    %c1_30 = arith.constant 1 : index
    %c0_31 = arith.constant 0 : index
    %29 = vector.load %arg1[%c0_28, %c1_29, %c1_30, %c0_31] : memref<1x18x18x4xbf16, #tpu.memory_space<vmem>>, vector<1x16x16x4xbf16>
    %30 = vector.shape_cast %29 : vector<1x16x16x4xbf16> to vector<16x16x4xbf16>
    %31 = vector.shape_cast %30 : vector<16x16x4xbf16> to vector<256x4xbf16>
    %c4 = arith.constant 4 : index
    %c0_32 = arith.constant 0 : index
    %c0_33 = arith.constant 0 : index
    %32 = vector.load %arg2[%c4, %c0_32, %c0_33] : memref<9x4x128xbf16, #tpu.memory_space<vmem>>, vector<1x4x128xbf16>
    %33 = vector.shape_cast %32 : vector<1x4x128xbf16> to vector<4x128xbf16>
    %cst_34 = arith.constant dense<0.000000e+00> : vector<256x128xf32>
    %34 = tpu.matmul %31, %33, %cst_34 {dimension_numbers = #tpu.dot_dimension_numbers<[1], [0], [0], [1], [0, 0, 1, 1], [], []>} : vector<256x4xbf16>, vector<4x128xbf16>, vector<256x128xf32> -> vector<256x128xf32>
    %35 = arith.addf %28, %34 : vector<256x128xf32>
    %c0_35 = arith.constant 0 : index
    %c1_36 = arith.constant 1 : index
    %c2_37 = arith.constant 2 : index
    %c0_38 = arith.constant 0 : index
    %36 = vector.load %arg1[%c0_35, %c1_36, %c2_37, %c0_38] : memref<1x18x18x4xbf16, #tpu.memory_space<vmem>>, vector<1x16x16x4xbf16>
    %37 = vector.shape_cast %36 : vector<1x16x16x4xbf16> to vector<16x16x4xbf16>
    %38 = vector.shape_cast %37 : vector<16x16x4xbf16> to vector<256x4xbf16>
    %c5 = arith.constant 5 : index
    %c0_39 = arith.constant 0 : index
    %c0_40 = arith.constant 0 : index
    %39 = vector.load %arg2[%c5, %c0_39, %c0_40] : memref<9x4x128xbf16, #tpu.memory_space<vmem>>, vector<1x4x128xbf16>
    %40 = vector.shape_cast %39 : vector<1x4x128xbf16> to vector<4x128xbf16>
    %cst_41 = arith.constant dense<0.000000e+00> : vector<256x128xf32>
    %41 = tpu.matmul %38, %40, %cst_41 {dimension_numbers = #tpu.dot_dimension_numbers<[1], [0], [0], [1], [0, 0, 1, 1], [], []>} : vector<256x4xbf16>, vector<4x128xbf16>, vector<256x128xf32> -> vector<256x128xf32>
    %42 = arith.addf %35, %41 : vector<256x128xf32>
    %c0_42 = arith.constant 0 : index
    %c2_43 = arith.constant 2 : index
    %c0_44 = arith.constant 0 : index
    %c0_45 = arith.constant 0 : index
    %43 = vector.load %arg1[%c0_42, %c2_43, %c0_44, %c0_45] : memref<1x18x18x4xbf16, #tpu.memory_space<vmem>>, vector<1x16x16x4xbf16>
    %44 = vector.shape_cast %43 : vector<1x16x16x4xbf16> to vector<16x16x4xbf16>
    %45 = vector.shape_cast %44 : vector<16x16x4xbf16> to vector<256x4xbf16>
    %c6 = arith.constant 6 : index
    %c0_46 = arith.constant 0 : index
    %c0_47 = arith.constant 0 : index
    %46 = vector.load %arg2[%c6, %c0_46, %c0_47] : memref<9x4x128xbf16, #tpu.memory_space<vmem>>, vector<1x4x128xbf16>
    %47 = vector.shape_cast %46 : vector<1x4x128xbf16> to vector<4x128xbf16>
    %cst_48 = arith.constant dense<0.000000e+00> : vector<256x128xf32>
    %48 = tpu.matmul %45, %47, %cst_48 {dimension_numbers = #tpu.dot_dimension_numbers<[1], [0], [0], [1], [0, 0, 1, 1], [], []>} : vector<256x4xbf16>, vector<4x128xbf16>, vector<256x128xf32> -> vector<256x128xf32>
    %49 = arith.addf %42, %48 : vector<256x128xf32>
    %c0_49 = arith.constant 0 : index
    %c2_50 = arith.constant 2 : index
    %c1_51 = arith.constant 1 : index
    %c0_52 = arith.constant 0 : index
    %50 = vector.load %arg1[%c0_49, %c2_50, %c1_51, %c0_52] : memref<1x18x18x4xbf16, #tpu.memory_space<vmem>>, vector<1x16x16x4xbf16>
    %51 = vector.shape_cast %50 : vector<1x16x16x4xbf16> to vector<16x16x4xbf16>
    %52 = vector.shape_cast %51 : vector<16x16x4xbf16> to vector<256x4xbf16>
    %c7 = arith.constant 7 : index
    %c0_53 = arith.constant 0 : index
    %c0_54 = arith.constant 0 : index
    %53 = vector.load %arg2[%c7, %c0_53, %c0_54] : memref<9x4x128xbf16, #tpu.memory_space<vmem>>, vector<1x4x128xbf16>
    %54 = vector.shape_cast %53 : vector<1x4x128xbf16> to vector<4x128xbf16>
    %cst_55 = arith.constant dense<0.000000e+00> : vector<256x128xf32>
    %55 = tpu.matmul %52, %54, %cst_55 {dimension_numbers = #tpu.dot_dimension_numbers<[1], [0], [0], [1], [0, 0, 1, 1], [], []>} : vector<256x4xbf16>, vector<4x128xbf16>, vector<256x128xf32> -> vector<256x128xf32>
    %56 = arith.addf %49, %55 : vector<256x128xf32>
    %c0_56 = arith.constant 0 : index
    %c2_57 = arith.constant 2 : index
    %c2_58 = arith.constant 2 : index
    %c0_59 = arith.constant 0 : index
    %57 = vector.load %arg1[%c0_56, %c2_57, %c2_58, %c0_59] : memref<1x18x18x4xbf16, #tpu.memory_space<vmem>>, vector<1x16x16x4xbf16>
    %58 = vector.shape_cast %57 : vector<1x16x16x4xbf16> to vector<16x16x4xbf16>
    %59 = vector.shape_cast %58 : vector<16x16x4xbf16> to vector<256x4xbf16>
    %c8 = arith.constant 8 : index
    %c0_60 = arith.constant 0 : index
    %c0_61 = arith.constant 0 : index
    %60 = vector.load %arg2[%c8, %c0_60, %c0_61] : memref<9x4x128xbf16, #tpu.memory_space<vmem>>, vector<1x4x128xbf16>
    %61 = vector.shape_cast %60 : vector<1x4x128xbf16> to vector<4x128xbf16>
    %cst_62 = arith.constant dense<0.000000e+00> : vector<256x128xf32>
    %62 = tpu.matmul %59, %61, %cst_62 {dimension_numbers = #tpu.dot_dimension_numbers<[1], [0], [0], [1], [0, 0, 1, 1], [], []>} : vector<256x4xbf16>, vector<4x128xbf16>, vector<256x128xf32> -> vector<256x128xf32>
    %63 = arith.addf %56, %62 : vector<256x128xf32>
    %c0_63 = arith.constant 0 : index
    %c0_64 = arith.constant 0 : index
    %64 = vector.load %arg3[%c0_63, %c0_64] : memref<1x128xf32, #tpu.memory_space<vmem>>, vector<1x128xf32>
    %65 = vector.broadcast %64 : vector<1x128xf32> to vector<256x128xf32>
    %66 = arith.addf %63, %65 : vector<256x128xf32>
    %cst_65 = arith.constant 0.000000e+00 : f32
    %67 = vector.broadcast %cst_65 : f32 to vector<256x128xf32>
    %68 = arith.maximumf %66, %67 : vector<256x128xf32>
    %cst_66 = arith.constant 0.000000e+00 : bf16
    %69 = vector.broadcast %cst_66 : bf16 to vector<18x34x128xbf16>
    %c0_67 = arith.constant 0 : index
    %c0_68 = arith.constant 0 : index
    %c0_69 = arith.constant 0 : index
    %70 = vector.load %arg9[%c0_67, %c0_68, %c0_69] : memref<18x34x128xbf16, #tpu.memory_space<vmem>>, vector<18x34x128xbf16>
    tpu.vector_store %arg9[%c0_67, %c0_68, %c0_69], %69 {strides = array<i32>} : memref<18x34x128xbf16, #tpu.memory_space<vmem>>, vector<18x34x128xbf16>,
    %71 = vector.shape_cast %68 : vector<256x128xf32> to vector<16x16x128xf32>
    %72 = arith.truncf %71 : vector<16x16x128xf32> to vector<16x16x128xbf16>
    %c1_70 = arith.constant 1 : index
    %c16 = arith.constant 16 : index
    %c0_71 = arith.constant 0 : index
    %73 = vector.load %arg9[%c1_70, %c16, %c0_71] : memref<18x34x128xbf16, #tpu.memory_space<vmem>>, vector<16x16x128xbf16>
    tpu.vector_store %arg9[%c1_70, %c16, %c0_71], %72 {strides = array<i32>} : memref<18x34x128xbf16, #tpu.memory_space<vmem>>, vector<16x16x128xbf16>,
    %cst_72 = arith.constant 0.000000e+00 : f32
    %74 = vector.broadcast %cst_72 : f32 to vector<256x128xf32>
    %c0_73 = arith.constant 0 : index
    %c15 = arith.constant 15 : index
    %c0_74 = arith.constant 0 : index
    %75 = vector.load %arg9[%c0_73, %c15, %c0_74] : memref<18x34x128xbf16, #tpu.memory_space<vmem>>, vector<16x16x128xbf16>
    %76 = vector.shape_cast %75 : vector<16x16x128xbf16> to vector<256x128xbf16>
    %c0_75 = arith.constant 0 : index
    %c0_76 = arith.constant 0 : index
    %c0_77 = arith.constant 0 : index
    %77 = vector.load %arg4[%c0_75, %c0_76, %c0_77] : memref<9x128x128xbf16, #tpu.memory_space<vmem>>, vector<1x128x128xbf16>
    %78 = vector.shape_cast %77 : vector<1x128x128xbf16> to vector<128x128xbf16>
    %cst_78 = arith.constant dense<0.000000e+00> : vector<256x128xf32>
    %79 = tpu.matmul %76, %78, %cst_78 {dimension_numbers = #tpu.dot_dimension_numbers<[1], [0], [0], [1], [0, 0, 1, 1], [], []>} : vector<256x128xbf16>, vector<128x128xbf16>, vector<256x128xf32> -> vector<256x128xf32>
    %80 = arith.addf %74, %79 : vector<256x128xf32>
    %c0_79 = arith.constant 0 : index
    %c16_80 = arith.constant 16 : index
    %c0_81 = arith.constant 0 : index
    %81 = vector.load %arg9[%c0_79, %c16_80, %c0_81] : memref<18x34x128xbf16, #tpu.memory_space<vmem>>, vector<16x16x128xbf16>
    %82 = vector.shape_cast %81 : vector<16x16x128xbf16> to vector<256x128xbf16>
    %c1_82 = arith.constant 1 : index
    %c0_83 = arith.constant 0 : index
    %c0_84 = arith.constant 0 : index
    %83 = vector.load %arg4[%c1_82, %c0_83, %c0_84] : memref<9x128x128xbf16, #tpu.memory_space<vmem>>, vector<1x128x128xbf16>
    %84 = vector.shape_cast %83 : vector<1x128x128xbf16> to vector<128x128xbf16>
    %cst_85 = arith.constant dense<0.000000e+00> : vector<256x128xf32>
    %85 = tpu.matmul %82, %84, %cst_85 {dimension_numbers = #tpu.dot_dimension_numbers<[1], [0], [0], [1], [0, 0, 1, 1], [], []>} : vector<256x128xbf16>, vector<128x128xbf16>, vector<256x128xf32> -> vector<256x128xf32>
    %86 = arith.addf %80, %85 : vector<256x128xf32>
    %c0_86 = arith.constant 0 : index
    %c17 = arith.constant 17 : index
    %c0_87 = arith.constant 0 : index
    %87 = vector.load %arg9[%c0_86, %c17, %c0_87] : memref<18x34x128xbf16, #tpu.memory_space<vmem>>, vector<16x16x128xbf16>
    %88 = vector.shape_cast %87 : vector<16x16x128xbf16> to vector<256x128xbf16>
    %c2_88 = arith.constant 2 : index
    %c0_89 = arith.constant 0 : index
    %c0_90 = arith.constant 0 : index
    %89 = vector.load %arg4[%c2_88, %c0_89, %c0_90] : memref<9x128x128xbf16, #tpu.memory_space<vmem>>, vector<1x128x128xbf16>
    %90 = vector.shape_cast %89 : vector<1x128x128xbf16> to vector<128x128xbf16>
    %cst_91 = arith.constant dense<0.000000e+00> : vector<256x128xf32>
    %91 = tpu.matmul %88, %90, %cst_91 {dimension_numbers = #tpu.dot_dimension_numbers<[1], [0], [0], [1], [0, 0, 1, 1], [], []>} : vector<256x128xbf16>, vector<128x128xbf16>, vector<256x128xf32> -> vector<256x128xf32>
    %92 = arith.addf %86, %91 : vector<256x128xf32>
    %c1_92 = arith.constant 1 : index
    %c15_93 = arith.constant 15 : index
    %c0_94 = arith.constant 0 : index
    %93 = vector.load %arg9[%c1_92, %c15_93, %c0_94] : memref<18x34x128xbf16, #tpu.memory_space<vmem>>, vector<16x16x128xbf16>
    %94 = vector.shape_cast %93 : vector<16x16x128xbf16> to vector<256x128xbf16>
    %c3_95 = arith.constant 3 : index
    %c0_96 = arith.constant 0 : index
    %c0_97 = arith.constant 0 : index
    %95 = vector.load %arg4[%c3_95, %c0_96, %c0_97] : memref<9x128x128xbf16, #tpu.memory_space<vmem>>, vector<1x128x128xbf16>
    %96 = vector.shape_cast %95 : vector<1x128x128xbf16> to vector<128x128xbf16>
    %cst_98 = arith.constant dense<0.000000e+00> : vector<256x128xf32>
    %97 = tpu.matmul %94, %96, %cst_98 {dimension_numbers = #tpu.dot_dimension_numbers<[1], [0], [0], [1], [0, 0, 1, 1], [], []>} : vector<256x128xbf16>, vector<128x128xbf16>, vector<256x128xf32> -> vector<256x128xf32>
    %98 = arith.addf %92, %97 : vector<256x128xf32>
    %c1_99 = arith.constant 1 : index
    %c16_100 = arith.constant 16 : index
    %c0_101 = arith.constant 0 : index
    %99 = vector.load %arg9[%c1_99, %c16_100, %c0_101] : memref<18x34x128xbf16, #tpu.memory_space<vmem>>, vector<16x16x128xbf16>
    %100 = vector.shape_cast %99 : vector<16x16x128xbf16> to vector<256x128xbf16>
    %c4_102 = arith.constant 4 : index
    %c0_103 = arith.constant 0 : index
    %c0_104 = arith.constant 0 : index
    %101 = vector.load %arg4[%c4_102, %c0_103, %c0_104] : memref<9x128x128xbf16, #tpu.memory_space<vmem>>, vector<1x128x128xbf16>
    %102 = vector.shape_cast %101 : vector<1x128x128xbf16> to vector<128x128xbf16>
    %cst_105 = arith.constant dense<0.000000e+00> : vector<256x128xf32>
    %103 = tpu.matmul %100, %102, %cst_105 {dimension_numbers = #tpu.dot_dimension_numbers<[1], [0], [0], [1], [0, 0, 1, 1], [], []>} : vector<256x128xbf16>, vector<128x128xbf16>, vector<256x128xf32> -> vector<256x128xf32>
    %104 = arith.addf %98, %103 : vector<256x128xf32>
    %c1_106 = arith.constant 1 : index
    %c17_107 = arith.constant 17 : index
    %c0_108 = arith.constant 0 : index
    %105 = vector.load %arg9[%c1_106, %c17_107, %c0_108] : memref<18x34x128xbf16, #tpu.memory_space<vmem>>, vector<16x16x128xbf16>
    %106 = vector.shape_cast %105 : vector<16x16x128xbf16> to vector<256x128xbf16>
    %c5_109 = arith.constant 5 : index
    %c0_110 = arith.constant 0 : index
    %c0_111 = arith.constant 0 : index
    %107 = vector.load %arg4[%c5_109, %c0_110, %c0_111] : memref<9x128x128xbf16, #tpu.memory_space<vmem>>, vector<1x128x128xbf16>
    %108 = vector.shape_cast %107 : vector<1x128x128xbf16> to vector<128x128xbf16>
    %cst_112 = arith.constant dense<0.000000e+00> : vector<256x128xf32>
    %109 = tpu.matmul %106, %108, %cst_112 {dimension_numbers = #tpu.dot_dimension_numbers<[1], [0], [0], [1], [0, 0, 1, 1], [], []>} : vector<256x128xbf16>, vector<128x128xbf16>, vector<256x128xf32> -> vector<256x128xf32>
    %110 = arith.addf %104, %109 : vector<256x128xf32>
    %c2_113 = arith.constant 2 : index
    %c15_114 = arith.constant 15 : index
    %c0_115 = arith.constant 0 : index
    %111 = vector.load %arg9[%c2_113, %c15_114, %c0_115] : memref<18x34x128xbf16, #tpu.memory_space<vmem>>, vector<16x16x128xbf16>
    %112 = vector.shape_cast %111 : vector<16x16x128xbf16> to vector<256x128xbf16>
    %c6_116 = arith.constant 6 : index
    %c0_117 = arith.constant 0 : index
    %c0_118 = arith.constant 0 : index
    %113 = vector.load %arg4[%c6_116, %c0_117, %c0_118] : memref<9x128x128xbf16, #tpu.memory_space<vmem>>, vector<1x128x128xbf16>
    %114 = vector.shape_cast %113 : vector<1x128x128xbf16> to vector<128x128xbf16>
    %cst_119 = arith.constant dense<0.000000e+00> : vector<256x128xf32>
    %115 = tpu.matmul %112, %114, %cst_119 {dimension_numbers = #tpu.dot_dimension_numbers<[1], [0], [0], [1], [0, 0, 1, 1], [], []>} : vector<256x128xbf16>, vector<128x128xbf16>, vector<256x128xf32> -> vector<256x128xf32>
    %116 = arith.addf %110, %115 : vector<256x128xf32>
    %c2_120 = arith.constant 2 : index
    %c16_121 = arith.constant 16 : index
    %c0_122 = arith.constant 0 : index
    %117 = vector.load %arg9[%c2_120, %c16_121, %c0_122] : memref<18x34x128xbf16, #tpu.memory_space<vmem>>, vector<16x16x128xbf16>
    %118 = vector.shape_cast %117 : vector<16x16x128xbf16> to vector<256x128xbf16>
    %c7_123 = arith.constant 7 : index
    %c0_124 = arith.constant 0 : index
    %c0_125 = arith.constant 0 : index
    %119 = vector.load %arg4[%c7_123, %c0_124, %c0_125] : memref<9x128x128xbf16, #tpu.memory_space<vmem>>, vector<1x128x128xbf16>
    %120 = vector.shape_cast %119 : vector<1x128x128xbf16> to vector<128x128xbf16>
    %cst_126 = arith.constant dense<0.000000e+00> : vector<256x128xf32>
    %121 = tpu.matmul %118, %120, %cst_126 {dimension_numbers = #tpu.dot_dimension_numbers<[1], [0], [0], [1], [0, 0, 1, 1], [], []>} : vector<256x128xbf16>, vector<128x128xbf16>, vector<256x128xf32> -> vector<256x128xf32>
    %122 = arith.addf %116, %121 : vector<256x128xf32>
    %c2_127 = arith.constant 2 : index
    %c17_128 = arith.constant 17 : index
    %c0_129 = arith.constant 0 : index
    %123 = vector.load %arg9[%c2_127, %c17_128, %c0_129] : memref<18x34x128xbf16, #tpu.memory_space<vmem>>, vector<16x16x128xbf16>
    %124 = vector.shape_cast %123 : vector<16x16x128xbf16> to vector<256x128xbf16>
    %c8_130 = arith.constant 8 : index
    %c0_131 = arith.constant 0 : index
    %c0_132 = arith.constant 0 : index
    %125 = vector.load %arg4[%c8_130, %c0_131, %c0_132] : memref<9x128x128xbf16, #tpu.memory_space<vmem>>, vector<1x128x128xbf16>
    %126 = vector.shape_cast %125 : vector<1x128x128xbf16> to vector<128x128xbf16>
    %cst_133 = arith.constant dense<0.000000e+00> : vector<256x128xf32>
    %127 = tpu.matmul %124, %126, %cst_133 {dimension_numbers = #tpu.dot_dimension_numbers<[1], [0], [0], [1], [0, 0, 1, 1], [], []>} : vector<256x128xbf16>, vector<128x128xbf16>, vector<256x128xf32> -> vector<256x128xf32>
    %128 = arith.addf %122, %127 : vector<256x128xf32>
    %c0_134 = arith.constant 0 : index
    %c0_135 = arith.constant 0 : index
    %129 = vector.load %arg5[%c0_134, %c0_135] : memref<1x128xf32, #tpu.memory_space<vmem>>, vector<1x128xf32>
    %130 = vector.broadcast %129 : vector<1x128xf32> to vector<256x128xf32>
    %131 = arith.addf %128, %130 : vector<256x128xf32>
    %c0_136 = arith.constant 0 : index
    %c1_137 = arith.constant 1 : index
    %c1_138 = arith.constant 1 : index
    %c0_139 = arith.constant 0 : index
    %132 = vector.load %arg1[%c0_136, %c1_137, %c1_138, %c0_139] : memref<1x18x18x4xbf16, #tpu.memory_space<vmem>>, vector<1x16x16x4xbf16>
    %133 = vector.shape_cast %132 : vector<1x16x16x4xbf16> to vector<16x16x4xbf16>
    %134 = vector.shape_cast %133 : vector<16x16x4xbf16> to vector<256x4xbf16>
    %c0_140 = arith.constant 0 : index
    %c0_141 = arith.constant 0 : index
    %135 = vector.load %arg6[%c0_140, %c0_141] : memref<4x128xbf16, #tpu.memory_space<vmem>>, vector<4x128xbf16>
    %cst_142 = arith.constant dense<0.000000e+00> : vector<256x128xf32>
    %136 = tpu.matmul %134, %135, %cst_142 {dimension_numbers = #tpu.dot_dimension_numbers<[1], [0], [0], [1], [0, 0, 1, 1], [], []>} : vector<256x4xbf16>, vector<4x128xbf16>, vector<256x128xf32> -> vector<256x128xf32>
    %137 = arith.addf %131, %136 : vector<256x128xf32>
    %c0_143 = arith.constant 0 : index
    %c0_144 = arith.constant 0 : index
    %138 = vector.load %arg7[%c0_143, %c0_144] : memref<1x128xf32, #tpu.memory_space<vmem>>, vector<1x128xf32>
    %139 = vector.broadcast %138 : vector<1x128xf32> to vector<256x128xf32>
    %140 = arith.addf %137, %139 : vector<256x128xf32>
    %cst_145 = arith.constant 0.000000e+00 : f32
    %141 = vector.broadcast %cst_145 : f32 to vector<256x128xf32>
    %142 = arith.maximumf %140, %141 : vector<256x128xf32>
    %143 = vector.shape_cast %142 : vector<256x128xf32> to vector<16x16x128xf32>
    %c0_146 = arith.constant 0 : index
    %c0_147 = arith.constant 0 : index
    %c0_148 = arith.constant 0 : index
    %c0_149 = arith.constant 0 : index
    %144 = vector.load %arg8[%c0_146, %c0_147, %c0_148, %c0_149] : memref<1x16x16x128xf32, #tpu.memory_space<vmem>>, vector<1x16x16x128xf32>
    %145 = vector.shape_cast %144 : vector<1x16x16x128xf32> to vector<16x16x128xf32>
    %146 = vector.shape_cast %143 : vector<16x16x128xf32> to vector<1x16x16x128xf32>
    tpu.vector_store %arg8[%c0_146, %c0_147, %c0_148, %c0_149], %146 {strides = array<i32>} : memref<1x16x16x128xf32, #tpu.memory_space<vmem>>, vector<1x16x16x128xf32>,
    return
  }
  func.func @transform_0(%arg0: i32) -> (i32, i32, i32, i32) {
    %c0_i32 = arith.constant 0 : i32
    %c0_i32_0 = arith.constant 0 : i32
    %c0_i32_1 = arith.constant 0 : i32
    %c0_i32_2 = arith.constant 0 : i32
    return %arg0, %c0_i32, %c0_i32_0, %c0_i32_1 : i32, i32, i32, i32
  }
  func.func @transform_1(%arg0: i32) -> (i32, i32, i32) {
    %c0_i32 = arith.constant 0 : i32
    %c0_i32_0 = arith.constant 0 : i32
    %c0_i32_1 = arith.constant 0 : i32
    %c0_i32_2 = arith.constant 0 : i32
    return %c0_i32, %c0_i32_0, %c0_i32_1 : i32, i32, i32
  }
  func.func @transform_2(%arg0: i32) -> (i32, i32) {
    %c0_i32 = arith.constant 0 : i32
    %c0_i32_0 = arith.constant 0 : i32
    %c0_i32_1 = arith.constant 0 : i32
    return %c0_i32, %c0_i32_0 : i32, i32
  }
  func.func @transform_3(%arg0: i32) -> (i32, i32, i32) {
    %c0_i32 = arith.constant 0 : i32
    %c0_i32_0 = arith.constant 0 : i32
    %c0_i32_1 = arith.constant 0 : i32
    %c0_i32_2 = arith.constant 0 : i32
    return %c0_i32, %c0_i32_0, %c0_i32_1 : i32, i32, i32
  }
  func.func @transform_4(%arg0: i32) -> (i32, i32) {
    %c0_i32 = arith.constant 0 : i32
    %c0_i32_0 = arith.constant 0 : i32
    %c0_i32_1 = arith.constant 0 : i32
    return %c0_i32, %c0_i32_0 : i32, i32
  }
  func.func @transform_5(%arg0: i32) -> (i32, i32) {
    %c0_i32 = arith.constant 0 : i32
    %c0_i32_0 = arith.constant 0 : i32
    %c0_i32_1 = arith.constant 0 : i32
    return %c0_i32, %c0_i32_0 : i32, i32
  }
  func.func @transform_6(%arg0: i32) -> (i32, i32) {
    %c0_i32 = arith.constant 0 : i32
    %c0_i32_0 = arith.constant 0 : i32
    %c0_i32_1 = arith.constant 0 : i32
    return %c0_i32, %c0_i32_0 : i32, i32
  }
  func.func @transform_7(%arg0: i32) -> (i32, i32, i32, i32) {
    %c0_i32 = arith.constant 0 : i32
    %c0_i32_0 = arith.constant 0 : i32
    %c0_i32_1 = arith.constant 0 : i32
    %c0_i32_2 = arith.constant 0 : i32
    return %arg0, %c0_i32, %c0_i32_0, %c0_i32_1 : i32, i32, i32, i32
  }
}

</mosaic_0001>

<llo_original>
// kernel: conv_block_forward.1
$region0: #{conv_block_forward.1}
  #allocation0 [shape = 'u32[]', space=smem, size = 0x4, offset = 0x4, fixed_abs, tag = 'smem constant byte address 0x4 - core index']
  #allocation1 [shape = 'u32[72,128]{1,0:T(1,128)}', space=vmem, size = 0x9000, scoped, tag = 'internal scratch']
  #allocation2 [shape = 'bf16[18,34,128]{2,1,0:T(8,128)(2,1)}', space=vmem, size = 0x2d000, scoped, tag = 'scratch operand']
  %s0 = inlined_call_operand.vmem [shape: bf16[2,18,18,4], index: 0, kind: input, shape index: {}]
  %s1 = inlined_call_operand.vmem [shape: bf16[9,4,128], index: 1, kind: input, shape index: {}]
  %s2 = inlined_call_operand.vmem [shape: f32[1,128], index: 2, kind: input, shape index: {}]
  %s3 = inlined_call_operand.vmem [shape: bf16[9,128,128], index: 3, kind: input, shape index: {}]
  %s4 = inlined_call_operand.vmem [shape: f32[1,128], index: 4, kind: input, shape index: {}]
  %s5 = inlined_call_operand.vmem [shape: bf16[4,128], index: 5, kind: input, shape index: {}]
  %s6 = inlined_call_operand.vmem [shape: f32[1,128], index: 6, kind: input, shape index: {}]
  %s7 = inlined_call_operand.vmem [shape: f32[2,16,16,128], index: 7, kind: output, shape index: {}]
  %s8 = sld [smem:[#allocation0]]
  $region61: #{conv_block_forward.1} parent=0
    _
  %s10 = ssub.s32 1, %s8
  %s11 = scalar_select 0, %s10, %s8
  loop: start=0, step=1, limit=4
  $region2: #{conv_block_forward.1} parent=0 // loop_pre_header
    _
  $region3: #{conv_block_forward.1} parent=0 // loop_header
    %s13 = sphi 0, %s17
    %p14 = scmp.ge.s32.totalorder %s13, 4
    %s23 = sphi 0, %s25
    %s26 = sphi 0, %s23
    %s27 = sphi 0, %s26
    %s43 = sphi 0, %s27
    %s47 = sphi 0, %s47
    %s49 = sphi 0, %s47
    %s50 = sphi 0, %s49
    %s64 = sphi 0, %s50
    %s68 = sphi 0, %s68
    %s70 = sphi 0, %s68
    %s71 = sphi 0, %s70
    %s85 = sphi 0, %s71
    %s89 = sphi 0, %s89
    %s91 = sphi 0, %s89
    %s92 = sphi 0, %s91
    %s106 = sphi 0, %s92
    %s110 = sphi 0, %s110
    %s112 = sphi 0, %s110
    %s113 = sphi 0, %s112
    %s127 = sphi 0, %s113
    %s131 = sphi 0, %s131
    %s133 = sphi 0, %s131
    %s134 = sphi 0, %s133
    %s148 = sphi 0, %s134
    %s152 = sphi 0, %s152
    %s154 = sphi 0, %s152
    %s155 = sphi 0, %s154
    %s169 = sphi 0, %s155
    %s175 = sphi 0, %s177
    %s178 = sphi 0, %s175
    %s179 = sphi 0, %s178
    %s195 = sphi 0, %s179
  $region4: #{conv_block_forward.1} parent=0 // loop_header_branch
    %16 = sbr.rel (%p14) target = $region8
  $region5: #{conv_block_forward.1} parent=0 // loop_body
    %s18 = ssub.s32 %s13, 1
    %s19 = ssub.s32 %s13, 2
    %s20 = sadd.s32 %s13, 1
    %s21 = ssub.s32 %s13, %s20
    %p22 = scmp.eq.s32.totalorder %s21, 0
    %s24 = sadd.s32 %s23, 1
    %s25 = scalar_select %p22, %s23, %s24
    %p28 = pneg %p22
    %p29 = scmp.eq.s32.totalorder %s13, 1
    %p30 = por %p28, %p29
    %p31 = scmp.ne.s32.totalorder %s23, %s26
    %p32 = scmp.eq.s32.totalorder %s13, 0
    %p33 = por %p31, %p32
    %p34 = scmp.ne.s32.totalorder %s23, %s26
    %p35 = scmp.eq.s32.totalorder %s18, 1
    %p36 = por %p34, %p35
    %p37 = scmp.ne.s32.totalorder %s26, %s27
    %p38 = scmp.eq.s32.totalorder %s18, 0
    %p39 = por %p37, %p38
    %p40 = scmp.ne.s32.totalorder %s26, %s27
    %p41 = scmp.eq.s32.totalorder %s19, 1
    %p42 = por %p40, %p41
    %p44 = scmp.ne.s32.totalorder %s27, %s43
    %p45 = scmp.eq.s32.totalorder %s19, 0
    %p46 = por %p44, %p45
    %s48 = sadd.s32 %s47, 1
    %p51 = scmp.eq.s32.totalorder %s13, 1
    %p52 = scmp.ne.s32.totalorder %s47, %s49
    %p53 = scmp.eq.s32.totalorder %s13, 0
    %p54 = por %p52, %p53
    %p55 = scmp.ne.s32.totalorder %s47, %s49
    %p56 = scmp.eq.s32.totalorder %s18, 1
    %p57 = por %p55, %p56
    %p58 = scmp.ne.s32.totalorder %s49, %s50
    %p59 = scmp.eq.s32.totalorder %s18, 0
    %p60 = por %p58, %p59
    %p61 = scmp.ne.s32.totalorder %s49, %s50
    %p62 = scmp.eq.s32.totalorder %s19, 1
    %p63 = por %p61, %p62
    %p65 = scmp.ne.s32.totalorder %s50, %s64
    %p66 = scmp.eq.s32.totalorder %s19, 0
    %p67 = por %p65, %p66
    %s69 = sadd.s32 %s68, 1
    %p72 = scmp.eq.s32.totalorder %s13, 1
    %p73 = scmp.ne.s32.totalorder %s68, %s70
    %p74 = scmp.eq.s32.totalorder %s13, 0
    %p75 = por %p73, %p74
    %p76 = scmp.ne.s32.totalorder %s68, %s70
    %p77 = scmp.eq.s32.totalorder %s18, 1
    %p78 = por %p76, %p77
    %p79 = scmp.ne.s32.totalorder %s70, %s71
    %p80 = scmp.eq.s32.totalorder %s18, 0
    %p81 = por %p79, %p80
    %p82 = scmp.ne.s32.totalorder %s70, %s71
    %p83 = scmp.eq.s32.totalorder %s19, 1
    %p84 = por %p82, %p83
    %p86 = scmp.ne.s32.totalorder %s71, %s85
    %p87 = scmp.eq.s32.totalorder %s19, 0
    %p88 = por %p86, %p87
    %s90 = sadd.s32 %s89, 1
    %p93 = scmp.eq.s32.totalorder %s13, 1
    %p94 = scmp.ne.s32.totalorder %s89, %s91
    %p95 = scmp.eq.s32.totalorder %s13, 0
    %p96 = por %p94, %p95
    %p97 = scmp.ne.s32.totalorder %s89, %s91
    %p98 = scmp.eq.s32.totalorder %s18, 1
    %p99 = por %p97, %p98
    %p100 = scmp.ne.s32.totalorder %s91, %s92
    %p101 = scmp.eq.s32.totalorder %s18, 0
    %p102 = por %p100, %p101
    %p103 = scmp.ne.s32.totalorder %s91, %s92
    %p104 = scmp.eq.s32.totalorder %s19, 1
    %p105 = por %p103, %p104
    %p107 = scmp.ne.s32.totalorder %s92, %s106
    %p108 = scmp.eq.s32.totalorder %s19, 0
    %p109 = por %p107, %p108
    %s111 = sadd.s32 %s110, 1
    %p114 = scmp.eq.s32.totalorder %s13, 1
    %p115 = scmp.ne.s32.totalorder %s110, %s112
    %p116 = scmp.eq.s32.totalorder %s13, 0
    %p117 = por %p115, %p116
    %p118 = scmp.ne.s32.totalorder %s110, %s112
    %p119 = scmp.eq.s32.totalorder %s18, 1
    %p120 = por %p118, %p119
    %p121 = scmp.ne.s32.totalorder %s112, %s113
    %p122 = scmp.eq.s32.totalorder %s18, 0
    %p123 = por %p121, %p122
    %p124 = scmp.ne.s32.totalorder %s112, %s113
    %p125 = scmp.eq.s32.totalorder %s19, 1
    %p126 = por %p124, %p125
    %p128 = scmp.ne.s32.totalorder %s113, %s127
    %p129 = scmp.eq.s32.totalorder %s19, 0
    %p130 = por %p128, %p129
    %s132 = sadd.s32 %s131, 1
    %p135 = scmp.eq.s32.totalorder %s13, 1
    %p136 = scmp.ne.s32.totalorder %s131, %s133
    %p137 = scmp.eq.s32.totalorder %s13, 0
    %p138 = por %p136, %p137
    %p139 = scmp.ne.s32.totalorder %s131, %s133
    %p140 = scmp.eq.s32.totalorder %s18, 1
    %p141 = por %p139, %p140
    %p142 = scmp.ne.s32.totalorder %s133, %s134
    %p143 = scmp.eq.s32.totalorder %s18, 0
    %p144 = por %p142, %p143
    %p145 = scmp.ne.s32.totalorder %s133, %s134
    %p146 = scmp.eq.s32.totalorder %s19, 1
    %p147 = por %p145, %p146
    %p149 = scmp.ne.s32.totalorder %s134, %s148
    %p150 = scmp.eq.s32.totalorder %s19, 0
    %p151 = por %p149, %p150
    %s153 = sadd.s32 %s152, 1
    %p156 = scmp.eq.s32.totalorder %s13, 1
    %p157 = scmp.ne.s32.totalorder %s152, %s154
    %p158 = scmp.eq.s32.totalorder %s13, 0
    %p159 = por %p157, %p158
    %p160 = scmp.ne.s32.totalorder %s152, %s154
    %p161 = scmp.eq.s32.totalorder %s18, 1
    %p162 = por %p160, %p161
    %p163 = scmp.ne.s32.totalorder %s154, %s155
    %p164 = scmp.eq.s32.totalorder %s18, 0
    %p165 = por %p163, %p164
    %p166 = scmp.ne.s32.totalorder %s154, %s155
    %p167 = scmp.eq.s32.totalorder %s19, 1
    %p168 = por %p166, %p167
    %p170 = scmp.ne.s32.totalorder %s155, %s169
    %p171 = scmp.eq.s32.totalorder %s19, 0
    %p172 = por %p170, %p171
    %s173 = ssub.s32 %s13, %s20
    %p174 = scmp.eq.s32.totalorder %s173, 0
    %s176 = sadd.s32 %s175, 1
    %s177 = scalar_select %p174, %s175, %s176
    %p180 = pneg %p174
    %p181 = scmp.eq.s32.totalorder %s13, 1
    %p182 = por %p180, %p181
    %p183 = scmp.ne.s32.totalorder %s175, %s178
    %p184 = scmp.eq.s32.totalorder %s13, 0
    %p185 = por %p183, %p184
    %p186 = scmp.ne.s32.totalorder %s175, %s178
    %p187 = scmp.eq.s32.totalorder %s18, 1
    %p188 = por %p186, %p187
    %p189 = scmp.ne.s32.totalorder %s178, %s179
    %p190 = scmp.eq.s32.totalorder %s18, 0
    %p191 = por %p189, %p190
    %p192 = scmp.ne.s32.totalorder %s178, %s179
    %p193 = scmp.eq.s32.totalorder %s19, 1
    %p194 = por %p192, %p193
    %p196 = scmp.ne.s32.totalorder %s179, %s195
    %p197 = scmp.eq.s32.totalorder %s19, 0
    %p198 = por %p196, %p197
    %p199 = scmp.le.s32.totalorder 1, %s13
    %p200 = scmp.lt.s32.totalorder %s13, 3
    %p201 = pnand %p199, %p200
    %p202 = pneg %p201
    // Predicated region
    $region9: #{conv_block_forward.1} parent=5 // pred_check
      _
    $region10: #{conv_block_forward.1} parent=5 // pred_check_branch
      %204 = sbr.rel (%p201) target = $region12
    $region11: #{conv_block_forward.1} parent=5 // pred_region
      %s205 = ssub.s32 %s13, 1
      // Predicated region
      $region13: #{conv_block_forward.1} parent=11 // pred_check
        %p206 = pneg %p60
      $region14: #{conv_block_forward.1} parent=11 // pred_check_branch
        %208 = sbr.rel (%p206) target = $region16
      $region15: #{conv_block_forward.1} parent=11 // pred_region
        _
      $region16: #{conv_block_forward.1} parent=11 // pred_fallthru
        _
      // Predicated region
      $region17: #{conv_block_forward.1} parent=11 // pred_check
        %p209 = pneg %p81
      $region18: #{conv_block_forward.1} parent=11 // pred_check_branch
        %211 = sbr.rel (%p209) target = $region20
      $region19: #{conv_block_forward.1} parent=11 // pred_region
        _
      $region20: #{conv_block_forward.1} parent=11 // pred_fallthru
        _
      // Predicated region
      $region21: #{conv_block_forward.1} parent=11 // pred_check
        %p212 = pneg %p102
      $region22: #{conv_block_forward.1} parent=11 // pred_check_branch
        %214 = sbr.rel (%p212) target = $region24
      $region23: #{conv_block_forward.1} parent=11 // pred_region
        _
      $region24: #{conv_block_forward.1} parent=11 // pred_fallthru
        _
      // Predicated region
      $region25: #{conv_block_forward.1} parent=11 // pred_check
        %p215 = pneg %p123
      $region26: #{conv_block_forward.1} parent=11 // pred_check_branch
        %217 = sbr.rel (%p215) target = $region28
      $region27: #{conv_block_forward.1} parent=11 // pred_region
        _
      $region28: #{conv_block_forward.1} parent=11 // pred_fallthru
        _
      // Predicated region
      $region29: #{conv_block_forward.1} parent=11 // pred_check
        %p218 = pneg %p144
      $region30: #{conv_block_forward.1} parent=11 // pred_check_branch
        %220 = sbr.rel (%p218) target = $region32
      $region31: #{conv_block_forward.1} parent=11 // pred_region
        _
      $region32: #{conv_block_forward.1} parent=11 // pred_fallthru
        _
      // Predicated region
      $region33: #{conv_block_forward.1} parent=11 // pred_check
        %p221 = pneg %p165
      $region34: #{conv_block_forward.1} parent=11 // pred_check_branch
        %223 = sbr.rel (%p221) target = $region36
      $region35: #{conv_block_forward.1} parent=11 // pred_region
        _
      $region36: #{conv_block_forward.1} parent=11 // pred_fallthru
        _
    $region12: #{conv_block_forward.1} parent=5 // pred_fallthru
      _
    %p224 = scmp.lt.s32.totalorder %s13, 2
    // Predicated region
    $region37: #{conv_block_forward.1} parent=5 // pred_check
      %p225 = pneg %p224
    $region38: #{conv_block_forward.1} parent=5 // pred_check_branch
      %227 = sbr.rel (%p225) target = $region40
    $region39: #{conv_block_forward.1} parent=5 // pred_region
      // Predicated region
      $region41: #{conv_block_forward.1} parent=39 // pred_check
        %p228 = pneg %p33
      $region42: #{conv_block_forward.1} parent=39 // pred_check_branch
        %230 = sbr.rel (%p228) target = $region44
      $region43: #{conv_block_forward.1} parent=39 // pred_region
        %p231 = scmp.lt.s32.totalorder %s13, 1
        %s232 = scalar_select %p231, %s13, 1
        %s233 = smul.addr %s232, 54
        %s234 = smul.addr %s233, 4
        %s235 = scalar_lea.vmem %s0, %s234
      $region44: #{conv_block_forward.1} parent=39 // pred_fallthru
        _
    $region40: #{conv_block_forward.1} parent=5 // pred_fallthru
      _
    %p236 = scmp.le.s32.totalorder 1, %s13
    %p237 = scmp.lt.s32.totalorder %s13, 3
    %p238 = pnand %p236, %p237
    %p239 = pneg %p238
    // Predicated region
    $region45: #{conv_block_forward.1} parent=5 // pred_check
      _
    $region46: #{conv_block_forward.1} parent=5 // pred_check_branch
      %241 = sbr.rel (%p238) target = $region48
    $region47: #{conv_block_forward.1} parent=5 // pred_region
      %s242 = ssub.s32 %s13, 1
      %p243 = scmp.lt.s32.totalorder %s18, 1
      %s244 = scalar_select %p243, %s18, 1
      %s245 = smul.addr %s244, 54
      %s246 = smul.addr %s245, 4
      %s247 = scalar_lea.vmem %s0, %s246
      %p248 = pneg %p39
      %p249 = pneg %p36
      %p250 = pneg %p60
      %p251 = pneg %p57
      %p252 = pneg %p81
      %p253 = pneg %p78
      %p254 = pneg %p102
      %p255 = pneg %p99
      %p256 = pneg %p123
      %p257 = pneg %p120
      %p258 = pneg %p144
      %p259 = pneg %p141
      %p260 = pneg %p165
      %p261 = pneg %p162
      %p262 = pneg %p191
      %p263 = pneg %p188
      %p264 = scmp.lt.s32.totalorder %s18, 1
      %s265 = scalar_select %p264, %s18, 1
      %s266 = smul.addr %s265, 32
      %s267 = smul.addr %s266, 8
      %s268 = scalar_lea.vmem %s7, %s267
      %p269 = scmp.lt.s32.totalorder %s18, 1
      %s270 = scalar_select %p269, %s18, 1
      %s271 = smul.addr %s270, 54
      %s272 = smul.addr %s271, 4
      %s273 = scalar_lea.vmem %s0, %s272
      %p274 = scmp.lt.s32.totalorder %s18, 1
      %s275 = scalar_select %p274, %s18, 1
      %s276 = smul.addr %s275, 32
      %s277 = smul.addr %s276, 8
      %s278 = scalar_lea.vmem %s7, %s277
      %v280 = vld [vmem:[%s273] sm:$0xf]
      %v281 = vld [vmem:[%s273 + $0x4] sm:$0xf]
      %v282 = vld [vmem:[%s273 + $0xc] sm:$0xf]
      %v283 = vld [vmem:[%s273 + $0x10] sm:$0xf]
      %v284 = vld [vmem:[%s273 + $0x18] sm:$0xf]
      %v285 = vld [vmem:[%s273 + $0x1c] sm:$0xf]
      %v286 = vld [vmem:[%s273 + $0x24] sm:$0xf]
      %v287 = vld [vmem:[%s273 + $0x28] sm:$0xf]
      %v288 = vld [vmem:[%s273 + $0x30] sm:$0xf]
      %v289 = vld [vmem:[%s273 + $0x34] sm:$0xf]
      %v290 = vld [vmem:[%s273 + $0x3c] sm:$0xf]
      %v291 = vld [vmem:[%s273 + $0x40] sm:$0xf]
      %v292 = vld [vmem:[%s273 + $0x48] sm:$0xf]
      %v293 = vld [vmem:[%s273 + $0x4c] sm:$0xf]
      %v294 = vld [vmem:[%s273 + $0x54] sm:$0xf]
      %v295 = vld [vmem:[%s273 + $0x58] sm:$0xf]
      %v296 = vld [vmem:[%s273 + $0x60] sm:$0xf]
      %v297 = vld [vmem:[%s273 + $0x64] sm:$0xf]
      %v298 = vld [vmem:[%s273 + $0x6c] sm:$0xf]
      %v299 = vld [vmem:[%s273 + $0x70] sm:$0xf]
      %v300 = vld [vmem:[%s273 + $0x78] sm:$0xf]
      %v301 = vld [vmem:[%s273 + $0x7c] sm:$0xf]
      %v302 = vld [vmem:[%s273 + $0x84] sm:$0xf]
      %v303 = vld [vmem:[%s273 + $0x88] sm:$0xf]
      %v304 = vld [vmem:[%s273 + $0x90] sm:$0xf]
      %v305 = vld [vmem:[%s273 + $0x94] sm:$0xf]
      %v306 = vld [vmem:[%s273 + $0x9c] sm:$0xf]
      %v307 = vld [vmem:[%s273 + $0xa0] sm:$0xf]
      %v308 = vld [vmem:[%s273 + $0xa8] sm:$0xf]
      %v309 = vld [vmem:[%s273 + $0xac] sm:$0xf]
      %v310 = vld [vmem:[%s273 + $0xb4] sm:$0xf]
      %v311 = vld [vmem:[%s273 + $0xb8] sm:$0xf]
      %v312 = vld [vmem:[%s1] sm:$0x3]
      %v313 = vld [vmem:[%s273 + $0x8] sm:$0x1]
      %v314 = vld [vmem:[%s273 + $0x14] sm:$0x1]
      %v315 = vld [vmem:[%s273 + $0x20] sm:$0x1]
      %v316 = vld [vmem:[%s273 + $0x2c] sm:$0x1]
      %v317 = vld [vmem:[%s273 + $0x38] sm:$0x1]
      %v318 = vld [vmem:[%s273 + $0x44] sm:$0x1]
      %v319 = vld [vmem:[%s273 + $0x50] sm:$0x1]
      %v320 = vld [vmem:[%s273 + $0x5c] sm:$0x1]
      %v321 = vld [vmem:[%s273 + $0x68] sm:$0x1]
      %v322 = vld [vmem:[%s273 + $0x74] sm:$0x1]
      %v323 = vld [vmem:[%s273 + $0x80] sm:$0x1]
      %v324 = vld [vmem:[%s273 + $0x8c] sm:$0x1]
      %v325 = vld [vmem:[%s273 + $0x98] sm:$0x1]
      %v326 = vld [vmem:[%s273 + $0xa4] sm:$0x1]
      %v327 = vld [vmem:[%s273 + $0xb0] sm:$0x1]
      %v328 = vld [vmem:[%s273 + $0xbc] sm:$0x1]
      %vm329 = vsmask.f32 3328
      %vm330 = vsmask.f32 7440
      %vm331 = vmor %vm329, %vm330
      %v333 = vshrl.u32 %v280, 16
      %v335 = vrot.slane %v333, 4
      %v336 = vshll.u32 %v280, 16
      %v338 = vrot.slane %v336, 5
      %v339 = vor.u32 %v335, %v338
      %v340 = vrot.slane %v339, 4
      %v342 = vshll.u32 %v281, 16
      %v344 = vrot.slane %v342, 5
      %v345 = vsel %vm331, %v340, %v344
      %v346 = vshrl.u32 %v281, 16
      %v348 = vrot.slane %v346, 4
      %v349 = vor.u32 %v348, %v344
      %v350 = vrot.slane %v349, 4
      %v352 = vshll.u32 %v313, 16
      %v354 = vrot.slane %v352, 5
      %v355 = vsel %vm331, %v350, %v354
      %v357 = vshrl.u32 %v282, 16
      %v359 = vrot.slane %v357, 4
      %v360 = vshll.u32 %v282, 16
      %v362 = vrot.slane %v360, 5
      %v363 = vor.u32 %v359, %v362
      %v364 = vrot.slane %v363, 4
      %v366 = vshll.u32 %v283, 16
      %v368 = vrot.slane %v366, 5
      %v369 = vsel %vm331, %v364, %v368
      %v370 = vshrl.u32 %v283, 16
      %v372 = vrot.slane %v370, 4
      %v373 = vor.u32 %v372, %v368
      %v374 = vrot.slane %v373, 4
      %v376 = vshll.u32 %v314, 16
      %v378 = vrot.slane %v376, 5
      %v379 = vsel %vm331, %v374, %v378
      %v381 = vshrl.u32 %v284, 16
      %v383 = vrot.slane %v381, 4
      %v384 = vshll.u32 %v284, 16
      %v386 = vrot.slane %v384, 5
      %v387 = vor.u32 %v383, %v386
      %v388 = vrot.slane %v387, 4
      %v390 = vshll.u32 %v285, 16
      %v392 = vrot.slane %v390, 5
      %v393 = vsel %vm331, %v388, %v392
      %v394 = vshrl.u32 %v285, 16
      %v396 = vrot.slane %v394, 4
      %v397 = vor.u32 %v396, %v392
      %v398 = vrot.slane %v397, 4
      %v400 = vshll.u32 %v315, 16
      %v402 = vrot.slane %v400, 5
      %v403 = vsel %vm331, %v398, %v402
      %v405 = vshrl.u32 %v286, 16
      %v407 = vrot.slane %v405, 4
      %v408 = vshll.u32 %v286, 16
      %v410 = vrot.slane %v408, 5
      %v411 = vor.u32 %v407, %v410
      %v412 = vrot.slane %v411, 4
      %v414 = vshll.u32 %v287, 16
      %v416 = vrot.slane %v414, 5
      %v417 = vsel %vm331, %v412, %v416
      %v418 = vshrl.u32 %v287, 16
      %v420 = vrot.slane %v418, 4
      %v421 = vor.u32 %v420, %v416
      %v422 = vrot.slane %v421, 4
      %v424 = vshll.u32 %v316, 16
      %v426 = vrot.slane %v424, 5
      %v427 = vsel %vm331, %v422, %v426
      %v429 = vshrl.u32 %v288, 16
      %v431 = vrot.slane %v429, 4
      %v432 = vshll.u32 %v288, 16
      %v434 = vrot.slane %v432, 5
      %v435 = vor.u32 %v431, %v434
      %v436 = vrot.slane %v435, 4
      %v438 = vshll.u32 %v289, 16
      %v440 = vrot.slane %v438, 5
      %v441 = vsel %vm331, %v436, %v440
      %v442 = vshrl.u32 %v289, 16
      %v444 = vrot.slane %v442, 4
      %v445 = vor.u32 %v444, %v440
      %v446 = vrot.slane %v445, 4
      %v448 = vshll.u32 %v317, 16
      %v450 = vrot.slane %v448, 5
      %v451 = vsel %vm331, %v446, %v450
      %v453 = vshrl.u32 %v290, 16
      %v455 = vrot.slane %v453, 4
      %v456 = vshll.u32 %v290, 16
      %v458 = vrot.slane %v456, 5
      %v459 = vor.u32 %v455, %v458
      %v460 = vrot.slane %v459, 4
      %v462 = vshll.u32 %v291, 16
      %v464 = vrot.slane %v462, 5
      %v465 = vsel %vm331, %v460, %v464
      %v466 = vshrl.u32 %v291, 16
      %v468 = vrot.slane %v466, 4
      %v469 = vor.u32 %v468, %v464
      %v470 = vrot.slane %v469, 4
      %v472 = vshll.u32 %v318, 16
      %v474 = vrot.slane %v472, 5
      %v475 = vsel %vm331, %v470, %v474
      %v477 = vshrl.u32 %v292, 16
      %v479 = vrot.slane %v477, 4
      %v480 = vshll.u32 %v292, 16
      %v482 = vrot.slane %v480, 5
      %v483 = vor.u32 %v479, %v482
      %v484 = vrot.slane %v483, 4
      %v486 = vshll.u32 %v293, 16
      %v488 = vrot.slane %v486, 5
      %v489 = vsel %vm331, %v484, %v488
      %v490 = vshrl.u32 %v293, 16
      %v492 = vrot.slane %v490, 4
      %v493 = vor.u32 %v492, %v488
      %v494 = vrot.slane %v493, 4
      %v496 = vshll.u32 %v319, 16
      %v498 = vrot.slane %v496, 5
      %v499 = vsel %vm331, %v494, %v498
      %v501 = vshrl.u32 %v294, 16
      %v503 = vrot.slane %v501, 4
      %v504 = vshll.u32 %v294, 16
      %v506 = vrot.slane %v504, 5
      %v507 = vor.u32 %v503, %v506
      %v508 = vrot.slane %v507, 4
      %v510 = vshll.u32 %v295, 16
      %v512 = vrot.slane %v510, 5
      %v513 = vsel %vm331, %v508, %v512
      %v514 = vshrl.u32 %v295, 16
      %v516 = vrot.slane %v514, 4
      %v517 = vor.u32 %v516, %v512
      %v518 = vrot.slane %v517, 4
      %v520 = vshll.u32 %v320, 16
      %v522 = vrot.slane %v520, 5
      %v523 = vsel %vm331, %v518, %v522
      %v525 = vshrl.u32 %v296, 16
      %v527 = vrot.slane %v525, 4
      %v528 = vshll.u32 %v296, 16
      %v530 = vrot.slane %v528, 5
      %v531 = vor.u32 %v527, %v530
      %v532 = vrot.slane %v531, 4
      %v534 = vshll.u32 %v297, 16
      %v536 = vrot.slane %v534, 5
      %v537 = vsel %vm331, %v532, %v536
      %v538 = vshrl.u32 %v297, 16
      %v540 = vrot.slane %v538, 4
      %v541 = vor.u32 %v540, %v536
      %v542 = vrot.slane %v541, 4
      %v544 = vshll.u32 %v321, 16
      %v546 = vrot.slane %v544, 5
      %v547 = vsel %vm331, %v542, %v546
      %v549 = vshrl.u32 %v298, 16
      %v551 = vrot.slane %v549, 4
      %v552 = vshll.u32 %v298, 16
      %v554 = vrot.slane %v552, 5
      %v555 = vor.u32 %v551, %v554
      %v556 = vrot.slane %v555, 4
      %v558 = vshll.u32 %v299, 16
      %v560 = vrot.slane %v558, 5
      %v561 = vsel %vm331, %v556, %v560
      %v562 = vshrl.u32 %v299, 16
      %v564 = vrot.slane %v562, 4
      %v565 = vor.u32 %v564, %v560
      %v566 = vrot.slane %v565, 4
      %v568 = vshll.u32 %v322, 16
      %v570 = vrot.slane %v568, 5
      %v571 = vsel %vm331, %v566, %v570
      %v573 = vshrl.u32 %v300, 16
      %v575 = vrot.slane %v573, 4
      %v576 = vshll.u32 %v300, 16
      %v578 = vrot.slane %v576, 5
      %v579 = vor.u32 %v575, %v578
      %v580 = vrot.slane %v579, 4
      %v582 = vshll.u32 %v301, 16
      %v584 = vrot.slane %v582, 5
      %v585 = vsel %vm331, %v580, %v584
      %v586 = vshrl.u32 %v301, 16
      %v588 = vrot.slane %v586, 4
      %v589 = vor.u32 %v588, %v584
      %v590 = vrot.slane %v589, 4
      %v592 = vshll.u32 %v323, 16
      %v594 = vrot.slane %v592, 5
      %v595 = vsel %vm331, %v590, %v594
      %v597 = vshrl.u32 %v302, 16
      %v599 = vrot.slane %v597, 4
      %v600 = vshll.u32 %v302, 16
      %v602 = vrot.slane %v600, 5
      %v603 = vor.u32 %v599, %v602
      %v604 = vrot.slane %v603, 4
      %v606 = vshll.u32 %v303, 16
      %v608 = vrot.slane %v606, 5
      %v609 = vsel %vm331, %v604, %v608
      %v610 = vshrl.u32 %v303, 16
      %v612 = vrot.slane %v610, 4
      %v613 = vor.u32 %v612, %v608
      %v614 = vrot.slane %v613, 4
      %v616 = vshll.u32 %v324, 16
      %v618 = vrot.slane %v616, 5
      %v619 = vsel %vm331, %v614, %v618
      %v621 = vshrl.u32 %v304, 16
      %v623 = vrot.slane %v621, 4
      %v624 = vshll.u32 %v304, 16
      %v626 = vrot.slane %v624, 5
      %v627 = vor.u32 %v623, %v626
      %v628 = vrot.slane %v627, 4
      %v630 = vshll.u32 %v305, 16
      %v632 = vrot.slane %v630, 5
      %v633 = vsel %vm331, %v628, %v632
      %v634 = vshrl.u32 %v305, 16
      %v636 = vrot.slane %v634, 4
      %v637 = vor.u32 %v636, %v632
      %v638 = vrot.slane %v637, 4
      %v640 = vshll.u32 %v325, 16
      %v642 = vrot.slane %v640, 5
      %v643 = vsel %vm331, %v638, %v642
      %v645 = vshrl.u32 %v306, 16
      %v647 = vrot.slane %v645, 4
      %v648 = vshll.u32 %v306, 16
      %v650 = vrot.slane %v648, 5
      %v651 = vor.u32 %v647, %v650
      %v652 = vrot.slane %v651, 4
      %v654 = vshll.u32 %v307, 16
      %v656 = vrot.slane %v654, 5
      %v657 = vsel %vm331, %v652, %v656
      %v658 = vshrl.u32 %v307, 16
      %v660 = vrot.slane %v658, 4
      %v661 = vor.u32 %v660, %v656
      %v662 = vrot.slane %v661, 4
      %v664 = vshll.u32 %v326, 16
      %v666 = vrot.slane %v664, 5
      %v667 = vsel %vm331, %v662, %v666
      %v669 = vshrl.u32 %v308, 16
      %v671 = vrot.slane %v669, 4
      %v672 = vshll.u32 %v308, 16
      %v674 = vrot.slane %v672, 5
      %v675 = vor.u32 %v671, %v674
      %v676 = vrot.slane %v675, 4
      %v678 = vshll.u32 %v309, 16
      %v680 = vrot.slane %v678, 5
      %v681 = vsel %vm331, %v676, %v680
      %v682 = vshrl.u32 %v309, 16
      %v684 = vrot.slane %v682, 4
      %v685 = vor.u32 %v684, %v680
      %v686 = vrot.slane %v685, 4
      %v688 = vshll.u32 %v327, 16
      %v690 = vrot.slane %v688, 5
      %v691 = vsel %vm331, %v686, %v690
      %v693 = vshrl.u32 %v310, 16
      %v695 = vrot.slane %v693, 4
      %v696 = vshll.u32 %v310, 16
      %v698 = vrot.slane %v696, 5
      %v699 = vor.u32 %v695, %v698
      %v700 = vrot.slane %v699, 4
      %v702 = vshll.u32 %v311, 16
      %v704 = vrot.slane %v702, 5
      %v705 = vsel %vm331, %v700, %v704
      %v706 = vshrl.u32 %v311, 16
      %v708 = vrot.slane %v706, 4
      %v709 = vor.u32 %v708, %v704
      %v710 = vrot.slane %v709, 4
      %v712 = vshll.u32 %v328, 16
      %v714 = vrot.slane %v712, 5
      %v715 = vsel %vm331, %v710, %v714
      %s716 = scalar_lea.vmem %s1, 2
      %v717 = vld [vmem:[%s716] sm:$0x3]
      %v718 = vunpack.c.l.b16 %v345
      %v719 = vunpack.c.l.b16 %v355
      %v720 = vunpack.c.l.b16 %v369
      %v721 = vunpack.c.l.b16 %v379
      %v722 = vunpack.c.l.b16 %v393
      %v723 = vunpack.c.l.b16 %v403
      %v724 = vunpack.c.l.b16 %v417
      %v725 = vunpack.c.l.b16 %v427
      %v726 = vunpack.c.l.b16 %v441
      %v727 = vunpack.c.l.b16 %v451
      %v728 = vunpack.c.l.b16 %v465
      %v729 = vunpack.c.l.b16 %v475
      %v730 = vunpack.c.l.b16 %v489
      %v731 = vunpack.c.l.b16 %v499
      %v732 = vunpack.c.l.b16 %v513
      %v733 = vunpack.c.l.b16 %v523
      %v734 = vunpack.c.l.b16 %v537
      %v735 = vunpack.c.l.b16 %v547
      %v736 = vunpack.c.l.b16 %v561
      %v737 = vunpack.c.l.b16 %v571
      %v738 = vunpack.c.l.b16 %v585
      %v739 = vunpack.c.l.b16 %v595
      %v740 = vunpack.c.l.b16 %v609
      %v741 = vunpack.c.l.b16 %v619
      %v742 = vunpack.c.l.b16 %v633
      %v743 = vunpack.c.l.b16 %v643
      %v744 = vunpack.c.l.b16 %v657
      %v745 = vunpack.c.l.b16 %v667
      %v746 = vunpack.c.l.b16 %v681
      %v747 = vunpack.c.l.b16 %v691
      %v748 = vunpack.c.l.b16 %v705
      %v749 = vunpack.c.l.b16 %v715
      %v750 = vpack.c.b16 %v719, %v718
      %v751 = vpack.c.b16 %v721, %v720
      %v752 = vpack.c.b16 %v723, %v722
      %v753 = vpack.c.b16 %v725, %v724
      %v754 = vpack.c.b16 %v727, %v726
      %v755 = vpack.c.b16 %v729, %v728
      %v756 = vpack.c.b16 %v731, %v730
      %v757 = vpack.c.b16 %v733, %v732
      %v758 = vpack.c.b16 %v735, %v734
      %v759 = vpack.c.b16 %v737, %v736
      %v760 = vpack.c.b16 %v739, %v738
      %v761 = vpack.c.b16 %v741, %v740
      %v762 = vpack.c.b16 %v743, %v742
      %v763 = vpack.c.b16 %v745, %v744
      %v764 = vpack.c.b16 %v747, %v746
      %v765 = vpack.c.b16 %v749, %v748
      %vm766 = vcmask 31744
      %v768 = vsel %vm766, %v750, 0
      %v771 = vsel %vm766, %v751, 0
      %v774 = vsel %vm766, %v752, 0
      %v777 = vsel %vm766, %v753, 0
      %v780 = vsel %vm766, %v754, 0
      %v783 = vsel %vm766, %v755, 0
      %v786 = vsel %vm766, %v756, 0
      %v789 = vsel %vm766, %v757, 0
      %v792 = vsel %vm766, %v758, 0
      %v795 = vsel %vm766, %v759, 0
      %v798 = vsel %vm766, %v760, 0
      %v801 = vsel %vm766, %v761, 0
      %v804 = vsel %vm766, %v762, 0
      %v807 = vsel %vm766, %v763, 0
      %v810 = vsel %vm766, %v764, 0
      %v813 = vsel %vm766, %v765, 0
      %vm815 = vcmask 1041408
      %v817 = vsel %vm815, %v717, 0
      %819 = vmatpush.bf16.msra.mxu0 0
      %820 = vmatpush.bf16.msra.mxu0 0
      %821 = vmatpush.bf16.msra.mxu0 0
      %822 = vmatpush.bf16.msra.mxu0 0
      %823 = vmatpush.bf16.msra.mxu0 0
      %824 = vmatpush.bf16.msra.mxu0 0
      %825 = vmatpush.bf16.msra.mxu0 0
      %826 = vmatpush.bf16.msra.mxu0 %v817
      %827 = vmatmul.bf16.gmra.mxu0 %v768
      %v828 = vpop.f32.mrf.mxu0
      %v829 = vadd.f32 0.0, %v828
      %v830 = vpop.f32.mrf.mxu0
      %v831 = vadd.f32 0.0, %v830
      %832 = vmatmul.bf16.gmra.mxu0 %v771
      %v833 = vpop.f32.mrf.mxu0
      %v834 = vadd.f32 0.0, %v833
      %v835 = vpop.f32.mrf.mxu0
      %v836 = vadd.f32 0.0, %v835
      %837 = vmatmul.bf16.gmra.mxu0 %v774
      %v838 = vpop.f32.mrf.mxu0
      %v839 = vadd.f32 0.0, %v838
      %v840 = vpop.f32.mrf.mxu0
      %v841 = vadd.f32 0.0, %v840
      %842 = vmatmul.bf16.gmra.mxu0 %v777
      %v843 = vpop.f32.mrf.mxu0
      %v844 = vadd.f32 0.0, %v843
      %v845 = vpop.f32.mrf.mxu0
      %v846 = vadd.f32 0.0, %v845
      %847 = vmatmul.bf16.gmra.mxu0 %v780
      %v848 = vpop.f32.mrf.mxu0
      %v849 = vadd.f32 0.0, %v848
      %v850 = vpop.f32.mrf.mxu0
      %v851 = vadd.f32 0.0, %v850
      %852 = vmatmul.bf16.gmra.mxu0 %v783
      %v853 = vpop.f32.mrf.mxu0
      %v854 = vadd.f32 0.0, %v853
      %v855 = vpop.f32.mrf.mxu0
      %v856 = vadd.f32 0.0, %v855
      %857 = vmatmul.bf16.gmra.mxu0 %v786
      %v858 = vpop.f32.mrf.mxu0
      %v859 = vadd.f32 0.0, %v858
      %v860 = vpop.f32.mrf.mxu0
      %v861 = vadd.f32 0.0, %v860
      %862 = vmatmul.bf16.gmra.mxu0 %v789
      %v863 = vpop.f32.mrf.mxu0
      %v864 = vadd.f32 0.0, %v863
      %v865 = vpop.f32.mrf.mxu0
      %v866 = vadd.f32 0.0, %v865
      %867 = vmatmul.bf16.gmra.mxu0 %v792
      %v868 = vpop.f32.mrf.mxu0
      %v869 = vadd.f32 0.0, %v868
      %v870 = vpop.f32.mrf.mxu0
      %v871 = vadd.f32 0.0, %v870
      %872 = vmatmul.bf16.gmra.mxu0 %v795
      %v873 = vpop.f32.mrf.mxu0
      %v874 = vadd.f32 0.0, %v873
      %v875 = vpop.f32.mrf.mxu0
      %v876 = vadd.f32 0.0, %v875
      %877 = vmatmul.bf16.gmra.mxu0 %v798
      %v878 = vpop.f32.mrf.mxu0
      %v879 = vadd.f32 0.0, %v878
      %v880 = vpop.f32.mrf.mxu0
      %v881 = vadd.f32 0.0, %v880
      %882 = vmatmul.bf16.gmra.mxu0 %v801
      %v883 = vpop.f32.mrf.mxu0
      %v884 = vadd.f32 0.0, %v883
      %v885 = vpop.f32.mrf.mxu0
      %v886 = vadd.f32 0.0, %v885
      %887 = vmatmul.bf16.gmra.mxu0 %v804
      %v888 = vpop.f32.mrf.mxu0
      %v889 = vadd.f32 0.0, %v888
      %v890 = vpop.f32.mrf.mxu0
      %v891 = vadd.f32 0.0, %v890
      %892 = vmatmul.bf16.gmra.mxu0 %v807
      %v893 = vpop.f32.mrf.mxu0
      %v894 = vadd.f32 0.0, %v893
      %v895 = vpop.f32.mrf.mxu0
      %v896 = vadd.f32 0.0, %v895
      %897 = vmatmul.bf16.gmra.mxu0 %v810
      %v898 = vpop.f32.mrf.mxu0
      %v899 = vadd.f32 0.0, %v898
      %v900 = vpop.f32.mrf.mxu0
      %v901 = vadd.f32 0.0, %v900
      %902 = vmatmul.bf16.gmra.mxu0 %v813
      %v903 = vpop.f32.mrf.mxu0
      %v904 = vadd.f32 0.0, %v903
      %v905 = vpop.f32.mrf.mxu0
      %v906 = vadd.f32 0.0, %v905
      %907 = vdwg.mxu0
      %v940 = vunpack.c.l.b16 %v280
      %v941 = vunpack.c.l.b16 %v281
      %v942 = vunpack.c.l.b16 %v282
      %v943 = vunpack.c.l.b16 %v283
      %v944 = vunpack.c.l.b16 %v284
      %v945 = vunpack.c.l.b16 %v285
      %v946 = vunpack.c.l.b16 %v286
      %v947 = vunpack.c.l.b16 %v287
      %v948 = vunpack.c.l.b16 %v288
      %v949 = vunpack.c.l.b16 %v289
      %v950 = vunpack.c.l.b16 %v290
      %v951 = vunpack.c.l.b16 %v291
      %v952 = vunpack.c.l.b16 %v292
      %v953 = vunpack.c.l.b16 %v293
      %v954 = vunpack.c.l.b16 %v294
      %v955 = vunpack.c.l.b16 %v295
      %v956 = vunpack.c.l.b16 %v296
      %v957 = vunpack.c.l.b16 %v297
      %v958 = vunpack.c.l.b16 %v298
      %v959 = vunpack.c.l.b16 %v299
      %v960 = vunpack.c.l.b16 %v300
      %v961 = vunpack.c.l.b16 %v301
      %v962 = vunpack.c.l.b16 %v302
      %v963 = vunpack.c.l.b16 %v303
      %v964 = vunpack.c.l.b16 %v304
      %v965 = vunpack.c.l.b16 %v305
      %v966 = vunpack.c.l.b16 %v306
      %v967 = vunpack.c.l.b16 %v307
      %v968 = vunpack.c.l.b16 %v308
      %v969 = vunpack.c.l.b16 %v309
      %v970 = vunpack.c.l.b16 %v310
      %v971 = vunpack.c.l.b16 %v311
      %v972 = vpack.c.b16 %v941, %v940
      %v973 = vpack.c.b16 %v943, %v942
      %v974 = vpack.c.b16 %v945, %v944
      %v975 = vpack.c.b16 %v947, %v946
      %v976 = vpack.c.b16 %v949, %v948
      %v977 = vpack.c.b16 %v951, %v950
      %v978 = vpack.c.b16 %v953, %v952
      %v979 = vpack.c.b16 %v955, %v954
      %v980 = vpack.c.b16 %v957, %v956
      %v981 = vpack.c.b16 %v959, %v958
      %v982 = vpack.c.b16 %v961, %v960
      %v983 = vpack.c.b16 %v963, %v962
      %v984 = vpack.c.b16 %v965, %v964
      %v985 = vpack.c.b16 %v967, %v966
      %v986 = vpack.c.b16 %v969, %v968
      %v987 = vpack.c.b16 %v971, %v970
      %v989 = vsel %vm766, %v972, 0
      %v992 = vsel %vm766, %v973, 0
      %v995 = vsel %vm766, %v974, 0
      %v998 = vsel %vm766, %v975, 0
      %v1001 = vsel %vm766, %v976, 0
      %v1004 = vsel %vm766, %v977, 0
      %v1007 = vsel %vm766, %v978, 0
      %v1010 = vsel %vm766, %v979, 0
      %v1013 = vsel %vm766, %v980, 0
      %v1016 = vsel %vm766, %v981, 0
      %v1019 = vsel %vm766, %v982, 0
      %v1022 = vsel %vm766, %v983, 0
      %v1025 = vsel %vm766, %v984, 0
      %v1028 = vsel %vm766, %v985, 0
      %v1031 = vsel %vm766, %v986, 0
      %v1034 = vsel %vm766, %v987, 0
      %v1037 = vsel %vm815, %v312, 0
      %1039 = vmatpush.bf16.msra.mxu0 0
      %1040 = vmatpush.bf16.msra.mxu0 0
      %1041 = vmatpush.bf16.msra.mxu0 0
      %1042 = vmatpush.bf16.msra.mxu0 0
      %1043 = vmatpush.bf16.msra.mxu0 0
      %1044 = vmatpush.bf16.msra.mxu0 0
      %1045 = vmatpush.bf16.msra.mxu0 0
      %1046 = vmatpush.bf16.msra.mxu0 %v1037
      %1047 = vmatmul.bf16.gmra.mxu0 %v989
      %v1048 = vpop.f32.mrf.mxu0
      %v1049 = vadd.f32 %v829, %v1048
      %v1050 = vpop.f32.mrf.mxu0
      %v1051 = vadd.f32 %v831, %v1050
      %1052 = vmatmul.bf16.gmra.mxu0 %v992
      %v1053 = vpop.f32.mrf.mxu0
      %v1054 = vadd.f32 %v834, %v1053
      %v1055 = vpop.f32.mrf.mxu0
      %v1056 = vadd.f32 %v836, %v1055
      %1057 = vmatmul.bf16.gmra.mxu0 %v995
      %v1058 = vpop.f32.mrf.mxu0
      %v1059 = vadd.f32 %v839, %v1058
      %v1060 = vpop.f32.mrf.mxu0
      %v1061 = vadd.f32 %v841, %v1060
      %1062 = vmatmul.bf16.gmra.mxu0 %v998
      %v1063 = vpop.f32.mrf.mxu0
      %v1064 = vadd.f32 %v844, %v1063
      %v1065 = vpop.f32.mrf.mxu0
      %v1066 = vadd.f32 %v846, %v1065
      %1067 = vmatmul.bf16.gmra.mxu0 %v1001
      %v1068 = vpop.f32.mrf.mxu0
      %v1069 = vadd.f32 %v849, %v1068
      %v1070 = vpop.f32.mrf.mxu0
      %v1071 = vadd.f32 %v851, %v1070
      %1072 = vmatmul.bf16.gmra.mxu0 %v1004
      %v1073 = vpop.f32.mrf.mxu0
      %v1074 = vadd.f32 %v854, %v1073
      %v1075 = vpop.f32.mrf.mxu0
      %v1076 = vadd.f32 %v856, %v1075
      %1077 = vmatmul.bf16.gmra.mxu0 %v1007
      %v1078 = vpop.f32.mrf.mxu0
      %v1079 = vadd.f32 %v859, %v1078
      %v1080 = vpop.f32.mrf.mxu0
      %v1081 = vadd.f32 %v861, %v1080
      %1082 = vmatmul.bf16.gmra.mxu0 %v1010
      %v1083 = vpop.f32.mrf.mxu0
      %v1084 = vadd.f32 %v864, %v1083
      %v1085 = vpop.f32.mrf.mxu0
      %v1086 = vadd.f32 %v866, %v1085
      %1087 = vmatmul.bf16.gmra.mxu0 %v1013
      %v1088 = vpop.f32.mrf.mxu0
      %v1089 = vadd.f32 %v869, %v1088
      %v1090 = vpop.f32.mrf.mxu0
      %v1091 = vadd.f32 %v871, %v1090
      %1092 = vmatmul.bf16.gmra.mxu0 %v1016
      %v1093 = vpop.f32.mrf.mxu0
      %v1094 = vadd.f32 %v874, %v1093
      %v1095 = vpop.f32.mrf.mxu0
      %v1096 = vadd.f32 %v876, %v1095
      %1097 = vmatmul.bf16.gmra.mxu0 %v1019
      %v1098 = vpop.f32.mrf.mxu0
      %v1099 = vadd.f32 %v879, %v1098
      %v1100 = vpop.f32.mrf.mxu0
      %v1101 = vadd.f32 %v881, %v1100
      %1102 = vmatmul.bf16.gmra.mxu0 %v1022
      %v1103 = vpop.f32.mrf.mxu0
      %v1104 = vadd.f32 %v884, %v1103
      %v1105 = vpop.f32.mrf.mxu0
      %v1106 = vadd.f32 %v886, %v1105
      %1107 = vmatmul.bf16.gmra.mxu0 %v1025
      %v1108 = vpop.f32.mrf.mxu0
      %v1109 = vadd.f32 %v889, %v1108
      %v1110 = vpop.f32.mrf.mxu0
      %v1111 = vadd.f32 %v891, %v1110
      %1112 = vmatmul.bf16.gmra.mxu0 %v1028
      %v1113 = vpop.f32.mrf.mxu0
      %v1114 = vadd.f32 %v894, %v1113
      %v1115 = vpop.f32.mrf.mxu0
      %v1116 = vadd.f32 %v896, %v1115
      %1117 = vmatmul.bf16.gmra.mxu0 %v1031
      %v1118 = vpop.f32.mrf.mxu0
      %v1119 = vadd.f32 %v899, %v1118
      %v1120 = vpop.f32.mrf.mxu0
      %v1121 = vadd.f32 %v901, %v1120
      %1122 = vmatmul.bf16.gmra.mxu0 %v1034
      %v1123 = vpop.f32.mrf.mxu0
      %v1124 = vadd.f32 %v904, %v1123
      %v1125 = vpop.f32.mrf.mxu0
      %v1126 = vadd.f32 %v906, %v1125
      %1127 = vdwg.mxu0
      %v1128 = vld [vmem:[%s273] sm:$0xe]
      %v1129 = vld [vmem:[%s273 + $0xc] sm:$0xe]
      %v1130 = vld [vmem:[%s273 + $0x18] sm:$0xe]
      %v1131 = vld [vmem:[%s273 + $0x24] sm:$0xe]
      %v1132 = vld [vmem:[%s273 + $0x30] sm:$0xe]
      %v1133 = vld [vmem:[%s273 + $0x3c] sm:$0xe]
      %v1134 = vld [vmem:[%s273 + $0x48] sm:$0xe]
      %v1135 = vld [vmem:[%s273 + $0x54] sm:$0xe]
      %v1136 = vld [vmem:[%s273 + $0x60] sm:$0xe]
      %v1137 = vld [vmem:[%s273 + $0x6c] sm:$0xe]
      %v1138 = vld [vmem:[%s273 + $0x78] sm:$0xe]
      %v1139 = vld [vmem:[%s273 + $0x84] sm:$0xe]
      %v1140 = vld [vmem:[%s273 + $0x90] sm:$0xe]
      %v1141 = vld [vmem:[%s273 + $0x9c] sm:$0xe]
      %v1142 = vld [vmem:[%s273 + $0xa8] sm:$0xe]
      %v1143 = vld [vmem:[%s273 + $0xb4] sm:$0xe]
      %vm1176 = vcmask 1042432
      %vm1177 = vcmask 1046532
      %vm1178 = vmor %vm1176, %vm1177
      %v1179 = vrot.slane %v1128, 5
      %v1180 = vrot.slane %v1179, 4
      %v1181 = vrot.slane %v281, 5
      %v1182 = vsel %vm1178, %v1180, %v1181
      %v1183 = vrot.slane %v1181, 4
      %v1184 = vrot.slane %v313, 5
      %v1185 = vsel %vm1178, %v1183, %v1184
      %v1186 = vrot.slane %v1129, 5
      %v1187 = vrot.slane %v1186, 4
      %v1188 = vrot.slane %v283, 5
      %v1189 = vsel %vm1178, %v1187, %v1188
      %v1190 = vrot.slane %v1188, 4
      %v1191 = vrot.slane %v314, 5
      %v1192 = vsel %vm1178, %v1190, %v1191
      %v1193 = vrot.slane %v1130, 5
      %v1194 = vrot.slane %v1193, 4
      %v1195 = vrot.slane %v285, 5
      %v1196 = vsel %vm1178, %v1194, %v1195
      %v1197 = vrot.slane %v1195, 4
      %v1198 = vrot.slane %v315, 5
      %v1199 = vsel %vm1178, %v1197, %v1198
      %v1200 = vrot.slane %v1131, 5
      %v1201 = vrot.slane %v1200, 4
      %v1202 = vrot.slane %v287, 5
      %v1203 = vsel %vm1178, %v1201, %v1202
      %v1204 = vrot.slane %v1202, 4
      %v1205 = vrot.slane %v316, 5
      %v1206 = vsel %vm1178, %v1204, %v1205
      %v1207 = vrot.slane %v1132, 5
      %v1208 = vrot.slane %v1207, 4
      %v1209 = vrot.slane %v289, 5
      %v1210 = vsel %vm1178, %v1208, %v1209
      %v1211 = vrot.slane %v1209, 4
      %v1212 = vrot.slane %v317, 5
      %v1213 = vsel %vm1178, %v1211, %v1212
      %v1214 = vrot.slane %v1133, 5
      %v1215 = vrot.slane %v1214, 4
      %v1216 = vrot.slane %v291, 5
      %v1217 = vsel %vm1178, %v1215, %v1216
      %v1218 = vrot.slane %v1216, 4
      %v1219 = vrot.slane %v318, 5
      %v1220 = vsel %vm1178, %v1218, %v1219
      %v1221 = vrot.slane %v1134, 5
      %v1222 = vrot.slane %v1221, 4
      %v1223 = vrot.slane %v293, 5
      %v1224 = vsel %vm1178, %v1222, %v1223
      %v1225 = vrot.slane %v1223, 4
      %v1226 = vrot.slane %v319, 5
      %v1227 = vsel %vm1178, %v1225, %v1226
      %v1228 = vrot.slane %v1135, 5
      %v1229 = vrot.slane %v1228, 4
      %v1230 = vrot.slane %v295, 5
      %v1231 = vsel %vm1178, %v1229, %v1230
      %v1232 = vrot.slane %v1230, 4
      %v1233 = vrot.slane %v320, 5
      %v1234 = vsel %vm1178, %v1232, %v1233
      %v1235 = vrot.slane %v1136, 5
      %v1236 = vrot.slane %v1235, 4
      %v1237 = vrot.slane %v297, 5
      %v1238 = vsel %vm1178, %v1236, %v1237
      %v1239 = vrot.slane %v1237, 4
      %v1240 = vrot.slane %v321, 5
      %v1241 = vsel %vm1178, %v1239, %v1240
      %v1242 = vrot.slane %v1137, 5
      %v1243 = vrot.slane %v1242, 4
      %v1244 = vrot.slane %v299, 5
      %v1245 = vsel %vm1178, %v1243, %v1244
      %v1246 = vrot.slane %v1244, 4
      %v1247 = vrot.slane %v322, 5
      %v1248 = vsel %vm1178, %v1246, %v1247
      %v1249 = vrot.slane %v1138, 5
      %v1250 = vrot.slane %v1249, 4
      %v1251 = vrot.slane %v301, 5
      %v1252 = vsel %vm1178, %v1250, %v1251
      %v1253 = vrot.slane %v1251, 4
      %v1254 = vrot.slane %v323, 5
      %v1255 = vsel %vm1178, %v1253, %v1254
      %v1256 = vrot.slane %v1139, 5
      %v1257 = vrot.slane %v1256, 4
      %v1258 = vrot.slane %v303, 5
      %v1259 = vsel %vm1178, %v1257, %v1258
      %v1260 = vrot.slane %v1258, 4
      %v1261 = vrot.slane %v324, 5
      %v1262 = vsel %vm1178, %v1260, %v1261
      %v1263 = vrot.slane %v1140, 5
      %v1264 = vrot.slane %v1263, 4
      %v1265 = vrot.slane %v305, 5
      %v1266 = vsel %vm1178, %v1264, %v1265
      %v1267 = vrot.slane %v1265, 4
      %v1268 = vrot.slane %v325, 5
      %v1269 = vsel %vm1178, %v1267, %v1268
      %v1270 = vrot.slane %v1141, 5
      %v1271 = vrot.slane %v1270, 4
      %v1272 = vrot.slane %v307, 5
      %v1273 = vsel %vm1178, %v1271, %v1272
      %v1274 = vrot.slane %v1272, 4
      %v1275 = vrot.slane %v326, 5
      %v1276 = vsel %vm1178, %v1274, %v1275
      %v1277 = vrot.slane %v1142, 5
      %v1278 = vrot.slane %v1277, 4
      %v1279 = vrot.slane %v309, 5
      %v1280 = vsel %vm1178, %v1278, %v1279
      %v1281 = vrot.slane %v1279, 4
      %v1282 = vrot.slane %v327, 5
      %v1283 = vsel %vm1178, %v1281, %v1282
      %v1284 = vrot.slane %v1143, 5
      %v1285 = vrot.slane %v1284, 4
      %v1286 = vrot.slane %v311, 5
      %v1287 = vsel %vm1178, %v1285, %v1286
      %v1288 = vrot.slane %v1286, 4
      %v1289 = vrot.slane %v328, 5
      %v1290 = vsel %vm1178, %v1288, %v1289
      %s1291 = scalar_lea.vmem %s1, 4
      %v1292 = vld [vmem:[%s1291] sm:$0x3]
      %v1293 = vunpack.c.l.b16 %v1182
      %v1294 = vunpack.c.l.b16 %v1185
      %v1295 = vunpack.c.l.b16 %v1189
      %v1296 = vunpack.c.l.b16 %v1192
      %v1297 = vunpack.c.l.b16 %v1196
      %v1298 = vunpack.c.l.b16 %v1199
      %v1299 = vunpack.c.l.b16 %v1203
      %v1300 = vunpack.c.l.b16 %v1206
      %v1301 = vunpack.c.l.b16 %v1210
      %v1302 = vunpack.c.l.b16 %v1213
      %v1303 = vunpack.c.l.b16 %v1217
      %v1304 = vunpack.c.l.b16 %v1220
      %v1305 = vunpack.c.l.b16 %v1224
      %v1306 = vunpack.c.l.b16 %v1227
      %v1307 = vunpack.c.l.b16 %v1231
      %v1308 = vunpack.c.l.b16 %v1234
      %v1309 = vunpack.c.l.b16 %v1238
      %v1310 = vunpack.c.l.b16 %v1241
      %v1311 = vunpack.c.l.b16 %v1245
      %v1312 = vunpack.c.l.b16 %v1248
      %v1313 = vunpack.c.l.b16 %v1252
      %v1314 = vunpack.c.l.b16 %v1255
      %v1315 = vunpack.c.l.b16 %v1259
      %v1316 = vunpack.c.l.b16 %v1262
      %v1317 = vunpack.c.l.b16 %v1266
      %v1318 = vunpack.c.l.b16 %v1269
      %v1319 = vunpack.c.l.b16 %v1273
      %v1320 = vunpack.c.l.b16 %v1276
      %v1321 = vunpack.c.l.b16 %v1280
      %v1322 = vunpack.c.l.b16 %v1283
      %v1323 = vunpack.c.l.b16 %v1287
      %v1324 = vunpack.c.l.b16 %v1290
      %v1325 = vpack.c.b16 %v1294, %v1293
      %v1326 = vpack.c.b16 %v1296, %v1295
      %v1327 = vpack.c.b16 %v1298, %v1297
      %v1328 = vpack.c.b16 %v1300, %v1299
      %v1329 = vpack.c.b16 %v1302, %v1301
      %v1330 = vpack.c.b16 %v1304, %v1303
      %v1331 = vpack.c.b16 %v1306, %v1305
      %v1332 = vpack.c.b16 %v1308, %v1307
      %v1333 = vpack.c.b16 %v1310, %v1309
      %v1334 = vpack.c.b16 %v1312, %v1311
      %v1335 = vpack.c.b16 %v1314, %v1313
      %v1336 = vpack.c.b16 %v1316, %v1315
      %v1337 = vpack.c.b16 %v1318, %v1317
      %v1338 = vpack.c.b16 %v1320, %v1319
      %v1339 = vpack.c.b16 %v1322, %v1321
      %v1340 = vpack.c.b16 %v1324, %v1323
      %v1342 = vsel %vm766, %v1325, 0
      %v1345 = vsel %vm766, %v1326, 0
      %v1348 = vsel %vm766, %v1327, 0
      %v1351 = vsel %vm766, %v1328, 0
      %v1354 = vsel %vm766, %v1329, 0
      %v1357 = vsel %vm766, %v1330, 0
      %v1360 = vsel %vm766, %v1331, 0
      %v1363 = vsel %vm766, %v1332, 0
      %v1366 = vsel %vm766, %v1333, 0
      %v1369 = vsel %vm766, %v1334, 0
      %v1372 = vsel %vm766, %v1335, 0
      %v1375 = vsel %vm766, %v1336, 0
      %v1378 = vsel %vm766, %v1337, 0
      %v1381 = vsel %vm766, %v1338, 0
      %v1384 = vsel %vm766, %v1339, 0
      %v1387 = vsel %vm766, %v1340, 0
      %v1390 = vsel %vm815, %v1292, 0
      %1392 = vmatpush.bf16.msra.mxu0 0
      %1393 = vmatpush.bf16.msra.mxu0 0
      %1394 = vmatpush.bf16.msra.mxu0 0
      %1395 = vmatpush.bf16.msra.mxu0 0
      %1396 = vmatpush.bf16.msra.mxu0 0
      %1397 = vmatpush.bf16.msra.mxu0 0
      %1398 = vmatpush.bf16.msra.mxu0 0
      %1399 = vmatpush.bf16.msra.mxu0 %v1390
      %1400 = vmatmul.bf16.gmra.mxu0 %v1342
      %v1401 = vpop.f32.mrf.mxu0
      %v1402 = vadd.f32 0.0, %v1401
      %v1403 = vpop.f32.mrf.mxu0
      %v1404 = vadd.f32 0.0, %v1403
      %1405 = vmatmul.bf16.gmra.mxu0 %v1345
      %v1406 = vpop.f32.mrf.mxu0
      %v1407 = vadd.f32 0.0, %v1406
      %v1408 = vpop.f32.mrf.mxu0
      %v1409 = vadd.f32 0.0, %v1408
      %1410 = vmatmul.bf16.gmra.mxu0 %v1348
      %v1411 = vpop.f32.mrf.mxu0
      %v1412 = vadd.f32 0.0, %v1411
      %v1413 = vpop.f32.mrf.mxu0
      %v1414 = vadd.f32 0.0, %v1413
      %1415 = vmatmul.bf16.gmra.mxu0 %v1351
      %v1416 = vpop.f32.mrf.mxu0
      %v1417 = vadd.f32 0.0, %v1416
      %v1418 = vpop.f32.mrf.mxu0
      %v1419 = vadd.f32 0.0, %v1418
      %1420 = vmatmul.bf16.gmra.mxu0 %v1354
      %v1421 = vpop.f32.mrf.mxu0
      %v1422 = vadd.f32 0.0, %v1421
      %v1423 = vpop.f32.mrf.mxu0
      %v1424 = vadd.f32 0.0, %v1423
      %1425 = vmatmul.bf16.gmra.mxu0 %v1357
      %v1426 = vpop.f32.mrf.mxu0
      %v1427 = vadd.f32 0.0, %v1426
      %v1428 = vpop.f32.mrf.mxu0
      %v1429 = vadd.f32 0.0, %v1428
      %1430 = vmatmul.bf16.gmra.mxu0 %v1360
      %v1431 = vpop.f32.mrf.mxu0
      %v1432 = vadd.f32 0.0, %v1431
      %v1433 = vpop.f32.mrf.mxu0
      %v1434 = vadd.f32 0.0, %v1433
      %1435 = vmatmul.bf16.gmra.mxu0 %v1363
      %v1436 = vpop.f32.mrf.mxu0
      %v1437 = vadd.f32 0.0, %v1436
      %v1438 = vpop.f32.mrf.mxu0
      %v1439 = vadd.f32 0.0, %v1438
      %1440 = vmatmul.bf16.gmra.mxu0 %v1366
      %v1441 = vpop.f32.mrf.mxu0
      %v1442 = vadd.f32 0.0, %v1441
      %v1443 = vpop.f32.mrf.mxu0
      %v1444 = vadd.f32 0.0, %v1443
      %1445 = vmatmul.bf16.gmra.mxu0 %v1369
      %v1446 = vpop.f32.mrf.mxu0
      %v1447 = vadd.f32 0.0, %v1446
      %v1448 = vpop.f32.mrf.mxu0
      %v1449 = vadd.f32 0.0, %v1448
      %1450 = vmatmul.bf16.gmra.mxu0 %v1372
      %v1451 = vpop.f32.mrf.mxu0
      %v1452 = vadd.f32 0.0, %v1451
      %v1453 = vpop.f32.mrf.mxu0
      %v1454 = vadd.f32 0.0, %v1453
      %1455 = vmatmul.bf16.gmra.mxu0 %v1375
      %v1456 = vpop.f32.mrf.mxu0
      %v1457 = vadd.f32 0.0, %v1456
      %v1458 = vpop.f32.mrf.mxu0
      %v1459 = vadd.f32 0.0, %v1458
      %1460 = vmatmul.bf16.gmra.mxu0 %v1378
      %v1461 = vpop.f32.mrf.mxu0
      %v1462 = vadd.f32 0.0, %v1461
      %v1463 = vpop.f32.mrf.mxu0
      %v1464 = vadd.f32 0.0, %v1463
      %1465 = vmatmul.bf16.gmra.mxu0 %v1381
      %v1466 = vpop.f32.mrf.mxu0
      %v1467 = vadd.f32 0.0, %v1466
      %v1468 = vpop.f32.mrf.mxu0
      %v1469 = vadd.f32 0.0, %v1468
      %1470 = vmatmul.bf16.gmra.mxu0 %v1384
      %v1471 = vpop.f32.mrf.mxu0
      %v1472 = vadd.f32 0.0, %v1471
      %v1473 = vpop.f32.mrf.mxu0
      %v1474 = vadd.f32 0.0, %v1473
      %1475 = vmatmul.bf16.gmra.mxu0 %v1387
      %v1476 = vpop.f32.mrf.mxu0
      %v1477 = vadd.f32 0.0, %v1476
      %v1478 = vpop.f32.mrf.mxu0
      %v1479 = vadd.f32 0.0, %v1478
      %1480 = vdwg.mxu0
      %v1481 = vadd.f32 %v1049, %v1402
      %v1482 = vadd.f32 %v1051, %v1404
      %v1483 = vadd.f32 %v1054, %v1407
      %v1484 = vadd.f32 %v1056, %v1409
      %v1485 = vadd.f32 %v1059, %v1412
      %v1486 = vadd.f32 %v1061, %v1414
      %v1487 = vadd.f32 %v1064, %v1417
      %v1488 = vadd.f32 %v1066, %v1419
      %v1489 = vadd.f32 %v1069, %v1422
      %v1490 = vadd.f32 %v1071, %v1424
      %v1491 = vadd.f32 %v1074, %v1427
      %v1492 = vadd.f32 %v1076, %v1429
      %v1493 = vadd.f32 %v1079, %v1432
      %v1494 = vadd.f32 %v1081, %v1434
      %v1495 = vadd.f32 %v1084, %v1437
      %v1496 = vadd.f32 %v1086, %v1439
      %v1497 = vadd.f32 %v1089, %v1442
      %v1498 = vadd.f32 %v1091, %v1444
      %v1499 = vadd.f32 %v1094, %v1447
      %v1500 = vadd.f32 %v1096, %v1449
      %v1501 = vadd.f32 %v1099, %v1452
      %v1502 = vadd.f32 %v1101, %v1454
      %v1503 = vadd.f32 %v1104, %v1457
      %v1504 = vadd.f32 %v1106, %v1459
      %v1505 = vadd.f32 %v1109, %v1462
      %v1506 = vadd.f32 %v1111, %v1464
      %v1507 = vadd.f32 %v1114, %v1467
      %v1508 = vadd.f32 %v1116, %v1469
      %v1509 = vadd.f32 %v1119, %v1472
      %v1510 = vadd.f32 %v1121, %v1474
      %v1511 = vadd.f32 %v1124, %v1477
      %v1512 = vadd.f32 %v1126, %v1479
      %s1513 = scalar_lea.vmem %s273, 12
      %v1514 = vld [vmem:[%s1513] sm:$0xf]
      %v1515 = vld [vmem:[%s1513 + $0x4] sm:$0xf]
      %v1516 = vld [vmem:[%s1513 + $0xc] sm:$0xf]
      %v1517 = vld [vmem:[%s1513 + $0x10] sm:$0xf]
      %v1518 = vld [vmem:[%s1513 + $0x18] sm:$0xf]
      %v1519 = vld [vmem:[%s1513 + $0x1c] sm:$0xf]
      %v1520 = vld [vmem:[%s1513 + $0x24] sm:$0xf]
      %v1521 = vld [vmem:[%s1513 + $0x28] sm:$0xf]
      %v1522 = vld [vmem:[%s1513 + $0x30] sm:$0xf]
      %v1523 = vld [vmem:[%s1513 + $0x34] sm:$0xf]
      %v1524 = vld [vmem:[%s1513 + $0x3c] sm:$0xf]
      %v1525 = vld [vmem:[%s1513 + $0x40] sm:$0xf]
      %v1526 = vld [vmem:[%s1513 + $0x48] sm:$0xf]
      %v1527 = vld [vmem:[%s1513 + $0x4c] sm:$0xf]
      %v1528 = vld [vmem:[%s1513 + $0x54] sm:$0xf]
      %v1529 = vld [vmem:[%s1513 + $0x58] sm:$0xf]
      %v1530 = vld [vmem:[%s1513 + $0x60] sm:$0xf]
      %v1531 = vld [vmem:[%s1513 + $0x64] sm:$0xf]
      %v1532 = vld [vmem:[%s1513 + $0x6c] sm:$0xf]
      %v1533 = vld [vmem:[%s1513 + $0x70] sm:$0xf]
      %v1534 = vld [vmem:[%s1513 + $0x78] sm:$0xf]
      %v1535 = vld [vmem:[%s1513 + $0x7c] sm:$0xf]
      %v1536 = vld [vmem:[%s1513 + $0x84] sm:$0xf]
      %v1537 = vld [vmem:[%s1513 + $0x88] sm:$0xf]
      %v1538 = vld [vmem:[%s1513 + $0x90] sm:$0xf]
      %v1539 = vld [vmem:[%s1513 + $0x94] sm:$0xf]
      %v1540 = vld [vmem:[%s1513 + $0x9c] sm:$0xf]
      %v1541 = vld [vmem:[%s1513 + $0xa0] sm:$0xf]
      %v1542 = vld [vmem:[%s1513 + $0xa8] sm:$0xf]
      %v1543 = vld [vmem:[%s1513 + $0xac] sm:$0xf]
      %v1544 = vld [vmem:[%s1513 + $0xb4] sm:$0xf]
      %v1545 = vld [vmem:[%s1513 + $0xb8] sm:$0xf]
      %s1546 = scalar_lea.vmem %s1, 6
      %v1547 = vld [vmem:[%s1546] sm:$0x3]
      %v1580 = vunpack.c.l.b16 %v1514
      %v1581 = vunpack.c.l.b16 %v1515
      %v1582 = vunpack.c.l.b16 %v1516
      %v1583 = vunpack.c.l.b16 %v1517
      %v1584 = vunpack.c.l.b16 %v1518
      %v1585 = vunpack.c.l.b16 %v1519
      %v1586 = vunpack.c.l.b16 %v1520
      %v1587 = vunpack.c.l.b16 %v1521
      %v1588 = vunpack.c.l.b16 %v1522
      %v1589 = vunpack.c.l.b16 %v1523
      %v1590 = vunpack.c.l.b16 %v1524
      %v1591 = vunpack.c.l.b16 %v1525
      %v1592 = vunpack.c.l.b16 %v1526
      %v1593 = vunpack.c.l.b16 %v1527
      %v1594 = vunpack.c.l.b16 %v1528
      %v1595 = vunpack.c.l.b16 %v1529
      %v1596 = vunpack.c.l.b16 %v1530
      %v1597 = vunpack.c.l.b16 %v1531
      %v1598 = vunpack.c.l.b16 %v1532
      %v1599 = vunpack.c.l.b16 %v1533
      %v1600 = vunpack.c.l.b16 %v1534
      %v1601 = vunpack.c.l.b16 %v1535
      %v1602 = vunpack.c.l.b16 %v1536
      %v1603 = vunpack.c.l.b16 %v1537
      %v1604 = vunpack.c.l.b16 %v1538
      %v1605 = vunpack.c.l.b16 %v1539
      %v1606 = vunpack.c.l.b16 %v1540
      %v1607 = vunpack.c.l.b16 %v1541
      %v1608 = vunpack.c.l.b16 %v1542
      %v1609 = vunpack.c.l.b16 %v1543
      %v1610 = vunpack.c.l.b16 %v1544
      %v1611 = vunpack.c.l.b16 %v1545
      %v1612 = vpack.c.b16 %v1581, %v1580
      %v1613 = vpack.c.b16 %v1583, %v1582
      %v1614 = vpack.c.b16 %v1585, %v1584
      %v1615 = vpack.c.b16 %v1587, %v1586
      %v1616 = vpack.c.b16 %v1589, %v1588
      %v1617 = vpack.c.b16 %v1591, %v1590
      %v1618 = vpack.c.b16 %v1593, %v1592
      %v1619 = vpack.c.b16 %v1595, %v1594
      %v1620 = vpack.c.b16 %v1597, %v1596
      %v1621 = vpack.c.b16 %v1599, %v1598
      %v1622 = vpack.c.b16 %v1601, %v1600
      %v1623 = vpack.c.b16 %v1603, %v1602
      %v1624 = vpack.c.b16 %v1605, %v1604
      %v1625 = vpack.c.b16 %v1607, %v1606
      %v1626 = vpack.c.b16 %v1609, %v1608
      %v1627 = vpack.c.b16 %v1611, %v1610
      %v1629 = vsel %vm766, %v1612, 0
      %v1632 = vsel %vm766, %v1613, 0
      %v1635 = vsel %vm766, %v1614, 0
      %v1638 = vsel %vm766, %v1615, 0
      %v1641 = vsel %vm766, %v1616, 0
      %v1644 = vsel %vm766, %v1617, 0
      %v1647 = vsel %vm766, %v1618, 0
      %v1650 = vsel %vm766, %v1619, 0
      %v1653 = vsel %vm766, %v1620, 0
      %v1656 = vsel %vm766, %v1621, 0
      %v1659 = vsel %vm766, %v1622, 0
      %v1662 = vsel %vm766, %v1623, 0
      %v1665 = vsel %vm766, %v1624, 0
      %v1668 = vsel %vm766, %v1625, 0
      %v1671 = vsel %vm766, %v1626, 0
      %v1674 = vsel %vm766, %v1627, 0
      %v1677 = vsel %vm815, %v1547, 0
      %1679 = vmatpush.bf16.msra.mxu0 0
      %1680 = vmatpush.bf16.msra.mxu0 0
      %1681 = vmatpush.bf16.msra.mxu0 0
      %1682 = vmatpush.bf16.msra.mxu0 0
      %1683 = vmatpush.bf16.msra.mxu0 0
      %1684 = vmatpush.bf16.msra.mxu0 0
      %1685 = vmatpush.bf16.msra.mxu0 0
      %1686 = vmatpush.bf16.msra.mxu0 %v1677
      %1687 = vmatmul.bf16.gmra.mxu0 %v1629
      %v1688 = vpop.f32.mrf.mxu0
      %v1689 = vadd.f32 0.0, %v1688
      %v1690 = vpop.f32.mrf.mxu0
      %v1691 = vadd.f32 0.0, %v1690
      %1692 = vmatmul.bf16.gmra.mxu0 %v1632
      %v1693 = vpop.f32.mrf.mxu0
      %v1694 = vadd.f32 0.0, %v1693
      %v1695 = vpop.f32.mrf.mxu0
      %v1696 = vadd.f32 0.0, %v1695
      %1697 = vmatmul.bf16.gmra.mxu0 %v1635
      %v1698 = vpop.f32.mrf.mxu0
      %v1699 = vadd.f32 0.0, %v1698
      %v1700 = vpop.f32.mrf.mxu0
      %v1701 = vadd.f32 0.0, %v1700
      %1702 = vmatmul.bf16.gmra.mxu0 %v1638
      %v1703 = vpop.f32.mrf.mxu0
      %v1704 = vadd.f32 0.0, %v1703
      %v1705 = vpop.f32.mrf.mxu0
      %v1706 = vadd.f32 0.0, %v1705
      %1707 = vmatmul.bf16.gmra.mxu0 %v1641
      %v1708 = vpop.f32.mrf.mxu0
      %v1709 = vadd.f32 0.0, %v1708
      %v1710 = vpop.f32.mrf.mxu0
      %v1711 = vadd.f32 0.0, %v1710
      %1712 = vmatmul.bf16.gmra.mxu0 %v1644
      %v1713 = vpop.f32.mrf.mxu0
      %v1714 = vadd.f32 0.0, %v1713
      %v1715 = vpop.f32.mrf.mxu0
      %v1716 = vadd.f32 0.0, %v1715
      %1717 = vmatmul.bf16.gmra.mxu0 %v1647
      %v1718 = vpop.f32.mrf.mxu0
      %v1719 = vadd.f32 0.0, %v1718
      %v1720 = vpop.f32.mrf.mxu0
      %v1721 = vadd.f32 0.0, %v1720
      %1722 = vmatmul.bf16.gmra.mxu0 %v1650
      %v1723 = vpop.f32.mrf.mxu0
      %v1724 = vadd.f32 0.0, %v1723
      %v1725 = vpop.f32.mrf.mxu0
      %v1726 = vadd.f32 0.0, %v1725
      %1727 = vmatmul.bf16.gmra.mxu0 %v1653
      %v1728 = vpop.f32.mrf.mxu0
      %v1729 = vadd.f32 0.0, %v1728
      %v1730 = vpop.f32.mrf.mxu0
      %v1731 = vadd.f32 0.0, %v1730
      %1732 = vmatmul.bf16.gmra.mxu0 %v1656
      %v1733 = vpop.f32.mrf.mxu0
      %v1734 = vadd.f32 0.0, %v1733
      %v1735 = vpop.f32.mrf.mxu0
      %v1736 = vadd.f32 0.0, %v1735
      %1737 = vmatmul.bf16.gmra.mxu0 %v1659
      %v1738 = vpop.f32.mrf.mxu0
      %v1739 = vadd.f32 0.0, %v1738
      %v1740 = vpop.f32.mrf.mxu0
      %v1741 = vadd.f32 0.0, %v1740
      %1742 = vmatmul.bf16.gmra.mxu0 %v1662
      %v1743 = vpop.f32.mrf.mxu0
      %v1744 = vadd.f32 0.0, %v1743
      %v1745 = vpop.f32.mrf.mxu0
      %v1746 = vadd.f32 0.0, %v1745
      %1747 = vmatmul.bf16.gmra.mxu0 %v1665
      %v1748 = vpop.f32.mrf.mxu0
      %v1749 = vadd.f32 0.0, %v1748
      %v1750 = vpop.f32.mrf.mxu0
      %v1751 = vadd.f32 0.0, %v1750
      %1752 = vmatmul.bf16.gmra.mxu0 %v1668
      %v1753 = vpop.f32.mrf.mxu0
      %v1754 = vadd.f32 0.0, %v1753
      %v1755 = vpop.f32.mrf.mxu0
      %v1756 = vadd.f32 0.0, %v1755
      %1757 = vmatmul.bf16.gmra.mxu0 %v1671
      %v1758 = vpop.f32.mrf.mxu0
      %v1759 = vadd.f32 0.0, %v1758
      %v1760 = vpop.f32.mrf.mxu0
      %v1761 = vadd.f32 0.0, %v1760
      %1762 = vmatmul.bf16.gmra.mxu0 %v1674
      %v1763 = vpop.f32.mrf.mxu0
      %v1764 = vadd.f32 0.0, %v1763
      %v1765 = vpop.f32.mrf.mxu0
      %v1766 = vadd.f32 0.0, %v1765
      %1767 = vdwg.mxu0
      %v1768 = vadd.f32 %v1481, %v1689
      %v1769 = vadd.f32 %v1482, %v1691
      %v1770 = vadd.f32 %v1483, %v1694
      %v1771 = vadd.f32 %v1484, %v1696
      %v1772 = vadd.f32 %v1485, %v1699
      %v1773 = vadd.f32 %v1486, %v1701
      %v1774 = vadd.f32 %v1487, %v1704
      %v1775 = vadd.f32 %v1488, %v1706
      %v1776 = vadd.f32 %v1489, %v1709
      %v1777 = vadd.f32 %v1490, %v1711
      %v1778 = vadd.f32 %v1491, %v1714
      %v1779 = vadd.f32 %v1492, %v1716
      %v1780 = vadd.f32 %v1493, %v1719
      %v1781 = vadd.f32 %v1494, %v1721
      %v1782 = vadd.f32 %v1495, %v1724
      %v1783 = vadd.f32 %v1496, %v1726
      %v1784 = vadd.f32 %v1497, %v1729
      %v1785 = vadd.f32 %v1498, %v1731
      %v1786 = vadd.f32 %v1499, %v1734
      %v1787 = vadd.f32 %v1500, %v1736
      %v1788 = vadd.f32 %v1501, %v1739
      %v1789 = vadd.f32 %v1502, %v1741
      %v1790 = vadd.f32 %v1503, %v1744
      %v1791 = vadd.f32 %v1504, %v1746
      %v1792 = vadd.f32 %v1505, %v1749
      %v1793 = vadd.f32 %v1506, %v1751
      %v1794 = vadd.f32 %v1507, %v1754
      %v1795 = vadd.f32 %v1508, %v1756
      %v1796 = vadd.f32 %v1509, %v1759
      %v1797 = vadd.f32 %v1510, %v1761
      %v1798 = vadd.f32 %v1511, %v1764
      %v1799 = vadd.f32 %v1512, %v1766
      %v1800 = vld [vmem:[%s1513] sm:$0xf]
      %v1801 = vld [vmem:[%s1513 + $0x4] sm:$0xf]
      %v1802 = vld [vmem:[%s1513 + $0x8] sm:$0x1]
      %v1803 = vld [vmem:[%s1513 + $0xc] sm:$0xf]
      %v1804 = vld [vmem:[%s1513 + $0x10] sm:$0xf]
      %v1805 = vld [vmem:[%s1513 + $0x14] sm:$0x1]
      %v1806 = vld [vmem:[%s1513 + $0x18] sm:$0xf]
      %v1807 = vld [vmem:[%s1513 + $0x1c] sm:$0xf]
      %v1808 = vld [vmem:[%s1513 + $0x20] sm:$0x1]
      %v1809 = vld [vmem:[%s1513 + $0x24] sm:$0xf]
      %v1810 = vld [vmem:[%s1513 + $0x28] sm:$0xf]
      %v1811 = vld [vmem:[%s1513 + $0x2c] sm:$0x1]
      %v1812 = vld [vmem:[%s1513 + $0x30] sm:$0xf]
      %v1813 = vld [vmem:[%s1513 + $0x34] sm:$0xf]
      %v1814 = vld [vmem:[%s1513 + $0x38] sm:$0x1]
      %v1815 = vld [vmem:[%s1513 + $0x3c] sm:$0xf]
      %v1816 = vld [vmem:[%s1513 + $0x40] sm:$0xf]
      %v1817 = vld [vmem:[%s1513 + $0x44] sm:$0x1]
      %v1818 = vld [vmem:[%s1513 + $0x48] sm:$0xf]
      %v1819 = vld [vmem:[%s1513 + $0x4c] sm:$0xf]
      %v1820 = vld [vmem:[%s1513 + $0x50] sm:$0x1]
      %v1821 = vld [vmem:[%s1513 + $0x54] sm:$0xf]
      %v1822 = vld [vmem:[%s1513 + $0x58] sm:$0xf]
      %v1823 = vld [vmem:[%s1513 + $0x5c] sm:$0x1]
      %v1824 = vld [vmem:[%s1513 + $0x60] sm:$0xf]
      %v1825 = vld [vmem:[%s1513 + $0x64] sm:$0xf]
      %v1826 = vld [vmem:[%s1513 + $0x68] sm:$0x1]
      %v1827 = vld [vmem:[%s1513 + $0x6c] sm:$0xf]
      %v1828 = vld [vmem:[%s1513 + $0x70] sm:$0xf]
      %v1829 = vld [vmem:[%s1513 + $0x74] sm:$0x1]
      %v1830 = vld [vmem:[%s1513 + $0x78] sm:$0xf]
      %v1831 = vld [vmem:[%s1513 + $0x7c] sm:$0xf]
      %v1832 = vld [vmem:[%s1513 + $0x80] sm:$0x1]
      %v1833 = vld [vmem:[%s1513 + $0x84] sm:$0xf]
      %v1834 = vld [vmem:[%s1513 + $0x88] sm:$0xf]
      %v1835 = vld [vmem:[%s1513 + $0x8c] sm:$0x1]
      %v1836 = vld [vmem:[%s1513 + $0x90] sm:$0xf]
      %v1837 = vld [vmem:[%s1513 + $0x94] sm:$0xf]
      %v1838 = vld [vmem:[%s1513 + $0x98] sm:$0x1]
      %v1839 = vld [vmem:[%s1513 + $0x9c] sm:$0xf]
      %v1840 = vld [vmem:[%s1513 + $0xa0] sm:$0xf]
      %v1841 = vld [vmem:[%s1513 + $0xa4] sm:$0x1]
      %v1842 = vld [vmem:[%s1513 + $0xa8] sm:$0xf]
      %v1843 = vld [vmem:[%s1513 + $0xac] sm:$0xf]
      %v1844 = vld [vmem:[%s1513 + $0xb0] sm:$0x1]
      %v1845 = vld [vmem:[%s1513 + $0xb4] sm:$0xf]
      %v1846 = vld [vmem:[%s1513 + $0xb8] sm:$0xf]
      %v1847 = vld [vmem:[%s1513 + $0xbc] sm:$0x1]
      %v1849 = vshrl.u32 %v1800, 16
      %v1851 = vrot.slane %v1849, 4
      %v1852 = vshll.u32 %v1800, 16
      %v1854 = vrot.slane %v1852, 5
      %v1855 = vor.u32 %v1851, %v1854
      %v1856 = vrot.slane %v1855, 4
      %v1858 = vshll.u32 %v1801, 16
      %v1860 = vrot.slane %v1858, 5
      %v1861 = vsel %vm331, %v1856, %v1860
      %v1862 = vshrl.u32 %v1801, 16
      %v1864 = vrot.slane %v1862, 4
      %v1865 = vor.u32 %v1864, %v1860
      %v1866 = vrot.slane %v1865, 4
      %v1868 = vshll.u32 %v1802, 16
      %v1870 = vrot.slane %v1868, 5
      %v1871 = vsel %vm331, %v1866, %v1870
      %v1873 = vshrl.u32 %v1803, 16
      %v1875 = vrot.slane %v1873, 4
      %v1876 = vshll.u32 %v1803, 16
      %v1878 = vrot.slane %v1876, 5
      %v1879 = vor.u32 %v1875, %v1878
      %v1880 = vrot.slane %v1879, 4
      %v1882 = vshll.u32 %v1804, 16
      %v1884 = vrot.slane %v1882, 5
      %v1885 = vsel %vm331, %v1880, %v1884
      %v1886 = vshrl.u32 %v1804, 16
      %v1888 = vrot.slane %v1886, 4
      %v1889 = vor.u32 %v1888, %v1884
      %v1890 = vrot.slane %v1889, 4
      %v1892 = vshll.u32 %v1805, 16
      %v1894 = vrot.slane %v1892, 5
      %v1895 = vsel %vm331, %v1890, %v1894
      %v1897 = vshrl.u32 %v1806, 16
      %v1899 = vrot.slane %v1897, 4
      %v1900 = vshll.u32 %v1806, 16
      %v1902 = vrot.slane %v1900, 5
      %v1903 = vor.u32 %v1899, %v1902
      %v1904 = vrot.slane %v1903, 4
      %v1906 = vshll.u32 %v1807, 16
      %v1908 = vrot.slane %v1906, 5
      %v1909 = vsel %vm331, %v1904, %v1908
      %v1910 = vshrl.u32 %v1807, 16
      %v1912 = vrot.slane %v1910, 4
      %v1913 = vor.u32 %v1912, %v1908
      %v1914 = vrot.slane %v1913, 4
      %v1916 = vshll.u32 %v1808, 16
      %v1918 = vrot.slane %v1916, 5
      %v1919 = vsel %vm331, %v1914, %v1918
      %v1921 = vshrl.u32 %v1809, 16
      %v1923 = vrot.slane %v1921, 4
      %v1924 = vshll.u32 %v1809, 16
      %v1926 = vrot.slane %v1924, 5
      %v1927 = vor.u32 %v1923, %v1926
      %v1928 = vrot.slane %v1927, 4
      %v1930 = vshll.u32 %v1810, 16
      %v1932 = vrot.slane %v1930, 5
      %v1933 = vsel %vm331, %v1928, %v1932
      %v1934 = vshrl.u32 %v1810, 16
      %v1936 = vrot.slane %v1934, 4
      %v1937 = vor.u32 %v1936, %v1932
      %v1938 = vrot.slane %v1937, 4
      %v1940 = vshll.u32 %v1811, 16
      %v1942 = vrot.slane %v1940, 5
      %v1943 = vsel %vm331, %v1938, %v1942
      %v1945 = vshrl.u32 %v1812, 16
      %v1947 = vrot.slane %v1945, 4
      %v1948 = vshll.u32 %v1812, 16
      %v1950 = vrot.slane %v1948, 5
      %v1951 = vor.u32 %v1947, %v1950
      %v1952 = vrot.slane %v1951, 4
      %v1954 = vshll.u32 %v1813, 16
      %v1956 = vrot.slane %v1954, 5
      %v1957 = vsel %vm331, %v1952, %v1956
      %v1958 = vshrl.u32 %v1813, 16
      %v1960 = vrot.slane %v1958, 4
      %v1961 = vor.u32 %v1960, %v1956
      %v1962 = vrot.slane %v1961, 4
      %v1964 = vshll.u32 %v1814, 16
      %v1966 = vrot.slane %v1964, 5
      %v1967 = vsel %vm331, %v1962, %v1966
      %v1969 = vshrl.u32 %v1815, 16
      %v1971 = vrot.slane %v1969, 4
      %v1972 = vshll.u32 %v1815, 16
      %v1974 = vrot.slane %v1972, 5
      %v1975 = vor.u32 %v1971, %v1974
      %v1976 = vrot.slane %v1975, 4
      %v1978 = vshll.u32 %v1816, 16
      %v1980 = vrot.slane %v1978, 5
      %v1981 = vsel %vm331, %v1976, %v1980
      %v1982 = vshrl.u32 %v1816, 16
      %v1984 = vrot.slane %v1982, 4
      %v1985 = vor.u32 %v1984, %v1980
      %v1986 = vrot.slane %v1985, 4
      %v1988 = vshll.u32 %v1817, 16
      %v1990 = vrot.slane %v1988, 5
      %v1991 = vsel %vm331, %v1986, %v1990
      %v1993 = vshrl.u32 %v1818, 16
      %v1995 = vrot.slane %v1993, 4
      %v1996 = vshll.u32 %v1818, 16
      %v1998 = vrot.slane %v1996, 5
      %v1999 = vor.u32 %v1995, %v1998
      %v2000 = vrot.slane %v1999, 4
      %v2002 = vshll.u32 %v1819, 16
      %v2004 = vrot.slane %v2002, 5
      %v2005 = vsel %vm331, %v2000, %v2004
      %v2006 = vshrl.u32 %v1819, 16
      %v2008 = vrot.slane %v2006, 4
      %v2009 = vor.u32 %v2008, %v2004
      %v2010 = vrot.slane %v2009, 4
      %v2012 = vshll.u32 %v1820, 16
      %v2014 = vrot.slane %v2012, 5
      %v2015 = vsel %vm331, %v2010, %v2014
      %v2017 = vshrl.u32 %v1821, 16
      %v2019 = vrot.slane %v2017, 4
      %v2020 = vshll.u32 %v1821, 16
      %v2022 = vrot.slane %v2020, 5
      %v2023 = vor.u32 %v2019, %v2022
      %v2024 = vrot.slane %v2023, 4
      %v2026 = vshll.u32 %v1822, 16
      %v2028 = vrot.slane %v2026, 5
      %v2029 = vsel %vm331, %v2024, %v2028
      %v2030 = vshrl.u32 %v1822, 16
      %v2032 = vrot.slane %v2030, 4
      %v2033 = vor.u32 %v2032, %v2028
      %v2034 = vrot.slane %v2033, 4
      %v2036 = vshll.u32 %v1823, 16
      %v2038 = vrot.slane %v2036, 5
      %v2039 = vsel %vm331, %v2034, %v2038
      %v2041 = vshrl.u32 %v1824, 16
      %v2043 = vrot.slane %v2041, 4
      %v2044 = vshll.u32 %v1824, 16
      %v2046 = vrot.slane %v2044, 5
      %v2047 = vor.u32 %v2043, %v2046
      %v2048 = vrot.slane %v2047, 4
      %v2050 = vshll.u32 %v1825, 16
      %v2052 = vrot.slane %v2050, 5
      %v2053 = vsel %vm331, %v2048, %v2052
      %v2054 = vshrl.u32 %v1825, 16
      %v2056 = vrot.slane %v2054, 4
      %v2057 = vor.u32 %v2056, %v2052
      %v2058 = vrot.slane %v2057, 4
      %v2060 = vshll.u32 %v1826, 16
      %v2062 = vrot.slane %v2060, 5
      %v2063 = vsel %vm331, %v2058, %v2062
      %v2065 = vshrl.u32 %v1827, 16
      %v2067 = vrot.slane %v2065, 4
      %v2068 = vshll.u32 %v1827, 16
      %v2070 = vrot.slane %v2068, 5
      %v2071 = vor.u32 %v2067, %v2070
      %v2072 = vrot.slane %v2071, 4
      %v2074 = vshll.u32 %v1828, 16
      %v2076 = vrot.slane %v2074, 5
      %v2077 = vsel %vm331, %v2072, %v2076
      %v2078 = vshrl.u32 %v1828, 16
      %v2080 = vrot.slane %v2078, 4
      %v2081 = vor.u32 %v2080, %v2076
      %v2082 = vrot.slane %v2081, 4
      %v2084 = vshll.u32 %v1829, 16
      %v2086 = vrot.slane %v2084, 5
      %v2087 = vsel %vm331, %v2082, %v2086
      %v2089 = vshrl.u32 %v1830, 16
      %v2091 = vrot.slane %v2089, 4
      %v2092 = vshll.u32 %v1830, 16
      %v2094 = vrot.slane %v2092, 5
      %v2095 = vor.u32 %v2091, %v2094
      %v2096 = vrot.slane %v2095, 4
      %v2098 = vshll.u32 %v1831, 16
      %v2100 = vrot.slane %v2098, 5
      %v2101 = vsel %vm331, %v2096, %v2100
      %v2102 = vshrl.u32 %v1831, 16
      %v2104 = vrot.slane %v2102, 4
      %v2105 = vor.u32 %v2104, %v2100
      %v2106 = vrot.slane %v2105, 4
      %v2108 = vshll.u32 %v1832, 16
      %v2110 = vrot.slane %v2108, 5
      %v2111 = vsel %vm331, %v2106, %v2110
      %v2113 = vshrl.u32 %v1833, 16
      %v2115 = vrot.slane %v2113, 4
      %v2116 = vshll.u32 %v1833, 16
      %v2118 = vrot.slane %v2116, 5
      %v2119 = vor.u32 %v2115, %v2118
      %v2120 = vrot.slane %v2119, 4
      %v2122 = vshll.u32 %v1834, 16
      %v2124 = vrot.slane %v2122, 5
      %v2125 = vsel %vm331, %v2120, %v2124
      %v2126 = vshrl.u32 %v1834, 16
      %v2128 = vrot.slane %v2126, 4
      %v2129 = vor.u32 %v2128, %v2124
      %v2130 = vrot.slane %v2129, 4
      %v2132 = vshll.u32 %v1835, 16
      %v2134 = vrot.slane %v2132, 5
      %v2135 = vsel %vm331, %v2130, %v2134
      %v2137 = vshrl.u32 %v1836, 16
      %v2139 = vrot.slane %v2137, 4
      %v2140 = vshll.u32 %v1836, 16
      %v2142 = vrot.slane %v2140, 5
      %v2143 = vor.u32 %v2139, %v2142
      %v2144 = vrot.slane %v2143, 4
      %v2146 = vshll.u32 %v1837, 16
      %v2148 = vrot.slane %v2146, 5
      %v2149 = vsel %vm331, %v2144, %v2148
      %v2150 = vshrl.u32 %v1837, 16
      %v2152 = vrot.slane %v2150, 4
      %v2153 = vor.u32 %v2152, %v2148
      %v2154 = vrot.slane %v2153, 4
      %v2156 = vshll.u32 %v1838, 16
      %v2158 = vrot.slane %v2156, 5
      %v2159 = vsel %vm331, %v2154, %v2158
      %v2161 = vshrl.u32 %v1839, 16
      %v2163 = vrot.slane %v2161, 4
      %v2164 = vshll.u32 %v1839, 16
      %v2166 = vrot.slane %v2164, 5
      %v2167 = vor.u32 %v2163, %v2166
      %v2168 = vrot.slane %v2167, 4
      %v2170 = vshll.u32 %v1840, 16
      %v2172 = vrot.slane %v2170, 5
      %v2173 = vsel %vm331, %v2168, %v2172
      %v2174 = vshrl.u32 %v1840, 16
      %v2176 = vrot.slane %v2174, 4
      %v2177 = vor.u32 %v2176, %v2172
      %v2178 = vrot.slane %v2177, 4
      %v2180 = vshll.u32 %v1841, 16
      %v2182 = vrot.slane %v2180, 5
      %v2183 = vsel %vm331, %v2178, %v2182
      %v2185 = vshrl.u32 %v1842, 16
      %v2187 = vrot.slane %v2185, 4
      %v2188 = vshll.u32 %v1842, 16
      %v2190 = vrot.slane %v2188, 5
      %v2191 = vor.u32 %v2187, %v2190
      %v2192 = vrot.slane %v2191, 4
      %v2194 = vshll.u32 %v1843, 16
      %v2196 = vrot.slane %v2194, 5
      %v2197 = vsel %vm331, %v2192, %v2196
      %v2198 = vshrl.u32 %v1843, 16
      %v2200 = vrot.slane %v2198, 4
      %v2201 = vor.u32 %v2200, %v2196
      %v2202 = vrot.slane %v2201, 4
      %v2204 = vshll.u32 %v1844, 16
      %v2206 = vrot.slane %v2204, 5
      %v2207 = vsel %vm331, %v2202, %v2206
      %v2209 = vshrl.u32 %v1845, 16
      %v2211 = vrot.slane %v2209, 4
      %v2212 = vshll.u32 %v1845, 16
      %v2214 = vrot.slane %v2212, 5
      %v2215 = vor.u32 %v2211, %v2214
      %v2216 = vrot.slane %v2215, 4
      %v2218 = vshll.u32 %v1846, 16
      %v2220 = vrot.slane %v2218, 5
      %v2221 = vsel %vm331, %v2216, %v2220
      %v2222 = vshrl.u32 %v1846, 16
      %v2224 = vrot.slane %v2222, 4
      %v2225 = vor.u32 %v2224, %v2220
      %v2226 = vrot.slane %v2225, 4
      %v2228 = vshll.u32 %v1847, 16
      %v2230 = vrot.slane %v2228, 5
      %v2231 = vsel %vm331, %v2226, %v2230
      %s2232 = scalar_lea.vmem %s1, 8
      %v2233 = vld [vmem:[%s2232] sm:$0x3]
      %v2234 = vunpack.c.l.b16 %v1861
      %v2235 = vunpack.c.l.b16 %v1871
      %v2236 = vunpack.c.l.b16 %v1885
      %v2237 = vunpack.c.l.b16 %v1895
      %v2238 = vunpack.c.l.b16 %v1909
      %v2239 = vunpack.c.l.b16 %v1919
      %v2240 = vunpack.c.l.b16 %v1933
      %v2241 = vunpack.c.l.b16 %v1943
      %v2242 = vunpack.c.l.b16 %v1957
      %v2243 = vunpack.c.l.b16 %v1967
      %v2244 = vunpack.c.l.b16 %v1981
      %v2245 = vunpack.c.l.b16 %v1991
      %v2246 = vunpack.c.l.b16 %v2005
      %v2247 = vunpack.c.l.b16 %v2015
      %v2248 = vunpack.c.l.b16 %v2029
      %v2249 = vunpack.c.l.b16 %v2039
      %v2250 = vunpack.c.l.b16 %v2053
      %v2251 = vunpack.c.l.b16 %v2063
      %v2252 = vunpack.c.l.b16 %v2077
      %v2253 = vunpack.c.l.b16 %v2087
      %v2254 = vunpack.c.l.b16 %v2101
      %v2255 = vunpack.c.l.b16 %v2111
      %v2256 = vunpack.c.l.b16 %v2125
      %v2257 = vunpack.c.l.b16 %v2135
      %v2258 = vunpack.c.l.b16 %v2149
      %v2259 = vunpack.c.l.b16 %v2159
      %v2260 = vunpack.c.l.b16 %v2173
      %v2261 = vunpack.c.l.b16 %v2183
      %v2262 = vunpack.c.l.b16 %v2197
      %v2263 = vunpack.c.l.b16 %v2207
      %v2264 = vunpack.c.l.b16 %v2221
      %v2265 = vunpack.c.l.b16 %v2231
      %v2266 = vpack.c.b16 %v2235, %v2234
      %v2267 = vpack.c.b16 %v2237, %v2236
      %v2268 = vpack.c.b16 %v2239, %v2238
      %v2269 = vpack.c.b16 %v2241, %v2240
      %v2270 = vpack.c.b16 %v2243, %v2242
      %v2271 = vpack.c.b16 %v2245, %v2244
      %v2272 = vpack.c.b16 %v2247, %v2246
      %v2273 = vpack.c.b16 %v2249, %v2248
      %v2274 = vpack.c.b16 %v2251, %v2250
      %v2275 = vpack.c.b16 %v2253, %v2252
      %v2276 = vpack.c.b16 %v2255, %v2254
      %v2277 = vpack.c.b16 %v2257, %v2256
      %v2278 = vpack.c.b16 %v2259, %v2258
      %v2279 = vpack.c.b16 %v2261, %v2260
      %v2280 = vpack.c.b16 %v2263, %v2262
      %v2281 = vpack.c.b16 %v2265, %v2264
      %v2283 = vsel %vm766, %v2266, 0
      %v2286 = vsel %vm766, %v2267, 0
      %v2289 = vsel %vm766, %v2268, 0
      %v2292 = vsel %vm766, %v2269, 0
      %v2295 = vsel %vm766, %v2270, 0
      %v2298 = vsel %vm766, %v2271, 0
      %v2301 = vsel %vm766, %v2272, 0
      %v2304 = vsel %vm766, %v2273, 0
      %v2307 = vsel %vm766, %v2274, 0
      %v2310 = vsel %vm766, %v2275, 0
      %v2313 = vsel %vm766, %v2276, 0
      %v2316 = vsel %vm766, %v2277, 0
      %v2319 = vsel %vm766, %v2278, 0
      %v2322 = vsel %vm766, %v2279, 0
      %v2325 = vsel %vm766, %v2280, 0
      %v2328 = vsel %vm766, %v2281, 0
      %v2331 = vsel %vm815, %v2233, 0
      %2333 = vmatpush.bf16.msra.mxu0 0
      %2334 = vmatpush.bf16.msra.mxu0 0
      %2335 = vmatpush.bf16.msra.mxu0 0
      %2336 = vmatpush.bf16.msra.mxu0 0
      %2337 = vmatpush.bf16.msra.mxu0 0
      %2338 = vmatpush.bf16.msra.mxu0 0
      %2339 = vmatpush.bf16.msra.mxu0 0
      %2340 = vmatpush.bf16.msra.mxu0 %v2331
      %2341 = vmatmul.bf16.gmra.mxu0 %v2283
      %v2342 = vpop.f32.mrf.mxu0
      %v2343 = vadd.f32 0.0, %v2342
      %v2344 = vpop.f32.mrf.mxu0
      %v2345 = vadd.f32 0.0, %v2344
      %2346 = vmatmul.bf16.gmra.mxu0 %v2286
      %v2347 = vpop.f32.mrf.mxu0
      %v2348 = vadd.f32 0.0, %v2347
      %v2349 = vpop.f32.mrf.mxu0
      %v2350 = vadd.f32 0.0, %v2349
      %2351 = vmatmul.bf16.gmra.mxu0 %v2289
      %v2352 = vpop.f32.mrf.mxu0
      %v2353 = vadd.f32 0.0, %v2352
      %v2354 = vpop.f32.mrf.mxu0
      %v2355 = vadd.f32 0.0, %v2354
      %2356 = vmatmul.bf16.gmra.mxu0 %v2292
      %v2357 = vpop.f32.mrf.mxu0
      %v2358 = vadd.f32 0.0, %v2357
      %v2359 = vpop.f32.mrf.mxu0
      %v2360 = vadd.f32 0.0, %v2359
      %2361 = vmatmul.bf16.gmra.mxu0 %v2295
      %v2362 = vpop.f32.mrf.mxu0
      %v2363 = vadd.f32 0.0, %v2362
      %v2364 = vpop.f32.mrf.mxu0
      %v2365 = vadd.f32 0.0, %v2364
      %2366 = vmatmul.bf16.gmra.mxu0 %v2298
      %v2367 = vpop.f32.mrf.mxu0
      %v2368 = vadd.f32 0.0, %v2367
      %v2369 = vpop.f32.mrf.mxu0
      %v2370 = vadd.f32 0.0, %v2369
      %2371 = vmatmul.bf16.gmra.mxu0 %v2301
      %v2372 = vpop.f32.mrf.mxu0
      %v2373 = vadd.f32 0.0, %v2372
      %v2374 = vpop.f32.mrf.mxu0
      %v2375 = vadd.f32 0.0, %v2374
      %2376 = vmatmul.bf16.gmra.mxu0 %v2304
      %v2377 = vpop.f32.mrf.mxu0
      %v2378 = vadd.f32 0.0, %v2377
      %v2379 = vpop.f32.mrf.mxu0
      %v2380 = vadd.f32 0.0, %v2379
      %2381 = vmatmul.bf16.gmra.mxu0 %v2307
      %v2382 = vpop.f32.mrf.mxu0
      %v2383 = vadd.f32 0.0, %v2382
      %v2384 = vpop.f32.mrf.mxu0
      %v2385 = vadd.f32 0.0, %v2384
      %2386 = vmatmul.bf16.gmra.mxu0 %v2310
      %v2387 = vpop.f32.mrf.mxu0
      %v2388 = vadd.f32 0.0, %v2387
      %v2389 = vpop.f32.mrf.mxu0
      %v2390 = vadd.f32 0.0, %v2389
      %2391 = vmatmul.bf16.gmra.mxu0 %v2313
      %v2392 = vpop.f32.mrf.mxu0
      %v2393 = vadd.f32 0.0, %v2392
      %v2394 = vpop.f32.mrf.mxu0
      %v2395 = vadd.f32 0.0, %v2394
      %2396 = vmatmul.bf16.gmra.mxu0 %v2316
      %v2397 = vpop.f32.mrf.mxu0
      %v2398 = vadd.f32 0.0, %v2397
      %v2399 = vpop.f32.mrf.mxu0
      %v2400 = vadd.f32 0.0, %v2399
      %2401 = vmatmul.bf16.gmra.mxu0 %v2319
      %v2402 = vpop.f32.mrf.mxu0
      %v2403 = vadd.f32 0.0, %v2402
      %v2404 = vpop.f32.mrf.mxu0
      %v2405 = vadd.f32 0.0, %v2404
      %2406 = vmatmul.bf16.gmra.mxu0 %v2322
      %v2407 = vpop.f32.mrf.mxu0
      %v2408 = vadd.f32 0.0, %v2407
      %v2409 = vpop.f32.mrf.mxu0
      %v2410 = vadd.f32 0.0, %v2409
      %2411 = vmatmul.bf16.gmra.mxu0 %v2325
      %v2412 = vpop.f32.mrf.mxu0
      %v2413 = vadd.f32 0.0, %v2412
      %v2414 = vpop.f32.mrf.mxu0
      %v2415 = vadd.f32 0.0, %v2414
      %2416 = vmatmul.bf16.gmra.mxu0 %v2328
      %v2417 = vpop.f32.mrf.mxu0
      %v2418 = vadd.f32 0.0, %v2417
      %v2419 = vpop.f32.mrf.mxu0
      %v2420 = vadd.f32 0.0, %v2419
      %2421 = vdwg.mxu0
      %v2422 = vadd.f32 %v1768, %v2343
      %v2423 = vadd.f32 %v1769, %v2345
      %v2424 = vadd.f32 %v1770, %v2348
      %v2425 = vadd.f32 %v1771, %v2350
      %v2426 = vadd.f32 %v1772, %v2353
      %v2427 = vadd.f32 %v1773, %v2355
      %v2428 = vadd.f32 %v1774, %v2358
      %v2429 = vadd.f32 %v1775, %v2360
      %v2430 = vadd.f32 %v1776, %v2363
      %v2431 = vadd.f32 %v1777, %v2365
      %v2432 = vadd.f32 %v1778, %v2368
      %v2433 = vadd.f32 %v1779, %v2370
      %v2434 = vadd.f32 %v1780, %v2373
      %v2435 = vadd.f32 %v1781, %v2375
      %v2436 = vadd.f32 %v1782, %v2378
      %v2437 = vadd.f32 %v1783, %v2380
      %v2438 = vadd.f32 %v1784, %v2383
      %v2439 = vadd.f32 %v1785, %v2385
      %v2440 = vadd.f32 %v1786, %v2388
      %v2441 = vadd.f32 %v1787, %v2390
      %v2442 = vadd.f32 %v1788, %v2393
      %v2443 = vadd.f32 %v1789, %v2395
      %v2444 = vadd.f32 %v1790, %v2398
      %v2445 = vadd.f32 %v1791, %v2400
      %v2446 = vadd.f32 %v1792, %v2403
      %v2447 = vadd.f32 %v1793, %v2405
      %v2448 = vadd.f32 %v1794, %v2408
      %v2449 = vadd.f32 %v1795, %v2410
      %v2450 = vadd.f32 %v1796, %v2413
      %v2451 = vadd.f32 %v1797, %v2415
      %v2452 = vadd.f32 %v1798, %v2418
      %v2453 = vadd.f32 %v1799, %v2420
      %v2454 = vld [vmem:[%s1513] sm:$0xe]
      %v2455 = vld [vmem:[%s1513 + $0xc] sm:$0xe]
      %v2456 = vld [vmem:[%s1513 + $0x18] sm:$0xe]
      %v2457 = vld [vmem:[%s1513 + $0x24] sm:$0xe]
      %v2458 = vld [vmem:[%s1513 + $0x30] sm:$0xe]
      %v2459 = vld [vmem:[%s1513 + $0x3c] sm:$0xe]
      %v2460 = vld [vmem:[%s1513 + $0x48] sm:$0xe]
      %v2461 = vld [vmem:[%s1513 + $0x54] sm:$0xe]
      %v2462 = vld [vmem:[%s1513 + $0x60] sm:$0xe]
      %v2463 = vld [vmem:[%s1513 + $0x6c] sm:$0xe]
      %v2464 = vld [vmem:[%s1513 + $0x78] sm:$0xe]
      %v2465 = vld [vmem:[%s1513 + $0x84] sm:$0xe]
      %v2466 = vld [vmem:[%s1513 + $0x90] sm:$0xe]
      %v2467 = vld [vmem:[%s1513 + $0x9c] sm:$0xe]
      %v2468 = vld [vmem:[%s1513 + $0xa8] sm:$0xe]
      %v2469 = vld [vmem:[%s1513 + $0xb4] sm:$0xe]
      %v2518 = vrot.slane %v2454, 5
      %v2519 = vrot.slane %v2518, 4
      %v2520 = vrot.slane %v1801, 5
      %v2521 = vsel %vm1178, %v2519, %v2520
      %v2522 = vrot.slane %v2520, 4
      %v2523 = vrot.slane %v1802, 5
      %v2524 = vsel %vm1178, %v2522, %v2523
      %v2525 = vrot.slane %v2455, 5
      %v2526 = vrot.slane %v2525, 4
      %v2527 = vrot.slane %v1804, 5
      %v2528 = vsel %vm1178, %v2526, %v2527
      %v2529 = vrot.slane %v2527, 4
      %v2530 = vrot.slane %v1805, 5
      %v2531 = vsel %vm1178, %v2529, %v2530
      %v2532 = vrot.slane %v2456, 5
      %v2533 = vrot.slane %v2532, 4
      %v2534 = vrot.slane %v1807, 5
      %v2535 = vsel %vm1178, %v2533, %v2534
      %v2536 = vrot.slane %v2534, 4
      %v2537 = vrot.slane %v1808, 5
      %v2538 = vsel %vm1178, %v2536, %v2537
      %v2539 = vrot.slane %v2457, 5
      %v2540 = vrot.slane %v2539, 4
      %v2541 = vrot.slane %v1810, 5
      %v2542 = vsel %vm1178, %v2540, %v2541
      %v2543 = vrot.slane %v2541, 4
      %v2544 = vrot.slane %v1811, 5
      %v2545 = vsel %vm1178, %v2543, %v2544
      %v2546 = vrot.slane %v2458, 5
      %v2547 = vrot.slane %v2546, 4
      %v2548 = vrot.slane %v1813, 5
      %v2549 = vsel %vm1178, %v2547, %v2548
      %v2550 = vrot.slane %v2548, 4
      %v2551 = vrot.slane %v1814, 5
      %v2552 = vsel %vm1178, %v2550, %v2551
      %v2553 = vrot.slane %v2459, 5
      %v2554 = vrot.slane %v2553, 4
      %v2555 = vrot.slane %v1816, 5
      %v2556 = vsel %vm1178, %v2554, %v2555
      %v2557 = vrot.slane %v2555, 4
      %v2558 = vrot.slane %v1817, 5
      %v2559 = vsel %vm1178, %v2557, %v2558
      %v2560 = vrot.slane %v2460, 5
      %v2561 = vrot.slane %v2560, 4
      %v2562 = vrot.slane %v1819, 5
      %v2563 = vsel %vm1178, %v2561, %v2562
      %v2564 = vrot.slane %v2562, 4
      %v2565 = vrot.slane %v1820, 5
      %v2566 = vsel %vm1178, %v2564, %v2565
      %v2567 = vrot.slane %v2461, 5
      %v2568 = vrot.slane %v2567, 4
      %v2569 = vrot.slane %v1822, 5
      %v2570 = vsel %vm1178, %v2568, %v2569
      %v2571 = vrot.slane %v2569, 4
      %v2572 = vrot.slane %v1823, 5
      %v2573 = vsel %vm1178, %v2571, %v2572
      %v2574 = vrot.slane %v2462, 5
      %v2575 = vrot.slane %v2574, 4
      %v2576 = vrot.slane %v1825, 5
      %v2577 = vsel %vm1178, %v2575, %v2576
      %v2578 = vrot.slane %v2576, 4
      %v2579 = vrot.slane %v1826, 5
      %v2580 = vsel %vm1178, %v2578, %v2579
      %v2581 = vrot.slane %v2463, 5
      %v2582 = vrot.slane %v2581, 4
      %v2583 = vrot.slane %v1828, 5
      %v2584 = vsel %vm1178, %v2582, %v2583
      %v2585 = vrot.slane %v2583, 4
      %v2586 = vrot.slane %v1829, 5
      %v2587 = vsel %vm1178, %v2585, %v2586
      %v2588 = vrot.slane %v2464, 5
      %v2589 = vrot.slane %v2588, 4
      %v2590 = vrot.slane %v1831, 5
      %v2591 = vsel %vm1178, %v2589, %v2590
      %v2592 = vrot.slane %v2590, 4
      %v2593 = vrot.slane %v1832, 5
      %v2594 = vsel %vm1178, %v2592, %v2593
      %v2595 = vrot.slane %v2465, 5
      %v2596 = vrot.slane %v2595, 4
      %v2597 = vrot.slane %v1834, 5
      %v2598 = vsel %vm1178, %v2596, %v2597
      %v2599 = vrot.slane %v2597, 4
      %v2600 = vrot.slane %v1835, 5
      %v2601 = vsel %vm1178, %v2599, %v2600
      %v2602 = vrot.slane %v2466, 5
      %v2603 = vrot.slane %v2602, 4
      %v2604 = vrot.slane %v1837, 5
      %v2605 = vsel %vm1178, %v2603, %v2604
      %v2606 = vrot.slane %v2604, 4
      %v2607 = vrot.slane %v1838, 5
      %v2608 = vsel %vm1178, %v2606, %v2607
      %v2609 = vrot.slane %v2467, 5
      %v2610 = vrot.slane %v2609, 4
      %v2611 = vrot.slane %v1840, 5
      %v2612 = vsel %vm1178, %v2610, %v2611
      %v2613 = vrot.slane %v2611, 4
      %v2614 = vrot.slane %v1841, 5
      %v2615 = vsel %vm1178, %v2613, %v2614
      %v2616 = vrot.slane %v2468, 5
      %v2617 = vrot.slane %v2616, 4
      %v2618 = vrot.slane %v1843, 5
      %v2619 = vsel %vm1178, %v2617, %v2618
      %v2620 = vrot.slane %v2618, 4
      %v2621 = vrot.slane %v1844, 5
      %v2622 = vsel %vm1178, %v2620, %v2621
      %v2623 = vrot.slane %v2469, 5
      %v2624 = vrot.slane %v2623, 4
      %v2625 = vrot.slane %v1846, 5
      %v2626 = vsel %vm1178, %v2624, %v2625
      %v2627 = vrot.slane %v2625, 4
      %v2628 = vrot.slane %v1847, 5
      %v2629 = vsel %vm1178, %v2627, %v2628
      %s2630 = scalar_lea.vmem %s1, 10
      %v2631 = vld [vmem:[%s2630] sm:$0x3]
      %v2632 = vunpack.c.l.b16 %v2521
      %v2633 = vunpack.c.l.b16 %v2524
      %v2634 = vunpack.c.l.b16 %v2528
      %v2635 = vunpack.c.l.b16 %v2531
      %v2636 = vunpack.c.l.b16 %v2535
      %v2637 = vunpack.c.l.b16 %v2538
      %v2638 = vunpack.c.l.b16 %v2542
      %v2639 = vunpack.c.l.b16 %v2545
      %v2640 = vunpack.c.l.b16 %v2549
      %v2641 = vunpack.c.l.b16 %v2552
      %v2642 = vunpack.c.l.b16 %v2556
      %v2643 = vunpack.c.l.b16 %v2559
      %v2644 = vunpack.c.l.b16 %v2563
      %v2645 = vunpack.c.l.b16 %v2566
      %v2646 = vunpack.c.l.b16 %v2570
      %v2647 = vunpack.c.l.b16 %v2573
      %v2648 = vunpack.c.l.b16 %v2577
      %v2649 = vunpack.c.l.b16 %v2580
      %v2650 = vunpack.c.l.b16 %v2584
      %v2651 = vunpack.c.l.b16 %v2587
      %v2652 = vunpack.c.l.b16 %v2591
      %v2653 = vunpack.c.l.b16 %v2594
      %v2654 = vunpack.c.l.b16 %v2598
      %v2655 = vunpack.c.l.b16 %v2601
      %v2656 = vunpack.c.l.b16 %v2605
      %v2657 = vunpack.c.l.b16 %v2608
      %v2658 = vunpack.c.l.b16 %v2612
      %v2659 = vunpack.c.l.b16 %v2615
      %v2660 = vunpack.c.l.b16 %v2619
      %v2661 = vunpack.c.l.b16 %v2622
      %v2662 = vunpack.c.l.b16 %v2626
      %v2663 = vunpack.c.l.b16 %v2629
      %v2664 = vpack.c.b16 %v2633, %v2632
      %v2665 = vpack.c.b16 %v2635, %v2634
      %v2666 = vpack.c.b16 %v2637, %v2636
      %v2667 = vpack.c.b16 %v2639, %v2638
      %v2668 = vpack.c.b16 %v2641, %v2640
      %v2669 = vpack.c.b16 %v2643, %v2642
      %v2670 = vpack.c.b16 %v2645, %v2644
      %v2671 = vpack.c.b16 %v2647, %v2646
      %v2672 = vpack.c.b16 %v2649, %v2648
      %v2673 = vpack.c.b16 %v2651, %v2650
      %v2674 = vpack.c.b16 %v2653, %v2652
      %v2675 = vpack.c.b16 %v2655, %v2654
      %v2676 = vpack.c.b16 %v2657, %v2656
      %v2677 = vpack.c.b16 %v2659, %v2658
      %v2678 = vpack.c.b16 %v2661, %v2660
      %v2679 = vpack.c.b16 %v2663, %v2662
      %v2681 = vsel %vm766, %v2664, 0
      %v2684 = vsel %vm766, %v2665, 0
      %v2687 = vsel %vm766, %v2666, 0
      %v2690 = vsel %vm766, %v2667, 0
      %v2693 = vsel %vm766, %v2668, 0
      %v2696 = vsel %vm766, %v2669, 0
      %v2699 = vsel %vm766, %v2670, 0
      %v2702 = vsel %vm766, %v2671, 0
      %v2705 = vsel %vm766, %v2672, 0
      %v2708 = vsel %vm766, %v2673, 0
      %v2711 = vsel %vm766, %v2674, 0
      %v2714 = vsel %vm766, %v2675, 0
      %v2717 = vsel %vm766, %v2676, 0
      %v2720 = vsel %vm766, %v2677, 0
      %v2723 = vsel %vm766, %v2678, 0
      %v2726 = vsel %vm766, %v2679, 0
      %v2729 = vsel %vm815, %v2631, 0
      %2731 = vmatpush.bf16.msra.mxu0 0
      %2732 = vmatpush.bf16.msra.mxu0 0
      %2733 = vmatpush.bf16.msra.mxu0 0
      %2734 = vmatpush.bf16.msra.mxu0 0
      %2735 = vmatpush.bf16.msra.mxu0 0
      %2736 = vmatpush.bf16.msra.mxu0 0
      %2737 = vmatpush.bf16.msra.mxu0 0
      %2738 = vmatpush.bf16.msra.mxu0 %v2729
      %2739 = vmatmul.bf16.gmra.mxu0 %v2681
      %v2740 = vpop.f32.mrf.mxu0
      %v2741 = vadd.f32 0.0, %v2740
      %v2742 = vpop.f32.mrf.mxu0
      %v2743 = vadd.f32 0.0, %v2742
      %2744 = vmatmul.bf16.gmra.mxu0 %v2684
      %v2745 = vpop.f32.mrf.mxu0
      %v2746 = vadd.f32 0.0, %v2745
      %v2747 = vpop.f32.mrf.mxu0
      %v2748 = vadd.f32 0.0, %v2747
      %2749 = vmatmul.bf16.gmra.mxu0 %v2687
      %v2750 = vpop.f32.mrf.mxu0
      %v2751 = vadd.f32 0.0, %v2750
      %v2752 = vpop.f32.mrf.mxu0
      %v2753 = vadd.f32 0.0, %v2752
      %2754 = vmatmul.bf16.gmra.mxu0 %v2690
      %v2755 = vpop.f32.mrf.mxu0
      %v2756 = vadd.f32 0.0, %v2755
      %v2757 = vpop.f32.mrf.mxu0
      %v2758 = vadd.f32 0.0, %v2757
      %2759 = vmatmul.bf16.gmra.mxu0 %v2693
      %v2760 = vpop.f32.mrf.mxu0
      %v2761 = vadd.f32 0.0, %v2760
      %v2762 = vpop.f32.mrf.mxu0
      %v2763 = vadd.f32 0.0, %v2762
      %2764 = vmatmul.bf16.gmra.mxu0 %v2696
      %v2765 = vpop.f32.mrf.mxu0
      %v2766 = vadd.f32 0.0, %v2765
      %v2767 = vpop.f32.mrf.mxu0
      %v2768 = vadd.f32 0.0, %v2767
      %2769 = vmatmul.bf16.gmra.mxu0 %v2699
      %v2770 = vpop.f32.mrf.mxu0
      %v2771 = vadd.f32 0.0, %v2770
      %v2772 = vpop.f32.mrf.mxu0
      %v2773 = vadd.f32 0.0, %v2772
      %2774 = vmatmul.bf16.gmra.mxu0 %v2702
      %v2775 = vpop.f32.mrf.mxu0
      %v2776 = vadd.f32 0.0, %v2775
      %v2777 = vpop.f32.mrf.mxu0
      %v2778 = vadd.f32 0.0, %v2777
      %2779 = vmatmul.bf16.gmra.mxu0 %v2705
      %v2780 = vpop.f32.mrf.mxu0
      %v2781 = vadd.f32 0.0, %v2780
      %v2782 = vpop.f32.mrf.mxu0
      %v2783 = vadd.f32 0.0, %v2782
      %2784 = vmatmul.bf16.gmra.mxu0 %v2708
      %v2785 = vpop.f32.mrf.mxu0
      %v2786 = vadd.f32 0.0, %v2785
      %v2787 = vpop.f32.mrf.mxu0
      %v2788 = vadd.f32 0.0, %v2787
      %2789 = vmatmul.bf16.gmra.mxu0 %v2711
      %v2790 = vpop.f32.mrf.mxu0
      %v2791 = vadd.f32 0.0, %v2790
      %v2792 = vpop.f32.mrf.mxu0
      %v2793 = vadd.f32 0.0, %v2792
      %2794 = vmatmul.bf16.gmra.mxu0 %v2714
      %v2795 = vpop.f32.mrf.mxu0
      %v2796 = vadd.f32 0.0, %v2795
      %v2797 = vpop.f32.mrf.mxu0
      %v2798 = vadd.f32 0.0, %v2797
      %2799 = vmatmul.bf16.gmra.mxu0 %v2717
      %v2800 = vpop.f32.mrf.mxu0
      %v2801 = vadd.f32 0.0, %v2800
      %v2802 = vpop.f32.mrf.mxu0
      %v2803 = vadd.f32 0.0, %v2802
      %2804 = vmatmul.bf16.gmra.mxu0 %v2720
      %v2805 = vpop.f32.mrf.mxu0
      %v2806 = vadd.f32 0.0, %v2805
      %v2807 = vpop.f32.mrf.mxu0
      %v2808 = vadd.f32 0.0, %v2807
      %2809 = vmatmul.bf16.gmra.mxu0 %v2723
      %v2810 = vpop.f32.mrf.mxu0
      %v2811 = vadd.f32 0.0, %v2810
      %v2812 = vpop.f32.mrf.mxu0
      %v2813 = vadd.f32 0.0, %v2812
      %2814 = vmatmul.bf16.gmra.mxu0 %v2726
      %v2815 = vpop.f32.mrf.mxu0
      %v2816 = vadd.f32 0.0, %v2815
      %v2817 = vpop.f32.mrf.mxu0
      %v2818 = vadd.f32 0.0, %v2817
      %2819 = vdwg.mxu0
      %v2820 = vadd.f32 %v2422, %v2741
      %v2821 = vadd.f32 %v2423, %v2743
      %v2822 = vadd.f32 %v2424, %v2746
      %v2823 = vadd.f32 %v2425, %v2748
      %v2824 = vadd.f32 %v2426, %v2751
      %v2825 = vadd.f32 %v2427, %v2753
      %v2826 = vadd.f32 %v2428, %v2756
      %v2827 = vadd.f32 %v2429, %v2758
      %v2828 = vadd.f32 %v2430, %v2761
      %v2829 = vadd.f32 %v2431, %v2763
      %v2830 = vadd.f32 %v2432, %v2766
      %v2831 = vadd.f32 %v2433, %v2768
      %v2832 = vadd.f32 %v2434, %v2771
      %v2833 = vadd.f32 %v2435, %v2773
      %v2834 = vadd.f32 %v2436, %v2776
      %v2835 = vadd.f32 %v2437, %v2778
      %v2836 = vadd.f32 %v2438, %v2781
      %v2837 = vadd.f32 %v2439, %v2783
      %v2838 = vadd.f32 %v2440, %v2786
      %v2839 = vadd.f32 %v2441, %v2788
      %v2840 = vadd.f32 %v2442, %v2791
      %v2841 = vadd.f32 %v2443, %v2793
      %v2842 = vadd.f32 %v2444, %v2796
      %v2843 = vadd.f32 %v2445, %v2798
      %v2844 = vadd.f32 %v2446, %v2801
      %v2845 = vadd.f32 %v2447, %v2803
      %v2846 = vadd.f32 %v2448, %v2806
      %v2847 = vadd.f32 %v2449, %v2808
      %v2848 = vadd.f32 %v2450, %v2811
      %v2849 = vadd.f32 %v2451, %v2813
      %v2850 = vadd.f32 %v2452, %v2816
      %v2851 = vadd.f32 %v2453, %v2818
      %s2852 = scalar_lea.vmem %s273, 24
      %v2853 = vld [vmem:[%s2852] sm:$0xf]
      %v2854 = vld [vmem:[%s2852 + $0x4] sm:$0xf]
      %v2855 = vld [vmem:[%s2852 + $0xc] sm:$0xf]
      %v2856 = vld [vmem:[%s2852 + $0x10] sm:$0xf]
      %v2857 = vld [vmem:[%s2852 + $0x18] sm:$0xf]
      %v2858 = vld [vmem:[%s2852 + $0x1c] sm:$0xf]
      %v2859 = vld [vmem:[%s2852 + $0x24] sm:$0xf]
      %v2860 = vld [vmem:[%s2852 + $0x28] sm:$0xf]
      %v2861 = vld [vmem:[%s2852 + $0x30] sm:$0xf]
      %v2862 = vld [vmem:[%s2852 + $0x34] sm:$0xf]
      %v2863 = vld [vmem:[%s2852 + $0x3c] sm:$0xf]
      %v2864 = vld [vmem:[%s2852 + $0x40] sm:$0xf]
      %v2865 = vld [vmem:[%s2852 + $0x48] sm:$0xf]
      %v2866 = vld [vmem:[%s2852 + $0x4c] sm:$0xf]
      %v2867 = vld [vmem:[%s2852 + $0x54] sm:$0xf]
      %v2868 = vld [vmem:[%s2852 + $0x58] sm:$0xf]
      %v2869 = vld [vmem:[%s2852 + $0x60] sm:$0xf]
      %v2870 = vld [vmem:[%s2852 + $0x64] sm:$0xf]
      %v2871 = vld [vmem:[%s2852 + $0x6c] sm:$0xf]
      %v2872 = vld [vmem:[%s2852 + $0x70] sm:$0xf]
      %v2873 = vld [vmem:[%s2852 + $0x78] sm:$0xf]
      %v2874 = vld [vmem:[%s2852 + $0x7c] sm:$0xf]
      %v2875 = vld [vmem:[%s2852 + $0x84] sm:$0xf]
      %v2876 = vld [vmem:[%s2852 + $0x88] sm:$0xf]
      %v2877 = vld [vmem:[%s2852 + $0x90] sm:$0xf]
      %v2878 = vld [vmem:[%s2852 + $0x94] sm:$0xf]
      %v2879 = vld [vmem:[%s2852 + $0x9c] sm:$0xf]
      %v2880 = vld [vmem:[%s2852 + $0xa0] sm:$0xf]
      %v2881 = vld [vmem:[%s2852 + $0xa8] sm:$0xf]
      %v2882 = vld [vmem:[%s2852 + $0xac] sm:$0xf]
      %v2883 = vld [vmem:[%s2852 + $0xb4] sm:$0xf]
      %v2884 = vld [vmem:[%s2852 + $0xb8] sm:$0xf]
      %s2885 = scalar_lea.vmem %s1, 12
      %v2886 = vld [vmem:[%s2885] sm:$0x3]
      %v2919 = vunpack.c.l.b16 %v2853
      %v2920 = vunpack.c.l.b16 %v2854
      %v2921 = vunpack.c.l.b16 %v2855
      %v2922 = vunpack.c.l.b16 %v2856
      %v2923 = vunpack.c.l.b16 %v2857
      %v2924 = vunpack.c.l.b16 %v2858
      %v2925 = vunpack.c.l.b16 %v2859
      %v2926 = vunpack.c.l.b16 %v2860
      %v2927 = vunpack.c.l.b16 %v2861
      %v2928 = vunpack.c.l.b16 %v2862
      %v2929 = vunpack.c.l.b16 %v2863
      %v2930 = vunpack.c.l.b16 %v2864
      %v2931 = vunpack.c.l.b16 %v2865
      %v2932 = vunpack.c.l.b16 %v2866
      %v2933 = vunpack.c.l.b16 %v2867
      %v2934 = vunpack.c.l.b16 %v2868
      %v2935 = vunpack.c.l.b16 %v2869
      %v2936 = vunpack.c.l.b16 %v2870
      %v2937 = vunpack.c.l.b16 %v2871
      %v2938 = vunpack.c.l.b16 %v2872
      %v2939 = vunpack.c.l.b16 %v2873
      %v2940 = vunpack.c.l.b16 %v2874
      %v2941 = vunpack.c.l.b16 %v2875
      %v2942 = vunpack.c.l.b16 %v2876
      %v2943 = vunpack.c.l.b16 %v2877
      %v2944 = vunpack.c.l.b16 %v2878
      %v2945 = vunpack.c.l.b16 %v2879
      %v2946 = vunpack.c.l.b16 %v2880
      %v2947 = vunpack.c.l.b16 %v2881
      %v2948 = vunpack.c.l.b16 %v2882
      %v2949 = vunpack.c.l.b16 %v2883
      %v2950 = vunpack.c.l.b16 %v2884
      %v2951 = vpack.c.b16 %v2920, %v2919
      %v2952 = vpack.c.b16 %v2922, %v2921
      %v2953 = vpack.c.b16 %v2924, %v2923
      %v2954 = vpack.c.b16 %v2926, %v2925
      %v2955 = vpack.c.b16 %v2928, %v2927
      %v2956 = vpack.c.b16 %v2930, %v2929
      %v2957 = vpack.c.b16 %v2932, %v2931
      %v2958 = vpack.c.b16 %v2934, %v2933
      %v2959 = vpack.c.b16 %v2936, %v2935
      %v2960 = vpack.c.b16 %v2938, %v2937
      %v2961 = vpack.c.b16 %v2940, %v2939
      %v2962 = vpack.c.b16 %v2942, %v2941
      %v2963 = vpack.c.b16 %v2944, %v2943
      %v2964 = vpack.c.b16 %v2946, %v2945
      %v2965 = vpack.c.b16 %v2948, %v2947
      %v2966 = vpack.c.b16 %v2950, %v2949
      %v2968 = vsel %vm766, %v2951, 0
      %v2971 = vsel %vm766, %v2952, 0
      %v2974 = vsel %vm766, %v2953, 0
      %v2977 = vsel %vm766, %v2954, 0
      %v2980 = vsel %vm766, %v2955, 0
      %v2983 = vsel %vm766, %v2956, 0
      %v2986 = vsel %vm766, %v2957, 0
      %v2989 = vsel %vm766, %v2958, 0
      %v2992 = vsel %vm766, %v2959, 0
      %v2995 = vsel %vm766, %v2960, 0
      %v2998 = vsel %vm766, %v2961, 0
      %v3001 = vsel %vm766, %v2962, 0
      %v3004 = vsel %vm766, %v2963, 0
      %v3007 = vsel %vm766, %v2964, 0
      %v3010 = vsel %vm766, %v2965, 0
      %v3013 = vsel %vm766, %v2966, 0
      %v3016 = vsel %vm815, %v2886, 0
      %3018 = vmatpush.bf16.msra.mxu0 0
      %3019 = vmatpush.bf16.msra.mxu0 0
      %3020 = vmatpush.bf16.msra.mxu0 0
      %3021 = vmatpush.bf16.msra.mxu0 0
      %3022 = vmatpush.bf16.msra.mxu0 0
      %3023 = vmatpush.bf16.msra.mxu0 0
      %3024 = vmatpush.bf16.msra.mxu0 0
      %3025 = vmatpush.bf16.msra.mxu0 %v3016
      %3026 = vmatmul.bf16.gmra.mxu0 %v2968
      %v3027 = vpop.f32.mrf.mxu0
      %v3028 = vadd.f32 0.0, %v3027
      %v3029 = vpop.f32.mrf.mxu0
      %v3030 = vadd.f32 0.0, %v3029
      %3031 = vmatmul.bf16.gmra.mxu0 %v2971
      %v3032 = vpop.f32.mrf.mxu0
      %v3033 = vadd.f32 0.0, %v3032
      %v3034 = vpop.f32.mrf.mxu0
      %v3035 = vadd.f32 0.0, %v3034
      %3036 = vmatmul.bf16.gmra.mxu0 %v2974
      %v3037 = vpop.f32.mrf.mxu0
      %v3038 = vadd.f32 0.0, %v3037
      %v3039 = vpop.f32.mrf.mxu0
      %v3040 = vadd.f32 0.0, %v3039
      %3041 = vmatmul.bf16.gmra.mxu0 %v2977
      %v3042 = vpop.f32.mrf.mxu0
      %v3043 = vadd.f32 0.0, %v3042
      %v3044 = vpop.f32.mrf.mxu0
      %v3045 = vadd.f32 0.0, %v3044
      %3046 = vmatmul.bf16.gmra.mxu0 %v2980
      %v3047 = vpop.f32.mrf.mxu0
      %v3048 = vadd.f32 0.0, %v3047
      %v3049 = vpop.f32.mrf.mxu0
      %v3050 = vadd.f32 0.0, %v3049
      %3051 = vmatmul.bf16.gmra.mxu0 %v2983
      %v3052 = vpop.f32.mrf.mxu0
      %v3053 = vadd.f32 0.0, %v3052
      %v3054 = vpop.f32.mrf.mxu0
      %v3055 = vadd.f32 0.0, %v3054
      %3056 = vmatmul.bf16.gmra.mxu0 %v2986
      %v3057 = vpop.f32.mrf.mxu0
      %v3058 = vadd.f32 0.0, %v3057
      %v3059 = vpop.f32.mrf.mxu0
      %v3060 = vadd.f32 0.0, %v3059
      %3061 = vmatmul.bf16.gmra.mxu0 %v2989
      %v3062 = vpop.f32.mrf.mxu0
      %v3063 = vadd.f32 0.0, %v3062
      %v3064 = vpop.f32.mrf.mxu0
      %v3065 = vadd.f32 0.0, %v3064
      %3066 = vmatmul.bf16.gmra.mxu0 %v2992
      %v3067 = vpop.f32.mrf.mxu0
      %v3068 = vadd.f32 0.0, %v3067
      %v3069 = vpop.f32.mrf.mxu0
      %v3070 = vadd.f32 0.0, %v3069
      %3071 = vmatmul.bf16.gmra.mxu0 %v2995
      %v3072 = vpop.f32.mrf.mxu0
      %v3073 = vadd.f32 0.0, %v3072
      %v3074 = vpop.f32.mrf.mxu0
      %v3075 = vadd.f32 0.0, %v3074
      %3076 = vmatmul.bf16.gmra.mxu0 %v2998
      %v3077 = vpop.f32.mrf.mxu0
      %v3078 = vadd.f32 0.0, %v3077
      %v3079 = vpop.f32.mrf.mxu0
      %v3080 = vadd.f32 0.0, %v3079
      %3081 = vmatmul.bf16.gmra.mxu0 %v3001
      %v3082 = vpop.f32.mrf.mxu0
      %v3083 = vadd.f32 0.0, %v3082
      %v3084 = vpop.f32.mrf.mxu0
      %v3085 = vadd.f32 0.0, %v3084
      %3086 = vmatmul.bf16.gmra.mxu0 %v3004
      %v3087 = vpop.f32.mrf.mxu0
      %v3088 = vadd.f32 0.0, %v3087
      %v3089 = vpop.f32.mrf.mxu0
      %v3090 = vadd.f32 0.0, %v3089
      %3091 = vmatmul.bf16.gmra.mxu0 %v3007
      %v3092 = vpop.f32.mrf.mxu0
      %v3093 = vadd.f32 0.0, %v3092
      %v3094 = vpop.f32.mrf.mxu0
      %v3095 = vadd.f32 0.0, %v3094
      %3096 = vmatmul.bf16.gmra.mxu0 %v3010
      %v3097 = vpop.f32.mrf.mxu0
      %v3098 = vadd.f32 0.0, %v3097
      %v3099 = vpop.f32.mrf.mxu0
      %v3100 = vadd.f32 0.0, %v3099
      %3101 = vmatmul.bf16.gmra.mxu0 %v3013
      %v3102 = vpop.f32.mrf.mxu0
      %v3103 = vadd.f32 0.0, %v3102
      %v3104 = vpop.f32.mrf.mxu0
      %v3105 = vadd.f32 0.0, %v3104
      %3106 = vdwg.mxu0
      %v3107 = vadd.f32 %v2820, %v3028
      %v3108 = vadd.f32 %v2821, %v3030
      %v3109 = vadd.f32 %v2822, %v3033
      %v3110 = vadd.f32 %v2823, %v3035
      %v3111 = vadd.f32 %v2824, %v3038
      %v3112 = vadd.f32 %v2825, %v3040
      %v3113 = vadd.f32 %v2826, %v3043
      %v3114 = vadd.f32 %v2827, %v3045
      %v3115 = vadd.f32 %v2828, %v3048
      %v3116 = vadd.f32 %v2829, %v3050
      %v3117 = vadd.f32 %v2830, %v3053
      %v3118 = vadd.f32 %v2831, %v3055
      %v3119 = vadd.f32 %v2832, %v3058
      %v3120 = vadd.f32 %v2833, %v3060
      %v3121 = vadd.f32 %v2834, %v3063
      %v3122 = vadd.f32 %v2835, %v3065
      %v3123 = vadd.f32 %v2836, %v3068
      %v3124 = vadd.f32 %v2837, %v3070
      %v3125 = vadd.f32 %v2838, %v3073
      %v3126 = vadd.f32 %v2839, %v3075
      %v3127 = vadd.f32 %v2840, %v3078
      %v3128 = vadd.f32 %v2841, %v3080
      %v3129 = vadd.f32 %v2842, %v3083
      %v3130 = vadd.f32 %v2843, %v3085
      %v3131 = vadd.f32 %v2844, %v3088
      %v3132 = vadd.f32 %v2845, %v3090
      %v3133 = vadd.f32 %v2846, %v3093
      %v3134 = vadd.f32 %v2847, %v3095
      %v3135 = vadd.f32 %v2848, %v3098
      %v3136 = vadd.f32 %v2849, %v3100
      %v3137 = vadd.f32 %v2850, %v3103
      %v3138 = vadd.f32 %v2851, %v3105
      %v3139 = vld [vmem:[%s2852] sm:$0xf]
      %v3140 = vld [vmem:[%s2852 + $0x4] sm:$0xf]
      %v3141 = vld [vmem:[%s2852 + $0x8] sm:$0x1]
      %v3142 = vld [vmem:[%s2852 + $0xc] sm:$0xf]
      %v3143 = vld [vmem:[%s2852 + $0x10] sm:$0xf]
      %v3144 = vld [vmem:[%s2852 + $0x14] sm:$0x1]
      %v3145 = vld [vmem:[%s2852 + $0x18] sm:$0xf]
      %v3146 = vld [vmem:[%s2852 + $0x1c] sm:$0xf]
      %v3147 = vld [vmem:[%s2852 + $0x20] sm:$0x1]
      %v3148 = vld [vmem:[%s2852 + $0x24] sm:$0xf]
      %v3149 = vld [vmem:[%s2852 + $0x28] sm:$0xf]
      %v3150 = vld [vmem:[%s2852 + $0x2c] sm:$0x1]
      %v3151 = vld [vmem:[%s2852 + $0x30] sm:$0xf]
      %v3152 = vld [vmem:[%s2852 + $0x34] sm:$0xf]
      %v3153 = vld [vmem:[%s2852 + $0x38] sm:$0x1]
      %v3154 = vld [vmem:[%s2852 + $0x3c] sm:$0xf]
      %v3155 = vld [vmem:[%s2852 + $0x40] sm:$0xf]
      %v3156 = vld [vmem:[%s2852 + $0x44] sm:$0x1]
      %v3157 = vld [vmem:[%s2852 + $0x48] sm:$0xf]
      %v3158 = vld [vmem:[%s2852 + $0x4c] sm:$0xf]
      %v3159 = vld [vmem:[%s2852 + $0x50] sm:$0x1]
      %v3160 = vld [vmem:[%s2852 + $0x54] sm:$0xf]
      %v3161 = vld [vmem:[%s2852 + $0x58] sm:$0xf]
      %v3162 = vld [vmem:[%s2852 + $0x5c] sm:$0x1]
      %v3163 = vld [vmem:[%s2852 + $0x60] sm:$0xf]
      %v3164 = vld [vmem:[%s2852 + $0x64] sm:$0xf]
      %v3165 = vld [vmem:[%s2852 + $0x68] sm:$0x1]
      %v3166 = vld [vmem:[%s2852 + $0x6c] sm:$0xf]
      %v3167 = vld [vmem:[%s2852 + $0x70] sm:$0xf]
      %v3168 = vld [vmem:[%s2852 + $0x74] sm:$0x1]
      %v3169 = vld [vmem:[%s2852 + $0x78] sm:$0xf]
      %v3170 = vld [vmem:[%s2852 + $0x7c] sm:$0xf]
      %v3171 = vld [vmem:[%s2852 + $0x80] sm:$0x1]
      %v3172 = vld [vmem:[%s2852 + $0x84] sm:$0xf]
      %v3173 = vld [vmem:[%s2852 + $0x88] sm:$0xf]
      %v3174 = vld [vmem:[%s2852 + $0x8c] sm:$0x1]
      %v3175 = vld [vmem:[%s2852 + $0x90] sm:$0xf]
      %v3176 = vld [vmem:[%s2852 + $0x94] sm:$0xf]
      %v3177 = vld [vmem:[%s2852 + $0x98] sm:$0x1]
      %v3178 = vld [vmem:[%s2852 + $0x9c] sm:$0xf]
      %v3179 = vld [vmem:[%s2852 + $0xa0] sm:$0xf]
      %v3180 = vld [vmem:[%s2852 + $0xa4] sm:$0x1]
      %v3181 = vld [vmem:[%s2852 + $0xa8] sm:$0xf]
      %v3182 = vld [vmem:[%s2852 + $0xac] sm:$0xf]
      %v3183 = vld [vmem:[%s2852 + $0xb0] sm:$0x1]
      %v3184 = vld [vmem:[%s2852 + $0xb4] sm:$0xf]
      %v3185 = vld [vmem:[%s2852 + $0xb8] sm:$0xf]
      %v3186 = vld [vmem:[%s2852 + $0xbc] sm:$0x1]
      %v3188 = vshrl.u32 %v3139, 16
      %v3190 = vrot.slane %v3188, 4
      %v3191 = vshll.u32 %v3139, 16
      %v3193 = vrot.slane %v3191, 5
      %v3194 = vor.u32 %v3190, %v3193
      %v3195 = vrot.slane %v3194, 4
      %v3197 = vshll.u32 %v3140, 16
      %v3199 = vrot.slane %v3197, 5
      %v3200 = vsel %vm331, %v3195, %v3199
      %v3201 = vshrl.u32 %v3140, 16
      %v3203 = vrot.slane %v3201, 4
      %v3204 = vor.u32 %v3203, %v3199
      %v3205 = vrot.slane %v3204, 4
      %v3207 = vshll.u32 %v3141, 16
      %v3209 = vrot.slane %v3207, 5
      %v3210 = vsel %vm331, %v3205, %v3209
      %v3212 = vshrl.u32 %v3142, 16
      %v3214 = vrot.slane %v3212, 4
      %v3215 = vshll.u32 %v3142, 16
      %v3217 = vrot.slane %v3215, 5
      %v3218 = vor.u32 %v3214, %v3217
      %v3219 = vrot.slane %v3218, 4
      %v3221 = vshll.u32 %v3143, 16
      %v3223 = vrot.slane %v3221, 5
      %v3224 = vsel %vm331, %v3219, %v3223
      %v3225 = vshrl.u32 %v3143, 16
      %v3227 = vrot.slane %v3225, 4
      %v3228 = vor.u32 %v3227, %v3223
      %v3229 = vrot.slane %v3228, 4
      %v3231 = vshll.u32 %v3144, 16
      %v3233 = vrot.slane %v3231, 5
      %v3234 = vsel %vm331, %v3229, %v3233
      %v3236 = vshrl.u32 %v3145, 16
      %v3238 = vrot.slane %v3236, 4
      %v3239 = vshll.u32 %v3145, 16
      %v3241 = vrot.slane %v3239, 5
      %v3242 = vor.u32 %v3238, %v3241
      %v3243 = vrot.slane %v3242, 4
      %v3245 = vshll.u32 %v3146, 16
      %v3247 = vrot.slane %v3245, 5
      %v3248 = vsel %vm331, %v3243, %v3247
      %v3249 = vshrl.u32 %v3146, 16
      %v3251 = vrot.slane %v3249, 4
      %v3252 = vor.u32 %v3251, %v3247
      %v3253 = vrot.slane %v3252, 4
      %v3255 = vshll.u32 %v3147, 16
      %v3257 = vrot.slane %v3255, 5
      %v3258 = vsel %vm331, %v3253, %v3257
      %v3260 = vshrl.u32 %v3148, 16
      %v3262 = vrot.slane %v3260, 4
      %v3263 = vshll.u32 %v3148, 16
      %v3265 = vrot.slane %v3263, 5
      %v3266 = vor.u32 %v3262, %v3265
      %v3267 = vrot.slane %v3266, 4
      %v3269 = vshll.u32 %v3149, 16
      %v3271 = vrot.slane %v3269, 5
      %v3272 = vsel %vm331, %v3267, %v3271
      %v3273 = vshrl.u32 %v3149, 16
      %v3275 = vrot.slane %v3273, 4
      %v3276 = vor.u32 %v3275, %v3271
      %v3277 = vrot.slane %v3276, 4
      %v3279 = vshll.u32 %v3150, 16
      %v3281 = vrot.slane %v3279, 5
      %v3282 = vsel %vm331, %v3277, %v3281
      %v3284 = vshrl.u32 %v3151, 16
      %v3286 = vrot.slane %v3284, 4
      %v3287 = vshll.u32 %v3151, 16
      %v3289 = vrot.slane %v3287, 5
      %v3290 = vor.u32 %v3286, %v3289
      %v3291 = vrot.slane %v3290, 4
      %v3293 = vshll.u32 %v3152, 16
      %v3295 = vrot.slane %v3293, 5
      %v3296 = vsel %vm331, %v3291, %v3295
      %v3297 = vshrl.u32 %v3152, 16
      %v3299 = vrot.slane %v3297, 4
      %v3300 = vor.u32 %v3299, %v3295
      %v3301 = vrot.slane %v3300, 4
      %v3303 = vshll.u32 %v3153, 16
      %v3305 = vrot.slane %v3303, 5
      %v3306 = vsel %vm331, %v3301, %v3305
      %v3308 = vshrl.u32 %v3154, 16
      %v3310 = vrot.slane %v3308, 4
      %v3311 = vshll.u32 %v3154, 16
      %v3313 = vrot.slane %v3311, 5
      %v3314 = vor.u32 %v3310, %v3313
      %v3315 = vrot.slane %v3314, 4
      %v3317 = vshll.u32 %v3155, 16
      %v3319 = vrot.slane %v3317, 5
      %v3320 = vsel %vm331, %v3315, %v3319
      %v3321 = vshrl.u32 %v3155, 16
      %v3323 = vrot.slane %v3321, 4
      %v3324 = vor.u32 %v3323, %v3319
      %v3325 = vrot.slane %v3324, 4
      %v3327 = vshll.u32 %v3156, 16
      %v3329 = vrot.slane %v3327, 5
      %v3330 = vsel %vm331, %v3325, %v3329
      %v3332 = vshrl.u32 %v3157, 16
      %v3334 = vrot.slane %v3332, 4
      %v3335 = vshll.u32 %v3157, 16
      %v3337 = vrot.slane %v3335, 5
      %v3338 = vor.u32 %v3334, %v3337
      %v3339 = vrot.slane %v3338, 4
      %v3341 = vshll.u32 %v3158, 16
      %v3343 = vrot.slane %v3341, 5
      %v3344 = vsel %vm331, %v3339, %v3343
      %v3345 = vshrl.u32 %v3158, 16
      %v3347 = vrot.slane %v3345, 4
      %v3348 = vor.u32 %v3347, %v3343
      %v3349 = vrot.slane %v3348, 4
      %v3351 = vshll.u32 %v3159, 16
      %v3353 = vrot.slane %v3351, 5
      %v3354 = vsel %vm331, %v3349, %v3353
      %v3356 = vshrl.u32 %v3160, 16
      %v3358 = vrot.slane %v3356, 4
      %v3359 = vshll.u32 %v3160, 16
      %v3361 = vrot.slane %v3359, 5
      %v3362 = vor.u32 %v3358, %v3361
      %v3363 = vrot.slane %v3362, 4
      %v3365 = vshll.u32 %v3161, 16
      %v3367 = vrot.slane %v3365, 5
      %v3368 = vsel %vm331, %v3363, %v3367
      %v3369 = vshrl.u32 %v3161, 16
      %v3371 = vrot.slane %v3369, 4
      %v3372 = vor.u32 %v3371, %v3367
      %v3373 = vrot.slane %v3372, 4
      %v3375 = vshll.u32 %v3162, 16
      %v3377 = vrot.slane %v3375, 5
      %v3378 = vsel %vm331, %v3373, %v3377
      %v3380 = vshrl.u32 %v3163, 16
      %v3382 = vrot.slane %v3380, 4
      %v3383 = vshll.u32 %v3163, 16
      %v3385 = vrot.slane %v3383, 5
      %v3386 = vor.u32 %v3382, %v3385
      %v3387 = vrot.slane %v3386, 4
      %v3389 = vshll.u32 %v3164, 16
      %v3391 = vrot.slane %v3389, 5
      %v3392 = vsel %vm331, %v3387, %v3391
      %v3393 = vshrl.u32 %v3164, 16
      %v3395 = vrot.slane %v3393, 4
      %v3396 = vor.u32 %v3395, %v3391
      %v3397 = vrot.slane %v3396, 4
      %v3399 = vshll.u32 %v3165, 16
      %v3401 = vrot.slane %v3399, 5
      %v3402 = vsel %vm331, %v3397, %v3401
      %v3404 = vshrl.u32 %v3166, 16
      %v3406 = vrot.slane %v3404, 4
      %v3407 = vshll.u32 %v3166, 16
      %v3409 = vrot.slane %v3407, 5
      %v3410 = vor.u32 %v3406, %v3409
      %v3411 = vrot.slane %v3410, 4
      %v3413 = vshll.u32 %v3167, 16
      %v3415 = vrot.slane %v3413, 5
      %v3416 = vsel %vm331, %v3411, %v3415
      %v3417 = vshrl.u32 %v3167, 16
      %v3419 = vrot.slane %v3417, 4
      %v3420 = vor.u32 %v3419, %v3415
      %v3421 = vrot.slane %v3420, 4
      %v3423 = vshll.u32 %v3168, 16
      %v3425 = vrot.slane %v3423, 5
      %v3426 = vsel %vm331, %v3421, %v3425
      %v3428 = vshrl.u32 %v3169, 16
      %v3430 = vrot.slane %v3428, 4
      %v3431 = vshll.u32 %v3169, 16
      %v3433 = vrot.slane %v3431, 5
      %v3434 = vor.u32 %v3430, %v3433
      %v3435 = vrot.slane %v3434, 4
      %v3437 = vshll.u32 %v3170, 16
      %v3439 = vrot.slane %v3437, 5
      %v3440 = vsel %vm331, %v3435, %v3439
      %v3441 = vshrl.u32 %v3170, 16
      %v3443 = vrot.slane %v3441, 4
      %v3444 = vor.u32 %v3443, %v3439
      %v3445 = vrot.slane %v3444, 4
      %v3447 = vshll.u32 %v3171, 16
      %v3449 = vrot.slane %v3447, 5
      %v3450 = vsel %vm331, %v3445, %v3449
      %v3452 = vshrl.u32 %v3172, 16
      %v3454 = vrot.slane %v3452, 4
      %v3455 = vshll.u32 %v3172, 16
      %v3457 = vrot.slane %v3455, 5
      %v3458 = vor.u32 %v3454, %v3457
      %v3459 = vrot.slane %v3458, 4
      %v3461 = vshll.u32 %v3173, 16
      %v3463 = vrot.slane %v3461, 5
      %v3464 = vsel %vm331, %v3459, %v3463
      %v3465 = vshrl.u32 %v3173, 16
      %v3467 = vrot.slane %v3465, 4
      %v3468 = vor.u32 %v3467, %v3463
      %v3469 = vrot.slane %v3468, 4
      %v3471 = vshll.u32 %v3174, 16
      %v3473 = vrot.slane %v3471, 5
      %v3474 = vsel %vm331, %v3469, %v3473
      %v3476 = vshrl.u32 %v3175, 16
      %v3478 = vrot.slane %v3476, 4
      %v3479 = vshll.u32 %v3175, 16
      %v3481 = vrot.slane %v3479, 5
      %v3482 = vor.u32 %v3478, %v3481
      %v3483 = vrot.slane %v3482, 4
      %v3485 = vshll.u32 %v3176, 16
      %v3487 = vrot.slane %v3485, 5
      %v3488 = vsel %vm331, %v3483, %v3487
      %v3489 = vshrl.u32 %v3176, 16
      %v3491 = vrot.slane %v3489, 4
      %v3492 = vor.u32 %v3491, %v3487
      %v3493 = vrot.slane %v3492, 4
      %v3495 = vshll.u32 %v3177, 16
      %v3497 = vrot.slane %v3495, 5
      %v3498 = vsel %vm331, %v3493, %v3497
      %v3500 = vshrl.u32 %v3178, 16
      %v3502 = vrot.slane %v3500, 4
      %v3503 = vshll.u32 %v3178, 16
      %v3505 = vrot.slane %v3503, 5
      %v3506 = vor.u32 %v3502, %v3505
      %v3507 = vrot.slane %v3506, 4
      %v3509 = vshll.u32 %v3179, 16
      %v3511 = vrot.slane %v3509, 5
      %v3512 = vsel %vm331, %v3507, %v3511
      %v3513 = vshrl.u32 %v3179, 16
      %v3515 = vrot.slane %v3513, 4
      %v3516 = vor.u32 %v3515, %v3511
      %v3517 = vrot.slane %v3516, 4
      %v3519 = vshll.u32 %v3180, 16
      %v3521 = vrot.slane %v3519, 5
      %v3522 = vsel %vm331, %v3517, %v3521
      %v3524 = vshrl.u32 %v3181, 16
      %v3526 = vrot.slane %v3524, 4
      %v3527 = vshll.u32 %v3181, 16
      %v3529 = vrot.slane %v3527, 5
      %v3530 = vor.u32 %v3526, %v3529
      %v3531 = vrot.slane %v3530, 4
      %v3533 = vshll.u32 %v3182, 16
      %v3535 = vrot.slane %v3533, 5
      %v3536 = vsel %vm331, %v3531, %v3535
      %v3537 = vshrl.u32 %v3182, 16
      %v3539 = vrot.slane %v3537, 4
      %v3540 = vor.u32 %v3539, %v3535
      %v3541 = vrot.slane %v3540, 4
      %v3543 = vshll.u32 %v3183, 16
      %v3545 = vrot.slane %v3543, 5
      %v3546 = vsel %vm331, %v3541, %v3545
      %v3548 = vshrl.u32 %v3184, 16
      %v3550 = vrot.slane %v3548, 4
      %v3551 = vshll.u32 %v3184, 16
      %v3553 = vrot.slane %v3551, 5
      %v3554 = vor.u32 %v3550, %v3553
      %v3555 = vrot.slane %v3554, 4
      %v3557 = vshll.u32 %v3185, 16
      %v3559 = vrot.slane %v3557, 5
      %v3560 = vsel %vm331, %v3555, %v3559
      %v3561 = vshrl.u32 %v3185, 16
      %v3563 = vrot.slane %v3561, 4
      %v3564 = vor.u32 %v3563, %v3559
      %v3565 = vrot.slane %v3564, 4
      %v3567 = vshll.u32 %v3186, 16
      %v3569 = vrot.slane %v3567, 5
      %v3570 = vsel %vm331, %v3565, %v3569
      %s3571 = scalar_lea.vmem %s1, 14
      %v3572 = vld [vmem:[%s3571] sm:$0x3]
      %v3573 = vunpack.c.l.b16 %v3200
      %v3574 = vunpack.c.l.b16 %v3210
      %v3575 = vunpack.c.l.b16 %v3224
      %v3576 = vunpack.c.l.b16 %v3234
      %v3577 = vunpack.c.l.b16 %v3248
      %v3578 = vunpack.c.l.b16 %v3258
      %v3579 = vunpack.c.l.b16 %v3272
      %v3580 = vunpack.c.l.b16 %v3282
      %v3581 = vunpack.c.l.b16 %v3296
      %v3582 = vunpack.c.l.b16 %v3306
      %v3583 = vunpack.c.l.b16 %v3320
      %v3584 = vunpack.c.l.b16 %v3330
      %v3585 = vunpack.c.l.b16 %v3344
      %v3586 = vunpack.c.l.b16 %v3354
      %v3587 = vunpack.c.l.b16 %v3368
      %v3588 = vunpack.c.l.b16 %v3378
      %v3589 = vunpack.c.l.b16 %v3392
      %v3590 = vunpack.c.l.b16 %v3402
      %v3591 = vunpack.c.l.b16 %v3416
      %v3592 = vunpack.c.l.b16 %v3426
      %v3593 = vunpack.c.l.b16 %v3440
      %v3594 = vunpack.c.l.b16 %v3450
      %v3595 = vunpack.c.l.b16 %v3464
      %v3596 = vunpack.c.l.b16 %v3474
      %v3597 = vunpack.c.l.b16 %v3488
      %v3598 = vunpack.c.l.b16 %v3498
      %v3599 = vunpack.c.l.b16 %v3512
      %v3600 = vunpack.c.l.b16 %v3522
      %v3601 = vunpack.c.l.b16 %v3536
      %v3602 = vunpack.c.l.b16 %v3546
      %v3603 = vunpack.c.l.b16 %v3560
      %v3604 = vunpack.c.l.b16 %v3570
      %v3605 = vpack.c.b16 %v3574, %v3573
      %v3606 = vpack.c.b16 %v3576, %v3575
      %v3607 = vpack.c.b16 %v3578, %v3577
      %v3608 = vpack.c.b16 %v3580, %v3579
      %v3609 = vpack.c.b16 %v3582, %v3581
      %v3610 = vpack.c.b16 %v3584, %v3583
      %v3611 = vpack.c.b16 %v3586, %v3585
      %v3612 = vpack.c.b16 %v3588, %v3587
      %v3613 = vpack.c.b16 %v3590, %v3589
      %v3614 = vpack.c.b16 %v3592, %v3591
      %v3615 = vpack.c.b16 %v3594, %v3593
      %v3616 = vpack.c.b16 %v3596, %v3595
      %v3617 = vpack.c.b16 %v3598, %v3597
      %v3618 = vpack.c.b16 %v3600, %v3599
      %v3619 = vpack.c.b16 %v3602, %v3601
      %v3620 = vpack.c.b16 %v3604, %v3603
      %v3622 = vsel %vm766, %v3605, 0
      %v3625 = vsel %vm766, %v3606, 0
      %v3628 = vsel %vm766, %v3607, 0
      %v3631 = vsel %vm766, %v3608, 0
      %v3634 = vsel %vm766, %v3609, 0
      %v3637 = vsel %vm766, %v3610, 0
      %v3640 = vsel %vm766, %v3611, 0
      %v3643 = vsel %vm766, %v3612, 0
      %v3646 = vsel %vm766, %v3613, 0
      %v3649 = vsel %vm766, %v3614, 0
      %v3652 = vsel %vm766, %v3615, 0
      %v3655 = vsel %vm766, %v3616, 0
      %v3658 = vsel %vm766, %v3617, 0
      %v3661 = vsel %vm766, %v3618, 0
      %v3664 = vsel %vm766, %v3619, 0
      %v3667 = vsel %vm766, %v3620, 0
      %v3670 = vsel %vm815, %v3572, 0
      %3672 = vmatpush.bf16.msra.mxu0 0
      %3673 = vmatpush.bf16.msra.mxu0 0
      %3674 = vmatpush.bf16.msra.mxu0 0
      %3675 = vmatpush.bf16.msra.mxu0 0
      %3676 = vmatpush.bf16.msra.mxu0 0
      %3677 = vmatpush.bf16.msra.mxu0 0
      %3678 = vmatpush.bf16.msra.mxu0 0
      %3679 = vmatpush.bf16.msra.mxu0 %v3670
      %3680 = vmatmul.bf16.gmra.mxu0 %v3622
      %v3681 = vpop.f32.mrf.mxu0
      %v3682 = vadd.f32 0.0, %v3681
      %v3683 = vpop.f32.mrf.mxu0
      %v3684 = vadd.f32 0.0, %v3683
      %3685 = vmatmul.bf16.gmra.mxu0 %v3625
      %v3686 = vpop.f32.mrf.mxu0
      %v3687 = vadd.f32 0.0, %v3686
      %v3688 = vpop.f32.mrf.mxu0
      %v3689 = vadd.f32 0.0, %v3688
      %3690 = vmatmul.bf16.gmra.mxu0 %v3628
      %v3691 = vpop.f32.mrf.mxu0
      %v3692 = vadd.f32 0.0, %v3691
      %v3693 = vpop.f32.mrf.mxu0
      %v3694 = vadd.f32 0.0, %v3693
      %3695 = vmatmul.bf16.gmra.mxu0 %v3631
      %v3696 = vpop.f32.mrf.mxu0
      %v3697 = vadd.f32 0.0, %v3696
      %v3698 = vpop.f32.mrf.mxu0
      %v3699 = vadd.f32 0.0, %v3698
      %3700 = vmatmul.bf16.gmra.mxu0 %v3634
      %v3701 = vpop.f32.mrf.mxu0
      %v3702 = vadd.f32 0.0, %v3701
      %v3703 = vpop.f32.mrf.mxu0
      %v3704 = vadd.f32 0.0, %v3703
      %3705 = vmatmul.bf16.gmra.mxu0 %v3637
      %v3706 = vpop.f32.mrf.mxu0
      %v3707 = vadd.f32 0.0, %v3706
      %v3708 = vpop.f32.mrf.mxu0
      %v3709 = vadd.f32 0.0, %v3708
      %3710 = vmatmul.bf16.gmra.mxu0 %v3640
      %v3711 = vpop.f32.mrf.mxu0
      %v3712 = vadd.f32 0.0, %v3711
      %v3713 = vpop.f32.mrf.mxu0
      %v3714 = vadd.f32 0.0, %v3713
      %3715 = vmatmul.bf16.gmra.mxu0 %v3643
      %v3716 = vpop.f32.mrf.mxu0
      %v3717 = vadd.f32 0.0, %v3716
      %v3718 = vpop.f32.mrf.mxu0
      %v3719 = vadd.f32 0.0, %v3718
      %3720 = vmatmul.bf16.gmra.mxu0 %v3646
      %v3721 = vpop.f32.mrf.mxu0
      %v3722 = vadd.f32 0.0, %v3721
      %v3723 = vpop.f32.mrf.mxu0
      %v3724 = vadd.f32 0.0, %v3723
      %3725 = vmatmul.bf16.gmra.mxu0 %v3649
      %v3726 = vpop.f32.mrf.mxu0
      %v3727 = vadd.f32 0.0, %v3726
      %v3728 = vpop.f32.mrf.mxu0
      %v3729 = vadd.f32 0.0, %v3728
      %3730 = vmatmul.bf16.gmra.mxu0 %v3652
      %v3731 = vpop.f32.mrf.mxu0
      %v3732 = vadd.f32 0.0, %v3731
      %v3733 = vpop.f32.mrf.mxu0
      %v3734 = vadd.f32 0.0, %v3733
      %3735 = vmatmul.bf16.gmra.mxu0 %v3655
      %v3736 = vpop.f32.mrf.mxu0
      %v3737 = vadd.f32 0.0, %v3736
      %v3738 = vpop.f32.mrf.mxu0
      %v3739 = vadd.f32 0.0, %v3738
      %3740 = vmatmul.bf16.gmra.mxu0 %v3658
      %v3741 = vpop.f32.mrf.mxu0
      %v3742 = vadd.f32 0.0, %v3741
      %v3743 = vpop.f32.mrf.mxu0
      %v3744 = vadd.f32 0.0, %v3743
      %3745 = vmatmul.bf16.gmra.mxu0 %v3661
      %v3746 = vpop.f32.mrf.mxu0
      %v3747 = vadd.f32 0.0, %v3746
      %v3748 = vpop.f32.mrf.mxu0
      %v3749 = vadd.f32 0.0, %v3748
      %3750 = vmatmul.bf16.gmra.mxu0 %v3664
      %v3751 = vpop.f32.mrf.mxu0
      %v3752 = vadd.f32 0.0, %v3751
      %v3753 = vpop.f32.mrf.mxu0
      %v3754 = vadd.f32 0.0, %v3753
      %3755 = vmatmul.bf16.gmra.mxu0 %v3667
      %v3756 = vpop.f32.mrf.mxu0
      %v3757 = vadd.f32 0.0, %v3756
      %v3758 = vpop.f32.mrf.mxu0
      %v3759 = vadd.f32 0.0, %v3758
      %3760 = vdwg.mxu0
      %v3761 = vadd.f32 %v3107, %v3682
      %v3762 = vadd.f32 %v3108, %v3684
      %v3763 = vadd.f32 %v3109, %v3687
      %v3764 = vadd.f32 %v3110, %v3689
      %v3765 = vadd.f32 %v3111, %v3692
      %v3766 = vadd.f32 %v3112, %v3694
      %v3767 = vadd.f32 %v3113, %v3697
      %v3768 = vadd.f32 %v3114, %v3699
      %v3769 = vadd.f32 %v3115, %v3702
      %v3770 = vadd.f32 %v3116, %v3704
      %v3771 = vadd.f32 %v3117, %v3707
      %v3772 = vadd.f32 %v3118, %v3709
      %v3773 = vadd.f32 %v3119, %v3712
      %v3774 = vadd.f32 %v3120, %v3714
      %v3775 = vadd.f32 %v3121, %v3717
      %v3776 = vadd.f32 %v3122, %v3719
      %v3777 = vadd.f32 %v3123, %v3722
      %v3778 = vadd.f32 %v3124, %v3724
      %v3779 = vadd.f32 %v3125, %v3727
      %v3780 = vadd.f32 %v3126, %v3729
      %v3781 = vadd.f32 %v3127, %v3732
      %v3782 = vadd.f32 %v3128, %v3734
      %v3783 = vadd.f32 %v3129, %v3737
      %v3784 = vadd.f32 %v3130, %v3739
      %v3785 = vadd.f32 %v3131, %v3742
      %v3786 = vadd.f32 %v3132, %v3744
      %v3787 = vadd.f32 %v3133, %v3747
      %v3788 = vadd.f32 %v3134, %v3749
      %v3789 = vadd.f32 %v3135, %v3752
      %v3790 = vadd.f32 %v3136, %v3754
      %v3791 = vadd.f32 %v3137, %v3757
      %v3792 = vadd.f32 %v3138, %v3759
      %v3793 = vld [vmem:[%s2852] sm:$0xe]
      %v3794 = vld [vmem:[%s2852 + $0xc] sm:$0xe]
      %v3795 = vld [vmem:[%s2852 + $0x18] sm:$0xe]
      %v3796 = vld [vmem:[%s2852 + $0x24] sm:$0xe]
      %v3797 = vld [vmem:[%s2852 + $0x30] sm:$0xe]
      %v3798 = vld [vmem:[%s2852 + $0x3c] sm:$0xe]
      %v3799 = vld [vmem:[%s2852 + $0x48] sm:$0xe]
      %v3800 = vld [vmem:[%s2852 + $0x54] sm:$0xe]
      %v3801 = vld [vmem:[%s2852 + $0x60] sm:$0xe]
      %v3802 = vld [vmem:[%s2852 + $0x6c] sm:$0xe]
      %v3803 = vld [vmem:[%s2852 + $0x78] sm:$0xe]
      %v3804 = vld [vmem:[%s2852 + $0x84] sm:$0xe]
      %v3805 = vld [vmem:[%s2852 + $0x90] sm:$0xe]
      %v3806 = vld [vmem:[%s2852 + $0x9c] sm:$0xe]
      %v3807 = vld [vmem:[%s2852 + $0xa8] sm:$0xe]
      %v3808 = vld [vmem:[%s2852 + $0xb4] sm:$0xe]
      %v3857 = vrot.slane %v3793, 5
      %v3858 = vrot.slane %v3857, 4
      %v3859 = vrot.slane %v3140, 5
      %v3860 = vsel %vm1178, %v3858, %v3859
      %v3861 = vrot.slane %v3859, 4
      %v3862 = vrot.slane %v3141, 5
      %v3863 = vsel %vm1178, %v3861, %v3862
      %v3864 = vrot.slane %v3794, 5
      %v3865 = vrot.slane %v3864, 4
      %v3866 = vrot.slane %v3143, 5
      %v3867 = vsel %vm1178, %v3865, %v3866
      %v3868 = vrot.slane %v3866, 4
      %v3869 = vrot.slane %v3144, 5
      %v3870 = vsel %vm1178, %v3868, %v3869
      %v3871 = vrot.slane %v3795, 5
      %v3872 = vrot.slane %v3871, 4
      %v3873 = vrot.slane %v3146, 5
      %v3874 = vsel %vm1178, %v3872, %v3873
      %v3875 = vrot.slane %v3873, 4
      %v3876 = vrot.slane %v3147, 5
      %v3877 = vsel %vm1178, %v3875, %v3876
      %v3878 = vrot.slane %v3796, 5
      %v3879 = vrot.slane %v3878, 4
      %v3880 = vrot.slane %v3149, 5
      %v3881 = vsel %vm1178, %v3879, %v3880
      %v3882 = vrot.slane %v3880, 4
      %v3883 = vrot.slane %v3150, 5
      %v3884 = vsel %vm1178, %v3882, %v3883
      %v3885 = vrot.slane %v3797, 5
      %v3886 = vrot.slane %v3885, 4
      %v3887 = vrot.slane %v3152, 5
      %v3888 = vsel %vm1178, %v3886, %v3887
      %v3889 = vrot.slane %v3887, 4
      %v3890 = vrot.slane %v3153, 5
      %v3891 = vsel %vm1178, %v3889, %v3890
      %v3892 = vrot.slane %v3798, 5
      %v3893 = vrot.slane %v3892, 4
      %v3894 = vrot.slane %v3155, 5
      %v3895 = vsel %vm1178, %v3893, %v3894
      %v3896 = vrot.slane %v3894, 4
      %v3897 = vrot.slane %v3156, 5
      %v3898 = vsel %vm1178, %v3896, %v3897
      %v3899 = vrot.slane %v3799, 5
      %v3900 = vrot.slane %v3899, 4
      %v3901 = vrot.slane %v3158, 5
      %v3902 = vsel %vm1178, %v3900, %v3901
      %v3903 = vrot.slane %v3901, 4
      %v3904 = vrot.slane %v3159, 5
      %v3905 = vsel %vm1178, %v3903, %v3904
      %v3906 = vrot.slane %v3800, 5
      %v3907 = vrot.slane %v3906, 4
      %v3908 = vrot.slane %v3161, 5
      %v3909 = vsel %vm1178, %v3907, %v3908
      %v3910 = vrot.slane %v3908, 4
      %v3911 = vrot.slane %v3162, 5
      %v3912 = vsel %vm1178, %v3910, %v3911
      %v3913 = vrot.slane %v3801, 5
      %v3914 = vrot.slane %v3913, 4
      %v3915 = vrot.slane %v3164, 5
      %v3916 = vsel %vm1178, %v3914, %v3915
      %v3917 = vrot.slane %v3915, 4
      %v3918 = vrot.slane %v3165, 5
      %v3919 = vsel %vm1178, %v3917, %v3918
      %v3920 = vrot.slane %v3802, 5
      %v3921 = vrot.slane %v3920, 4
      %v3922 = vrot.slane %v3167, 5
      %v3923 = vsel %vm1178, %v3921, %v3922
      %v3924 = vrot.slane %v3922, 4
      %v3925 = vrot.slane %v3168, 5
      %v3926 = vsel %vm1178, %v3924, %v3925
      %v3927 = vrot.slane %v3803, 5
      %v3928 = vrot.slane %v3927, 4
      %v3929 = vrot.slane %v3170, 5
      %v3930 = vsel %vm1178, %v3928, %v3929
      %v3931 = vrot.slane %v3929, 4
      %v3932 = vrot.slane %v3171, 5
      %v3933 = vsel %vm1178, %v3931, %v3932
      %v3934 = vrot.slane %v3804, 5
      %v3935 = vrot.slane %v3934, 4
      %v3936 = vrot.slane %v3173, 5
      %v3937 = vsel %vm1178, %v3935, %v3936
      %v3938 = vrot.slane %v3936, 4
      %v3939 = vrot.slane %v3174, 5
      %v3940 = vsel %vm1178, %v3938, %v3939
      %v3941 = vrot.slane %v3805, 5
      %v3942 = vrot.slane %v3941, 4
      %v3943 = vrot.slane %v3176, 5
      %v3944 = vsel %vm1178, %v3942, %v3943
      %v3945 = vrot.slane %v3943, 4
      %v3946 = vrot.slane %v3177, 5
      %v3947 = vsel %vm1178, %v3945, %v3946
      %v3948 = vrot.slane %v3806, 5
      %v3949 = vrot.slane %v3948, 4
      %v3950 = vrot.slane %v3179, 5
      %v3951 = vsel %vm1178, %v3949, %v3950
      %v3952 = vrot.slane %v3950, 4
      %v3953 = vrot.slane %v3180, 5
      %v3954 = vsel %vm1178, %v3952, %v3953
      %v3955 = vrot.slane %v3807, 5
      %v3956 = vrot.slane %v3955, 4
      %v3957 = vrot.slane %v3182, 5
      %v3958 = vsel %vm1178, %v3956, %v3957
      %v3959 = vrot.slane %v3957, 4
      %v3960 = vrot.slane %v3183, 5
      %v3961 = vsel %vm1178, %v3959, %v3960
      %v3962 = vrot.slane %v3808, 5
      %v3963 = vrot.slane %v3962, 4
      %v3964 = vrot.slane %v3185, 5
      %v3965 = vsel %vm1178, %v3963, %v3964
      %v3966 = vrot.slane %v3964, 4
      %v3967 = vrot.slane %v3186, 5
      %v3968 = vsel %vm1178, %v3966, %v3967
      %s3969 = scalar_lea.vmem %s1, 16
      %v3970 = vld [vmem:[%s3969] sm:$0x3]
      %v3971 = vunpack.c.l.b16 %v3860
      %v3972 = vunpack.c.l.b16 %v3863
      %v3973 = vunpack.c.l.b16 %v3867
      %v3974 = vunpack.c.l.b16 %v3870
      %v3975 = vunpack.c.l.b16 %v3874
      %v3976 = vunpack.c.l.b16 %v3877
      %v3977 = vunpack.c.l.b16 %v3881
      %v3978 = vunpack.c.l.b16 %v3884
      %v3979 = vunpack.c.l.b16 %v3888
      %v3980 = vunpack.c.l.b16 %v3891
      %v3981 = vunpack.c.l.b16 %v3895
      %v3982 = vunpack.c.l.b16 %v3898
      %v3983 = vunpack.c.l.b16 %v3902
      %v3984 = vunpack.c.l.b16 %v3905
      %v3985 = vunpack.c.l.b16 %v3909
      %v3986 = vunpack.c.l.b16 %v3912
      %v3987 = vunpack.c.l.b16 %v3916
      %v3988 = vunpack.c.l.b16 %v3919
      %v3989 = vunpack.c.l.b16 %v3923
      %v3990 = vunpack.c.l.b16 %v3926
      %v3991 = vunpack.c.l.b16 %v3930
      %v3992 = vunpack.c.l.b16 %v3933
      %v3993 = vunpack.c.l.b16 %v3937
      %v3994 = vunpack.c.l.b16 %v3940
      %v3995 = vunpack.c.l.b16 %v3944
      %v3996 = vunpack.c.l.b16 %v3947
      %v3997 = vunpack.c.l.b16 %v3951
      %v3998 = vunpack.c.l.b16 %v3954
      %v3999 = vunpack.c.l.b16 %v3958
      %v4000 = vunpack.c.l.b16 %v3961
      %v4001 = vunpack.c.l.b16 %v3965
      %v4002 = vunpack.c.l.b16 %v3968
      %v4003 = vpack.c.b16 %v3972, %v3971
      %v4004 = vpack.c.b16 %v3974, %v3973
      %v4005 = vpack.c.b16 %v3976, %v3975
      %v4006 = vpack.c.b16 %v3978, %v3977
      %v4007 = vpack.c.b16 %v3980, %v3979
      %v4008 = vpack.c.b16 %v3982, %v3981
      %v4009 = vpack.c.b16 %v3984, %v3983
      %v4010 = vpack.c.b16 %v3986, %v3985
      %v4011 = vpack.c.b16 %v3988, %v3987
      %v4012 = vpack.c.b16 %v3990, %v3989
      %v4013 = vpack.c.b16 %v3992, %v3991
      %v4014 = vpack.c.b16 %v3994, %v3993
      %v4015 = vpack.c.b16 %v3996, %v3995
      %v4016 = vpack.c.b16 %v3998, %v3997
      %v4017 = vpack.c.b16 %v4000, %v3999
      %v4018 = vpack.c.b16 %v4002, %v4001
      %v4020 = vsel %vm766, %v4003, 0
      %v4023 = vsel %vm766, %v4004, 0
      %v4026 = vsel %vm766, %v4005, 0
      %v4029 = vsel %vm766, %v4006, 0
      %v4032 = vsel %vm766, %v4007, 0
      %v4035 = vsel %vm766, %v4008, 0
      %v4038 = vsel %vm766, %v4009, 0
      %v4041 = vsel %vm766, %v4010, 0
      %v4044 = vsel %vm766, %v4011, 0
      %v4047 = vsel %vm766, %v4012, 0
      %v4050 = vsel %vm766, %v4013, 0
      %v4053 = vsel %vm766, %v4014, 0
      %v4056 = vsel %vm766, %v4015, 0
      %v4059 = vsel %vm766, %v4016, 0
      %v4062 = vsel %vm766, %v4017, 0
      %v4065 = vsel %vm766, %v4018, 0
      %v4068 = vsel %vm815, %v3970, 0
      %4070 = vmatpush.bf16.msra.mxu0 0
      %4071 = vmatpush.bf16.msra.mxu0 0
      %4072 = vmatpush.bf16.msra.mxu0 0
      %4073 = vmatpush.bf16.msra.mxu0 0
      %4074 = vmatpush.bf16.msra.mxu0 0
      %4075 = vmatpush.bf16.msra.mxu0 0
      %4076 = vmatpush.bf16.msra.mxu0 0
      %4077 = vmatpush.bf16.msra.mxu0 %v4068
      %4078 = vmatmul.bf16.gmra.mxu0 %v4020
      %v4079 = vpop.f32.mrf.mxu0
      %v4080 = vadd.f32 0.0, %v4079
      %v4081 = vpop.f32.mrf.mxu0
      %v4082 = vadd.f32 0.0, %v4081
      %4083 = vmatmul.bf16.gmra.mxu0 %v4023
      %v4084 = vpop.f32.mrf.mxu0
      %v4085 = vadd.f32 0.0, %v4084
      %v4086 = vpop.f32.mrf.mxu0
      %v4087 = vadd.f32 0.0, %v4086
      %4088 = vmatmul.bf16.gmra.mxu0 %v4026
      %v4089 = vpop.f32.mrf.mxu0
      %v4090 = vadd.f32 0.0, %v4089
      %v4091 = vpop.f32.mrf.mxu0
      %v4092 = vadd.f32 0.0, %v4091
      %4093 = vmatmul.bf16.gmra.mxu0 %v4029
      %v4094 = vpop.f32.mrf.mxu0
      %v4095 = vadd.f32 0.0, %v4094
      %v4096 = vpop.f32.mrf.mxu0
      %v4097 = vadd.f32 0.0, %v4096
      %4098 = vmatmul.bf16.gmra.mxu0 %v4032
      %v4099 = vpop.f32.mrf.mxu0
      %v4100 = vadd.f32 0.0, %v4099
      %v4101 = vpop.f32.mrf.mxu0
      %v4102 = vadd.f32 0.0, %v4101
      %4103 = vmatmul.bf16.gmra.mxu0 %v4035
      %v4104 = vpop.f32.mrf.mxu0
      %v4105 = vadd.f32 0.0, %v4104
      %v4106 = vpop.f32.mrf.mxu0
      %v4107 = vadd.f32 0.0, %v4106
      %4108 = vmatmul.bf16.gmra.mxu0 %v4038
      %v4109 = vpop.f32.mrf.mxu0
      %v4110 = vadd.f32 0.0, %v4109
      %v4111 = vpop.f32.mrf.mxu0
      %v4112 = vadd.f32 0.0, %v4111
      %4113 = vmatmul.bf16.gmra.mxu0 %v4041
      %v4114 = vpop.f32.mrf.mxu0
      %v4115 = vadd.f32 0.0, %v4114
      %v4116 = vpop.f32.mrf.mxu0
      %v4117 = vadd.f32 0.0, %v4116
      %4118 = vmatmul.bf16.gmra.mxu0 %v4044
      %v4119 = vpop.f32.mrf.mxu0
      %v4120 = vadd.f32 0.0, %v4119
      %v4121 = vpop.f32.mrf.mxu0
      %v4122 = vadd.f32 0.0, %v4121
      %4123 = vmatmul.bf16.gmra.mxu0 %v4047
      %v4124 = vpop.f32.mrf.mxu0
      %v4125 = vadd.f32 0.0, %v4124
      %v4126 = vpop.f32.mrf.mxu0
      %v4127 = vadd.f32 0.0, %v4126
      %4128 = vmatmul.bf16.gmra.mxu0 %v4050
      %v4129 = vpop.f32.mrf.mxu0
      %v4130 = vadd.f32 0.0, %v4129
      %v4131 = vpop.f32.mrf.mxu0
      %v4132 = vadd.f32 0.0, %v4131
      %4133 = vmatmul.bf16.gmra.mxu0 %v4053
      %v4134 = vpop.f32.mrf.mxu0
      %v4135 = vadd.f32 0.0, %v4134
      %v4136 = vpop.f32.mrf.mxu0
      %v4137 = vadd.f32 0.0, %v4136
      %4138 = vmatmul.bf16.gmra.mxu0 %v4056
      %v4139 = vpop.f32.mrf.mxu0
      %v4140 = vadd.f32 0.0, %v4139
      %v4141 = vpop.f32.mrf.mxu0
      %v4142 = vadd.f32 0.0, %v4141
      %4143 = vmatmul.bf16.gmra.mxu0 %v4059
      %v4144 = vpop.f32.mrf.mxu0
      %v4145 = vadd.f32 0.0, %v4144
      %v4146 = vpop.f32.mrf.mxu0
      %v4147 = vadd.f32 0.0, %v4146
      %4148 = vmatmul.bf16.gmra.mxu0 %v4062
      %v4149 = vpop.f32.mrf.mxu0
      %v4150 = vadd.f32 0.0, %v4149
      %v4151 = vpop.f32.mrf.mxu0
      %v4152 = vadd.f32 0.0, %v4151
      %4153 = vmatmul.bf16.gmra.mxu0 %v4065
      %v4154 = vpop.f32.mrf.mxu0
      %v4155 = vadd.f32 0.0, %v4154
      %v4156 = vpop.f32.mrf.mxu0
      %v4157 = vadd.f32 0.0, %v4156
      %4158 = vdwg.mxu0
      %v4159 = vadd.f32 %v3761, %v4080
      %v4160 = vadd.f32 %v3762, %v4082
      %v4161 = vadd.f32 %v3763, %v4085
      %v4162 = vadd.f32 %v3764, %v4087
      %v4163 = vadd.f32 %v3765, %v4090
      %v4164 = vadd.f32 %v3766, %v4092
      %v4165 = vadd.f32 %v3767, %v4095
      %v4166 = vadd.f32 %v3768, %v4097
      %v4167 = vadd.f32 %v3769, %v4100
      %v4168 = vadd.f32 %v3770, %v4102
      %v4169 = vadd.f32 %v3771, %v4105
      %v4170 = vadd.f32 %v3772, %v4107
      %v4171 = vadd.f32 %v3773, %v4110
      %v4172 = vadd.f32 %v3774, %v4112
      %v4173 = vadd.f32 %v3775, %v4115
      %v4174 = vadd.f32 %v3776, %v4117
      %v4175 = vadd.f32 %v3777, %v4120
      %v4176 = vadd.f32 %v3778, %v4122
      %v4177 = vadd.f32 %v3779, %v4125
      %v4178 = vadd.f32 %v3780, %v4127
      %v4179 = vadd.f32 %v3781, %v4130
      %v4180 = vadd.f32 %v3782, %v4132
      %v4181 = vadd.f32 %v3783, %v4135
      %v4182 = vadd.f32 %v3784, %v4137
      %v4183 = vadd.f32 %v3785, %v4140
      %v4184 = vadd.f32 %v3786, %v4142
      %v4185 = vadd.f32 %v3787, %v4145
      %v4186 = vadd.f32 %v3788, %v4147
      %v4187 = vadd.f32 %v3789, %v4150
      %v4188 = vadd.f32 %v3790, %v4152
      %v4189 = vadd.f32 %v3791, %v4155
      %v4190 = vadd.f32 %v3792, %v4157
      %v4191 = vld [vmem:[%s2] sm:$0x1]
      %v4193 = vperm.slane %v4191, 0
      %v4195 = vadd.f32 %v4159, %v4193
      %v4196 = vadd.f32 %v4160, %v4193
      %v4197 = vadd.f32 %v4161, %v4193
      %v4198 = vadd.f32 %v4162, %v4193
      %v4199 = vadd.f32 %v4163, %v4193
      %v4200 = vadd.f32 %v4164, %v4193
      %v4201 = vadd.f32 %v4165, %v4193
      %v4202 = vadd.f32 %v4166, %v4193
      %v4203 = vadd.f32 %v4167, %v4193
      %v4204 = vadd.f32 %v4168, %v4193
      %v4205 = vadd.f32 %v4169, %v4193
      %v4206 = vadd.f32 %v4170, %v4193
      %v4207 = vadd.f32 %v4171, %v4193
      %v4208 = vadd.f32 %v4172, %v4193
      %v4209 = vadd.f32 %v4173, %v4193
      %v4210 = vadd.f32 %v4174, %v4193
      %v4211 = vadd.f32 %v4175, %v4193
      %v4212 = vadd.f32 %v4176, %v4193
      %v4213 = vadd.f32 %v4177, %v4193
      %v4214 = vadd.f32 %v4178, %v4193
      %v4215 = vadd.f32 %v4179, %v4193
      %v4216 = vadd.f32 %v4180, %v4193
      %v4217 = vadd.f32 %v4181, %v4193
      %v4218 = vadd.f32 %v4182, %v4193
      %v4219 = vadd.f32 %v4183, %v4193
      %v4220 = vadd.f32 %v4184, %v4193
      %v4221 = vadd.f32 %v4185, %v4193
      %v4222 = vadd.f32 %v4186, %v4193
      %v4223 = vadd.f32 %v4187, %v4193
      %v4224 = vadd.f32 %v4188, %v4193
      %v4225 = vadd.f32 %v4189, %v4193
      %v4226 = vadd.f32 %v4190, %v4193
      %v4227 = vmax.f32 %v4195, 0.0
      %v4228 = vmax.f32 %v4196, 0.0
      %v4229 = vmax.f32 %v4197, 0.0
      %v4230 = vmax.f32 %v4198, 0.0
      %v4231 = vmax.f32 %v4199, 0.0
      %v4232 = vmax.f32 %v4200, 0.0
      %v4233 = vmax.f32 %v4201, 0.0
      %v4234 = vmax.f32 %v4202, 0.0
      %v4235 = vmax.f32 %v4203, 0.0
      %v4236 = vmax.f32 %v4204, 0.0
      %v4237 = vmax.f32 %v4205, 0.0
      %v4238 = vmax.f32 %v4206, 0.0
      %v4239 = vmax.f32 %v4207, 0.0
      %v4240 = vmax.f32 %v4208, 0.0
      %v4241 = vmax.f32 %v4209, 0.0
      %v4242 = vmax.f32 %v4210, 0.0
      %v4243 = vmax.f32 %v4211, 0.0
      %v4244 = vmax.f32 %v4212, 0.0
      %v4245 = vmax.f32 %v4213, 0.0
      %v4246 = vmax.f32 %v4214, 0.0
      %v4247 = vmax.f32 %v4215, 0.0
      %v4248 = vmax.f32 %v4216, 0.0
      %v4249 = vmax.f32 %v4217, 0.0
      %v4250 = vmax.f32 %v4218, 0.0
      %v4251 = vmax.f32 %v4219, 0.0
      %v4252 = vmax.f32 %v4220, 0.0
      %v4253 = vmax.f32 %v4221, 0.0
      %v4254 = vmax.f32 %v4222, 0.0
      %v4255 = vmax.f32 %v4223, 0.0
      %v4256 = vmax.f32 %v4224, 0.0
      %v4257 = vmax.f32 %v4225, 0.0
      %v4258 = vmax.f32 %v4226, 0.0
      %4259 = vst [vmem:[#allocation2] sm:$0xf] 0
      %4260 = vst [vmem:[#allocation2 + $0x4] sm:$0xf] 0
      %4261 = vst [vmem:[#allocation2 + $0x8] sm:$0xf] 0
      %4262 = vst [vmem:[#allocation2 + $0xc] sm:$0xf] 0
      %4263 = vst [vmem:[#allocation2 + $0x10] sm:$0x1] 0
      %4264 = vst [vmem:[#allocation2 + $0x14] sm:$0xf] 0
      %4265 = vst [vmem:[#allocation2 + $0x18] sm:$0xf] 0
      %4266 = vst [vmem:[#allocation2 + $0x1c] sm:$0xf] 0
      %4267 = vst [vmem:[#allocation2 + $0x20] sm:$0xf] 0
      %4268 = vst [vmem:[#allocation2 + $0x24] sm:$0x1] 0
      %4269 = vst [vmem:[#allocation2 + $0x28] sm:$0xf] 0
      %4270 = vst [vmem:[#allocation2 + $0x2c] sm:$0xf] 0
      %4271 = vst [vmem:[#allocation2 + $0x30] sm:$0xf] 0
      %4272 = vst [vmem:[#allocation2 + $0x34] sm:$0xf] 0
      %4273 = vst [vmem:[#allocation2 + $0x38] sm:$0x1] 0
      %4274 = vst [vmem:[#allocation2 + $0x3c] sm:$0xf] 0
      %4275 = vst [vmem:[#allocation2 + $0x40] sm:$0xf] 0
      %4276 = vst [vmem:[#allocation2 + $0x44] sm:$0xf] 0
      %4277 = vst [vmem:[#allocation2 + $0x48] sm:$0xf] 0
      %4278 = vst [vmem:[#allocation2 + $0x4c] sm:$0x1] 0
      %4279 = vst [vmem:[#allocation2 + $0x50] sm:$0xf] 0
      %4280 = vst [vmem:[#allocation2 + $0x54] sm:$0xf] 0
      %4281 = vst [vmem:[#allocation2 + $0x58] sm:$0xf] 0
      %4282 = vst [vmem:[#allocation2 + $0x5c] sm:$0xf] 0
      %4283 = vst [vmem:[#allocation2 + $0x60] sm:$0x1] 0
      %4284 = vst [vmem:[#allocation2 + $0x64] sm:$0xf] 0
      %4285 = vst [vmem:[#allocation2 + $0x68] sm:$0xf] 0
      %4286 = vst [vmem:[#allocation2 + $0x6c] sm:$0xf] 0
      %4287 = vst [vmem:[#allocation2 + $0x70] sm:$0xf] 0
      %4288 = vst [vmem:[#allocation2 + $0x74] sm:$0x1] 0
      %4289 = vst [vmem:[#allocation2 + $0x78] sm:$0xf] 0
      %4290 = vst [vmem:[#allocation2 + $0x7c] sm:$0xf] 0
      %4291 = vst [vmem:[#allocation2 + $0x80] sm:$0xf] 0
      %4292 = vst [vmem:[#allocation2 + $0x84] sm:$0xf] 0
      %4293 = vst [vmem:[#allocation2 + $0x88] sm:$0x1] 0
      %4294 = vst [vmem:[#allocation2 + $0x8c] sm:$0xf] 0
      %4295 = vst [vmem:[#allocation2 + $0x90] sm:$0xf] 0
      %4296 = vst [vmem:[#allocation2 + $0x94] sm:$0xf] 0
      %4297 = vst [vmem:[#allocation2 + $0x98] sm:$0xf] 0
      %4298 = vst [vmem:[#allocation2 + $0x9c] sm:$0x1] 0
      %4299 = vst [vmem:[#allocation2 + $0xa0] sm:$0xf] 0
      %4300 = vst [vmem:[#allocation2 + $0xa4] sm:$0xf] 0
      %4301 = vst [vmem:[#allocation2 + $0xa8] sm:$0xf] 0
      %4302 = vst [vmem:[#allocation2 + $0xac] sm:$0xf] 0
      %4303 = vst [vmem:[#allocation2 + $0xb0] sm:$0x1] 0
      %4304 = vst [vmem:[#allocation2 + $0xb4] sm:$0xf] 0
      %4305 = vst [vmem:[#allocation2 + $0xb8] sm:$0xf] 0
      %4306 = vst [vmem:[#allocation2 + $0xbc] sm:$0xf] 0
      %4307 = vst [vmem:[#allocation2 + $0xc0] sm:$0xf] 0
      %4308 = vst [vmem:[#allocation2 + $0xc4] sm:$0x1] 0
      %4309 = vst [vmem:[#allocation2 + $0xc8] sm:$0xf] 0
      %4310 = vst [vmem:[#allocation2 + $0xcc] sm:$0xf] 0
      %4311 = vst [vmem:[#allocation2 + $0xd0] sm:$0xf] 0
      %4312 = vst [vmem:[#allocation2 + $0xd4] sm:$0xf] 0
      %4313 = vst [vmem:[#allocation2 + $0xd8] sm:$0x1] 0
      %4314 = vst [vmem:[#allocation2 + $0xdc] sm:$0xf] 0
      %4315 = vst [vmem:[#allocation2 + $0xe0] sm:$0xf] 0
      %4316 = vst [vmem:[#allocation2 + $0xe4] sm:$0xf] 0
      %4317 = vst [vmem:[#allocation2 + $0xe8] sm:$0xf] 0
      %4318 = vst [vmem:[#allocation2 + $0xec] sm:$0x1] 0
      %4319 = vst [vmem:[#allocation2 + $0xf0] sm:$0xf] 0
      %4320 = vst [vmem:[#allocation2 + $0xf4] sm:$0xf] 0
      %4321 = vst [vmem:[#allocation2 + $0xf8] sm:$0xf] 0
      %4322 = vst [vmem:[#allocation2 + $0xfc] sm:$0xf] 0
      %4323 = vst [vmem:[#allocation2 + $0x100] sm:$0x1] 0
      %4324 = vst [vmem:[#allocation2 + $0x104] sm:$0xf] 0
      %4325 = vst [vmem:[#allocation2 + $0x108] sm:$0xf] 0
      %4326 = vst [vmem:[#allocation2 + $0x10c] sm:$0xf] 0
      %4327 = vst [vmem:[#allocation2 + $0x110] sm:$0xf] 0
      %4328 = vst [vmem:[#allocation2 + $0x114] sm:$0x1] 0
      %4329 = vst [vmem:[#allocation2 + $0x118] sm:$0xf] 0
      %4330 = vst [vmem:[#allocation2 + $0x11c] sm:$0xf] 0
      %4331 = vst [vmem:[#allocation2 + $0x120] sm:$0xf] 0
      %4332 = vst [vmem:[#allocation2 + $0x124] sm:$0xf] 0
      %4333 = vst [vmem:[#allocation2 + $0x128] sm:$0x1] 0
      %4334 = vst [vmem:[#allocation2 + $0x12c] sm:$0xf] 0
      %4335 = vst [vmem:[#allocation2 + $0x130] sm:$0xf] 0
      %4336 = vst [vmem:[#allocation2 + $0x134] sm:$0xf] 0
      %4337 = vst [vmem:[#allocation2 + $0x138] sm:$0xf] 0
      %4338 = vst [vmem:[#allocation2 + $0x13c] sm:$0x1] 0
      %4339 = vst [vmem:[#allocation2 + $0x140] sm:$0xf] 0
      %4340 = vst [vmem:[#allocation2 + $0x144] sm:$0xf] 0
      %4341 = vst [vmem:[#allocation2 + $0x148] sm:$0xf] 0
      %4342 = vst [vmem:[#allocation2 + $0x14c] sm:$0xf] 0
      %4343 = vst [vmem:[#allocation2 + $0x150] sm:$0x1] 0
      %4344 = vst [vmem:[#allocation2 + $0x154] sm:$0xf] 0
      %4345 = vst [vmem:[#allocation2 + $0x158] sm:$0xf] 0
      %4346 = vst [vmem:[#allocation2 + $0x15c] sm:$0xf] 0
      %4347 = vst [vmem:[#allocation2 + $0x160] sm:$0xf] 0
      %4348 = vst [vmem:[#allocation2 + $0x164] sm:$0x1] 0
      %v4349 = vpack.c.bf16 %v4227, %v4227
      %v4350 = vpack.c.bf16 %v4228, %v4228
      %v4351 = vpack.c.bf16 %v4229, %v4229
      %v4352 = vpack.c.bf16 %v4230, %v4230
      %v4353 = vpack.c.bf16 %v4231, %v4231
      %v4354 = vpack.c.bf16 %v4232, %v4232
      %v4355 = vpack.c.bf16 %v4233, %v4233
      %v4356 = vpack.c.bf16 %v4234, %v4234
      %v4357 = vpack.c.bf16 %v4235, %v4235
      %v4358 = vpack.c.bf16 %v4236, %v4236
      %v4359 = vpack.c.bf16 %v4237, %v4237
      %v4360 = vpack.c.bf16 %v4238, %v4238
      %v4361 = vpack.c.bf16 %v4239, %v4239
      %v4362 = vpack.c.bf16 %v4240, %v4240
      %v4363 = vpack.c.bf16 %v4241, %v4241
      %v4364 = vpack.c.bf16 %v4242, %v4242
      %v4365 = vpack.c.bf16 %v4243, %v4243
      %v4366 = vpack.c.bf16 %v4244, %v4244
      %v4367 = vpack.c.bf16 %v4245, %v4245
      %v4368 = vpack.c.bf16 %v4246, %v4246
      %v4369 = vpack.c.bf16 %v4247, %v4247
      %v4370 = vpack.c.bf16 %v4248, %v4248
      %v4371 = vpack.c.bf16 %v4249, %v4249
      %v4372 = vpack.c.bf16 %v4250, %v4250
      %v4373 = vpack.c.bf16 %v4251, %v4251
      %v4374 = vpack.c.bf16 %v4252, %v4252
      %v4375 = vpack.c.bf16 %v4253, %v4253
      %v4376 = vpack.c.bf16 %v4254, %v4254
      %v4377 = vpack.c.bf16 %v4255, %v4255
      %v4378 = vpack.c.bf16 %v4256, %v4256
      %v4379 = vpack.c.bf16 %v4257, %v4257
      %v4380 = vpack.c.bf16 %v4258, %v4258
      %s4381 = scalar_lea.vmem [#allocation2], 20
      %4382 = vst [vmem:[%s4381 + $0x8] sm:$0xf] %v4349
      %4383 = vst [vmem:[%s4381 + $0xc] sm:$0xf] %v4350
      %4384 = vst [vmem:[%s4381 + $0x1c] sm:$0xf] %v4351
      %4385 = vst [vmem:[%s4381 + $0x20] sm:$0xf] %v4352
      %4386 = vst [vmem:[%s4381 + $0x30] sm:$0xf] %v4353
      %4387 = vst [vmem:[%s4381 + $0x34] sm:$0xf] %v4354
      %4388 = vst [vmem:[%s4381 + $0x44] sm:$0xf] %v4355
      %4389 = vst [vmem:[%s4381 + $0x48] sm:$0xf] %v4356
      %4390 = vst [vmem:[%s4381 + $0x58] sm:$0xf] %v4357
      %4391 = vst [vmem:[%s4381 + $0x5c] sm:$0xf] %v4358
      %4392 = vst [vmem:[%s4381 + $0x6c] sm:$0xf] %v4359
      %4393 = vst [vmem:[%s4381 + $0x70] sm:$0xf] %v4360
      %4394 = vst [vmem:[%s4381 + $0x80] sm:$0xf] %v4361
      %4395 = vst [vmem:[%s4381 + $0x84] sm:$0xf] %v4362
      %4396 = vst [vmem:[%s4381 + $0x94] sm:$0xf] %v4363
      %4397 = vst [vmem:[%s4381 + $0x98] sm:$0xf] %v4364
      %4398 = vst [vmem:[%s4381 + $0xa8] sm:$0xf] %v4365
      %4399 = vst [vmem:[%s4381 + $0xac] sm:$0xf] %v4366
      %4400 = vst [vmem:[%s4381 + $0xbc] sm:$0xf] %v4367
      %4401 = vst [vmem:[%s4381 + $0xc0] sm:$0xf] %v4368
      %4402 = vst [vmem:[%s4381 + $0xd0] sm:$0xf] %v4369
      %4403 = vst [vmem:[%s4381 + $0xd4] sm:$0xf] %v4370
      %4404 = vst [vmem:[%s4381 + $0xe4] sm:$0xf] %v4371
      %4405 = vst [vmem:[%s4381 + $0xe8] sm:$0xf] %v4372
      %4406 = vst [vmem:[%s4381 + $0xf8] sm:$0xf] %v4373
      %4407 = vst [vmem:[%s4381 + $0xfc] sm:$0xf] %v4374
      %4408 = vst [vmem:[%s4381 + $0x10c] sm:$0xf] %v4375
      %4409 = vst [vmem:[%s4381 + $0x110] sm:$0xf] %v4376
      %4410 = vst [vmem:[%s4381 + $0x120] sm:$0xf] %v4377
      %4411 = vst [vmem:[%s4381 + $0x124] sm:$0xf] %v4378
      %4412 = vst [vmem:[%s4381 + $0x134] sm:$0xf] %v4379
      %4413 = vst [vmem:[%s4381 + $0x138] sm:$0xf] %v4380
      %v4414 = vld [vmem:[#allocation2 + $0x4] sm:$0x8]
      %v4415 = vld [vmem:[#allocation2 + $0x8] sm:$0xf]
      %v4416 = vld [vmem:[#allocation2 + $0xc] sm:$0xf]
      %v4417 = vld [vmem:[#allocation2 + $0x18] sm:$0x8]
      %v4418 = vld [vmem:[#allocation2 + $0x1c] sm:$0xf]
      %v4419 = vld [vmem:[#allocation2 + $0x20] sm:$0xf]
      %v4420 = vld [vmem:[#allocation2 + $0x2c] sm:$0x8]
      %v4421 = vld [vmem:[#allocation2 + $0x30] sm:$0xf]
      %v4422 = vld [vmem:[#allocation2 + $0x34] sm:$0xf]
      %v4423 = vld [vmem:[#allocation2 + $0x40] sm:$0x8]
      %v4424 = vld [vmem:[#allocation2 + $0x44] sm:$0xf]
      %v4425 = vld [vmem:[#allocation2 + $0x48] sm:$0xf]
      %v4426 = vld [vmem:[#allocation2 + $0x54] sm:$0x8]
      %v4427 = vld [vmem:[#allocation2 + $0x58] sm:$0xf]
      %v4428 = vld [vmem:[#allocation2 + $0x5c] sm:$0xf]
      %v4429 = vld [vmem:[#allocation2 + $0x68] sm:$0x8]
      %v4430 = vld [vmem:[#allocation2 + $0x6c] sm:$0xf]
      %v4431 = vld [vmem:[#allocation2 + $0x70] sm:$0xf]
      %v4432 = vld [vmem:[#allocation2 + $0x7c] sm:$0x8]
      %v4433 = vld [vmem:[#allocation2 + $0x80] sm:$0xf]
      %v4434 = vld [vmem:[#allocation2 + $0x84] sm:$0xf]
      %v4435 = vld [vmem:[#allocation2 + $0x90] sm:$0x8]
      %v4436 = vld [vmem:[#allocation2 + $0x94] sm:$0xf]
      %v4437 = vld [vmem:[#allocation2 + $0x98] sm:$0xf]
      %v4438 = vld [vmem:[#allocation2 + $0xa4] sm:$0x8]
      %v4439 = vld [vmem:[#allocation2 + $0xa8] sm:$0xf]
      %v4440 = vld [vmem:[#allocation2 + $0xac] sm:$0xf]
      %v4441 = vld [vmem:[#allocation2 + $0xb8] sm:$0x8]
      %v4442 = vld [vmem:[#allocation2 + $0xbc] sm:$0xf]
      %v4443 = vld [vmem:[#allocation2 + $0xc0] sm:$0xf]
      %v4444 = vld [vmem:[#allocation2 + $0xcc] sm:$0x8]
      %v4445 = vld [vmem:[#allocation2 + $0xd0] sm:$0xf]
      %v4446 = vld [vmem:[#allocation2 + $0xd4] sm:$0xf]
      %v4447 = vld [vmem:[#allocation2 + $0xe0] sm:$0x8]
      %v4448 = vld [vmem:[#allocation2 + $0xe4] sm:$0xf]
      %v4449 = vld [vmem:[#allocation2 + $0xe8] sm:$0xf]
      %v4450 = vld [vmem:[#allocation2 + $0xf4] sm:$0x8]
      %v4451 = vld [vmem:[#allocation2 + $0xf8] sm:$0xf]
      %v4452 = vld [vmem:[#allocation2 + $0xfc] sm:$0xf]
      %v4453 = vld [vmem:[#allocation2 + $0x108] sm:$0x8]
      %v4454 = vld [vmem:[#allocation2 + $0x10c] sm:$0xf]
      %v4455 = vld [vmem:[#allocation2 + $0x110] sm:$0xf]
      %v4456 = vld [vmem:[#allocation2 + $0x11c] sm:$0x8]
      %v4457 = vld [vmem:[#allocation2 + $0x120] sm:$0xf]
      %v4458 = vld [vmem:[#allocation2 + $0x124] sm:$0xf]
      %v4459 = vld [vmem:[#allocation2 + $0x130] sm:$0x8]
      %v4460 = vld [vmem:[#allocation2 + $0x134] sm:$0xf]
      %v4461 = vld [vmem:[#allocation2 + $0x138] sm:$0xf]
      %vm4462 = vsmask.f32 256
      %vm4463 = vsmask.f32 4368
      %vm4464 = vmor %vm4462, %vm4463
      %v4466 = vshrl.u32 %v4414, 16
      %v4468 = vrot.slane %v4466, 7
      %v4469 = vrot.slane %v4468, 4
      %v4471 = vshrl.u32 %v4415, 16
      %v4473 = vrot.slane %v4471, 7
      %v4474 = vshll.u32 %v4415, 16
      %v4476 = vor.u32 %v4473, %v4474
      %v4477 = vsel %vm4464, %v4469, %v4476
      %v4478 = vrot.slane %v4473, 4
      %v4480 = vshrl.u32 %v4416, 16
      %v4482 = vrot.slane %v4480, 7
      %v4483 = vshll.u32 %v4416, 16
      %v4485 = vor.u32 %v4482, %v4483
      %v4486 = vsel %vm4464, %v4478, %v4485
      %v4488 = vshrl.u32 %v4417, 16
      %v4490 = vrot.slane %v4488, 7
      %v4491 = vrot.slane %v4490, 4
      %v4493 = vshrl.u32 %v4418, 16
      %v4495 = vrot.slane %v4493, 7
      %v4496 = vshll.u32 %v4418, 16
      %v4498 = vor.u32 %v4495, %v4496
      %v4499 = vsel %vm4464, %v4491, %v4498
      %v4500 = vrot.slane %v4495, 4
      %v4502 = vshrl.u32 %v4419, 16
      %v4504 = vrot.slane %v4502, 7
      %v4505 = vshll.u32 %v4419, 16
      %v4507 = vor.u32 %v4504, %v4505
      %v4508 = vsel %vm4464, %v4500, %v4507
      %v4510 = vshrl.u32 %v4420, 16
      %v4512 = vrot.slane %v4510, 7
      %v4513 = vrot.slane %v4512, 4
      %v4515 = vshrl.u32 %v4421, 16
      %v4517 = vrot.slane %v4515, 7
      %v4518 = vshll.u32 %v4421, 16
      %v4520 = vor.u32 %v4517, %v4518
      %v4521 = vsel %vm4464, %v4513, %v4520
      %v4522 = vrot.slane %v4517, 4
      %v4524 = vshrl.u32 %v4422, 16
      %v4526 = vrot.slane %v4524, 7
      %v4527 = vshll.u32 %v4422, 16
      %v4529 = vor.u32 %v4526, %v4527
      %v4530 = vsel %vm4464, %v4522, %v4529
      %v4532 = vshrl.u32 %v4423, 16
      %v4534 = vrot.slane %v4532, 7
      %v4535 = vrot.slane %v4534, 4
      %v4537 = vshrl.u32 %v4424, 16
      %v4539 = vrot.slane %v4537, 7
      %v4540 = vshll.u32 %v4424, 16
      %v4542 = vor.u32 %v4539, %v4540
      %v4543 = vsel %vm4464, %v4535, %v4542
      %v4544 = vrot.slane %v4539, 4
      %v4546 = vshrl.u32 %v4425, 16
      %v4548 = vrot.slane %v4546, 7
      %v4549 = vshll.u32 %v4425, 16
      %v4551 = vor.u32 %v4548, %v4549
      %v4552 = vsel %vm4464, %v4544, %v4551
      %v4554 = vshrl.u32 %v4426, 16
      %v4556 = vrot.slane %v4554, 7
      %v4557 = vrot.slane %v4556, 4
      %v4559 = vshrl.u32 %v4427, 16
      %v4561 = vrot.slane %v4559, 7
      %v4562 = vshll.u32 %v4427, 16
      %v4564 = vor.u32 %v4561, %v4562
      %v4565 = vsel %vm4464, %v4557, %v4564
      %v4566 = vrot.slane %v4561, 4
      %v4568 = vshrl.u32 %v4428, 16
      %v4570 = vrot.slane %v4568, 7
      %v4571 = vshll.u32 %v4428, 16
      %v4573 = vor.u32 %v4570, %v4571
      %v4574 = vsel %vm4464, %v4566, %v4573
      %v4576 = vshrl.u32 %v4429, 16
      %v4578 = vrot.slane %v4576, 7
      %v4579 = vrot.slane %v4578, 4
      %v4581 = vshrl.u32 %v4430, 16
      %v4583 = vrot.slane %v4581, 7
      %v4584 = vshll.u32 %v4430, 16
      %v4586 = vor.u32 %v4583, %v4584
      %v4587 = vsel %vm4464, %v4579, %v4586
      %v4588 = vrot.slane %v4583, 4
      %v4590 = vshrl.u32 %v4431, 16
      %v4592 = vrot.slane %v4590, 7
      %v4593 = vshll.u32 %v4431, 16
      %v4595 = vor.u32 %v4592, %v4593
      %v4596 = vsel %vm4464, %v4588, %v4595
      %v4598 = vshrl.u32 %v4432, 16
      %v4600 = vrot.slane %v4598, 7
      %v4601 = vrot.slane %v4600, 4
      %v4603 = vshrl.u32 %v4433, 16
      %v4605 = vrot.slane %v4603, 7
      %v4606 = vshll.u32 %v4433, 16
      %v4608 = vor.u32 %v4605, %v4606
      %v4609 = vsel %vm4464, %v4601, %v4608
      %v4610 = vrot.slane %v4605, 4
      %v4612 = vshrl.u32 %v4434, 16
      %v4614 = vrot.slane %v4612, 7
      %v4615 = vshll.u32 %v4434, 16
      %v4617 = vor.u32 %v4614, %v4615
      %v4618 = vsel %vm4464, %v4610, %v4617
      %v4620 = vshrl.u32 %v4435, 16
      %v4622 = vrot.slane %v4620, 7
      %v4623 = vrot.slane %v4622, 4
      %v4625 = vshrl.u32 %v4436, 16
      %v4627 = vrot.slane %v4625, 7
      %v4628 = vshll.u32 %v4436, 16
      %v4630 = vor.u32 %v4627, %v4628
      %v4631 = vsel %vm4464, %v4623, %v4630
      %v4632 = vrot.slane %v4627, 4
      %v4634 = vshrl.u32 %v4437, 16
      %v4636 = vrot.slane %v4634, 7
      %v4637 = vshll.u32 %v4437, 16
      %v4639 = vor.u32 %v4636, %v4637
      %v4640 = vsel %vm4464, %v4632, %v4639
      %v4642 = vshrl.u32 %v4438, 16
      %v4644 = vrot.slane %v4642, 7
      %v4645 = vrot.slane %v4644, 4
      %v4647 = vshrl.u32 %v4439, 16
      %v4649 = vrot.slane %v4647, 7
      %v4650 = vshll.u32 %v4439, 16
      %v4652 = vor.u32 %v4649, %v4650
      %v4653 = vsel %vm4464, %v4645, %v4652
      %v4654 = vrot.slane %v4649, 4
      %v4656 = vshrl.u32 %v4440, 16
      %v4658 = vrot.slane %v4656, 7
      %v4659 = vshll.u32 %v4440, 16
      %v4661 = vor.u32 %v4658, %v4659
      %v4662 = vsel %vm4464, %v4654, %v4661
      %v4664 = vshrl.u32 %v4441, 16
      %v4666 = vrot.slane %v4664, 7
      %v4667 = vrot.slane %v4666, 4
      %v4669 = vshrl.u32 %v4442, 16
      %v4671 = vrot.slane %v4669, 7
      %v4672 = vshll.u32 %v4442, 16
      %v4674 = vor.u32 %v4671, %v4672
      %v4675 = vsel %vm4464, %v4667, %v4674
      %v4676 = vrot.slane %v4671, 4
      %v4678 = vshrl.u32 %v4443, 16
      %v4680 = vrot.slane %v4678, 7
      %v4681 = vshll.u32 %v4443, 16
      %v4683 = vor.u32 %v4680, %v4681
      %v4684 = vsel %vm4464, %v4676, %v4683
      %v4686 = vshrl.u32 %v4444, 16
      %v4688 = vrot.slane %v4686, 7
      %v4689 = vrot.slane %v4688, 4
      %v4691 = vshrl.u32 %v4445, 16
      %v4693 = vrot.slane %v4691, 7
      %v4694 = vshll.u32 %v4445, 16
      %v4696 = vor.u32 %v4693, %v4694
      %v4697 = vsel %vm4464, %v4689, %v4696
      %v4698 = vrot.slane %v4693, 4
      %v4700 = vshrl.u32 %v4446, 16
      %v4702 = vrot.slane %v4700, 7
      %v4703 = vshll.u32 %v4446, 16
      %v4705 = vor.u32 %v4702, %v4703
      %v4706 = vsel %vm4464, %v4698, %v4705
      %v4708 = vshrl.u32 %v4447, 16
      %v4710 = vrot.slane %v4708, 7
      %v4711 = vrot.slane %v4710, 4
      %v4713 = vshrl.u32 %v4448, 16
      %v4715 = vrot.slane %v4713, 7
      %v4716 = vshll.u32 %v4448, 16
      %v4718 = vor.u32 %v4715, %v4716
      %v4719 = vsel %vm4464, %v4711, %v4718
      %v4720 = vrot.slane %v4715, 4
      %v4722 = vshrl.u32 %v4449, 16
      %v4724 = vrot.slane %v4722, 7
      %v4725 = vshll.u32 %v4449, 16
      %v4727 = vor.u32 %v4724, %v4725
      %v4728 = vsel %vm4464, %v4720, %v4727
      %v4730 = vshrl.u32 %v4450, 16
      %v4732 = vrot.slane %v4730, 7
      %v4733 = vrot.slane %v4732, 4
      %v4735 = vshrl.u32 %v4451, 16
      %v4737 = vrot.slane %v4735, 7
      %v4738 = vshll.u32 %v4451, 16
      %v4740 = vor.u32 %v4737, %v4738
      %v4741 = vsel %vm4464, %v4733, %v4740
      %v4742 = vrot.slane %v4737, 4
      %v4744 = vshrl.u32 %v4452, 16
      %v4746 = vrot.slane %v4744, 7
      %v4747 = vshll.u32 %v4452, 16
      %v4749 = vor.u32 %v4746, %v4747
      %v4750 = vsel %vm4464, %v4742, %v4749
      %v4752 = vshrl.u32 %v4453, 16
      %v4754 = vrot.slane %v4752, 7
      %v4755 = vrot.slane %v4754, 4
      %v4757 = vshrl.u32 %v4454, 16
      %v4759 = vrot.slane %v4757, 7
      %v4760 = vshll.u32 %v4454, 16
      %v4762 = vor.u32 %v4759, %v4760
      %v4763 = vsel %vm4464, %v4755, %v4762
      %v4764 = vrot.slane %v4759, 4
      %v4766 = vshrl.u32 %v4455, 16
      %v4768 = vrot.slane %v4766, 7
      %v4769 = vshll.u32 %v4455, 16
      %v4771 = vor.u32 %v4768, %v4769
      %v4772 = vsel %vm4464, %v4764, %v4771
      %v4774 = vshrl.u32 %v4456, 16
      %v4776 = vrot.slane %v4774, 7
      %v4777 = vrot.slane %v4776, 4
      %v4779 = vshrl.u32 %v4457, 16
      %v4781 = vrot.slane %v4779, 7
      %v4782 = vshll.u32 %v4457, 16
      %v4784 = vor.u32 %v4781, %v4782
      %v4785 = vsel %vm4464, %v4777, %v4784
      %v4786 = vrot.slane %v4781, 4
      %v4788 = vshrl.u32 %v4458, 16
      %v4790 = vrot.slane %v4788, 7
      %v4791 = vshll.u32 %v4458, 16
      %v4793 = vor.u32 %v4790, %v4791
      %v4794 = vsel %vm4464, %v4786, %v4793
      %v4796 = vshrl.u32 %v4459, 16
      %v4798 = vrot.slane %v4796, 7
      %v4799 = vrot.slane %v4798, 4
      %v4801 = vshrl.u32 %v4460, 16
      %v4803 = vrot.slane %v4801, 7
      %v4804 = vshll.u32 %v4460, 16
      %v4806 = vor.u32 %v4803, %v4804
      %v4807 = vsel %vm4464, %v4799, %v4806
      %v4808 = vrot.slane %v4803, 4
      %v4810 = vshrl.u32 %v4461, 16
      %v4812 = vrot.slane %v4810, 7
      %v4813 = vshll.u32 %v4461, 16
      %v4815 = vor.u32 %v4812, %v4813
      %v4816 = vsel %vm4464, %v4808, %v4815
      %v4817 = vld [vmem:[%s3] sm:$0xf]
      %v4818 = vld [vmem:[%s3 + $0x4] sm:$0xf]
      %v4819 = vld [vmem:[%s3 + $0x8] sm:$0xf]
      %v4820 = vld [vmem:[%s3 + $0xc] sm:$0xf]
      %v4821 = vld [vmem:[%s3 + $0x10] sm:$0xf]
      %v4822 = vld [vmem:[%s3 + $0x14] sm:$0xf]
      %v4823 = vld [vmem:[%s3 + $0x18] sm:$0xf]
      %v4824 = vld [vmem:[%s3 + $0x1c] sm:$0xf]
      %v4825 = vld [vmem:[%s3 + $0x20] sm:$0xf]
      %v4826 = vld [vmem:[%s3 + $0x24] sm:$0xf]
      %v4827 = vld [vmem:[%s3 + $0x28] sm:$0xf]
      %v4828 = vld [vmem:[%s3 + $0x2c] sm:$0xf]
      %v4829 = vld [vmem:[%s3 + $0x30] sm:$0xf]
      %v4830 = vld [vmem:[%s3 + $0x34] sm:$0xf]
      %v4831 = vld [vmem:[%s3 + $0x38] sm:$0xf]
      %v4832 = vld [vmem:[%s3 + $0x3c] sm:$0xf]
      %s4833 = scalar_lea.vmem %s3, 64
      %v4834 = vld [vmem:[%s4833] sm:$0xf]
      %v4835 = vld [vmem:[%s4833 + $0x4] sm:$0xf]
      %v4836 = vld [vmem:[%s4833 + $0x8] sm:$0xf]
      %v4837 = vld [vmem:[%s4833 + $0xc] sm:$0xf]
      %v4838 = vld [vmem:[%s4833 + $0x10] sm:$0xf]
      %v4839 = vld [vmem:[%s4833 + $0x14] sm:$0xf]
      %v4840 = vld [vmem:[%s4833 + $0x18] sm:$0xf]
      %v4841 = vld [vmem:[%s4833 + $0x1c] sm:$0xf]
      %v4842 = vld [vmem:[%s4833 + $0x20] sm:$0xf]
      %v4843 = vld [vmem:[%s4833 + $0x24] sm:$0xf]
      %v4844 = vld [vmem:[%s4833 + $0x28] sm:$0xf]
      %v4845 = vld [vmem:[%s4833 + $0x2c] sm:$0xf]
      %v4846 = vld [vmem:[%s4833 + $0x30] sm:$0xf]
      %v4847 = vld [vmem:[%s4833 + $0x34] sm:$0xf]
      %v4848 = vld [vmem:[%s4833 + $0x38] sm:$0xf]
      %v4849 = vld [vmem:[%s4833 + $0x3c] sm:$0xf]
      %v4882 = vunpack.c.l.b16 %v4415
      %v4883 = vunpack.c.l.b16 %v4416
      %v4884 = vunpack.c.l.b16 %v4418
      %v4885 = vunpack.c.l.b16 %v4419
      %v4886 = vunpack.c.l.b16 %v4421
      %v4887 = vunpack.c.l.b16 %v4422
      %v4888 = vunpack.c.l.b16 %v4424
      %v4889 = vunpack.c.l.b16 %v4425
      %v4890 = vunpack.c.l.b16 %v4427
      %v4891 = vunpack.c.l.b16 %v4428
      %v4892 = vunpack.c.l.b16 %v4430
      %v4893 = vunpack.c.l.b16 %v4431
      %v4894 = vunpack.c.l.b16 %v4433
      %v4895 = vunpack.c.l.b16 %v4434
      %v4896 = vunpack.c.l.b16 %v4436
      %v4897 = vunpack.c.l.b16 %v4437
      %v4898 = vunpack.c.l.b16 %v4439
      %v4899 = vunpack.c.l.b16 %v4440
      %v4900 = vunpack.c.l.b16 %v4442
      %v4901 = vunpack.c.l.b16 %v4443
      %v4902 = vunpack.c.l.b16 %v4445
      %v4903 = vunpack.c.l.b16 %v4446
      %v4904 = vunpack.c.l.b16 %v4448
      %v4905 = vunpack.c.l.b16 %v4449
      %v4906 = vunpack.c.l.b16 %v4451
      %v4907 = vunpack.c.l.b16 %v4452
      %v4908 = vunpack.c.l.b16 %v4454
      %v4909 = vunpack.c.l.b16 %v4455
      %v4910 = vunpack.c.l.b16 %v4457
      %v4911 = vunpack.c.l.b16 %v4458
      %v4912 = vunpack.c.l.b16 %v4460
      %v4913 = vunpack.c.l.b16 %v4461
      %v4914 = vpack.c.b16 %v4883, %v4882
      %v4915 = vpack.c.b16 %v4885, %v4884
      %v4916 = vpack.c.b16 %v4887, %v4886
      %v4917 = vpack.c.b16 %v4889, %v4888
      %v4918 = vpack.c.b16 %v4891, %v4890
      %v4919 = vpack.c.b16 %v4893, %v4892
      %v4920 = vpack.c.b16 %v4895, %v4894
      %v4921 = vpack.c.b16 %v4897, %v4896
      %v4922 = vpack.c.b16 %v4899, %v4898
      %v4923 = vpack.c.b16 %v4901, %v4900
      %v4924 = vpack.c.b16 %v4903, %v4902
      %v4925 = vpack.c.b16 %v4905, %v4904
      %v4926 = vpack.c.b16 %v4907, %v4906
      %v4927 = vpack.c.b16 %v4909, %v4908
      %v4928 = vpack.c.b16 %v4911, %v4910
      %v4929 = vpack.c.b16 %v4913, %v4912
      %v4962 = vunpack.c.l.b16 %v4834
      %v4963 = vunpack.c.l.b16 %v4835
      %v4964 = vunpack.c.l.b16 %v4836
      %v4965 = vunpack.c.l.b16 %v4837
      %v4966 = vunpack.c.l.b16 %v4838
      %v4967 = vunpack.c.l.b16 %v4839
      %v4968 = vunpack.c.l.b16 %v4840
      %v4969 = vunpack.c.l.b16 %v4841
      %v4970 = vunpack.c.l.b16 %v4842
      %v4971 = vunpack.c.l.b16 %v4843
      %v4972 = vunpack.c.l.b16 %v4844
      %v4973 = vunpack.c.l.b16 %v4845
      %v4974 = vunpack.c.l.b16 %v4846
      %v4975 = vunpack.c.l.b16 %v4847
      %v4976 = vunpack.c.l.b16 %v4848
      %v4977 = vunpack.c.l.b16 %v4849
      %v4978 = vpack.c.b16 %v4963, %v4962
      %v4979 = vpack.c.b16 %v4965, %v4964
      %v4980 = vpack.c.b16 %v4967, %v4966
      %v4981 = vpack.c.b16 %v4969, %v4968
      %v4982 = vpack.c.b16 %v4971, %v4970
      %v4983 = vpack.c.b16 %v4973, %v4972
      %v4984 = vpack.c.b16 %v4975, %v4974
      %v4985 = vpack.c.b16 %v4977, %v4976
      %4994 = vmatpush.bf16.msra.mxu0 %v4985
      %4995 = vmatpush.bf16.msra.mxu0 %v4984
      %4996 = vmatpush.bf16.msra.mxu0 %v4983
      %4997 = vmatpush.bf16.msra.mxu0 %v4982
      %4998 = vmatpush.bf16.msra.mxu0 %v4981
      %4999 = vmatpush.bf16.msra.mxu0 %v4980
      %5000 = vmatpush.bf16.msra.mxu0 %v4979
      %5001 = vmatpush.bf16.msra.mxu0 %v4978
      %5002 = vmatmul.bf16.gmra.mxu0 %v4914
      %v5003 = vpop.f32.mrf.mxu0
      %v5004 = vadd.f32 0.0, %v5003
      %v5005 = vpop.f32.mrf.mxu0
      %v5006 = vadd.f32 0.0, %v5005
      %5007 = vmatmul.bf16.gmra.mxu0 %v4915
      %v5008 = vpop.f32.mrf.mxu0
      %v5009 = vadd.f32 0.0, %v5008
      %v5010 = vpop.f32.mrf.mxu0
      %v5011 = vadd.f32 0.0, %v5010
      %5012 = vmatmul.bf16.gmra.mxu0 %v4916
      %v5013 = vpop.f32.mrf.mxu0
      %v5014 = vadd.f32 0.0, %v5013
      %v5015 = vpop.f32.mrf.mxu0
      %v5016 = vadd.f32 0.0, %v5015
      %5017 = vmatmul.bf16.gmra.mxu0 %v4917
      %v5018 = vpop.f32.mrf.mxu0
      %v5019 = vadd.f32 0.0, %v5018
      %v5020 = vpop.f32.mrf.mxu0
      %v5021 = vadd.f32 0.0, %v5020
      %5022 = vmatmul.bf16.gmra.mxu0 %v4918
      %v5023 = vpop.f32.mrf.mxu0
      %v5024 = vadd.f32 0.0, %v5023
      %v5025 = vpop.f32.mrf.mxu0
      %v5026 = vadd.f32 0.0, %v5025
      %5027 = vmatmul.bf16.gmra.mxu0 %v4919
      %v5028 = vpop.f32.mrf.mxu0
      %v5029 = vadd.f32 0.0, %v5028
      %v5030 = vpop.f32.mrf.mxu0
      %v5031 = vadd.f32 0.0, %v5030
      %5032 = vmatmul.bf16.gmra.mxu0 %v4920
      %v5033 = vpop.f32.mrf.mxu0
      %v5034 = vadd.f32 0.0, %v5033
      %v5035 = vpop.f32.mrf.mxu0
      %v5036 = vadd.f32 0.0, %v5035
      %5037 = vmatmul.bf16.gmra.mxu0 %v4921
      %v5038 = vpop.f32.mrf.mxu0
      %v5039 = vadd.f32 0.0, %v5038
      %v5040 = vpop.f32.mrf.mxu0
      %v5041 = vadd.f32 0.0, %v5040
      %5042 = vmatmul.bf16.gmra.mxu0 %v4922
      %v5043 = vpop.f32.mrf.mxu0
      %v5044 = vadd.f32 0.0, %v5043
      %v5045 = vpop.f32.mrf.mxu0
      %v5046 = vadd.f32 0.0, %v5045
      %5047 = vmatmul.bf16.gmra.mxu0 %v4923
      %v5048 = vpop.f32.mrf.mxu0
      %v5049 = vadd.f32 0.0, %v5048
      %v5050 = vpop.f32.mrf.mxu0
      %v5051 = vadd.f32 0.0, %v5050
      %5052 = vmatmul.bf16.gmra.mxu0 %v4924
      %v5053 = vpop.f32.mrf.mxu0
      %v5054 = vadd.f32 0.0, %v5053
      %v5055 = vpop.f32.mrf.mxu0
      %v5056 = vadd.f32 0.0, %v5055
      %5057 = vmatmul.bf16.gmra.mxu0 %v4925
      %v5058 = vpop.f32.mrf.mxu0
      %v5059 = vadd.f32 0.0, %v5058
      %v5060 = vpop.f32.mrf.mxu0
      %v5061 = vadd.f32 0.0, %v5060
      %5062 = vmatmul.bf16.gmra.mxu0 %v4926
      %v5063 = vpop.f32.mrf.mxu0
      %v5064 = vadd.f32 0.0, %v5063
      %v5065 = vpop.f32.mrf.mxu0
      %v5066 = vadd.f32 0.0, %v5065
      %5067 = vmatmul.bf16.gmra.mxu0 %v4927
      %v5068 = vpop.f32.mrf.mxu0
      %v5069 = vadd.f32 0.0, %v5068
      %v5070 = vpop.f32.mrf.mxu0
      %v5071 = vadd.f32 0.0, %v5070
      %5072 = vmatmul.bf16.gmra.mxu0 %v4928
      %v5073 = vpop.f32.mrf.mxu0
      %v5074 = vadd.f32 0.0, %v5073
      %v5075 = vpop.f32.mrf.mxu0
      %v5076 = vadd.f32 0.0, %v5075
      %5077 = vmatmul.bf16.gmra.mxu0 %v4929
      %v5078 = vpop.f32.mrf.mxu0
      %v5079 = vadd.f32 0.0, %v5078
      %v5080 = vpop.f32.mrf.mxu0
      %v5081 = vadd.f32 0.0, %v5080
      %5082 = vdwg.mxu0
      %v5083 = vunpack.c.l.b16 %v4477
      %v5084 = vunpack.c.l.b16 %v4486
      %v5085 = vunpack.c.l.b16 %v4499
      %v5086 = vunpack.c.l.b16 %v4508
      %v5087 = vunpack.c.l.b16 %v4521
      %v5088 = vunpack.c.l.b16 %v4530
      %v5089 = vunpack.c.l.b16 %v4543
      %v5090 = vunpack.c.l.b16 %v4552
      %v5091 = vunpack.c.l.b16 %v4565
      %v5092 = vunpack.c.l.b16 %v4574
      %v5093 = vunpack.c.l.b16 %v4587
      %v5094 = vunpack.c.l.b16 %v4596
      %v5095 = vunpack.c.l.b16 %v4609
      %v5096 = vunpack.c.l.b16 %v4618
      %v5097 = vunpack.c.l.b16 %v4631
      %v5098 = vunpack.c.l.b16 %v4640
      %v5099 = vunpack.c.l.b16 %v4653
      %v5100 = vunpack.c.l.b16 %v4662
      %v5101 = vunpack.c.l.b16 %v4675
      %v5102 = vunpack.c.l.b16 %v4684
      %v5103 = vunpack.c.l.b16 %v4697
      %v5104 = vunpack.c.l.b16 %v4706
      %v5105 = vunpack.c.l.b16 %v4719
      %v5106 = vunpack.c.l.b16 %v4728
      %v5107 = vunpack.c.l.b16 %v4741
      %v5108 = vunpack.c.l.b16 %v4750
      %v5109 = vunpack.c.l.b16 %v4763
      %v5110 = vunpack.c.l.b16 %v4772
      %v5111 = vunpack.c.l.b16 %v4785
      %v5112 = vunpack.c.l.b16 %v4794
      %v5113 = vunpack.c.l.b16 %v4807
      %v5114 = vunpack.c.l.b16 %v4816
      %v5115 = vpack.c.b16 %v5084, %v5083
      %v5116 = vpack.c.b16 %v5086, %v5085
      %v5117 = vpack.c.b16 %v5088, %v5087
      %v5118 = vpack.c.b16 %v5090, %v5089
      %v5119 = vpack.c.b16 %v5092, %v5091
      %v5120 = vpack.c.b16 %v5094, %v5093
      %v5121 = vpack.c.b16 %v5096, %v5095
      %v5122 = vpack.c.b16 %v5098, %v5097
      %v5123 = vpack.c.b16 %v5100, %v5099
      %v5124 = vpack.c.b16 %v5102, %v5101
      %v5125 = vpack.c.b16 %v5104, %v5103
      %v5126 = vpack.c.b16 %v5106, %v5105
      %v5127 = vpack.c.b16 %v5108, %v5107
      %v5128 = vpack.c.b16 %v5110, %v5109
      %v5129 = vpack.c.b16 %v5112, %v5111
      %v5130 = vpack.c.b16 %v5114, %v5113
      %v5163 = vunpack.c.l.b16 %v4817
      %v5164 = vunpack.c.l.b16 %v4818
      %v5165 = vunpack.c.l.b16 %v4819
      %v5166 = vunpack.c.l.b16 %v4820
      %v5167 = vunpack.c.l.b16 %v4821
      %v5168 = vunpack.c.l.b16 %v4822
      %v5169 = vunpack.c.l.b16 %v4823
      %v5170 = vunpack.c.l.b16 %v4824
      %v5171 = vunpack.c.l.b16 %v4825
      %v5172 = vunpack.c.l.b16 %v4826
      %v5173 = vunpack.c.l.b16 %v4827
      %v5174 = vunpack.c.l.b16 %v4828
      %v5175 = vunpack.c.l.b16 %v4829
      %v5176 = vunpack.c.l.b16 %v4830
      %v5177 = vunpack.c.l.b16 %v4831
      %v5178 = vunpack.c.l.b16 %v4832
      %v5179 = vpack.c.b16 %v5164, %v5163
      %v5180 = vpack.c.b16 %v5166, %v5165
      %v5181 = vpack.c.b16 %v5168, %v5167
      %v5182 = vpack.c.b16 %v5170, %v5169
      %v5183 = vpack.c.b16 %v5172, %v5171
      %v5184 = vpack.c.b16 %v5174, %v5173
      %v5185 = vpack.c.b16 %v5176, %v5175
      %v5186 = vpack.c.b16 %v5178, %v5177
      %5195 = vmatpush.bf16.msra.mxu0 %v5186
      %5196 = vmatpush.bf16.msra.mxu0 %v5185
      %5197 = vmatpush.bf16.msra.mxu0 %v5184
      %5198 = vmatpush.bf16.msra.mxu0 %v5183
      %5199 = vmatpush.bf16.msra.mxu0 %v5182
      %5200 = vmatpush.bf16.msra.mxu0 %v5181
      %5201 = vmatpush.bf16.msra.mxu0 %v5180
      %5202 = vmatpush.bf16.msra.mxu0 %v5179
      %5203 = vmatmul.bf16.gmra.mxu0 %v5115
      %v5204 = vpop.f32.mrf.mxu0
      %v5205 = vadd.f32 %v5004, %v5204
      %v5206 = vpop.f32.mrf.mxu0
      %v5207 = vadd.f32 %v5006, %v5206
      %5208 = vmatmul.bf16.gmra.mxu0 %v5116
      %v5209 = vpop.f32.mrf.mxu0
      %v5210 = vadd.f32 %v5009, %v5209
      %v5211 = vpop.f32.mrf.mxu0
      %v5212 = vadd.f32 %v5011, %v5211
      %5213 = vmatmul.bf16.gmra.mxu0 %v5117
      %v5214 = vpop.f32.mrf.mxu0
      %v5215 = vadd.f32 %v5014, %v5214
      %v5216 = vpop.f32.mrf.mxu0
      %v5217 = vadd.f32 %v5016, %v5216
      %5218 = vmatmul.bf16.gmra.mxu0 %v5118
      %v5219 = vpop.f32.mrf.mxu0
      %v5220 = vadd.f32 %v5019, %v5219
      %v5221 = vpop.f32.mrf.mxu0
      %v5222 = vadd.f32 %v5021, %v5221
      %5223 = vmatmul.bf16.gmra.mxu0 %v5119
      %v5224 = vpop.f32.mrf.mxu0
      %v5225 = vadd.f32 %v5024, %v5224
      %v5226 = vpop.f32.mrf.mxu0
      %v5227 = vadd.f32 %v5026, %v5226
      %5228 = vmatmul.bf16.gmra.mxu0 %v5120
      %v5229 = vpop.f32.mrf.mxu0
      %v5230 = vadd.f32 %v5029, %v5229
      %v5231 = vpop.f32.mrf.mxu0
      %v5232 = vadd.f32 %v5031, %v5231
      %5233 = vmatmul.bf16.gmra.mxu0 %v5121
      %v5234 = vpop.f32.mrf.mxu0
      %v5235 = vadd.f32 %v5034, %v5234
      %v5236 = vpop.f32.mrf.mxu0
      %v5237 = vadd.f32 %v5036, %v5236
      %5238 = vmatmul.bf16.gmra.mxu0 %v5122
      %v5239 = vpop.f32.mrf.mxu0
      %v5240 = vadd.f32 %v5039, %v5239
      %v5241 = vpop.f32.mrf.mxu0
      %v5242 = vadd.f32 %v5041, %v5241
      %5243 = vmatmul.bf16.gmra.mxu0 %v5123
      %v5244 = vpop.f32.mrf.mxu0
      %v5245 = vadd.f32 %v5044, %v5244
      %v5246 = vpop.f32.mrf.mxu0
      %v5247 = vadd.f32 %v5046, %v5246
      %5248 = vmatmul.bf16.gmra.mxu0 %v5124
      %v5249 = vpop.f32.mrf.mxu0
      %v5250 = vadd.f32 %v5049, %v5249
      %v5251 = vpop.f32.mrf.mxu0
      %v5252 = vadd.f32 %v5051, %v5251
      %5253 = vmatmul.bf16.gmra.mxu0 %v5125
      %v5254 = vpop.f32.mrf.mxu0
      %v5255 = vadd.f32 %v5054, %v5254
      %v5256 = vpop.f32.mrf.mxu0
      %v5257 = vadd.f32 %v5056, %v5256
      %5258 = vmatmul.bf16.gmra.mxu0 %v5126
      %v5259 = vpop.f32.mrf.mxu0
      %v5260 = vadd.f32 %v5059, %v5259
      %v5261 = vpop.f32.mrf.mxu0
      %v5262 = vadd.f32 %v5061, %v5261
      %5263 = vmatmul.bf16.gmra.mxu0 %v5127
      %v5264 = vpop.f32.mrf.mxu0
      %v5265 = vadd.f32 %v5064, %v5264
      %v5266 = vpop.f32.mrf.mxu0
      %v5267 = vadd.f32 %v5066, %v5266
      %5268 = vmatmul.bf16.gmra.mxu0 %v5128
      %v5269 = vpop.f32.mrf.mxu0
      %v5270 = vadd.f32 %v5069, %v5269
      %v5271 = vpop.f32.mrf.mxu0
      %v5272 = vadd.f32 %v5071, %v5271
      %5273 = vmatmul.bf16.gmra.mxu0 %v5129
      %v5274 = vpop.f32.mrf.mxu0
      %v5275 = vadd.f32 %v5074, %v5274
      %v5276 = vpop.f32.mrf.mxu0
      %v5277 = vadd.f32 %v5076, %v5276
      %5278 = vmatmul.bf16.gmra.mxu0 %v5130
      %v5279 = vpop.f32.mrf.mxu0
      %v5280 = vadd.f32 %v5079, %v5279
      %v5281 = vpop.f32.mrf.mxu0
      %v5282 = vadd.f32 %v5081, %v5281
      %5283 = vdwg.mxu0
      %v5284 = vld [vmem:[#allocation2 + $0x8] sm:$0xf]
      %v5285 = vld [vmem:[#allocation2 + $0xc] sm:$0xf]
      %v5286 = vld [vmem:[#allocation2 + $0x10] sm:$0x1]
      %v5287 = vld [vmem:[#allocation2 + $0x1c] sm:$0xf]
      %v5288 = vld [vmem:[#allocation2 + $0x20] sm:$0xf]
      %v5289 = vld [vmem:[#allocation2 + $0x24] sm:$0x1]
      %v5290 = vld [vmem:[#allocation2 + $0x30] sm:$0xf]
      %v5291 = vld [vmem:[#allocation2 + $0x34] sm:$0xf]
      %v5292 = vld [vmem:[#allocation2 + $0x38] sm:$0x1]
      %v5293 = vld [vmem:[#allocation2 + $0x44] sm:$0xf]
      %v5294 = vld [vmem:[#allocation2 + $0x48] sm:$0xf]
      %v5295 = vld [vmem:[#allocation2 + $0x4c] sm:$0x1]
      %v5296 = vld [vmem:[#allocation2 + $0x58] sm:$0xf]
      %v5297 = vld [vmem:[#allocation2 + $0x5c] sm:$0xf]
      %v5298 = vld [vmem:[#allocation2 + $0x60] sm:$0x1]
      %v5299 = vld [vmem:[#allocation2 + $0x6c] sm:$0xf]
      %v5300 = vld [vmem:[#allocation2 + $0x70] sm:$0xf]
      %v5301 = vld [vmem:[#allocation2 + $0x74] sm:$0x1]
      %v5302 = vld [vmem:[#allocation2 + $0x80] sm:$0xf]
      %v5303 = vld [vmem:[#allocation2 + $0x84] sm:$0xf]
      %v5304 = vld [vmem:[#allocation2 + $0x88] sm:$0x1]
      %v5305 = vld [vmem:[#allocation2 + $0x94] sm:$0xf]
      %v5306 = vld [vmem:[#allocation2 + $0x98] sm:$0xf]
      %v5307 = vld [vmem:[#allocation2 + $0x9c] sm:$0x1]
      %v5308 = vld [vmem:[#allocation2 + $0xa8] sm:$0xf]
      %v5309 = vld [vmem:[#allocation2 + $0xac] sm:$0xf]
      %v5310 = vld [vmem:[#allocation2 + $0xb0] sm:$0x1]
      %v5311 = vld [vmem:[#allocation2 + $0xbc] sm:$0xf]
      %v5312 = vld [vmem:[#allocation2 + $0xc0] sm:$0xf]
      %v5313 = vld [vmem:[#allocation2 + $0xc4] sm:$0x1]
      %v5314 = vld [vmem:[#allocation2 + $0xd0] sm:$0xf]
      %v5315 = vld [vmem:[#allocation2 + $0xd4] sm:$0xf]
      %v5316 = vld [vmem:[#allocation2 + $0xd8] sm:$0x1]
      %v5317 = vld [vmem:[#allocation2 + $0xe4] sm:$0xf]
      %v5318 = vld [vmem:[#allocation2 + $0xe8] sm:$0xf]
      %v5319 = vld [vmem:[#allocation2 + $0xec] sm:$0x1]
      %v5320 = vld [vmem:[#allocation2 + $0xf8] sm:$0xf]
      %v5321 = vld [vmem:[#allocation2 + $0xfc] sm:$0xf]
      %v5322 = vld [vmem:[#allocation2 + $0x100] sm:$0x1]
      %v5323 = vld [vmem:[#allocation2 + $0x10c] sm:$0xf]
      %v5324 = vld [vmem:[#allocation2 + $0x110] sm:$0xf]
      %v5325 = vld [vmem:[#allocation2 + $0x114] sm:$0x1]
      %v5326 = vld [vmem:[#allocation2 + $0x120] sm:$0xf]
      %v5327 = vld [vmem:[#allocation2 + $0x124] sm:$0xf]
      %v5328 = vld [vmem:[#allocation2 + $0x128] sm:$0x1]
      %v5329 = vld [vmem:[#allocation2 + $0x134] sm:$0xf]
      %v5330 = vld [vmem:[#allocation2 + $0x138] sm:$0xf]
      %v5331 = vld [vmem:[#allocation2 + $0x13c] sm:$0x1]
      %v5333 = vshrl.u32 %v5284, 16
      %v5335 = vrot.slane %v5333, 4
      %v5336 = vshll.u32 %v5284, 16
      %v5338 = vrot.slane %v5336, 5
      %v5339 = vor.u32 %v5335, %v5338
      %v5340 = vrot.slane %v5339, 4
      %v5342 = vshll.u32 %v5285, 16
      %v5344 = vrot.slane %v5342, 5
      %v5345 = vsel %vm331, %v5340, %v5344
      %v5346 = vshrl.u32 %v5285, 16
      %v5348 = vrot.slane %v5346, 4
      %v5349 = vor.u32 %v5348, %v5344
      %v5350 = vrot.slane %v5349, 4
      %v5352 = vshll.u32 %v5286, 16
      %v5354 = vrot.slane %v5352, 5
      %v5355 = vsel %vm331, %v5350, %v5354
      %v5357 = vshrl.u32 %v5287, 16
      %v5359 = vrot.slane %v5357, 4
      %v5360 = vshll.u32 %v5287, 16
      %v5362 = vrot.slane %v5360, 5
      %v5363 = vor.u32 %v5359, %v5362
      %v5364 = vrot.slane %v5363, 4
      %v5366 = vshll.u32 %v5288, 16
      %v5368 = vrot.slane %v5366, 5
      %v5369 = vsel %vm331, %v5364, %v5368
      %v5370 = vshrl.u32 %v5288, 16
      %v5372 = vrot.slane %v5370, 4
      %v5373 = vor.u32 %v5372, %v5368
      %v5374 = vrot.slane %v5373, 4
      %v5376 = vshll.u32 %v5289, 16
      %v5378 = vrot.slane %v5376, 5
      %v5379 = vsel %vm331, %v5374, %v5378
      %v5381 = vshrl.u32 %v5290, 16
      %v5383 = vrot.slane %v5381, 4
      %v5384 = vshll.u32 %v5290, 16
      %v5386 = vrot.slane %v5384, 5
      %v5387 = vor.u32 %v5383, %v5386
      %v5388 = vrot.slane %v5387, 4
      %v5390 = vshll.u32 %v5291, 16
      %v5392 = vrot.slane %v5390, 5
      %v5393 = vsel %vm331, %v5388, %v5392
      %v5394 = vshrl.u32 %v5291, 16
      %v5396 = vrot.slane %v5394, 4
      %v5397 = vor.u32 %v5396, %v5392
      %v5398 = vrot.slane %v5397, 4
      %v5400 = vshll.u32 %v5292, 16
      %v5402 = vrot.slane %v5400, 5
      %v5403 = vsel %vm331, %v5398, %v5402
      %v5405 = vshrl.u32 %v5293, 16
      %v5407 = vrot.slane %v5405, 4
      %v5408 = vshll.u32 %v5293, 16
      %v5410 = vrot.slane %v5408, 5
      %v5411 = vor.u32 %v5407, %v5410
      %v5412 = vrot.slane %v5411, 4
      %v5414 = vshll.u32 %v5294, 16
      %v5416 = vrot.slane %v5414, 5
      %v5417 = vsel %vm331, %v5412, %v5416
      %v5418 = vshrl.u32 %v5294, 16
      %v5420 = vrot.slane %v5418, 4
      %v5421 = vor.u32 %v5420, %v5416
      %v5422 = vrot.slane %v5421, 4
      %v5424 = vshll.u32 %v5295, 16
      %v5426 = vrot.slane %v5424, 5
      %v5427 = vsel %vm331, %v5422, %v5426
      %v5429 = vshrl.u32 %v5296, 16
      %v5431 = vrot.slane %v5429, 4
      %v5432 = vshll.u32 %v5296, 16
      %v5434 = vrot.slane %v5432, 5
      %v5435 = vor.u32 %v5431, %v5434
      %v5436 = vrot.slane %v5435, 4
      %v5438 = vshll.u32 %v5297, 16
      %v5440 = vrot.slane %v5438, 5
      %v5441 = vsel %vm331, %v5436, %v5440
      %v5442 = vshrl.u32 %v5297, 16
      %v5444 = vrot.slane %v5442, 4
      %v5445 = vor.u32 %v5444, %v5440
      %v5446 = vrot.slane %v5445, 4
      %v5448 = vshll.u32 %v5298, 16
      %v5450 = vrot.slane %v5448, 5
      %v5451 = vsel %vm331, %v5446, %v5450
      %v5453 = vshrl.u32 %v5299, 16
      %v5455 = vrot.slane %v5453, 4
      %v5456 = vshll.u32 %v5299, 16
      %v5458 = vrot.slane %v5456, 5
      %v5459 = vor.u32 %v5455, %v5458
      %v5460 = vrot.slane %v5459, 4
      %v5462 = vshll.u32 %v5300, 16
      %v5464 = vrot.slane %v5462, 5
      %v5465 = vsel %vm331, %v5460, %v5464
      %v5466 = vshrl.u32 %v5300, 16
      %v5468 = vrot.slane %v5466, 4
      %v5469 = vor.u32 %v5468, %v5464
      %v5470 = vrot.slane %v5469, 4
      %v5472 = vshll.u32 %v5301, 16
      %v5474 = vrot.slane %v5472, 5
      %v5475 = vsel %vm331, %v5470, %v5474
      %v5477 = vshrl.u32 %v5302, 16
      %v5479 = vrot.slane %v5477, 4
      %v5480 = vshll.u32 %v5302, 16
      %v5482 = vrot.slane %v5480, 5
      %v5483 = vor.u32 %v5479, %v5482
      %v5484 = vrot.slane %v5483, 4
      %v5486 = vshll.u32 %v5303, 16
      %v5488 = vrot.slane %v5486, 5
      %v5489 = vsel %vm331, %v5484, %v5488
      %v5490 = vshrl.u32 %v5303, 16
      %v5492 = vrot.slane %v5490, 4
      %v5493 = vor.u32 %v5492, %v5488
      %v5494 = vrot.slane %v5493, 4
      %v5496 = vshll.u32 %v5304, 16
      %v5498 = vrot.slane %v5496, 5
      %v5499 = vsel %vm331, %v5494, %v5498
      %v5501 = vshrl.u32 %v5305, 16
      %v5503 = vrot.slane %v5501, 4
      %v5504 = vshll.u32 %v5305, 16
      %v5506 = vrot.slane %v5504, 5
      %v5507 = vor.u32 %v5503, %v5506
      %v5508 = vrot.slane %v5507, 4
      %v5510 = vshll.u32 %v5306, 16
      %v5512 = vrot.slane %v5510, 5
      %v5513 = vsel %vm331, %v5508, %v5512
      %v5514 = vshrl.u32 %v5306, 16
      %v5516 = vrot.slane %v5514, 4
      %v5517 = vor.u32 %v5516, %v5512
      %v5518 = vrot.slane %v5517, 4
      %v5520 = vshll.u32 %v5307, 16
      %v5522 = vrot.slane %v5520, 5
      %v5523 = vsel %vm331, %v5518, %v5522
      %v5525 = vshrl.u32 %v5308, 16
      %v5527 = vrot.slane %v5525, 4
      %v5528 = vshll.u32 %v5308, 16
      %v5530 = vrot.slane %v5528, 5
      %v5531 = vor.u32 %v5527, %v5530
      %v5532 = vrot.slane %v5531, 4
      %v5534 = vshll.u32 %v5309, 16
      %v5536 = vrot.slane %v5534, 5
      %v5537 = vsel %vm331, %v5532, %v5536
      %v5538 = vshrl.u32 %v5309, 16
      %v5540 = vrot.slane %v5538, 4
      %v5541 = vor.u32 %v5540, %v5536
      %v5542 = vrot.slane %v5541, 4
      %v5544 = vshll.u32 %v5310, 16
      %v5546 = vrot.slane %v5544, 5
      %v5547 = vsel %vm331, %v5542, %v5546
      %v5549 = vshrl.u32 %v5311, 16
      %v5551 = vrot.slane %v5549, 4
      %v5552 = vshll.u32 %v5311, 16
      %v5554 = vrot.slane %v5552, 5
      %v5555 = vor.u32 %v5551, %v5554
      %v5556 = vrot.slane %v5555, 4
      %v5558 = vshll.u32 %v5312, 16
      %v5560 = vrot.slane %v5558, 5
      %v5561 = vsel %vm331, %v5556, %v5560
      %v5562 = vshrl.u32 %v5312, 16
      %v5564 = vrot.slane %v5562, 4
      %v5565 = vor.u32 %v5564, %v5560
      %v5566 = vrot.slane %v5565, 4
      %v5568 = vshll.u32 %v5313, 16
      %v5570 = vrot.slane %v5568, 5
      %v5571 = vsel %vm331, %v5566, %v5570
      %v5573 = vshrl.u32 %v5314, 16
      %v5575 = vrot.slane %v5573, 4
      %v5576 = vshll.u32 %v5314, 16
      %v5578 = vrot.slane %v5576, 5
      %v5579 = vor.u32 %v5575, %v5578
      %v5580 = vrot.slane %v5579, 4
      %v5582 = vshll.u32 %v5315, 16
      %v5584 = vrot.slane %v5582, 5
      %v5585 = vsel %vm331, %v5580, %v5584
      %v5586 = vshrl.u32 %v5315, 16
      %v5588 = vrot.slane %v5586, 4
      %v5589 = vor.u32 %v5588, %v5584
      %v5590 = vrot.slane %v5589, 4
      %v5592 = vshll.u32 %v5316, 16
      %v5594 = vrot.slane %v5592, 5
      %v5595 = vsel %vm331, %v5590, %v5594
      %v5597 = vshrl.u32 %v5317, 16
      %v5599 = vrot.slane %v5597, 4
      %v5600 = vshll.u32 %v5317, 16
      %v5602 = vrot.slane %v5600, 5
      %v5603 = vor.u32 %v5599, %v5602
      %v5604 = vrot.slane %v5603, 4
      %v5606 = vshll.u32 %v5318, 16
      %v5608 = vrot.slane %v5606, 5
      %v5609 = vsel %vm331, %v5604, %v5608
      %v5610 = vshrl.u32 %v5318, 16
      %v5612 = vrot.slane %v5610, 4
      %v5613 = vor.u32 %v5612, %v5608
      %v5614 = vrot.slane %v5613, 4
      %v5616 = vshll.u32 %v5319, 16
      %v5618 = vrot.slane %v5616, 5
      %v5619 = vsel %vm331, %v5614, %v5618
      %v5621 = vshrl.u32 %v5320, 16
      %v5623 = vrot.slane %v5621, 4
      %v5624 = vshll.u32 %v5320, 16
      %v5626 = vrot.slane %v5624, 5
      %v5627 = vor.u32 %v5623, %v5626
      %v5628 = vrot.slane %v5627, 4
      %v5630 = vshll.u32 %v5321, 16
      %v5632 = vrot.slane %v5630, 5
      %v5633 = vsel %vm331, %v5628, %v5632
      %v5634 = vshrl.u32 %v5321, 16
      %v5636 = vrot.slane %v5634, 4
      %v5637 = vor.u32 %v5636, %v5632
      %v5638 = vrot.slane %v5637, 4
      %v5640 = vshll.u32 %v5322, 16
      %v5642 = vrot.slane %v5640, 5
      %v5643 = vsel %vm331, %v5638, %v5642
      %v5645 = vshrl.u32 %v5323, 16
      %v5647 = vrot.slane %v5645, 4
      %v5648 = vshll.u32 %v5323, 16
      %v5650 = vrot.slane %v5648, 5
      %v5651 = vor.u32 %v5647, %v5650
      %v5652 = vrot.slane %v5651, 4
      %v5654 = vshll.u32 %v5324, 16
      %v5656 = vrot.slane %v5654, 5
      %v5657 = vsel %vm331, %v5652, %v5656
      %v5658 = vshrl.u32 %v5324, 16
      %v5660 = vrot.slane %v5658, 4
      %v5661 = vor.u32 %v5660, %v5656
      %v5662 = vrot.slane %v5661, 4
      %v5664 = vshll.u32 %v5325, 16
      %v5666 = vrot.slane %v5664, 5
      %v5667 = vsel %vm331, %v5662, %v5666
      %v5669 = vshrl.u32 %v5326, 16
      %v5671 = vrot.slane %v5669, 4
      %v5672 = vshll.u32 %v5326, 16
      %v5674 = vrot.slane %v5672, 5
      %v5675 = vor.u32 %v5671, %v5674
      %v5676 = vrot.slane %v5675, 4
      %v5678 = vshll.u32 %v5327, 16
      %v5680 = vrot.slane %v5678, 5
      %v5681 = vsel %vm331, %v5676, %v5680
      %v5682 = vshrl.u32 %v5327, 16
      %v5684 = vrot.slane %v5682, 4
      %v5685 = vor.u32 %v5684, %v5680
      %v5686 = vrot.slane %v5685, 4
      %v5688 = vshll.u32 %v5328, 16
      %v5690 = vrot.slane %v5688, 5
      %v5691 = vsel %vm331, %v5686, %v5690
      %v5693 = vshrl.u32 %v5329, 16
      %v5695 = vrot.slane %v5693, 4
      %v5696 = vshll.u32 %v5329, 16
      %v5698 = vrot.slane %v5696, 5
      %v5699 = vor.u32 %v5695, %v5698
      %v5700 = vrot.slane %v5699, 4
      %v5702 = vshll.u32 %v5330, 16
      %v5704 = vrot.slane %v5702, 5
      %v5705 = vsel %vm331, %v5700, %v5704
      %v5706 = vshrl.u32 %v5330, 16
      %v5708 = vrot.slane %v5706, 4
      %v5709 = vor.u32 %v5708, %v5704
      %v5710 = vrot.slane %v5709, 4
      %v5712 = vshll.u32 %v5331, 16
      %v5714 = vrot.slane %v5712, 5
      %v5715 = vsel %vm331, %v5710, %v5714
      %s5716 = scalar_lea.vmem %s3, 128
      %v5717 = vld [vmem:[%s5716] sm:$0xf]
      %v5718 = vld [vmem:[%s5716 + $0x4] sm:$0xf]
      %v5719 = vld [vmem:[%s5716 + $0x8] sm:$0xf]
      %v5720 = vld [vmem:[%s5716 + $0xc] sm:$0xf]
      %v5721 = vld [vmem:[%s5716 + $0x10] sm:$0xf]
      %v5722 = vld [vmem:[%s5716 + $0x14] sm:$0xf]
      %v5723 = vld [vmem:[%s5716 + $0x18] sm:$0xf]
      %v5724 = vld [vmem:[%s5716 + $0x1c] sm:$0xf]
      %v5725 = vld [vmem:[%s5716 + $0x20] sm:$0xf]
      %v5726 = vld [vmem:[%s5716 + $0x24] sm:$0xf]
      %v5727 = vld [vmem:[%s5716 + $0x28] sm:$0xf]
      %v5728 = vld [vmem:[%s5716 + $0x2c] sm:$0xf]
      %v5729 = vld [vmem:[%s5716 + $0x30] sm:$0xf]
      %v5730 = vld [vmem:[%s5716 + $0x34] sm:$0xf]
      %v5731 = vld [vmem:[%s5716 + $0x38] sm:$0xf]
      %v5732 = vld [vmem:[%s5716 + $0x3c] sm:$0xf]
      %v5733 = vunpack.c.l.b16 %v5345
      %v5734 = vunpack.c.l.b16 %v5355
      %v5735 = vunpack.c.l.b16 %v5369
      %v5736 = vunpack.c.l.b16 %v5379
      %v5737 = vunpack.c.l.b16 %v5393
      %v5738 = vunpack.c.l.b16 %v5403
      %v5739 = vunpack.c.l.b16 %v5417
      %v5740 = vunpack.c.l.b16 %v5427
      %v5741 = vunpack.c.l.b16 %v5441
      %v5742 = vunpack.c.l.b16 %v5451
      %v5743 = vunpack.c.l.b16 %v5465
      %v5744 = vunpack.c.l.b16 %v5475
      %v5745 = vunpack.c.l.b16 %v5489
      %v5746 = vunpack.c.l.b16 %v5499
      %v5747 = vunpack.c.l.b16 %v5513
      %v5748 = vunpack.c.l.b16 %v5523
      %v5749 = vunpack.c.l.b16 %v5537
      %v5750 = vunpack.c.l.b16 %v5547
      %v5751 = vunpack.c.l.b16 %v5561
      %v5752 = vunpack.c.l.b16 %v5571
      %v5753 = vunpack.c.l.b16 %v5585
      %v5754 = vunpack.c.l.b16 %v5595
      %v5755 = vunpack.c.l.b16 %v5609
      %v5756 = vunpack.c.l.b16 %v5619
      %v5757 = vunpack.c.l.b16 %v5633
      %v5758 = vunpack.c.l.b16 %v5643
      %v5759 = vunpack.c.l.b16 %v5657
      %v5760 = vunpack.c.l.b16 %v5667
      %v5761 = vunpack.c.l.b16 %v5681
      %v5762 = vunpack.c.l.b16 %v5691
      %v5763 = vunpack.c.l.b16 %v5705
      %v5764 = vunpack.c.l.b16 %v5715
      %v5765 = vpack.c.b16 %v5734, %v5733
      %v5766 = vpack.c.b16 %v5736, %v5735
      %v5767 = vpack.c.b16 %v5738, %v5737
      %v5768 = vpack.c.b16 %v5740, %v5739
      %v5769 = vpack.c.b16 %v5742, %v5741
      %v5770 = vpack.c.b16 %v5744, %v5743
      %v5771 = vpack.c.b16 %v5746, %v5745
      %v5772 = vpack.c.b16 %v5748, %v5747
      %v5773 = vpack.c.b16 %v5750, %v5749
      %v5774 = vpack.c.b16 %v5752, %v5751
      %v5775 = vpack.c.b16 %v5754, %v5753
      %v5776 = vpack.c.b16 %v5756, %v5755
      %v5777 = vpack.c.b16 %v5758, %v5757
      %v5778 = vpack.c.b16 %v5760, %v5759
      %v5779 = vpack.c.b16 %v5762, %v5761
      %v5780 = vpack.c.b16 %v5764, %v5763
      %v5813 = vunpack.c.l.b16 %v5717
      %v5814 = vunpack.c.l.b16 %v5718
      %v5815 = vunpack.c.l.b16 %v5719
      %v5816 = vunpack.c.l.b16 %v5720
      %v5817 = vunpack.c.l.b16 %v5721
      %v5818 = vunpack.c.l.b16 %v5722
      %v5819 = vunpack.c.l.b16 %v5723
      %v5820 = vunpack.c.l.b16 %v5724
      %v5821 = vunpack.c.l.b16 %v5725
      %v5822 = vunpack.c.l.b16 %v5726
      %v5823 = vunpack.c.l.b16 %v5727
      %v5824 = vunpack.c.l.b16 %v5728
      %v5825 = vunpack.c.l.b16 %v5729
      %v5826 = vunpack.c.l.b16 %v5730
      %v5827 = vunpack.c.l.b16 %v5731
      %v5828 = vunpack.c.l.b16 %v5732
      %v5829 = vpack.c.b16 %v5814, %v5813
      %v5830 = vpack.c.b16 %v5816, %v5815
      %v5831 = vpack.c.b16 %v5818, %v5817
      %v5832 = vpack.c.b16 %v5820, %v5819
      %v5833 = vpack.c.b16 %v5822, %v5821
      %v5834 = vpack.c.b16 %v5824, %v5823
      %v5835 = vpack.c.b16 %v5826, %v5825
      %v5836 = vpack.c.b16 %v5828, %v5827
      %5845 = vmatpush.bf16.msra.mxu0 %v5836
      %5846 = vmatpush.bf16.msra.mxu0 %v5835
      %5847 = vmatpush.bf16.msra.mxu0 %v5834
      %5848 = vmatpush.bf16.msra.mxu0 %v5833
      %5849 = vmatpush.bf16.msra.mxu0 %v5832
      %5850 = vmatpush.bf16.msra.mxu0 %v5831
      %5851 = vmatpush.bf16.msra.mxu0 %v5830
      %5852 = vmatpush.bf16.msra.mxu0 %v5829
      %5853 = vmatmul.bf16.gmra.mxu0 %v5765
      %v5854 = vpop.f32.mrf.mxu0
      %v5855 = vadd.f32 0.0, %v5854
      %v5856 = vpop.f32.mrf.mxu0
      %v5857 = vadd.f32 0.0, %v5856
      %5858 = vmatmul.bf16.gmra.mxu0 %v5766
      %v5859 = vpop.f32.mrf.mxu0
      %v5860 = vadd.f32 0.0, %v5859
      %v5861 = vpop.f32.mrf.mxu0
      %v5862 = vadd.f32 0.0, %v5861
      %5863 = vmatmul.bf16.gmra.mxu0 %v5767
      %v5864 = vpop.f32.mrf.mxu0
      %v5865 = vadd.f32 0.0, %v5864
      %v5866 = vpop.f32.mrf.mxu0
      %v5867 = vadd.f32 0.0, %v5866
      %5868 = vmatmul.bf16.gmra.mxu0 %v5768
      %v5869 = vpop.f32.mrf.mxu0
      %v5870 = vadd.f32 0.0, %v5869
      %v5871 = vpop.f32.mrf.mxu0
      %v5872 = vadd.f32 0.0, %v5871
      %5873 = vmatmul.bf16.gmra.mxu0 %v5769
      %v5874 = vpop.f32.mrf.mxu0
      %v5875 = vadd.f32 0.0, %v5874
      %v5876 = vpop.f32.mrf.mxu0
      %v5877 = vadd.f32 0.0, %v5876
      %5878 = vmatmul.bf16.gmra.mxu0 %v5770
      %v5879 = vpop.f32.mrf.mxu0
      %v5880 = vadd.f32 0.0, %v5879
      %v5881 = vpop.f32.mrf.mxu0
      %v5882 = vadd.f32 0.0, %v5881
      %5883 = vmatmul.bf16.gmra.mxu0 %v5771
      %v5884 = vpop.f32.mrf.mxu0
      %v5885 = vadd.f32 0.0, %v5884
      %v5886 = vpop.f32.mrf.mxu0
      %v5887 = vadd.f32 0.0, %v5886
      %5888 = vmatmul.bf16.gmra.mxu0 %v5772
      %v5889 = vpop.f32.mrf.mxu0
      %v5890 = vadd.f32 0.0, %v5889
      %v5891 = vpop.f32.mrf.mxu0
      %v5892 = vadd.f32 0.0, %v5891
      %5893 = vmatmul.bf16.gmra.mxu0 %v5773
      %v5894 = vpop.f32.mrf.mxu0
      %v5895 = vadd.f32 0.0, %v5894
      %v5896 = vpop.f32.mrf.mxu0
      %v5897 = vadd.f32 0.0, %v5896
      %5898 = vmatmul.bf16.gmra.mxu0 %v5774
      %v5899 = vpop.f32.mrf.mxu0
      %v5900 = vadd.f32 0.0, %v5899
      %v5901 = vpop.f32.mrf.mxu0
      %v5902 = vadd.f32 0.0, %v5901
      %5903 = vmatmul.bf16.gmra.mxu0 %v5775
      %v5904 = vpop.f32.mrf.mxu0
      %v5905 = vadd.f32 0.0, %v5904
      %v5906 = vpop.f32.mrf.mxu0
      %v5907 = vadd.f32 0.0, %v5906
      %5908 = vmatmul.bf16.gmra.mxu0 %v5776
      %v5909 = vpop.f32.mrf.mxu0
      %v5910 = vadd.f32 0.0, %v5909
      %v5911 = vpop.f32.mrf.mxu0
      %v5912 = vadd.f32 0.0, %v5911
      %5913 = vmatmul.bf16.gmra.mxu0 %v5777
      %v5914 = vpop.f32.mrf.mxu0
      %v5915 = vadd.f32 0.0, %v5914
      %v5916 = vpop.f32.mrf.mxu0
      %v5917 = vadd.f32 0.0, %v5916
      %5918 = vmatmul.bf16.gmra.mxu0 %v5778
      %v5919 = vpop.f32.mrf.mxu0
      %v5920 = vadd.f32 0.0, %v5919
      %v5921 = vpop.f32.mrf.mxu0
      %v5922 = vadd.f32 0.0, %v5921
      %5923 = vmatmul.bf16.gmra.mxu0 %v5779
      %v5924 = vpop.f32.mrf.mxu0
      %v5925 = vadd.f32 0.0, %v5924
      %v5926 = vpop.f32.mrf.mxu0
      %v5927 = vadd.f32 0.0, %v5926
      %5928 = vmatmul.bf16.gmra.mxu0 %v5780
      %v5929 = vpop.f32.mrf.mxu0
      %v5930 = vadd.f32 0.0, %v5929
      %v5931 = vpop.f32.mrf.mxu0
      %v5932 = vadd.f32 0.0, %v5931
      %5933 = vdwg.mxu0
      %v5934 = vadd.f32 %v5205, %v5855
      %v5935 = vadd.f32 %v5207, %v5857
      %v5936 = vadd.f32 %v5210, %v5860
      %v5937 = vadd.f32 %v5212, %v5862
      %v5938 = vadd.f32 %v5215, %v5865
      %v5939 = vadd.f32 %v5217, %v5867
      %v5940 = vadd.f32 %v5220, %v5870
      %v5941 = vadd.f32 %v5222, %v5872
      %v5942 = vadd.f32 %v5225, %v5875
      %v5943 = vadd.f32 %v5227, %v5877
      %v5944 = vadd.f32 %v5230, %v5880
      %v5945 = vadd.f32 %v5232, %v5882
      %v5946 = vadd.f32 %v5235, %v5885
      %v5947 = vadd.f32 %v5237, %v5887
      %v5948 = vadd.f32 %v5240, %v5890
      %v5949 = vadd.f32 %v5242, %v5892
      %v5950 = vadd.f32 %v5245, %v5895
      %v5951 = vadd.f32 %v5247, %v5897
      %v5952 = vadd.f32 %v5250, %v5900
      %v5953 = vadd.f32 %v5252, %v5902
      %v5954 = vadd.f32 %v5255, %v5905
      %v5955 = vadd.f32 %v5257, %v5907
      %v5956 = vadd.f32 %v5260, %v5910
      %v5957 = vadd.f32 %v5262, %v5912
      %v5958 = vadd.f32 %v5265, %v5915
      %v5959 = vadd.f32 %v5267, %v5917
      %v5960 = vadd.f32 %v5270, %v5920
      %v5961 = vadd.f32 %v5272, %v5922
      %v5962 = vadd.f32 %v5275, %v5925
      %v5963 = vadd.f32 %v5277, %v5927
      %v5964 = vadd.f32 %v5280, %v5930
      %v5965 = vadd.f32 %v5282, %v5932
      %v5966 = vld [vmem:[%s4381 + $0x4] sm:$0x8]
      %v5967 = vld [vmem:[%s4381 + $0x8] sm:$0xf]
      %v5968 = vld [vmem:[%s4381 + $0xc] sm:$0xf]
      %v5969 = vld [vmem:[%s4381 + $0x18] sm:$0x8]
      %v5970 = vld [vmem:[%s4381 + $0x1c] sm:$0xf]
      %v5971 = vld [vmem:[%s4381 + $0x20] sm:$0xf]
      %v5972 = vld [vmem:[%s4381 + $0x2c] sm:$0x8]
      %v5973 = vld [vmem:[%s4381 + $0x30] sm:$0xf]
      %v5974 = vld [vmem:[%s4381 + $0x34] sm:$0xf]
      %v5975 = vld [vmem:[%s4381 + $0x40] sm:$0x8]
      %v5976 = vld [vmem:[%s4381 + $0x44] sm:$0xf]
      %v5977 = vld [vmem:[%s4381 + $0x48] sm:$0xf]
      %v5978 = vld [vmem:[%s4381 + $0x54] sm:$0x8]
      %v5979 = vld [vmem:[%s4381 + $0x58] sm:$0xf]
      %v5980 = vld [vmem:[%s4381 + $0x5c] sm:$0xf]
      %v5981 = vld [vmem:[%s4381 + $0x68] sm:$0x8]
      %v5982 = vld [vmem:[%s4381 + $0x6c] sm:$0xf]
      %v5983 = vld [vmem:[%s4381 + $0x70] sm:$0xf]
      %v5984 = vld [vmem:[%s4381 + $0x7c] sm:$0x8]
      %v5985 = vld [vmem:[%s4381 + $0x80] sm:$0xf]
      %v5986 = vld [vmem:[%s4381 + $0x84] sm:$0xf]
      %v5987 = vld [vmem:[%s4381 + $0x90] sm:$0x8]
      %v5988 = vld [vmem:[%s4381 + $0x94] sm:$0xf]
      %v5989 = vld [vmem:[%s4381 + $0x98] sm:$0xf]
      %v5990 = vld [vmem:[%s4381 + $0xa4] sm:$0x8]
      %v5991 = vld [vmem:[%s4381 + $0xa8] sm:$0xf]
      %v5992 = vld [vmem:[%s4381 + $0xac] sm:$0xf]
      %v5993 = vld [vmem:[%s4381 + $0xb8] sm:$0x8]
      %v5994 = vld [vmem:[%s4381 + $0xbc] sm:$0xf]
      %v5995 = vld [vmem:[%s4381 + $0xc0] sm:$0xf]
      %v5996 = vld [vmem:[%s4381 + $0xcc] sm:$0x8]
      %v5997 = vld [vmem:[%s4381 + $0xd0] sm:$0xf]
      %v5998 = vld [vmem:[%s4381 + $0xd4] sm:$0xf]
      %v5999 = vld [vmem:[%s4381 + $0xe0] sm:$0x8]
      %v6000 = vld [vmem:[%s4381 + $0xe4] sm:$0xf]
      %v6001 = vld [vmem:[%s4381 + $0xe8] sm:$0xf]
      %v6002 = vld [vmem:[%s4381 + $0xf4] sm:$0x8]
      %v6003 = vld [vmem:[%s4381 + $0xf8] sm:$0xf]
      %v6004 = vld [vmem:[%s4381 + $0xfc] sm:$0xf]
      %v6005 = vld [vmem:[%s4381 + $0x108] sm:$0x8]
      %v6006 = vld [vmem:[%s4381 + $0x10c] sm:$0xf]
      %v6007 = vld [vmem:[%s4381 + $0x110] sm:$0xf]
      %v6008 = vld [vmem:[%s4381 + $0x11c] sm:$0x8]
      %v6009 = vld [vmem:[%s4381 + $0x120] sm:$0xf]
      %v6010 = vld [vmem:[%s4381 + $0x124] sm:$0xf]
      %v6011 = vld [vmem:[%s4381 + $0x130] sm:$0x8]
      %v6012 = vld [vmem:[%s4381 + $0x134] sm:$0xf]
      %v6013 = vld [vmem:[%s4381 + $0x138] sm:$0xf]
      %v6015 = vshrl.u32 %v5966, 16
      %v6017 = vrot.slane %v6015, 7
      %v6018 = vrot.slane %v6017, 4
      %v6020 = vshrl.u32 %v5967, 16
      %v6022 = vrot.slane %v6020, 7
      %v6023 = vshll.u32 %v5967, 16
      %v6025 = vor.u32 %v6022, %v6023
      %v6026 = vsel %vm4464, %v6018, %v6025
      %v6027 = vrot.slane %v6022, 4
      %v6029 = vshrl.u32 %v5968, 16
      %v6031 = vrot.slane %v6029, 7
      %v6032 = vshll.u32 %v5968, 16
      %v6034 = vor.u32 %v6031, %v6032
      %v6035 = vsel %vm4464, %v6027, %v6034
      %v6037 = vshrl.u32 %v5969, 16
      %v6039 = vrot.slane %v6037, 7
      %v6040 = vrot.slane %v6039, 4
      %v6042 = vshrl.u32 %v5970, 16
      %v6044 = vrot.slane %v6042, 7
      %v6045 = vshll.u32 %v5970, 16
      %v6047 = vor.u32 %v6044, %v6045
      %v6048 = vsel %vm4464, %v6040, %v6047
      %v6049 = vrot.slane %v6044, 4
      %v6051 = vshrl.u32 %v5971, 16
      %v6053 = vrot.slane %v6051, 7
      %v6054 = vshll.u32 %v5971, 16
      %v6056 = vor.u32 %v6053, %v6054
      %v6057 = vsel %vm4464, %v6049, %v6056
      %v6059 = vshrl.u32 %v5972, 16
      %v6061 = vrot.slane %v6059, 7
      %v6062 = vrot.slane %v6061, 4
      %v6064 = vshrl.u32 %v5973, 16
      %v6066 = vrot.slane %v6064, 7
      %v6067 = vshll.u32 %v5973, 16
      %v6069 = vor.u32 %v6066, %v6067
      %v6070 = vsel %vm4464, %v6062, %v6069
      %v6071 = vrot.slane %v6066, 4
      %v6073 = vshrl.u32 %v5974, 16
      %v6075 = vrot.slane %v6073, 7
      %v6076 = vshll.u32 %v5974, 16
      %v6078 = vor.u32 %v6075, %v6076
      %v6079 = vsel %vm4464, %v6071, %v6078
      %v6081 = vshrl.u32 %v5975, 16
      %v6083 = vrot.slane %v6081, 7
      %v6084 = vrot.slane %v6083, 4
      %v6086 = vshrl.u32 %v5976, 16
      %v6088 = vrot.slane %v6086, 7
      %v6089 = vshll.u32 %v5976, 16
      %v6091 = vor.u32 %v6088, %v6089
      %v6092 = vsel %vm4464, %v6084, %v6091
      %v6093 = vrot.slane %v6088, 4
      %v6095 = vshrl.u32 %v5977, 16
      %v6097 = vrot.slane %v6095, 7
      %v6098 = vshll.u32 %v5977, 16
      %v6100 = vor.u32 %v6097, %v6098
      %v6101 = vsel %vm4464, %v6093, %v6100
      %v6103 = vshrl.u32 %v5978, 16
      %v6105 = vrot.slane %v6103, 7
      %v6106 = vrot.slane %v6105, 4
      %v6108 = vshrl.u32 %v5979, 16
      %v6110 = vrot.slane %v6108, 7
      %v6111 = vshll.u32 %v5979, 16
      %v6113 = vor.u32 %v6110, %v6111
      %v6114 = vsel %vm4464, %v6106, %v6113
      %v6115 = vrot.slane %v6110, 4
      %v6117 = vshrl.u32 %v5980, 16
      %v6119 = vrot.slane %v6117, 7
      %v6120 = vshll.u32 %v5980, 16
      %v6122 = vor.u32 %v6119, %v6120
      %v6123 = vsel %vm4464, %v6115, %v6122
      %v6125 = vshrl.u32 %v5981, 16
      %v6127 = vrot.slane %v6125, 7
      %v6128 = vrot.slane %v6127, 4
      %v6130 = vshrl.u32 %v5982, 16
      %v6132 = vrot.slane %v6130, 7
      %v6133 = vshll.u32 %v5982, 16
      %v6135 = vor.u32 %v6132, %v6133
      %v6136 = vsel %vm4464, %v6128, %v6135
      %v6137 = vrot.slane %v6132, 4
      %v6139 = vshrl.u32 %v5983, 16
      %v6141 = vrot.slane %v6139, 7
      %v6142 = vshll.u32 %v5983, 16
      %v6144 = vor.u32 %v6141, %v6142
      %v6145 = vsel %vm4464, %v6137, %v6144
      %v6147 = vshrl.u32 %v5984, 16
      %v6149 = vrot.slane %v6147, 7
      %v6150 = vrot.slane %v6149, 4
      %v6152 = vshrl.u32 %v5985, 16
      %v6154 = vrot.slane %v6152, 7
      %v6155 = vshll.u32 %v5985, 16
      %v6157 = vor.u32 %v6154, %v6155
      %v6158 = vsel %vm4464, %v6150, %v6157
      %v6159 = vrot.slane %v6154, 4
      %v6161 = vshrl.u32 %v5986, 16
      %v6163 = vrot.slane %v6161, 7
      %v6164 = vshll.u32 %v5986, 16
      %v6166 = vor.u32 %v6163, %v6164
      %v6167 = vsel %vm4464, %v6159, %v6166
      %v6169 = vshrl.u32 %v5987, 16
      %v6171 = vrot.slane %v6169, 7
      %v6172 = vrot.slane %v6171, 4
      %v6174 = vshrl.u32 %v5988, 16
      %v6176 = vrot.slane %v6174, 7
      %v6177 = vshll.u32 %v5988, 16
      %v6179 = vor.u32 %v6176, %v6177
      %v6180 = vsel %vm4464, %v6172, %v6179
      %v6181 = vrot.slane %v6176, 4
      %v6183 = vshrl.u32 %v5989, 16
      %v6185 = vrot.slane %v6183, 7
      %v6186 = vshll.u32 %v5989, 16
      %v6188 = vor.u32 %v6185, %v6186
      %v6189 = vsel %vm4464, %v6181, %v6188
      %v6191 = vshrl.u32 %v5990, 16
      %v6193 = vrot.slane %v6191, 7
      %v6194 = vrot.slane %v6193, 4
      %v6196 = vshrl.u32 %v5991, 16
      %v6198 = vrot.slane %v6196, 7
      %v6199 = vshll.u32 %v5991, 16
      %v6201 = vor.u32 %v6198, %v6199
      %v6202 = vsel %vm4464, %v6194, %v6201
      %v6203 = vrot.slane %v6198, 4
      %v6205 = vshrl.u32 %v5992, 16
      %v6207 = vrot.slane %v6205, 7
      %v6208 = vshll.u32 %v5992, 16
      %v6210 = vor.u32 %v6207, %v6208
      %v6211 = vsel %vm4464, %v6203, %v6210
      %v6213 = vshrl.u32 %v5993, 16
      %v6215 = vrot.slane %v6213, 7
      %v6216 = vrot.slane %v6215, 4
      %v6218 = vshrl.u32 %v5994, 16
      %v6220 = vrot.slane %v6218, 7
      %v6221 = vshll.u32 %v5994, 16
      %v6223 = vor.u32 %v6220, %v6221
      %v6224 = vsel %vm4464, %v6216, %v6223
      %v6225 = vrot.slane %v6220, 4
      %v6227 = vshrl.u32 %v5995, 16
      %v6229 = vrot.slane %v6227, 7
      %v6230 = vshll.u32 %v5995, 16
      %v6232 = vor.u32 %v6229, %v6230
      %v6233 = vsel %vm4464, %v6225, %v6232
      %v6235 = vshrl.u32 %v5996, 16
      %v6237 = vrot.slane %v6235, 7
      %v6238 = vrot.slane %v6237, 4
      %v6240 = vshrl.u32 %v5997, 16
      %v6242 = vrot.slane %v6240, 7
      %v6243 = vshll.u32 %v5997, 16
      %v6245 = vor.u32 %v6242, %v6243
      %v6246 = vsel %vm4464, %v6238, %v6245
      %v6247 = vrot.slane %v6242, 4
      %v6249 = vshrl.u32 %v5998, 16
      %v6251 = vrot.slane %v6249, 7
      %v6252 = vshll.u32 %v5998, 16
      %v6254 = vor.u32 %v6251, %v6252
      %v6255 = vsel %vm4464, %v6247, %v6254
      %v6257 = vshrl.u32 %v5999, 16
      %v6259 = vrot.slane %v6257, 7
      %v6260 = vrot.slane %v6259, 4
      %v6262 = vshrl.u32 %v6000, 16
      %v6264 = vrot.slane %v6262, 7
      %v6265 = vshll.u32 %v6000, 16
      %v6267 = vor.u32 %v6264, %v6265
      %v6268 = vsel %vm4464, %v6260, %v6267
      %v6269 = vrot.slane %v6264, 4
      %v6271 = vshrl.u32 %v6001, 16
      %v6273 = vrot.slane %v6271, 7
      %v6274 = vshll.u32 %v6001, 16
      %v6276 = vor.u32 %v6273, %v6274
      %v6277 = vsel %vm4464, %v6269, %v6276
      %v6279 = vshrl.u32 %v6002, 16
      %v6281 = vrot.slane %v6279, 7
      %v6282 = vrot.slane %v6281, 4
      %v6284 = vshrl.u32 %v6003, 16
      %v6286 = vrot.slane %v6284, 7
      %v6287 = vshll.u32 %v6003, 16
      %v6289 = vor.u32 %v6286, %v6287
      %v6290 = vsel %vm4464, %v6282, %v6289
      %v6291 = vrot.slane %v6286, 4
      %v6293 = vshrl.u32 %v6004, 16
      %v6295 = vrot.slane %v6293, 7
      %v6296 = vshll.u32 %v6004, 16
      %v6298 = vor.u32 %v6295, %v6296
      %v6299 = vsel %vm4464, %v6291, %v6298
      %v6301 = vshrl.u32 %v6005, 16
      %v6303 = vrot.slane %v6301, 7
      %v6304 = vrot.slane %v6303, 4
      %v6306 = vshrl.u32 %v6006, 16
      %v6308 = vrot.slane %v6306, 7
      %v6309 = vshll.u32 %v6006, 16
      %v6311 = vor.u32 %v6308, %v6309
      %v6312 = vsel %vm4464, %v6304, %v6311
      %v6313 = vrot.slane %v6308, 4
      %v6315 = vshrl.u32 %v6007, 16
      %v6317 = vrot.slane %v6315, 7
      %v6318 = vshll.u32 %v6007, 16
      %v6320 = vor.u32 %v6317, %v6318
      %v6321 = vsel %vm4464, %v6313, %v6320
      %v6323 = vshrl.u32 %v6008, 16
      %v6325 = vrot.slane %v6323, 7
      %v6326 = vrot.slane %v6325, 4
      %v6328 = vshrl.u32 %v6009, 16
      %v6330 = vrot.slane %v6328, 7
      %v6331 = vshll.u32 %v6009, 16
      %v6333 = vor.u32 %v6330, %v6331
      %v6334 = vsel %vm4464, %v6326, %v6333
      %v6335 = vrot.slane %v6330, 4
      %v6337 = vshrl.u32 %v6010, 16
      %v6339 = vrot.slane %v6337, 7
      %v6340 = vshll.u32 %v6010, 16
      %v6342 = vor.u32 %v6339, %v6340
      %v6343 = vsel %vm4464, %v6335, %v6342
      %v6345 = vshrl.u32 %v6011, 16
      %v6347 = vrot.slane %v6345, 7
      %v6348 = vrot.slane %v6347, 4
      %v6350 = vshrl.u32 %v6012, 16
      %v6352 = vrot.slane %v6350, 7
      %v6353 = vshll.u32 %v6012, 16
      %v6355 = vor.u32 %v6352, %v6353
      %v6356 = vsel %vm4464, %v6348, %v6355
      %v6357 = vrot.slane %v6352, 4
      %v6359 = vshrl.u32 %v6013, 16
      %v6361 = vrot.slane %v6359, 7
      %v6362 = vshll.u32 %v6013, 16
      %v6364 = vor.u32 %v6361, %v6362
      %v6365 = vsel %vm4464, %v6357, %v6364
      %s6366 = scalar_lea.vmem %s3, 192
      %v6367 = vld [vmem:[%s6366] sm:$0xf]
      %v6368 = vld [vmem:[%s6366 + $0x4] sm:$0xf]
      %v6369 = vld [vmem:[%s6366 + $0x8] sm:$0xf]
      %v6370 = vld [vmem:[%s6366 + $0xc] sm:$0xf]
      %v6371 = vld [vmem:[%s6366 + $0x10] sm:$0xf]
      %v6372 = vld [vmem:[%s6366 + $0x14] sm:$0xf]
      %v6373 = vld [vmem:[%s6366 + $0x18] sm:$0xf]
      %v6374 = vld [vmem:[%s6366 + $0x1c] sm:$0xf]
      %v6375 = vld [vmem:[%s6366 + $0x20] sm:$0xf]
      %v6376 = vld [vmem:[%s6366 + $0x24] sm:$0xf]
      %v6377 = vld [vmem:[%s6366 + $0x28] sm:$0xf]
      %v6378 = vld [vmem:[%s6366 + $0x2c] sm:$0xf]
      %v6379 = vld [vmem:[%s6366 + $0x30] sm:$0xf]
      %v6380 = vld [vmem:[%s6366 + $0x34] sm:$0xf]
      %v6381 = vld [vmem:[%s6366 + $0x38] sm:$0xf]
      %v6382 = vld [vmem:[%s6366 + $0x3c] sm:$0xf]
      %v6383 = vunpack.c.l.b16 %v6026
      %v6384 = vunpack.c.l.b16 %v6035
      %v6385 = vunpack.c.l.b16 %v6048
      %v6386 = vunpack.c.l.b16 %v6057
      %v6387 = vunpack.c.l.b16 %v6070
      %v6388 = vunpack.c.l.b16 %v6079
      %v6389 = vunpack.c.l.b16 %v6092
      %v6390 = vunpack.c.l.b16 %v6101
      %v6391 = vunpack.c.l.b16 %v6114
      %v6392 = vunpack.c.l.b16 %v6123
      %v6393 = vunpack.c.l.b16 %v6136
      %v6394 = vunpack.c.l.b16 %v6145
      %v6395 = vunpack.c.l.b16 %v6158
      %v6396 = vunpack.c.l.b16 %v6167
      %v6397 = vunpack.c.l.b16 %v6180
      %v6398 = vunpack.c.l.b16 %v6189
      %v6399 = vunpack.c.l.b16 %v6202
      %v6400 = vunpack.c.l.b16 %v6211
      %v6401 = vunpack.c.l.b16 %v6224
      %v6402 = vunpack.c.l.b16 %v6233
      %v6403 = vunpack.c.l.b16 %v6246
      %v6404 = vunpack.c.l.b16 %v6255
      %v6405 = vunpack.c.l.b16 %v6268
      %v6406 = vunpack.c.l.b16 %v6277
      %v6407 = vunpack.c.l.b16 %v6290
      %v6408 = vunpack.c.l.b16 %v6299
      %v6409 = vunpack.c.l.b16 %v6312
      %v6410 = vunpack.c.l.b16 %v6321
      %v6411 = vunpack.c.l.b16 %v6334
      %v6412 = vunpack.c.l.b16 %v6343
      %v6413 = vunpack.c.l.b16 %v6356
      %v6414 = vunpack.c.l.b16 %v6365
      %v6415 = vpack.c.b16 %v6384, %v6383
      %v6416 = vpack.c.b16 %v6386, %v6385
      %v6417 = vpack.c.b16 %v6388, %v6387
      %v6418 = vpack.c.b16 %v6390, %v6389
      %v6419 = vpack.c.b16 %v6392, %v6391
      %v6420 = vpack.c.b16 %v6394, %v6393
      %v6421 = vpack.c.b16 %v6396, %v6395
      %v6422 = vpack.c.b16 %v6398, %v6397
      %v6423 = vpack.c.b16 %v6400, %v6399
      %v6424 = vpack.c.b16 %v6402, %v6401
      %v6425 = vpack.c.b16 %v6404, %v6403
      %v6426 = vpack.c.b16 %v6406, %v6405
      %v6427 = vpack.c.b16 %v6408, %v6407
      %v6428 = vpack.c.b16 %v6410, %v6409
      %v6429 = vpack.c.b16 %v6412, %v6411
      %v6430 = vpack.c.b16 %v6414, %v6413
      %v6463 = vunpack.c.l.b16 %v6367
      %v6464 = vunpack.c.l.b16 %v6368
      %v6465 = vunpack.c.l.b16 %v6369
      %v6466 = vunpack.c.l.b16 %v6370
      %v6467 = vunpack.c.l.b16 %v6371
      %v6468 = vunpack.c.l.b16 %v6372
      %v6469 = vunpack.c.l.b16 %v6373
      %v6470 = vunpack.c.l.b16 %v6374
      %v6471 = vunpack.c.l.b16 %v6375
      %v6472 = vunpack.c.l.b16 %v6376
      %v6473 = vunpack.c.l.b16 %v6377
      %v6474 = vunpack.c.l.b16 %v6378
      %v6475 = vunpack.c.l.b16 %v6379
      %v6476 = vunpack.c.l.b16 %v6380
      %v6477 = vunpack.c.l.b16 %v6381
      %v6478 = vunpack.c.l.b16 %v6382
      %v6479 = vpack.c.b16 %v6464, %v6463
      %v6480 = vpack.c.b16 %v6466, %v6465
      %v6481 = vpack.c.b16 %v6468, %v6467
      %v6482 = vpack.c.b16 %v6470, %v6469
      %v6483 = vpack.c.b16 %v6472, %v6471
      %v6484 = vpack.c.b16 %v6474, %v6473
      %v6485 = vpack.c.b16 %v6476, %v6475
      %v6486 = vpack.c.b16 %v6478, %v6477
      %6495 = vmatpush.bf16.msra.mxu0 %v6486
      %6496 = vmatpush.bf16.msra.mxu0 %v6485
      %6497 = vmatpush.bf16.msra.mxu0 %v6484
      %6498 = vmatpush.bf16.msra.mxu0 %v6483
      %6499 = vmatpush.bf16.msra.mxu0 %v6482
      %6500 = vmatpush.bf16.msra.mxu0 %v6481
      %6501 = vmatpush.bf16.msra.mxu0 %v6480
      %6502 = vmatpush.bf16.msra.mxu0 %v6479
      %6503 = vmatmul.bf16.gmra.mxu0 %v6415
      %v6504 = vpop.f32.mrf.mxu0
      %v6505 = vadd.f32 0.0, %v6504
      %v6506 = vpop.f32.mrf.mxu0
      %v6507 = vadd.f32 0.0, %v6506
      %6508 = vmatmul.bf16.gmra.mxu0 %v6416
      %v6509 = vpop.f32.mrf.mxu0
      %v6510 = vadd.f32 0.0, %v6509
      %v6511 = vpop.f32.mrf.mxu0
      %v6512 = vadd.f32 0.0, %v6511
      %6513 = vmatmul.bf16.gmra.mxu0 %v6417
      %v6514 = vpop.f32.mrf.mxu0
      %v6515 = vadd.f32 0.0, %v6514
      %v6516 = vpop.f32.mrf.mxu0
      %v6517 = vadd.f32 0.0, %v6516
      %6518 = vmatmul.bf16.gmra.mxu0 %v6418
      %v6519 = vpop.f32.mrf.mxu0
      %v6520 = vadd.f32 0.0, %v6519
      %v6521 = vpop.f32.mrf.mxu0
      %v6522 = vadd.f32 0.0, %v6521
      %6523 = vmatmul.bf16.gmra.mxu0 %v6419
      %v6524 = vpop.f32.mrf.mxu0
      %v6525 = vadd.f32 0.0, %v6524
      %v6526 = vpop.f32.mrf.mxu0
      %v6527 = vadd.f32 0.0, %v6526
      %6528 = vmatmul.bf16.gmra.mxu0 %v6420
      %v6529 = vpop.f32.mrf.mxu0
      %v6530 = vadd.f32 0.0, %v6529
      %v6531 = vpop.f32.mrf.mxu0
      %v6532 = vadd.f32 0.0, %v6531
      %6533 = vmatmul.bf16.gmra.mxu0 %v6421
      %v6534 = vpop.f32.mrf.mxu0
      %v6535 = vadd.f32 0.0, %v6534
      %v6536 = vpop.f32.mrf.mxu0
      %v6537 = vadd.f32 0.0, %v6536
      %6538 = vmatmul.bf16.gmra.mxu0 %v6422
      %v6539 = vpop.f32.mrf.mxu0
      %v6540 = vadd.f32 0.0, %v6539
      %v6541 = vpop.f32.mrf.mxu0
      %v6542 = vadd.f32 0.0, %v6541
      %6543 = vmatmul.bf16.gmra.mxu0 %v6423
      %v6544 = vpop.f32.mrf.mxu0
      %v6545 = vadd.f32 0.0, %v6544
      %v6546 = vpop.f32.mrf.mxu0
      %v6547 = vadd.f32 0.0, %v6546
      %6548 = vmatmul.bf16.gmra.mxu0 %v6424
      %v6549 = vpop.f32.mrf.mxu0
      %v6550 = vadd.f32 0.0, %v6549
      %v6551 = vpop.f32.mrf.mxu0
      %v6552 = vadd.f32 0.0, %v6551
      %6553 = vmatmul.bf16.gmra.mxu0 %v6425
      %v6554 = vpop.f32.mrf.mxu0
      %v6555 = vadd.f32 0.0, %v6554
      %v6556 = vpop.f32.mrf.mxu0
      %v6557 = vadd.f32 0.0, %v6556
      %6558 = vmatmul.bf16.gmra.mxu0 %v6426
      %v6559 = vpop.f32.mrf.mxu0
      %v6560 = vadd.f32 0.0, %v6559
      %v6561 = vpop.f32.mrf.mxu0
      %v6562 = vadd.f32 0.0, %v6561
      %6563 = vmatmul.bf16.gmra.mxu0 %v6427
      %v6564 = vpop.f32.mrf.mxu0
      %v6565 = vadd.f32 0.0, %v6564
      %v6566 = vpop.f32.mrf.mxu0
      %v6567 = vadd.f32 0.0, %v6566
      %6568 = vmatmul.bf16.gmra.mxu0 %v6428
      %v6569 = vpop.f32.mrf.mxu0
      %v6570 = vadd.f32 0.0, %v6569
      %v6571 = vpop.f32.mrf.mxu0
      %v6572 = vadd.f32 0.0, %v6571
      %6573 = vmatmul.bf16.gmra.mxu0 %v6429
      %v6574 = vpop.f32.mrf.mxu0
      %v6575 = vadd.f32 0.0, %v6574
      %v6576 = vpop.f32.mrf.mxu0
      %v6577 = vadd.f32 0.0, %v6576
      %6578 = vmatmul.bf16.gmra.mxu0 %v6430
      %v6579 = vpop.f32.mrf.mxu0
      %v6580 = vadd.f32 0.0, %v6579
      %v6581 = vpop.f32.mrf.mxu0
      %v6582 = vadd.f32 0.0, %v6581
      %6583 = vdwg.mxu0
      %v6584 = vadd.f32 %v5934, %v6505
      %v6585 = vadd.f32 %v5935, %v6507
      %v6586 = vadd.f32 %v5936, %v6510
      %v6587 = vadd.f32 %v5937, %v6512
      %v6588 = vadd.f32 %v5938, %v6515
      %v6589 = vadd.f32 %v5939, %v6517
      %v6590 = vadd.f32 %v5940, %v6520
      %v6591 = vadd.f32 %v5941, %v6522
      %v6592 = vadd.f32 %v5942, %v6525
      %v6593 = vadd.f32 %v5943, %v6527
      %v6594 = vadd.f32 %v5944, %v6530
      %v6595 = vadd.f32 %v5945, %v6532
      %v6596 = vadd.f32 %v5946, %v6535
      %v6597 = vadd.f32 %v5947, %v6537
      %v6598 = vadd.f32 %v5948, %v6540
      %v6599 = vadd.f32 %v5949, %v6542
      %v6600 = vadd.f32 %v5950, %v6545
      %v6601 = vadd.f32 %v5951, %v6547
      %v6602 = vadd.f32 %v5952, %v6550
      %v6603 = vadd.f32 %v5953, %v6552
      %v6604 = vadd.f32 %v5954, %v6555
      %v6605 = vadd.f32 %v5955, %v6557
      %v6606 = vadd.f32 %v5956, %v6560
      %v6607 = vadd.f32 %v5957, %v6562
      %v6608 = vadd.f32 %v5958, %v6565
      %v6609 = vadd.f32 %v5959, %v6567
      %v6610 = vadd.f32 %v5960, %v6570
      %v6611 = vadd.f32 %v5961, %v6572
      %v6612 = vadd.f32 %v5962, %v6575
      %v6613 = vadd.f32 %v5963, %v6577
      %v6614 = vadd.f32 %v5964, %v6580
      %v6615 = vadd.f32 %v5965, %v6582
      %s6616 = scalar_lea.vmem %s3, 256
      %v6617 = vld [vmem:[%s6616] sm:$0xf]
      %v6618 = vld [vmem:[%s6616 + $0x4] sm:$0xf]
      %v6619 = vld [vmem:[%s6616 + $0x8] sm:$0xf]
      %v6620 = vld [vmem:[%s6616 + $0xc] sm:$0xf]
      %v6621 = vld [vmem:[%s6616 + $0x10] sm:$0xf]
      %v6622 = vld [vmem:[%s6616 + $0x14] sm:$0xf]
      %v6623 = vld [vmem:[%s6616 + $0x18] sm:$0xf]
      %v6624 = vld [vmem:[%s6616 + $0x1c] sm:$0xf]
      %v6625 = vld [vmem:[%s6616 + $0x20] sm:$0xf]
      %v6626 = vld [vmem:[%s6616 + $0x24] sm:$0xf]
      %v6627 = vld [vmem:[%s6616 + $0x28] sm:$0xf]
      %v6628 = vld [vmem:[%s6616 + $0x2c] sm:$0xf]
      %v6629 = vld [vmem:[%s6616 + $0x30] sm:$0xf]
      %v6630 = vld [vmem:[%s6616 + $0x34] sm:$0xf]
      %v6631 = vld [vmem:[%s6616 + $0x38] sm:$0xf]
      %v6632 = vld [vmem:[%s6616 + $0x3c] sm:$0xf]
      %v6665 = vunpack.c.l.b16 %v5967
      %v6666 = vunpack.c.l.b16 %v5968
      %v6667 = vunpack.c.l.b16 %v5970
      %v6668 = vunpack.c.l.b16 %v5971
      %v6669 = vunpack.c.l.b16 %v5973
      %v6670 = vunpack.c.l.b16 %v5974
      %v6671 = vunpack.c.l.b16 %v5976
      %v6672 = vunpack.c.l.b16 %v5977
      %v6673 = vunpack.c.l.b16 %v5979
      %v6674 = vunpack.c.l.b16 %v5980
      %v6675 = vunpack.c.l.b16 %v5982
      %v6676 = vunpack.c.l.b16 %v5983
      %v6677 = vunpack.c.l.b16 %v5985
      %v6678 = vunpack.c.l.b16 %v5986
      %v6679 = vunpack.c.l.b16 %v5988
      %v6680 = vunpack.c.l.b16 %v5989
      %v6681 = vunpack.c.l.b16 %v5991
      %v6682 = vunpack.c.l.b16 %v5992
      %v6683 = vunpack.c.l.b16 %v5994
      %v6684 = vunpack.c.l.b16 %v5995
      %v6685 = vunpack.c.l.b16 %v5997
      %v6686 = vunpack.c.l.b16 %v5998
      %v6687 = vunpack.c.l.b16 %v6000
      %v6688 = vunpack.c.l.b16 %v6001
      %v6689 = vunpack.c.l.b16 %v6003
      %v6690 = vunpack.c.l.b16 %v6004
      %v6691 = vunpack.c.l.b16 %v6006
      %v6692 = vunpack.c.l.b16 %v6007
      %v6693 = vunpack.c.l.b16 %v6009
      %v6694 = vunpack.c.l.b16 %v6010
      %v6695 = vunpack.c.l.b16 %v6012
      %v6696 = vunpack.c.l.b16 %v6013
      %v6697 = vpack.c.b16 %v6666, %v6665
      %v6698 = vpack.c.b16 %v6668, %v6667
      %v6699 = vpack.c.b16 %v6670, %v6669
      %v6700 = vpack.c.b16 %v6672, %v6671
      %v6701 = vpack.c.b16 %v6674, %v6673
      %v6702 = vpack.c.b16 %v6676, %v6675
      %v6703 = vpack.c.b16 %v6678, %v6677
      %v6704 = vpack.c.b16 %v6680, %v6679
      %v6705 = vpack.c.b16 %v6682, %v6681
      %v6706 = vpack.c.b16 %v6684, %v6683
      %v6707 = vpack.c.b16 %v6686, %v6685
      %v6708 = vpack.c.b16 %v6688, %v6687
      %v6709 = vpack.c.b16 %v6690, %v6689
      %v6710 = vpack.c.b16 %v6692, %v6691
      %v6711 = vpack.c.b16 %v6694, %v6693
      %v6712 = vpack.c.b16 %v6696, %v6695
      %v6745 = vunpack.c.l.b16 %v6617
      %v6746 = vunpack.c.l.b16 %v6618
      %v6747 = vunpack.c.l.b16 %v6619
      %v6748 = vunpack.c.l.b16 %v6620
      %v6749 = vunpack.c.l.b16 %v6621
      %v6750 = vunpack.c.l.b16 %v6622
      %v6751 = vunpack.c.l.b16 %v6623
      %v6752 = vunpack.c.l.b16 %v6624
      %v6753 = vunpack.c.l.b16 %v6625
      %v6754 = vunpack.c.l.b16 %v6626
      %v6755 = vunpack.c.l.b16 %v6627
      %v6756 = vunpack.c.l.b16 %v6628
      %v6757 = vunpack.c.l.b16 %v6629
      %v6758 = vunpack.c.l.b16 %v6630
      %v6759 = vunpack.c.l.b16 %v6631
      %v6760 = vunpack.c.l.b16 %v6632
      %v6761 = vpack.c.b16 %v6746, %v6745
      %v6762 = vpack.c.b16 %v6748, %v6747
      %v6763 = vpack.c.b16 %v6750, %v6749
      %v6764 = vpack.c.b16 %v6752, %v6751
      %v6765 = vpack.c.b16 %v6754, %v6753
      %v6766 = vpack.c.b16 %v6756, %v6755
      %v6767 = vpack.c.b16 %v6758, %v6757
      %v6768 = vpack.c.b16 %v6760, %v6759
      %6777 = vmatpush.bf16.msra.mxu0 %v6768
      %6778 = vmatpush.bf16.msra.mxu0 %v6767
      %6779 = vmatpush.bf16.msra.mxu0 %v6766
      %6780 = vmatpush.bf16.msra.mxu0 %v6765
      %6781 = vmatpush.bf16.msra.mxu0 %v6764
      %6782 = vmatpush.bf16.msra.mxu0 %v6763
      %6783 = vmatpush.bf16.msra.mxu0 %v6762
      %6784 = vmatpush.bf16.msra.mxu0 %v6761
      %6785 = vmatmul.bf16.gmra.mxu0 %v6697
      %v6786 = vpop.f32.mrf.mxu0
      %v6787 = vadd.f32 0.0, %v6786
      %v6788 = vpop.f32.mrf.mxu0
      %v6789 = vadd.f32 0.0, %v6788
      %6790 = vmatmul.bf16.gmra.mxu0 %v6698
      %v6791 = vpop.f32.mrf.mxu0
      %v6792 = vadd.f32 0.0, %v6791
      %v6793 = vpop.f32.mrf.mxu0
      %v6794 = vadd.f32 0.0, %v6793
      %6795 = vmatmul.bf16.gmra.mxu0 %v6699
      %v6796 = vpop.f32.mrf.mxu0
      %v6797 = vadd.f32 0.0, %v6796
      %v6798 = vpop.f32.mrf.mxu0
      %v6799 = vadd.f32 0.0, %v6798
      %6800 = vmatmul.bf16.gmra.mxu0 %v6700
      %v6801 = vpop.f32.mrf.mxu0
      %v6802 = vadd.f32 0.0, %v6801
      %v6803 = vpop.f32.mrf.mxu0
      %v6804 = vadd.f32 0.0, %v6803
      %6805 = vmatmul.bf16.gmra.mxu0 %v6701
      %v6806 = vpop.f32.mrf.mxu0
      %v6807 = vadd.f32 0.0, %v6806
      %v6808 = vpop.f32.mrf.mxu0
      %v6809 = vadd.f32 0.0, %v6808
      %6810 = vmatmul.bf16.gmra.mxu0 %v6702
      %v6811 = vpop.f32.mrf.mxu0
      %v6812 = vadd.f32 0.0, %v6811
      %v6813 = vpop.f32.mrf.mxu0
      %v6814 = vadd.f32 0.0, %v6813
      %6815 = vmatmul.bf16.gmra.mxu0 %v6703
      %v6816 = vpop.f32.mrf.mxu0
      %v6817 = vadd.f32 0.0, %v6816
      %v6818 = vpop.f32.mrf.mxu0
      %v6819 = vadd.f32 0.0, %v6818
      %6820 = vmatmul.bf16.gmra.mxu0 %v6704
      %v6821 = vpop.f32.mrf.mxu0
      %v6822 = vadd.f32 0.0, %v6821
      %v6823 = vpop.f32.mrf.mxu0
      %v6824 = vadd.f32 0.0, %v6823
      %6825 = vmatmul.bf16.gmra.mxu0 %v6705
      %v6826 = vpop.f32.mrf.mxu0
      %v6827 = vadd.f32 0.0, %v6826
      %v6828 = vpop.f32.mrf.mxu0
      %v6829 = vadd.f32 0.0, %v6828
      %6830 = vmatmul.bf16.gmra.mxu0 %v6706
      %v6831 = vpop.f32.mrf.mxu0
      %v6832 = vadd.f32 0.0, %v6831
      %v6833 = vpop.f32.mrf.mxu0
      %v6834 = vadd.f32 0.0, %v6833
      %6835 = vmatmul.bf16.gmra.mxu0 %v6707
      %v6836 = vpop.f32.mrf.mxu0
      %v6837 = vadd.f32 0.0, %v6836
      %v6838 = vpop.f32.mrf.mxu0
      %v6839 = vadd.f32 0.0, %v6838
      %6840 = vmatmul.bf16.gmra.mxu0 %v6708
      %v6841 = vpop.f32.mrf.mxu0
      %v6842 = vadd.f32 0.0, %v6841
      %v6843 = vpop.f32.mrf.mxu0
      %v6844 = vadd.f32 0.0, %v6843
      %6845 = vmatmul.bf16.gmra.mxu0 %v6709
      %v6846 = vpop.f32.mrf.mxu0
      %v6847 = vadd.f32 0.0, %v6846
      %v6848 = vpop.f32.mrf.mxu0
      %v6849 = vadd.f32 0.0, %v6848
      %6850 = vmatmul.bf16.gmra.mxu0 %v6710
      %v6851 = vpop.f32.mrf.mxu0
      %v6852 = vadd.f32 0.0, %v6851
      %v6853 = vpop.f32.mrf.mxu0
      %v6854 = vadd.f32 0.0, %v6853
      %6855 = vmatmul.bf16.gmra.mxu0 %v6711
      %v6856 = vpop.f32.mrf.mxu0
      %v6857 = vadd.f32 0.0, %v6856
      %v6858 = vpop.f32.mrf.mxu0
      %v6859 = vadd.f32 0.0, %v6858
      %6860 = vmatmul.bf16.gmra.mxu0 %v6712
      %v6861 = vpop.f32.mrf.mxu0
      %v6862 = vadd.f32 0.0, %v6861
      %v6863 = vpop.f32.mrf.mxu0
      %v6864 = vadd.f32 0.0, %v6863
      %6865 = vdwg.mxu0
      %v6866 = vadd.f32 %v6584, %v6787
      %v6867 = vadd.f32 %v6585, %v6789
      %v6868 = vadd.f32 %v6586, %v6792
      %v6869 = vadd.f32 %v6587, %v6794
      %v6870 = vadd.f32 %v6588, %v6797
      %v6871 = vadd.f32 %v6589, %v6799
      %v6872 = vadd.f32 %v6590, %v6802
      %v6873 = vadd.f32 %v6591, %v6804
      %v6874 = vadd.f32 %v6592, %v6807
      %v6875 = vadd.f32 %v6593, %v6809
      %v6876 = vadd.f32 %v6594, %v6812
      %v6877 = vadd.f32 %v6595, %v6814
      %v6878 = vadd.f32 %v6596, %v6817
      %v6879 = vadd.f32 %v6597, %v6819
      %v6880 = vadd.f32 %v6598, %v6822
      %v6881 = vadd.f32 %v6599, %v6824
      %v6882 = vadd.f32 %v6600, %v6827
      %v6883 = vadd.f32 %v6601, %v6829
      %v6884 = vadd.f32 %v6602, %v6832
      %v6885 = vadd.f32 %v6603, %v6834
      %v6886 = vadd.f32 %v6604, %v6837
      %v6887 = vadd.f32 %v6605, %v6839
      %v6888 = vadd.f32 %v6606, %v6842
      %v6889 = vadd.f32 %v6607, %v6844
      %v6890 = vadd.f32 %v6608, %v6847
      %v6891 = vadd.f32 %v6609, %v6849
      %v6892 = vadd.f32 %v6610, %v6852
      %v6893 = vadd.f32 %v6611, %v6854
      %v6894 = vadd.f32 %v6612, %v6857
      %v6895 = vadd.f32 %v6613, %v6859
      %v6896 = vadd.f32 %v6614, %v6862
      %v6897 = vadd.f32 %v6615, %v6864
      %v6898 = vld [vmem:[%s4381 + $0x8] sm:$0xf]
      %v6899 = vld [vmem:[%s4381 + $0xc] sm:$0xf]
      %v6900 = vld [vmem:[%s4381 + $0x10] sm:$0x1]
      %v6901 = vld [vmem:[%s4381 + $0x1c] sm:$0xf]
      %v6902 = vld [vmem:[%s4381 + $0x20] sm:$0xf]
      %v6903 = vld [vmem:[%s4381 + $0x24] sm:$0x1]
      %v6904 = vld [vmem:[%s4381 + $0x30] sm:$0xf]
      %v6905 = vld [vmem:[%s4381 + $0x34] sm:$0xf]
      %v6906 = vld [vmem:[%s4381 + $0x38] sm:$0x1]
      %v6907 = vld [vmem:[%s4381 + $0x44] sm:$0xf]
      %v6908 = vld [vmem:[%s4381 + $0x48] sm:$0xf]
      %v6909 = vld [vmem:[%s4381 + $0x4c] sm:$0x1]
      %v6910 = vld [vmem:[%s4381 + $0x58] sm:$0xf]
      %v6911 = vld [vmem:[%s4381 + $0x5c] sm:$0xf]
      %v6912 = vld [vmem:[%s4381 + $0x60] sm:$0x1]
      %v6913 = vld [vmem:[%s4381 + $0x6c] sm:$0xf]
      %v6914 = vld [vmem:[%s4381 + $0x70] sm:$0xf]
      %v6915 = vld [vmem:[%s4381 + $0x74] sm:$0x1]
      %v6916 = vld [vmem:[%s4381 + $0x80] sm:$0xf]
      %v6917 = vld [vmem:[%s4381 + $0x84] sm:$0xf]
      %v6918 = vld [vmem:[%s4381 + $0x88] sm:$0x1]
      %v6919 = vld [vmem:[%s4381 + $0x94] sm:$0xf]
      %v6920 = vld [vmem:[%s4381 + $0x98] sm:$0xf]
      %v6921 = vld [vmem:[%s4381 + $0x9c] sm:$0x1]
      %v6922 = vld [vmem:[%s4381 + $0xa8] sm:$0xf]
      %v6923 = vld [vmem:[%s4381 + $0xac] sm:$0xf]
      %v6924 = vld [vmem:[%s4381 + $0xb0] sm:$0x1]
      %v6925 = vld [vmem:[%s4381 + $0xbc] sm:$0xf]
      %v6926 = vld [vmem:[%s4381 + $0xc0] sm:$0xf]
      %v6927 = vld [vmem:[%s4381 + $0xc4] sm:$0x1]
      %v6928 = vld [vmem:[%s4381 + $0xd0] sm:$0xf]
      %v6929 = vld [vmem:[%s4381 + $0xd4] sm:$0xf]
      %v6930 = vld [vmem:[%s4381 + $0xd8] sm:$0x1]
      %v6931 = vld [vmem:[%s4381 + $0xe4] sm:$0xf]
      %v6932 = vld [vmem:[%s4381 + $0xe8] sm:$0xf]
      %v6933 = vld [vmem:[%s4381 + $0xec] sm:$0x1]
      %v6934 = vld [vmem:[%s4381 + $0xf8] sm:$0xf]
      %v6935 = vld [vmem:[%s4381 + $0xfc] sm:$0xf]
      %v6936 = vld [vmem:[%s4381 + $0x100] sm:$0x1]
      %v6937 = vld [vmem:[%s4381 + $0x10c] sm:$0xf]
      %v6938 = vld [vmem:[%s4381 + $0x110] sm:$0xf]
      %v6939 = vld [vmem:[%s4381 + $0x114] sm:$0x1]
      %v6940 = vld [vmem:[%s4381 + $0x120] sm:$0xf]
      %v6941 = vld [vmem:[%s4381 + $0x124] sm:$0xf]
      %v6942 = vld [vmem:[%s4381 + $0x128] sm:$0x1]
      %v6943 = vld [vmem:[%s4381 + $0x134] sm:$0xf]
      %v6944 = vld [vmem:[%s4381 + $0x138] sm:$0xf]
      %v6945 = vld [vmem:[%s4381 + $0x13c] sm:$0x1]
      %v6947 = vshrl.u32 %v6898, 16
      %v6949 = vrot.slane %v6947, 4
      %v6950 = vshll.u32 %v6898, 16
      %v6952 = vrot.slane %v6950, 5
      %v6953 = vor.u32 %v6949, %v6952
      %v6954 = vrot.slane %v6953, 4
      %v6956 = vshll.u32 %v6899, 16
      %v6958 = vrot.slane %v6956, 5
      %v6959 = vsel %vm331, %v6954, %v6958
      %v6960 = vshrl.u32 %v6899, 16
      %v6962 = vrot.slane %v6960, 4
      %v6963 = vor.u32 %v6962, %v6958
      %v6964 = vrot.slane %v6963, 4
      %v6966 = vshll.u32 %v6900, 16
      %v6968 = vrot.slane %v6966, 5
      %v6969 = vsel %vm331, %v6964, %v6968
      %v6971 = vshrl.u32 %v6901, 16
      %v6973 = vrot.slane %v6971, 4
      %v6974 = vshll.u32 %v6901, 16
      %v6976 = vrot.slane %v6974, 5
      %v6977 = vor.u32 %v6973, %v6976
      %v6978 = vrot.slane %v6977, 4
      %v6980 = vshll.u32 %v6902, 16
      %v6982 = vrot.slane %v6980, 5
      %v6983 = vsel %vm331, %v6978, %v6982
      %v6984 = vshrl.u32 %v6902, 16
      %v6986 = vrot.slane %v6984, 4
      %v6987 = vor.u32 %v6986, %v6982
      %v6988 = vrot.slane %v6987, 4
      %v6990 = vshll.u32 %v6903, 16
      %v6992 = vrot.slane %v6990, 5
      %v6993 = vsel %vm331, %v6988, %v6992
      %v6995 = vshrl.u32 %v6904, 16
      %v6997 = vrot.slane %v6995, 4
      %v6998 = vshll.u32 %v6904, 16
      %v7000 = vrot.slane %v6998, 5
      %v7001 = vor.u32 %v6997, %v7000
      %v7002 = vrot.slane %v7001, 4
      %v7004 = vshll.u32 %v6905, 16
      %v7006 = vrot.slane %v7004, 5
      %v7007 = vsel %vm331, %v7002, %v7006
      %v7008 = vshrl.u32 %v6905, 16
      %v7010 = vrot.slane %v7008, 4
      %v7011 = vor.u32 %v7010, %v7006
      %v7012 = vrot.slane %v7011, 4
      %v7014 = vshll.u32 %v6906, 16
      %v7016 = vrot.slane %v7014, 5
      %v7017 = vsel %vm331, %v7012, %v7016
      %v7019 = vshrl.u32 %v6907, 16
      %v7021 = vrot.slane %v7019, 4
      %v7022 = vshll.u32 %v6907, 16
      %v7024 = vrot.slane %v7022, 5
      %v7025 = vor.u32 %v7021, %v7024
      %v7026 = vrot.slane %v7025, 4
      %v7028 = vshll.u32 %v6908, 16
      %v7030 = vrot.slane %v7028, 5
      %v7031 = vsel %vm331, %v7026, %v7030
      %v7032 = vshrl.u32 %v6908, 16
      %v7034 = vrot.slane %v7032, 4
      %v7035 = vor.u32 %v7034, %v7030
      %v7036 = vrot.slane %v7035, 4
      %v7038 = vshll.u32 %v6909, 16
      %v7040 = vrot.slane %v7038, 5
      %v7041 = vsel %vm331, %v7036, %v7040
      %v7043 = vshrl.u32 %v6910, 16
      %v7045 = vrot.slane %v7043, 4
      %v7046 = vshll.u32 %v6910, 16
      %v7048 = vrot.slane %v7046, 5
      %v7049 = vor.u32 %v7045, %v7048
      %v7050 = vrot.slane %v7049, 4
      %v7052 = vshll.u32 %v6911, 16
      %v7054 = vrot.slane %v7052, 5
      %v7055 = vsel %vm331, %v7050, %v7054
      %v7056 = vshrl.u32 %v6911, 16
      %v7058 = vrot.slane %v7056, 4
      %v7059 = vor.u32 %v7058, %v7054
      %v7060 = vrot.slane %v7059, 4
      %v7062 = vshll.u32 %v6912, 16
      %v7064 = vrot.slane %v7062, 5
      %v7065 = vsel %vm331, %v7060, %v7064
      %v7067 = vshrl.u32 %v6913, 16
      %v7069 = vrot.slane %v7067, 4
      %v7070 = vshll.u32 %v6913, 16
      %v7072 = vrot.slane %v7070, 5
      %v7073 = vor.u32 %v7069, %v7072
      %v7074 = vrot.slane %v7073, 4
      %v7076 = vshll.u32 %v6914, 16
      %v7078 = vrot.slane %v7076, 5
      %v7079 = vsel %vm331, %v7074, %v7078
      %v7080 = vshrl.u32 %v6914, 16
      %v7082 = vrot.slane %v7080, 4
      %v7083 = vor.u32 %v7082, %v7078
      %v7084 = vrot.slane %v7083, 4
      %v7086 = vshll.u32 %v6915, 16
      %v7088 = vrot.slane %v7086, 5
      %v7089 = vsel %vm331, %v7084, %v7088
      %v7091 = vshrl.u32 %v6916, 16
      %v7093 = vrot.slane %v7091, 4
      %v7094 = vshll.u32 %v6916, 16
      %v7096 = vrot.slane %v7094, 5
      %v7097 = vor.u32 %v7093, %v7096
      %v7098 = vrot.slane %v7097, 4
      %v7100 = vshll.u32 %v6917, 16
      %v7102 = vrot.slane %v7100, 5
      %v7103 = vsel %vm331, %v7098, %v7102
      %v7104 = vshrl.u32 %v6917, 16
      %v7106 = vrot.slane %v7104, 4
      %v7107 = vor.u32 %v7106, %v7102
      %v7108 = vrot.slane %v7107, 4
      %v7110 = vshll.u32 %v6918, 16
      %v7112 = vrot.slane %v7110, 5
      %v7113 = vsel %vm331, %v7108, %v7112
      %v7115 = vshrl.u32 %v6919, 16
      %v7117 = vrot.slane %v7115, 4
      %v7118 = vshll.u32 %v6919, 16
      %v7120 = vrot.slane %v7118, 5
      %v7121 = vor.u32 %v7117, %v7120
      %v7122 = vrot.slane %v7121, 4
      %v7124 = vshll.u32 %v6920, 16
      %v7126 = vrot.slane %v7124, 5
      %v7127 = vsel %vm331, %v7122, %v7126
      %v7128 = vshrl.u32 %v6920, 16
      %v7130 = vrot.slane %v7128, 4
      %v7131 = vor.u32 %v7130, %v7126
      %v7132 = vrot.slane %v7131, 4
      %v7134 = vshll.u32 %v6921, 16
      %v7136 = vrot.slane %v7134, 5
      %v7137 = vsel %vm331, %v7132, %v7136
      %v7139 = vshrl.u32 %v6922, 16
      %v7141 = vrot.slane %v7139, 4
      %v7142 = vshll.u32 %v6922, 16
      %v7144 = vrot.slane %v7142, 5
      %v7145 = vor.u32 %v7141, %v7144
      %v7146 = vrot.slane %v7145, 4
      %v7148 = vshll.u32 %v6923, 16
      %v7150 = vrot.slane %v7148, 5
      %v7151 = vsel %vm331, %v7146, %v7150
      %v7152 = vshrl.u32 %v6923, 16
      %v7154 = vrot.slane %v7152, 4
      %v7155 = vor.u32 %v7154, %v7150
      %v7156 = vrot.slane %v7155, 4
      %v7158 = vshll.u32 %v6924, 16
      %v7160 = vrot.slane %v7158, 5
      %v7161 = vsel %vm331, %v7156, %v7160
      %v7163 = vshrl.u32 %v6925, 16
      %v7165 = vrot.slane %v7163, 4
      %v7166 = vshll.u32 %v6925, 16
      %v7168 = vrot.slane %v7166, 5
      %v7169 = vor.u32 %v7165, %v7168
      %v7170 = vrot.slane %v7169, 4
      %v7172 = vshll.u32 %v6926, 16
      %v7174 = vrot.slane %v7172, 5
      %v7175 = vsel %vm331, %v7170, %v7174
      %v7176 = vshrl.u32 %v6926, 16
      %v7178 = vrot.slane %v7176, 4
      %v7179 = vor.u32 %v7178, %v7174
      %v7180 = vrot.slane %v7179, 4
      %v7182 = vshll.u32 %v6927, 16
      %v7184 = vrot.slane %v7182, 5
      %v7185 = vsel %vm331, %v7180, %v7184
      %v7187 = vshrl.u32 %v6928, 16
      %v7189 = vrot.slane %v7187, 4
      %v7190 = vshll.u32 %v6928, 16
      %v7192 = vrot.slane %v7190, 5
      %v7193 = vor.u32 %v7189, %v7192
      %v7194 = vrot.slane %v7193, 4
      %v7196 = vshll.u32 %v6929, 16
      %v7198 = vrot.slane %v7196, 5
      %v7199 = vsel %vm331, %v7194, %v7198
      %v7200 = vshrl.u32 %v6929, 16
      %v7202 = vrot.slane %v7200, 4
      %v7203 = vor.u32 %v7202, %v7198
      %v7204 = vrot.slane %v7203, 4
      %v7206 = vshll.u32 %v6930, 16
      %v7208 = vrot.slane %v7206, 5
      %v7209 = vsel %vm331, %v7204, %v7208
      %v7211 = vshrl.u32 %v6931, 16
      %v7213 = vrot.slane %v7211, 4
      %v7214 = vshll.u32 %v6931, 16
      %v7216 = vrot.slane %v7214, 5
      %v7217 = vor.u32 %v7213, %v7216
      %v7218 = vrot.slane %v7217, 4
      %v7220 = vshll.u32 %v6932, 16
      %v7222 = vrot.slane %v7220, 5
      %v7223 = vsel %vm331, %v7218, %v7222
      %v7224 = vshrl.u32 %v6932, 16
      %v7226 = vrot.slane %v7224, 4
      %v7227 = vor.u32 %v7226, %v7222
      %v7228 = vrot.slane %v7227, 4
      %v7230 = vshll.u32 %v6933, 16
      %v7232 = vrot.slane %v7230, 5
      %v7233 = vsel %vm331, %v7228, %v7232
      %v7235 = vshrl.u32 %v6934, 16
      %v7237 = vrot.slane %v7235, 4
      %v7238 = vshll.u32 %v6934, 16
      %v7240 = vrot.slane %v7238, 5
      %v7241 = vor.u32 %v7237, %v7240
      %v7242 = vrot.slane %v7241, 4
      %v7244 = vshll.u32 %v6935, 16
      %v7246 = vrot.slane %v7244, 5
      %v7247 = vsel %vm331, %v7242, %v7246
      %v7248 = vshrl.u32 %v6935, 16
      %v7250 = vrot.slane %v7248, 4
      %v7251 = vor.u32 %v7250, %v7246
      %v7252 = vrot.slane %v7251, 4
      %v7254 = vshll.u32 %v6936, 16
      %v7256 = vrot.slane %v7254, 5
      %v7257 = vsel %vm331, %v7252, %v7256
      %v7259 = vshrl.u32 %v6937, 16
      %v7261 = vrot.slane %v7259, 4
      %v7262 = vshll.u32 %v6937, 16
      %v7264 = vrot.slane %v7262, 5
      %v7265 = vor.u32 %v7261, %v7264
      %v7266 = vrot.slane %v7265, 4
      %v7268 = vshll.u32 %v6938, 16
      %v7270 = vrot.slane %v7268, 5
      %v7271 = vsel %vm331, %v7266, %v7270
      %v7272 = vshrl.u32 %v6938, 16
      %v7274 = vrot.slane %v7272, 4
      %v7275 = vor.u32 %v7274, %v7270
      %v7276 = vrot.slane %v7275, 4
      %v7278 = vshll.u32 %v6939, 16
      %v7280 = vrot.slane %v7278, 5
      %v7281 = vsel %vm331, %v7276, %v7280
      %v7283 = vshrl.u32 %v6940, 16
      %v7285 = vrot.slane %v7283, 4
      %v7286 = vshll.u32 %v6940, 16
      %v7288 = vrot.slane %v7286, 5
      %v7289 = vor.u32 %v7285, %v7288
      %v7290 = vrot.slane %v7289, 4
      %v7292 = vshll.u32 %v6941, 16
      %v7294 = vrot.slane %v7292, 5
      %v7295 = vsel %vm331, %v7290, %v7294
      %v7296 = vshrl.u32 %v6941, 16
      %v7298 = vrot.slane %v7296, 4
      %v7299 = vor.u32 %v7298, %v7294
      %v7300 = vrot.slane %v7299, 4
      %v7302 = vshll.u32 %v6942, 16
      %v7304 = vrot.slane %v7302, 5
      %v7305 = vsel %vm331, %v7300, %v7304
      %v7307 = vshrl.u32 %v6943, 16
      %v7309 = vrot.slane %v7307, 4
      %v7310 = vshll.u32 %v6943, 16
      %v7312 = vrot.slane %v7310, 5
      %v7313 = vor.u32 %v7309, %v7312
      %v7314 = vrot.slane %v7313, 4
      %v7316 = vshll.u32 %v6944, 16
      %v7318 = vrot.slane %v7316, 5
      %v7319 = vsel %vm331, %v7314, %v7318
      %v7320 = vshrl.u32 %v6944, 16
      %v7322 = vrot.slane %v7320, 4
      %v7323 = vor.u32 %v7322, %v7318
      %v7324 = vrot.slane %v7323, 4
      %v7326 = vshll.u32 %v6945, 16
      %v7328 = vrot.slane %v7326, 5
      %v7329 = vsel %vm331, %v7324, %v7328
      %s7330 = scalar_lea.vmem %s3, 320
      %v7331 = vld [vmem:[%s7330] sm:$0xf]
      %v7332 = vld [vmem:[%s7330 + $0x4] sm:$0xf]
      %v7333 = vld [vmem:[%s7330 + $0x8] sm:$0xf]
      %v7334 = vld [vmem:[%s7330 + $0xc] sm:$0xf]
      %v7335 = vld [vmem:[%s7330 + $0x10] sm:$0xf]
      %v7336 = vld [vmem:[%s7330 + $0x14] sm:$0xf]
      %v7337 = vld [vmem:[%s7330 + $0x18] sm:$0xf]
      %v7338 = vld [vmem:[%s7330 + $0x1c] sm:$0xf]
      %v7339 = vld [vmem:[%s7330 + $0x20] sm:$0xf]
      %v7340 = vld [vmem:[%s7330 + $0x24] sm:$0xf]
      %v7341 = vld [vmem:[%s7330 + $0x28] sm:$0xf]
      %v7342 = vld [vmem:[%s7330 + $0x2c] sm:$0xf]
      %v7343 = vld [vmem:[%s7330 + $0x30] sm:$0xf]
      %v7344 = vld [vmem:[%s7330 + $0x34] sm:$0xf]
      %v7345 = vld [vmem:[%s7330 + $0x38] sm:$0xf]
      %v7346 = vld [vmem:[%s7330 + $0x3c] sm:$0xf]
      %v7347 = vunpack.c.l.b16 %v6959
      %v7348 = vunpack.c.l.b16 %v6969
      %v7349 = vunpack.c.l.b16 %v6983
      %v7350 = vunpack.c.l.b16 %v6993
      %v7351 = vunpack.c.l.b16 %v7007
      %v7352 = vunpack.c.l.b16 %v7017
      %v7353 = vunpack.c.l.b16 %v7031
      %v7354 = vunpack.c.l.b16 %v7041
      %v7355 = vunpack.c.l.b16 %v7055
      %v7356 = vunpack.c.l.b16 %v7065
      %v7357 = vunpack.c.l.b16 %v7079
      %v7358 = vunpack.c.l.b16 %v7089
      %v7359 = vunpack.c.l.b16 %v7103
      %v7360 = vunpack.c.l.b16 %v7113
      %v7361 = vunpack.c.l.b16 %v7127
      %v7362 = vunpack.c.l.b16 %v7137
      %v7363 = vunpack.c.l.b16 %v7151
      %v7364 = vunpack.c.l.b16 %v7161
      %v7365 = vunpack.c.l.b16 %v7175
      %v7366 = vunpack.c.l.b16 %v7185
      %v7367 = vunpack.c.l.b16 %v7199
      %v7368 = vunpack.c.l.b16 %v7209
      %v7369 = vunpack.c.l.b16 %v7223
      %v7370 = vunpack.c.l.b16 %v7233
      %v7371 = vunpack.c.l.b16 %v7247
      %v7372 = vunpack.c.l.b16 %v7257
      %v7373 = vunpack.c.l.b16 %v7271
      %v7374 = vunpack.c.l.b16 %v7281
      %v7375 = vunpack.c.l.b16 %v7295
      %v7376 = vunpack.c.l.b16 %v7305
      %v7377 = vunpack.c.l.b16 %v7319
      %v7378 = vunpack.c.l.b16 %v7329
      %v7379 = vpack.c.b16 %v7348, %v7347
      %v7380 = vpack.c.b16 %v7350, %v7349
      %v7381 = vpack.c.b16 %v7352, %v7351
      %v7382 = vpack.c.b16 %v7354, %v7353
      %v7383 = vpack.c.b16 %v7356, %v7355
      %v7384 = vpack.c.b16 %v7358, %v7357
      %v7385 = vpack.c.b16 %v7360, %v7359
      %v7386 = vpack.c.b16 %v7362, %v7361
      %v7387 = vpack.c.b16 %v7364, %v7363
      %v7388 = vpack.c.b16 %v7366, %v7365
      %v7389 = vpack.c.b16 %v7368, %v7367
      %v7390 = vpack.c.b16 %v7370, %v7369
      %v7391 = vpack.c.b16 %v7372, %v7371
      %v7392 = vpack.c.b16 %v7374, %v7373
      %v7393 = vpack.c.b16 %v7376, %v7375
      %v7394 = vpack.c.b16 %v7378, %v7377
      %v7427 = vunpack.c.l.b16 %v7331
      %v7428 = vunpack.c.l.b16 %v7332
      %v7429 = vunpack.c.l.b16 %v7333
      %v7430 = vunpack.c.l.b16 %v7334
      %v7431 = vunpack.c.l.b16 %v7335
      %v7432 = vunpack.c.l.b16 %v7336
      %v7433 = vunpack.c.l.b16 %v7337
      %v7434 = vunpack.c.l.b16 %v7338
      %v7435 = vunpack.c.l.b16 %v7339
      %v7436 = vunpack.c.l.b16 %v7340
      %v7437 = vunpack.c.l.b16 %v7341
      %v7438 = vunpack.c.l.b16 %v7342
      %v7439 = vunpack.c.l.b16 %v7343
      %v7440 = vunpack.c.l.b16 %v7344
      %v7441 = vunpack.c.l.b16 %v7345
      %v7442 = vunpack.c.l.b16 %v7346
      %v7443 = vpack.c.b16 %v7428, %v7427
      %v7444 = vpack.c.b16 %v7430, %v7429
      %v7445 = vpack.c.b16 %v7432, %v7431
      %v7446 = vpack.c.b16 %v7434, %v7433
      %v7447 = vpack.c.b16 %v7436, %v7435
      %v7448 = vpack.c.b16 %v7438, %v7437
      %v7449 = vpack.c.b16 %v7440, %v7439
      %v7450 = vpack.c.b16 %v7442, %v7441
      %7459 = vmatpush.bf16.msra.mxu0 %v7450
      %7460 = vmatpush.bf16.msra.mxu0 %v7449
      %7461 = vmatpush.bf16.msra.mxu0 %v7448
      %7462 = vmatpush.bf16.msra.mxu0 %v7447
      %7463 = vmatpush.bf16.msra.mxu0 %v7446
      %7464 = vmatpush.bf16.msra.mxu0 %v7445
      %7465 = vmatpush.bf16.msra.mxu0 %v7444
      %7466 = vmatpush.bf16.msra.mxu0 %v7443
      %7467 = vmatmul.bf16.gmra.mxu0 %v7379
      %v7468 = vpop.f32.mrf.mxu0
      %v7469 = vadd.f32 0.0, %v7468
      %v7470 = vpop.f32.mrf.mxu0
      %v7471 = vadd.f32 0.0, %v7470
      %7472 = vmatmul.bf16.gmra.mxu0 %v7380
      %v7473 = vpop.f32.mrf.mxu0
      %v7474 = vadd.f32 0.0, %v7473
      %v7475 = vpop.f32.mrf.mxu0
      %v7476 = vadd.f32 0.0, %v7475
      %7477 = vmatmul.bf16.gmra.mxu0 %v7381
      %v7478 = vpop.f32.mrf.mxu0
      %v7479 = vadd.f32 0.0, %v7478
      %v7480 = vpop.f32.mrf.mxu0
      %v7481 = vadd.f32 0.0, %v7480
      %7482 = vmatmul.bf16.gmra.mxu0 %v7382
      %v7483 = vpop.f32.mrf.mxu0
      %v7484 = vadd.f32 0.0, %v7483
      %v7485 = vpop.f32.mrf.mxu0
      %v7486 = vadd.f32 0.0, %v7485
      %7487 = vmatmul.bf16.gmra.mxu0 %v7383
      %v7488 = vpop.f32.mrf.mxu0
      %v7489 = vadd.f32 0.0, %v7488
      %v7490 = vpop.f32.mrf.mxu0
      %v7491 = vadd.f32 0.0, %v7490
      %7492 = vmatmul.bf16.gmra.mxu0 %v7384
      %v7493 = vpop.f32.mrf.mxu0
      %v7494 = vadd.f32 0.0, %v7493
      %v7495 = vpop.f32.mrf.mxu0
      %v7496 = vadd.f32 0.0, %v7495
      %7497 = vmatmul.bf16.gmra.mxu0 %v7385
      %v7498 = vpop.f32.mrf.mxu0
      %v7499 = vadd.f32 0.0, %v7498
      %v7500 = vpop.f32.mrf.mxu0
      %v7501 = vadd.f32 0.0, %v7500
      %7502 = vmatmul.bf16.gmra.mxu0 %v7386
      %v7503 = vpop.f32.mrf.mxu0
      %v7504 = vadd.f32 0.0, %v7503
      %v7505 = vpop.f32.mrf.mxu0
      %v7506 = vadd.f32 0.0, %v7505
      %7507 = vmatmul.bf16.gmra.mxu0 %v7387
      %v7508 = vpop.f32.mrf.mxu0
      %v7509 = vadd.f32 0.0, %v7508
      %v7510 = vpop.f32.mrf.mxu0
      %v7511 = vadd.f32 0.0, %v7510
      %7512 = vmatmul.bf16.gmra.mxu0 %v7388
      %v7513 = vpop.f32.mrf.mxu0
      %v7514 = vadd.f32 0.0, %v7513
      %v7515 = vpop.f32.mrf.mxu0
      %v7516 = vadd.f32 0.0, %v7515
      %7517 = vmatmul.bf16.gmra.mxu0 %v7389
      %v7518 = vpop.f32.mrf.mxu0
      %v7519 = vadd.f32 0.0, %v7518
      %v7520 = vpop.f32.mrf.mxu0
      %v7521 = vadd.f32 0.0, %v7520
      %7522 = vmatmul.bf16.gmra.mxu0 %v7390
      %v7523 = vpop.f32.mrf.mxu0
      %v7524 = vadd.f32 0.0, %v7523
      %v7525 = vpop.f32.mrf.mxu0
      %v7526 = vadd.f32 0.0, %v7525
      %7527 = vmatmul.bf16.gmra.mxu0 %v7391
      %v7528 = vpop.f32.mrf.mxu0
      %v7529 = vadd.f32 0.0, %v7528
      %v7530 = vpop.f32.mrf.mxu0
      %v7531 = vadd.f32 0.0, %v7530
      %7532 = vmatmul.bf16.gmra.mxu0 %v7392
      %v7533 = vpop.f32.mrf.mxu0
      %v7534 = vadd.f32 0.0, %v7533
      %v7535 = vpop.f32.mrf.mxu0
      %v7536 = vadd.f32 0.0, %v7535
      %7537 = vmatmul.bf16.gmra.mxu0 %v7393
      %v7538 = vpop.f32.mrf.mxu0
      %v7539 = vadd.f32 0.0, %v7538
      %v7540 = vpop.f32.mrf.mxu0
      %v7541 = vadd.f32 0.0, %v7540
      %7542 = vmatmul.bf16.gmra.mxu0 %v7394
      %v7543 = vpop.f32.mrf.mxu0
      %v7544 = vadd.f32 0.0, %v7543
      %v7545 = vpop.f32.mrf.mxu0
      %v7546 = vadd.f32 0.0, %v7545
      %7547 = vdwg.mxu0
      %v7548 = vadd.f32 %v6866, %v7469
      %v7549 = vadd.f32 %v6867, %v7471
      %v7550 = vadd.f32 %v6868, %v7474
      %v7551 = vadd.f32 %v6869, %v7476
      %v7552 = vadd.f32 %v6870, %v7479
      %v7553 = vadd.f32 %v6871, %v7481
      %v7554 = vadd.f32 %v6872, %v7484
      %v7555 = vadd.f32 %v6873, %v7486
      %v7556 = vadd.f32 %v6874, %v7489
      %v7557 = vadd.f32 %v6875, %v7491
      %v7558 = vadd.f32 %v6876, %v7494
      %v7559 = vadd.f32 %v6877, %v7496
      %v7560 = vadd.f32 %v6878, %v7499
      %v7561 = vadd.f32 %v6879, %v7501
      %v7562 = vadd.f32 %v6880, %v7504
      %v7563 = vadd.f32 %v6881, %v7506
      %v7564 = vadd.f32 %v6882, %v7509
      %v7565 = vadd.f32 %v6883, %v7511
      %v7566 = vadd.f32 %v6884, %v7514
      %v7567 = vadd.f32 %v6885, %v7516
      %v7568 = vadd.f32 %v6886, %v7519
      %v7569 = vadd.f32 %v6887, %v7521
      %v7570 = vadd.f32 %v6888, %v7524
      %v7571 = vadd.f32 %v6889, %v7526
      %v7572 = vadd.f32 %v6890, %v7529
      %v7573 = vadd.f32 %v6891, %v7531
      %v7574 = vadd.f32 %v6892, %v7534
      %v7575 = vadd.f32 %v6893, %v7536
      %v7576 = vadd.f32 %v6894, %v7539
      %v7577 = vadd.f32 %v6895, %v7541
      %v7578 = vadd.f32 %v6896, %v7544
      %v7579 = vadd.f32 %v6897, %v7546
      %s7580 = scalar_lea.vmem [#allocation2], 40
      %v7581 = vld [vmem:[%s7580 + $0x4] sm:$0x8]
      %v7582 = vld [vmem:[%s7580 + $0x8] sm:$0xf]
      %v7583 = vld [vmem:[%s7580 + $0xc] sm:$0xf]
      %v7584 = vld [vmem:[%s7580 + $0x18] sm:$0x8]
      %v7585 = vld [vmem:[%s7580 + $0x1c] sm:$0xf]
      %v7586 = vld [vmem:[%s7580 + $0x20] sm:$0xf]
      %v7587 = vld [vmem:[%s7580 + $0x2c] sm:$0x8]
      %v7588 = vld [vmem:[%s7580 + $0x30] sm:$0xf]
      %v7589 = vld [vmem:[%s7580 + $0x34] sm:$0xf]
      %v7590 = vld [vmem:[%s7580 + $0x40] sm:$0x8]
      %v7591 = vld [vmem:[%s7580 + $0x44] sm:$0xf]
      %v7592 = vld [vmem:[%s7580 + $0x48] sm:$0xf]
      %v7593 = vld [vmem:[%s7580 + $0x54] sm:$0x8]
      %v7594 = vld [vmem:[%s7580 + $0x58] sm:$0xf]
      %v7595 = vld [vmem:[%s7580 + $0x5c] sm:$0xf]
      %v7596 = vld [vmem:[%s7580 + $0x68] sm:$0x8]
      %v7597 = vld [vmem:[%s7580 + $0x6c] sm:$0xf]
      %v7598 = vld [vmem:[%s7580 + $0x70] sm:$0xf]
      %v7599 = vld [vmem:[%s7580 + $0x7c] sm:$0x8]
      %v7600 = vld [vmem:[%s7580 + $0x80] sm:$0xf]
      %v7601 = vld [vmem:[%s7580 + $0x84] sm:$0xf]
      %v7602 = vld [vmem:[%s7580 + $0x90] sm:$0x8]
      %v7603 = vld [vmem:[%s7580 + $0x94] sm:$0xf]
      %v7604 = vld [vmem:[%s7580 + $0x98] sm:$0xf]
      %v7605 = vld [vmem:[%s7580 + $0xa4] sm:$0x8]
      %v7606 = vld [vmem:[%s7580 + $0xa8] sm:$0xf]
      %v7607 = vld [vmem:[%s7580 + $0xac] sm:$0xf]
      %v7608 = vld [vmem:[%s7580 + $0xb8] sm:$0x8]
      %v7609 = vld [vmem:[%s7580 + $0xbc] sm:$0xf]
      %v7610 = vld [vmem:[%s7580 + $0xc0] sm:$0xf]
      %v7611 = vld [vmem:[%s7580 + $0xcc] sm:$0x8]
      %v7612 = vld [vmem:[%s7580 + $0xd0] sm:$0xf]
      %v7613 = vld [vmem:[%s7580 + $0xd4] sm:$0xf]
      %v7614 = vld [vmem:[%s7580 + $0xe0] sm:$0x8]
      %v7615 = vld [vmem:[%s7580 + $0xe4] sm:$0xf]
      %v7616 = vld [vmem:[%s7580 + $0xe8] sm:$0xf]
      %v7617 = vld [vmem:[%s7580 + $0xf4] sm:$0x8]
      %v7618 = vld [vmem:[%s7580 + $0xf8] sm:$0xf]
      %v7619 = vld [vmem:[%s7580 + $0xfc] sm:$0xf]
      %v7620 = vld [vmem:[%s7580 + $0x108] sm:$0x8]
      %v7621 = vld [vmem:[%s7580 + $0x10c] sm:$0xf]
      %v7622 = vld [vmem:[%s7580 + $0x110] sm:$0xf]
      %v7623 = vld [vmem:[%s7580 + $0x11c] sm:$0x8]
      %v7624 = vld [vmem:[%s7580 + $0x120] sm:$0xf]
      %v7625 = vld [vmem:[%s7580 + $0x124] sm:$0xf]
      %v7626 = vld [vmem:[%s7580 + $0x130] sm:$0x8]
      %v7627 = vld [vmem:[%s7580 + $0x134] sm:$0xf]
      %v7628 = vld [vmem:[%s7580 + $0x138] sm:$0xf]
      %v7630 = vshrl.u32 %v7581, 16
      %v7632 = vrot.slane %v7630, 7
      %v7633 = vrot.slane %v7632, 4
      %v7635 = vshrl.u32 %v7582, 16
      %v7637 = vrot.slane %v7635, 7
      %v7638 = vshll.u32 %v7582, 16
      %v7640 = vor.u32 %v7637, %v7638
      %v7641 = vsel %vm4464, %v7633, %v7640
      %v7642 = vrot.slane %v7637, 4
      %v7644 = vshrl.u32 %v7583, 16
      %v7646 = vrot.slane %v7644, 7
      %v7647 = vshll.u32 %v7583, 16
      %v7649 = vor.u32 %v7646, %v7647
      %v7650 = vsel %vm4464, %v7642, %v7649
      %v7652 = vshrl.u32 %v7584, 16
      %v7654 = vrot.slane %v7652, 7
      %v7655 = vrot.slane %v7654, 4
      %v7657 = vshrl.u32 %v7585, 16
      %v7659 = vrot.slane %v7657, 7
      %v7660 = vshll.u32 %v7585, 16
      %v7662 = vor.u32 %v7659, %v7660
      %v7663 = vsel %vm4464, %v7655, %v7662
      %v7664 = vrot.slane %v7659, 4
      %v7666 = vshrl.u32 %v7586, 16
      %v7668 = vrot.slane %v7666, 7
      %v7669 = vshll.u32 %v7586, 16
      %v7671 = vor.u32 %v7668, %v7669
      %v7672 = vsel %vm4464, %v7664, %v7671
      %v7674 = vshrl.u32 %v7587, 16
      %v7676 = vrot.slane %v7674, 7
      %v7677 = vrot.slane %v7676, 4
      %v7679 = vshrl.u32 %v7588, 16
      %v7681 = vrot.slane %v7679, 7
      %v7682 = vshll.u32 %v7588, 16
      %v7684 = vor.u32 %v7681, %v7682
      %v7685 = vsel %vm4464, %v7677, %v7684
      %v7686 = vrot.slane %v7681, 4
      %v7688 = vshrl.u32 %v7589, 16
      %v7690 = vrot.slane %v7688, 7
      %v7691 = vshll.u32 %v7589, 16
      %v7693 = vor.u32 %v7690, %v7691
      %v7694 = vsel %vm4464, %v7686, %v7693
      %v7696 = vshrl.u32 %v7590, 16
      %v7698 = vrot.slane %v7696, 7
      %v7699 = vrot.slane %v7698, 4
      %v7701 = vshrl.u32 %v7591, 16
      %v7703 = vrot.slane %v7701, 7
      %v7704 = vshll.u32 %v7591, 16
      %v7706 = vor.u32 %v7703, %v7704
      %v7707 = vsel %vm4464, %v7699, %v7706
      %v7708 = vrot.slane %v7703, 4
      %v7710 = vshrl.u32 %v7592, 16
      %v7712 = vrot.slane %v7710, 7
      %v7713 = vshll.u32 %v7592, 16
      %v7715 = vor.u32 %v7712, %v7713
      %v7716 = vsel %vm4464, %v7708, %v7715
      %v7718 = vshrl.u32 %v7593, 16
      %v7720 = vrot.slane %v7718, 7
      %v7721 = vrot.slane %v7720, 4
      %v7723 = vshrl.u32 %v7594, 16
      %v7725 = vrot.slane %v7723, 7
      %v7726 = vshll.u32 %v7594, 16
      %v7728 = vor.u32 %v7725, %v7726
      %v7729 = vsel %vm4464, %v7721, %v7728
      %v7730 = vrot.slane %v7725, 4
      %v7732 = vshrl.u32 %v7595, 16
      %v7734 = vrot.slane %v7732, 7
      %v7735 = vshll.u32 %v7595, 16
      %v7737 = vor.u32 %v7734, %v7735
      %v7738 = vsel %vm4464, %v7730, %v7737
      %v7740 = vshrl.u32 %v7596, 16
      %v7742 = vrot.slane %v7740, 7
      %v7743 = vrot.slane %v7742, 4
      %v7745 = vshrl.u32 %v7597, 16
      %v7747 = vrot.slane %v7745, 7
      %v7748 = vshll.u32 %v7597, 16
      %v7750 = vor.u32 %v7747, %v7748
      %v7751 = vsel %vm4464, %v7743, %v7750
      %v7752 = vrot.slane %v7747, 4
      %v7754 = vshrl.u32 %v7598, 16
      %v7756 = vrot.slane %v7754, 7
      %v7757 = vshll.u32 %v7598, 16
      %v7759 = vor.u32 %v7756, %v7757
      %v7760 = vsel %vm4464, %v7752, %v7759
      %v7762 = vshrl.u32 %v7599, 16
      %v7764 = vrot.slane %v7762, 7
      %v7765 = vrot.slane %v7764, 4
      %v7767 = vshrl.u32 %v7600, 16
      %v7769 = vrot.slane %v7767, 7
      %v7770 = vshll.u32 %v7600, 16
      %v7772 = vor.u32 %v7769, %v7770
      %v7773 = vsel %vm4464, %v7765, %v7772
      %v7774 = vrot.slane %v7769, 4
      %v7776 = vshrl.u32 %v7601, 16
      %v7778 = vrot.slane %v7776, 7
      %v7779 = vshll.u32 %v7601, 16
      %v7781 = vor.u32 %v7778, %v7779
      %v7782 = vsel %vm4464, %v7774, %v7781
      %v7784 = vshrl.u32 %v7602, 16
      %v7786 = vrot.slane %v7784, 7
      %v7787 = vrot.slane %v7786, 4
      %v7789 = vshrl.u32 %v7603, 16
      %v7791 = vrot.slane %v7789, 7
      %v7792 = vshll.u32 %v7603, 16
      %v7794 = vor.u32 %v7791, %v7792
      %v7795 = vsel %vm4464, %v7787, %v7794
      %v7796 = vrot.slane %v7791, 4
      %v7798 = vshrl.u32 %v7604, 16
      %v7800 = vrot.slane %v7798, 7
      %v7801 = vshll.u32 %v7604, 16
      %v7803 = vor.u32 %v7800, %v7801
      %v7804 = vsel %vm4464, %v7796, %v7803
      %v7806 = vshrl.u32 %v7605, 16
      %v7808 = vrot.slane %v7806, 7
      %v7809 = vrot.slane %v7808, 4
      %v7811 = vshrl.u32 %v7606, 16
      %v7813 = vrot.slane %v7811, 7
      %v7814 = vshll.u32 %v7606, 16
      %v7816 = vor.u32 %v7813, %v7814
      %v7817 = vsel %vm4464, %v7809, %v7816
      %v7818 = vrot.slane %v7813, 4
      %v7820 = vshrl.u32 %v7607, 16
      %v7822 = vrot.slane %v7820, 7
      %v7823 = vshll.u32 %v7607, 16
      %v7825 = vor.u32 %v7822, %v7823
      %v7826 = vsel %vm4464, %v7818, %v7825
      %v7828 = vshrl.u32 %v7608, 16
      %v7830 = vrot.slane %v7828, 7
      %v7831 = vrot.slane %v7830, 4
      %v7833 = vshrl.u32 %v7609, 16
      %v7835 = vrot.slane %v7833, 7
      %v7836 = vshll.u32 %v7609, 16
      %v7838 = vor.u32 %v7835, %v7836
      %v7839 = vsel %vm4464, %v7831, %v7838
      %v7840 = vrot.slane %v7835, 4
      %v7842 = vshrl.u32 %v7610, 16
      %v7844 = vrot.slane %v7842, 7
      %v7845 = vshll.u32 %v7610, 16
      %v7847 = vor.u32 %v7844, %v7845
      %v7848 = vsel %vm4464, %v7840, %v7847
      %v7850 = vshrl.u32 %v7611, 16
      %v7852 = vrot.slane %v7850, 7
      %v7853 = vrot.slane %v7852, 4
      %v7855 = vshrl.u32 %v7612, 16
      %v7857 = vrot.slane %v7855, 7
      %v7858 = vshll.u32 %v7612, 16
      %v7860 = vor.u32 %v7857, %v7858
      %v7861 = vsel %vm4464, %v7853, %v7860
      %v7862 = vrot.slane %v7857, 4
      %v7864 = vshrl.u32 %v7613, 16
      %v7866 = vrot.slane %v7864, 7
      %v7867 = vshll.u32 %v7613, 16
      %v7869 = vor.u32 %v7866, %v7867
      %v7870 = vsel %vm4464, %v7862, %v7869
      %v7872 = vshrl.u32 %v7614, 16
      %v7874 = vrot.slane %v7872, 7
      %v7875 = vrot.slane %v7874, 4
      %v7877 = vshrl.u32 %v7615, 16
      %v7879 = vrot.slane %v7877, 7
      %v7880 = vshll.u32 %v7615, 16
      %v7882 = vor.u32 %v7879, %v7880
      %v7883 = vsel %vm4464, %v7875, %v7882
      %v7884 = vrot.slane %v7879, 4
      %v7886 = vshrl.u32 %v7616, 16
      %v7888 = vrot.slane %v7886, 7
      %v7889 = vshll.u32 %v7616, 16
      %v7891 = vor.u32 %v7888, %v7889
      %v7892 = vsel %vm4464, %v7884, %v7891
      %v7894 = vshrl.u32 %v7617, 16
      %v7896 = vrot.slane %v7894, 7
      %v7897 = vrot.slane %v7896, 4
      %v7899 = vshrl.u32 %v7618, 16
      %v7901 = vrot.slane %v7899, 7
      %v7902 = vshll.u32 %v7618, 16
      %v7904 = vor.u32 %v7901, %v7902
      %v7905 = vsel %vm4464, %v7897, %v7904
      %v7906 = vrot.slane %v7901, 4
      %v7908 = vshrl.u32 %v7619, 16
      %v7910 = vrot.slane %v7908, 7
      %v7911 = vshll.u32 %v7619, 16
      %v7913 = vor.u32 %v7910, %v7911
      %v7914 = vsel %vm4464, %v7906, %v7913
      %v7916 = vshrl.u32 %v7620, 16
      %v7918 = vrot.slane %v7916, 7
      %v7919 = vrot.slane %v7918, 4
      %v7921 = vshrl.u32 %v7621, 16
      %v7923 = vrot.slane %v7921, 7
      %v7924 = vshll.u32 %v7621, 16
      %v7926 = vor.u32 %v7923, %v7924
      %v7927 = vsel %vm4464, %v7919, %v7926
      %v7928 = vrot.slane %v7923, 4
      %v7930 = vshrl.u32 %v7622, 16
      %v7932 = vrot.slane %v7930, 7
      %v7933 = vshll.u32 %v7622, 16
      %v7935 = vor.u32 %v7932, %v7933
      %v7936 = vsel %vm4464, %v7928, %v7935
      %v7938 = vshrl.u32 %v7623, 16
      %v7940 = vrot.slane %v7938, 7
      %v7941 = vrot.slane %v7940, 4
      %v7943 = vshrl.u32 %v7624, 16
      %v7945 = vrot.slane %v7943, 7
      %v7946 = vshll.u32 %v7624, 16
      %v7948 = vor.u32 %v7945, %v7946
      %v7949 = vsel %vm4464, %v7941, %v7948
      %v7950 = vrot.slane %v7945, 4
      %v7952 = vshrl.u32 %v7625, 16
      %v7954 = vrot.slane %v7952, 7
      %v7955 = vshll.u32 %v7625, 16
      %v7957 = vor.u32 %v7954, %v7955
      %v7958 = vsel %vm4464, %v7950, %v7957
      %v7960 = vshrl.u32 %v7626, 16
      %v7962 = vrot.slane %v7960, 7
      %v7963 = vrot.slane %v7962, 4
      %v7965 = vshrl.u32 %v7627, 16
      %v7967 = vrot.slane %v7965, 7
      %v7968 = vshll.u32 %v7627, 16
      %v7970 = vor.u32 %v7967, %v7968
      %v7971 = vsel %vm4464, %v7963, %v7970
      %v7972 = vrot.slane %v7967, 4
      %v7974 = vshrl.u32 %v7628, 16
      %v7976 = vrot.slane %v7974, 7
      %v7977 = vshll.u32 %v7628, 16
      %v7979 = vor.u32 %v7976, %v7977
      %v7980 = vsel %vm4464, %v7972, %v7979
      %s7981 = scalar_lea.vmem %s3, 384
      %v7982 = vld [vmem:[%s7981] sm:$0xf]
      %v7983 = vld [vmem:[%s7981 + $0x4] sm:$0xf]
      %v7984 = vld [vmem:[%s7981 + $0x8] sm:$0xf]
      %v7985 = vld [vmem:[%s7981 + $0xc] sm:$0xf]
      %v7986 = vld [vmem:[%s7981 + $0x10] sm:$0xf]
      %v7987 = vld [vmem:[%s7981 + $0x14] sm:$0xf]
      %v7988 = vld [vmem:[%s7981 + $0x18] sm:$0xf]
      %v7989 = vld [vmem:[%s7981 + $0x1c] sm:$0xf]
      %v7990 = vld [vmem:[%s7981 + $0x20] sm:$0xf]
      %v7991 = vld [vmem:[%s7981 + $0x24] sm:$0xf]
      %v7992 = vld [vmem:[%s7981 + $0x28] sm:$0xf]
      %v7993 = vld [vmem:[%s7981 + $0x2c] sm:$0xf]
      %v7994 = vld [vmem:[%s7981 + $0x30] sm:$0xf]
      %v7995 = vld [vmem:[%s7981 + $0x34] sm:$0xf]
      %v7996 = vld [vmem:[%s7981 + $0x38] sm:$0xf]
      %v7997 = vld [vmem:[%s7981 + $0x3c] sm:$0xf]
      %v7998 = vunpack.c.l.b16 %v7641
      %v7999 = vunpack.c.l.b16 %v7650
      %v8000 = vunpack.c.l.b16 %v7663
      %v8001 = vunpack.c.l.b16 %v7672
      %v8002 = vunpack.c.l.b16 %v7685
      %v8003 = vunpack.c.l.b16 %v7694
      %v8004 = vunpack.c.l.b16 %v7707
      %v8005 = vunpack.c.l.b16 %v7716
      %v8006 = vunpack.c.l.b16 %v7729
      %v8007 = vunpack.c.l.b16 %v7738
      %v8008 = vunpack.c.l.b16 %v7751
      %v8009 = vunpack.c.l.b16 %v7760
      %v8010 = vunpack.c.l.b16 %v7773
      %v8011 = vunpack.c.l.b16 %v7782
      %v8012 = vunpack.c.l.b16 %v7795
      %v8013 = vunpack.c.l.b16 %v7804
      %v8014 = vunpack.c.l.b16 %v7817
      %v8015 = vunpack.c.l.b16 %v7826
      %v8016 = vunpack.c.l.b16 %v7839
      %v8017 = vunpack.c.l.b16 %v7848
      %v8018 = vunpack.c.l.b16 %v7861
      %v8019 = vunpack.c.l.b16 %v7870
      %v8020 = vunpack.c.l.b16 %v7883
      %v8021 = vunpack.c.l.b16 %v7892
      %v8022 = vunpack.c.l.b16 %v7905
      %v8023 = vunpack.c.l.b16 %v7914
      %v8024 = vunpack.c.l.b16 %v7927
      %v8025 = vunpack.c.l.b16 %v7936
      %v8026 = vunpack.c.l.b16 %v7949
      %v8027 = vunpack.c.l.b16 %v7958
      %v8028 = vunpack.c.l.b16 %v7971
      %v8029 = vunpack.c.l.b16 %v7980
      %v8030 = vpack.c.b16 %v7999, %v7998
      %v8031 = vpack.c.b16 %v8001, %v8000
      %v8032 = vpack.c.b16 %v8003, %v8002
      %v8033 = vpack.c.b16 %v8005, %v8004
      %v8034 = vpack.c.b16 %v8007, %v8006
      %v8035 = vpack.c.b16 %v8009, %v8008
      %v8036 = vpack.c.b16 %v8011, %v8010
      %v8037 = vpack.c.b16 %v8013, %v8012
      %v8038 = vpack.c.b16 %v8015, %v8014
      %v8039 = vpack.c.b16 %v8017, %v8016
      %v8040 = vpack.c.b16 %v8019, %v8018
      %v8041 = vpack.c.b16 %v8021, %v8020
      %v8042 = vpack.c.b16 %v8023, %v8022
      %v8043 = vpack.c.b16 %v8025, %v8024
      %v8044 = vpack.c.b16 %v8027, %v8026
      %v8045 = vpack.c.b16 %v8029, %v8028
      %v8078 = vunpack.c.l.b16 %v7982
      %v8079 = vunpack.c.l.b16 %v7983
      %v8080 = vunpack.c.l.b16 %v7984
      %v8081 = vunpack.c.l.b16 %v7985
      %v8082 = vunpack.c.l.b16 %v7986
      %v8083 = vunpack.c.l.b16 %v7987
      %v8084 = vunpack.c.l.b16 %v7988
      %v8085 = vunpack.c.l.b16 %v7989
      %v8086 = vunpack.c.l.b16 %v7990
      %v8087 = vunpack.c.l.b16 %v7991
      %v8088 = vunpack.c.l.b16 %v7992
      %v8089 = vunpack.c.l.b16 %v7993
      %v8090 = vunpack.c.l.b16 %v7994
      %v8091 = vunpack.c.l.b16 %v7995
      %v8092 = vunpack.c.l.b16 %v7996
      %v8093 = vunpack.c.l.b16 %v7997
      %v8094 = vpack.c.b16 %v8079, %v8078
      %v8095 = vpack.c.b16 %v8081, %v8080
      %v8096 = vpack.c.b16 %v8083, %v8082
      %v8097 = vpack.c.b16 %v8085, %v8084
      %v8098 = vpack.c.b16 %v8087, %v8086
      %v8099 = vpack.c.b16 %v8089, %v8088
      %v8100 = vpack.c.b16 %v8091, %v8090
      %v8101 = vpack.c.b16 %v8093, %v8092
      %8110 = vmatpush.bf16.msra.mxu0 %v8101
      %8111 = vmatpush.bf16.msra.mxu0 %v8100
      %8112 = vmatpush.bf16.msra.mxu0 %v8099
      %8113 = vmatpush.bf16.msra.mxu0 %v8098
      %8114 = vmatpush.bf16.msra.mxu0 %v8097
      %8115 = vmatpush.bf16.msra.mxu0 %v8096
      %8116 = vmatpush.bf16.msra.mxu0 %v8095
      %8117 = vmatpush.bf16.msra.mxu0 %v8094
      %8118 = vmatmul.bf16.gmra.mxu0 %v8030
      %v8119 = vpop.f32.mrf.mxu0
      %v8120 = vadd.f32 0.0, %v8119
      %v8121 = vpop.f32.mrf.mxu0
      %v8122 = vadd.f32 0.0, %v8121
      %8123 = vmatmul.bf16.gmra.mxu0 %v8031
      %v8124 = vpop.f32.mrf.mxu0
      %v8125 = vadd.f32 0.0, %v8124
      %v8126 = vpop.f32.mrf.mxu0
      %v8127 = vadd.f32 0.0, %v8126
      %8128 = vmatmul.bf16.gmra.mxu0 %v8032
      %v8129 = vpop.f32.mrf.mxu0
      %v8130 = vadd.f32 0.0, %v8129
      %v8131 = vpop.f32.mrf.mxu0
      %v8132 = vadd.f32 0.0, %v8131
      %8133 = vmatmul.bf16.gmra.mxu0 %v8033
      %v8134 = vpop.f32.mrf.mxu0
      %v8135 = vadd.f32 0.0, %v8134
      %v8136 = vpop.f32.mrf.mxu0
      %v8137 = vadd.f32 0.0, %v8136
      %8138 = vmatmul.bf16.gmra.mxu0 %v8034
      %v8139 = vpop.f32.mrf.mxu0
      %v8140 = vadd.f32 0.0, %v8139
      %v8141 = vpop.f32.mrf.mxu0
      %v8142 = vadd.f32 0.0, %v8141
      %8143 = vmatmul.bf16.gmra.mxu0 %v8035
      %v8144 = vpop.f32.mrf.mxu0
      %v8145 = vadd.f32 0.0, %v8144
      %v8146 = vpop.f32.mrf.mxu0
      %v8147 = vadd.f32 0.0, %v8146
      %8148 = vmatmul.bf16.gmra.mxu0 %v8036
      %v8149 = vpop.f32.mrf.mxu0
      %v8150 = vadd.f32 0.0, %v8149
      %v8151 = vpop.f32.mrf.mxu0
      %v8152 = vadd.f32 0.0, %v8151
      %8153 = vmatmul.bf16.gmra.mxu0 %v8037
      %v8154 = vpop.f32.mrf.mxu0
      %v8155 = vadd.f32 0.0, %v8154
      %v8156 = vpop.f32.mrf.mxu0
      %v8157 = vadd.f32 0.0, %v8156
      %8158 = vmatmul.bf16.gmra.mxu0 %v8038
      %v8159 = vpop.f32.mrf.mxu0
      %v8160 = vadd.f32 0.0, %v8159
      %v8161 = vpop.f32.mrf.mxu0
      %v8162 = vadd.f32 0.0, %v8161
      %8163 = vmatmul.bf16.gmra.mxu0 %v8039
      %v8164 = vpop.f32.mrf.mxu0
      %v8165 = vadd.f32 0.0, %v8164
      %v8166 = vpop.f32.mrf.mxu0
      %v8167 = vadd.f32 0.0, %v8166
      %8168 = vmatmul.bf16.gmra.mxu0 %v8040
      %v8169 = vpop.f32.mrf.mxu0
      %v8170 = vadd.f32 0.0, %v8169
      %v8171 = vpop.f32.mrf.mxu0
      %v8172 = vadd.f32 0.0, %v8171
      %8173 = vmatmul.bf16.gmra.mxu0 %v8041
      %v8174 = vpop.f32.mrf.mxu0
      %v8175 = vadd.f32 0.0, %v8174
      %v8176 = vpop.f32.mrf.mxu0
      %v8177 = vadd.f32 0.0, %v8176
      %8178 = vmatmul.bf16.gmra.mxu0 %v8042
      %v8179 = vpop.f32.mrf.mxu0
      %v8180 = vadd.f32 0.0, %v8179
      %v8181 = vpop.f32.mrf.mxu0
      %v8182 = vadd.f32 0.0, %v8181
      %8183 = vmatmul.bf16.gmra.mxu0 %v8043
      %v8184 = vpop.f32.mrf.mxu0
      %v8185 = vadd.f32 0.0, %v8184
      %v8186 = vpop.f32.mrf.mxu0
      %v8187 = vadd.f32 0.0, %v8186
      %8188 = vmatmul.bf16.gmra.mxu0 %v8044
      %v8189 = vpop.f32.mrf.mxu0
      %v8190 = vadd.f32 0.0, %v8189
      %v8191 = vpop.f32.mrf.mxu0
      %v8192 = vadd.f32 0.0, %v8191
      %8193 = vmatmul.bf16.gmra.mxu0 %v8045
      %v8194 = vpop.f32.mrf.mxu0
      %v8195 = vadd.f32 0.0, %v8194
      %v8196 = vpop.f32.mrf.mxu0
      %v8197 = vadd.f32 0.0, %v8196
      %8198 = vdwg.mxu0
      %v8199 = vadd.f32 %v7548, %v8120
      %v8200 = vadd.f32 %v7549, %v8122
      %v8201 = vadd.f32 %v7550, %v8125
      %v8202 = vadd.f32 %v7551, %v8127
      %v8203 = vadd.f32 %v7552, %v8130
      %v8204 = vadd.f32 %v7553, %v8132
      %v8205 = vadd.f32 %v7554, %v8135
      %v8206 = vadd.f32 %v7555, %v8137
      %v8207 = vadd.f32 %v7556, %v8140
      %v8208 = vadd.f32 %v7557, %v8142
      %v8209 = vadd.f32 %v7558, %v8145
      %v8210 = vadd.f32 %v7559, %v8147
      %v8211 = vadd.f32 %v7560, %v8150
      %v8212 = vadd.f32 %v7561, %v8152
      %v8213 = vadd.f32 %v7562, %v8155
      %v8214 = vadd.f32 %v7563, %v8157
      %v8215 = vadd.f32 %v7564, %v8160
      %v8216 = vadd.f32 %v7565, %v8162
      %v8217 = vadd.f32 %v7566, %v8165
      %v8218 = vadd.f32 %v7567, %v8167
      %v8219 = vadd.f32 %v7568, %v8170
      %v8220 = vadd.f32 %v7569, %v8172
      %v8221 = vadd.f32 %v7570, %v8175
      %v8222 = vadd.f32 %v7571, %v8177
      %v8223 = vadd.f32 %v7572, %v8180
      %v8224 = vadd.f32 %v7573, %v8182
      %v8225 = vadd.f32 %v7574, %v8185
      %v8226 = vadd.f32 %v7575, %v8187
      %v8227 = vadd.f32 %v7576, %v8190
      %v8228 = vadd.f32 %v7577, %v8192
      %v8229 = vadd.f32 %v7578, %v8195
      %v8230 = vadd.f32 %v7579, %v8197
      %s8231 = scalar_lea.vmem %s3, 448
      %v8232 = vld [vmem:[%s8231] sm:$0xf]
      %v8233 = vld [vmem:[%s8231 + $0x4] sm:$0xf]
      %v8234 = vld [vmem:[%s8231 + $0x8] sm:$0xf]
      %v8235 = vld [vmem:[%s8231 + $0xc] sm:$0xf]
      %v8236 = vld [vmem:[%s8231 + $0x10] sm:$0xf]
      %v8237 = vld [vmem:[%s8231 + $0x14] sm:$0xf]
      %v8238 = vld [vmem:[%s8231 + $0x18] sm:$0xf]
      %v8239 = vld [vmem:[%s8231 + $0x1c] sm:$0xf]
      %v8240 = vld [vmem:[%s8231 + $0x20] sm:$0xf]
      %v8241 = vld [vmem:[%s8231 + $0x24] sm:$0xf]
      %v8242 = vld [vmem:[%s8231 + $0x28] sm:$0xf]
      %v8243 = vld [vmem:[%s8231 + $0x2c] sm:$0xf]
      %v8244 = vld [vmem:[%s8231 + $0x30] sm:$0xf]
      %v8245 = vld [vmem:[%s8231 + $0x34] sm:$0xf]
      %v8246 = vld [vmem:[%s8231 + $0x38] sm:$0xf]
      %v8247 = vld [vmem:[%s8231 + $0x3c] sm:$0xf]
      %v8280 = vunpack.c.l.b16 %v7582
      %v8281 = vunpack.c.l.b16 %v7583
      %v8282 = vunpack.c.l.b16 %v7585
      %v8283 = vunpack.c.l.b16 %v7586
      %v8284 = vunpack.c.l.b16 %v7588
      %v8285 = vunpack.c.l.b16 %v7589
      %v8286 = vunpack.c.l.b16 %v7591
      %v8287 = vunpack.c.l.b16 %v7592
      %v8288 = vunpack.c.l.b16 %v7594
      %v8289 = vunpack.c.l.b16 %v7595
      %v8290 = vunpack.c.l.b16 %v7597
      %v8291 = vunpack.c.l.b16 %v7598
      %v8292 = vunpack.c.l.b16 %v7600
      %v8293 = vunpack.c.l.b16 %v7601
      %v8294 = vunpack.c.l.b16 %v7603
      %v8295 = vunpack.c.l.b16 %v7604
      %v8296 = vunpack.c.l.b16 %v7606
      %v8297 = vunpack.c.l.b16 %v7607
      %v8298 = vunpack.c.l.b16 %v7609
      %v8299 = vunpack.c.l.b16 %v7610
      %v8300 = vunpack.c.l.b16 %v7612
      %v8301 = vunpack.c.l.b16 %v7613
      %v8302 = vunpack.c.l.b16 %v7615
      %v8303 = vunpack.c.l.b16 %v7616
      %v8304 = vunpack.c.l.b16 %v7618
      %v8305 = vunpack.c.l.b16 %v7619
      %v8306 = vunpack.c.l.b16 %v7621
      %v8307 = vunpack.c.l.b16 %v7622
      %v8308 = vunpack.c.l.b16 %v7624
      %v8309 = vunpack.c.l.b16 %v7625
      %v8310 = vunpack.c.l.b16 %v7627
      %v8311 = vunpack.c.l.b16 %v7628
      %v8312 = vpack.c.b16 %v8281, %v8280
      %v8313 = vpack.c.b16 %v8283, %v8282
      %v8314 = vpack.c.b16 %v8285, %v8284
      %v8315 = vpack.c.b16 %v8287, %v8286
      %v8316 = vpack.c.b16 %v8289, %v8288
      %v8317 = vpack.c.b16 %v8291, %v8290
      %v8318 = vpack.c.b16 %v8293, %v8292
      %v8319 = vpack.c.b16 %v8295, %v8294
      %v8320 = vpack.c.b16 %v8297, %v8296
      %v8321 = vpack.c.b16 %v8299, %v8298
      %v8322 = vpack.c.b16 %v8301, %v8300
      %v8323 = vpack.c.b16 %v8303, %v8302
      %v8324 = vpack.c.b16 %v8305, %v8304
      %v8325 = vpack.c.b16 %v8307, %v8306
      %v8326 = vpack.c.b16 %v8309, %v8308
      %v8327 = vpack.c.b16 %v8311, %v8310
      %v8360 = vunpack.c.l.b16 %v8232
      %v8361 = vunpack.c.l.b16 %v8233
      %v8362 = vunpack.c.l.b16 %v8234
      %v8363 = vunpack.c.l.b16 %v8235
      %v8364 = vunpack.c.l.b16 %v8236
      %v8365 = vunpack.c.l.b16 %v8237
      %v8366 = vunpack.c.l.b16 %v8238
      %v8367 = vunpack.c.l.b16 %v8239
      %v8368 = vunpack.c.l.b16 %v8240
      %v8369 = vunpack.c.l.b16 %v8241
      %v8370 = vunpack.c.l.b16 %v8242
      %v8371 = vunpack.c.l.b16 %v8243
      %v8372 = vunpack.c.l.b16 %v8244
      %v8373 = vunpack.c.l.b16 %v8245
      %v8374 = vunpack.c.l.b16 %v8246
      %v8375 = vunpack.c.l.b16 %v8247
      %v8376 = vpack.c.b16 %v8361, %v8360
      %v8377 = vpack.c.b16 %v8363, %v8362
      %v8378 = vpack.c.b16 %v8365, %v8364
      %v8379 = vpack.c.b16 %v8367, %v8366
      %v8380 = vpack.c.b16 %v8369, %v8368
      %v8381 = vpack.c.b16 %v8371, %v8370
      %v8382 = vpack.c.b16 %v8373, %v8372
      %v8383 = vpack.c.b16 %v8375, %v8374
      %8392 = vmatpush.bf16.msra.mxu0 %v8383
      %8393 = vmatpush.bf16.msra.mxu0 %v8382
      %8394 = vmatpush.bf16.msra.mxu0 %v8381
      %8395 = vmatpush.bf16.msra.mxu0 %v8380
      %8396 = vmatpush.bf16.msra.mxu0 %v8379
      %8397 = vmatpush.bf16.msra.mxu0 %v8378
      %8398 = vmatpush.bf16.msra.mxu0 %v8377
      %8399 = vmatpush.bf16.msra.mxu0 %v8376
      %8400 = vmatmul.bf16.gmra.mxu0 %v8312
      %v8401 = vpop.f32.mrf.mxu0
      %v8402 = vadd.f32 0.0, %v8401
      %v8403 = vpop.f32.mrf.mxu0
      %v8404 = vadd.f32 0.0, %v8403
      %8405 = vmatmul.bf16.gmra.mxu0 %v8313
      %v8406 = vpop.f32.mrf.mxu0
      %v8407 = vadd.f32 0.0, %v8406
      %v8408 = vpop.f32.mrf.mxu0
      %v8409 = vadd.f32 0.0, %v8408
      %8410 = vmatmul.bf16.gmra.mxu0 %v8314
      %v8411 = vpop.f32.mrf.mxu0
      %v8412 = vadd.f32 0.0, %v8411
      %v8413 = vpop.f32.mrf.mxu0
      %v8414 = vadd.f32 0.0, %v8413
      %8415 = vmatmul.bf16.gmra.mxu0 %v8315
      %v8416 = vpop.f32.mrf.mxu0
      %v8417 = vadd.f32 0.0, %v8416
      %v8418 = vpop.f32.mrf.mxu0
      %v8419 = vadd.f32 0.0, %v8418
      %8420 = vmatmul.bf16.gmra.mxu0 %v8316
      %v8421 = vpop.f32.mrf.mxu0
      %v8422 = vadd.f32 0.0, %v8421
      %v8423 = vpop.f32.mrf.mxu0
      %v8424 = vadd.f32 0.0, %v8423
      %8425 = vmatmul.bf16.gmra.mxu0 %v8317
      %v8426 = vpop.f32.mrf.mxu0
      %v8427 = vadd.f32 0.0, %v8426
      %v8428 = vpop.f32.mrf.mxu0
      %v8429 = vadd.f32 0.0, %v8428
      %8430 = vmatmul.bf16.gmra.mxu0 %v8318
      %v8431 = vpop.f32.mrf.mxu0
      %v8432 = vadd.f32 0.0, %v8431
      %v8433 = vpop.f32.mrf.mxu0
      %v8434 = vadd.f32 0.0, %v8433
      %8435 = vmatmul.bf16.gmra.mxu0 %v8319
      %v8436 = vpop.f32.mrf.mxu0
      %v8437 = vadd.f32 0.0, %v8436
      %v8438 = vpop.f32.mrf.mxu0
      %v8439 = vadd.f32 0.0, %v8438
      %8440 = vmatmul.bf16.gmra.mxu0 %v8320
      %v8441 = vpop.f32.mrf.mxu0
      %v8442 = vadd.f32 0.0, %v8441
      %v8443 = vpop.f32.mrf.mxu0
      %v8444 = vadd.f32 0.0, %v8443
      %8445 = vmatmul.bf16.gmra.mxu0 %v8321
      %v8446 = vpop.f32.mrf.mxu0
      %v8447 = vadd.f32 0.0, %v8446
      %v8448 = vpop.f32.mrf.mxu0
      %v8449 = vadd.f32 0.0, %v8448
      %8450 = vmatmul.bf16.gmra.mxu0 %v8322
      %v8451 = vpop.f32.mrf.mxu0
      %v8452 = vadd.f32 0.0, %v8451
      %v8453 = vpop.f32.mrf.mxu0
      %v8454 = vadd.f32 0.0, %v8453
      %8455 = vmatmul.bf16.gmra.mxu0 %v8323
      %v8456 = vpop.f32.mrf.mxu0
      %v8457 = vadd.f32 0.0, %v8456
      %v8458 = vpop.f32.mrf.mxu0
      %v8459 = vadd.f32 0.0, %v8458
      %8460 = vmatmul.bf16.gmra.mxu0 %v8324
      %v8461 = vpop.f32.mrf.mxu0
      %v8462 = vadd.f32 0.0, %v8461
      %v8463 = vpop.f32.mrf.mxu0
      %v8464 = vadd.f32 0.0, %v8463
      %8465 = vmatmul.bf16.gmra.mxu0 %v8325
      %v8466 = vpop.f32.mrf.mxu0
      %v8467 = vadd.f32 0.0, %v8466
      %v8468 = vpop.f32.mrf.mxu0
      %v8469 = vadd.f32 0.0, %v8468
      %8470 = vmatmul.bf16.gmra.mxu0 %v8326
      %v8471 = vpop.f32.mrf.mxu0
      %v8472 = vadd.f32 0.0, %v8471
      %v8473 = vpop.f32.mrf.mxu0
      %v8474 = vadd.f32 0.0, %v8473
      %8475 = vmatmul.bf16.gmra.mxu0 %v8327
      %v8476 = vpop.f32.mrf.mxu0
      %v8477 = vadd.f32 0.0, %v8476
      %v8478 = vpop.f32.mrf.mxu0
      %v8479 = vadd.f32 0.0, %v8478
      %8480 = vdwg.mxu0
      %v8481 = vadd.f32 %v8199, %v8402
      %v8482 = vadd.f32 %v8200, %v8404
      %v8483 = vadd.f32 %v8201, %v8407
      %v8484 = vadd.f32 %v8202, %v8409
      %v8485 = vadd.f32 %v8203, %v8412
      %v8486 = vadd.f32 %v8204, %v8414
      %v8487 = vadd.f32 %v8205, %v8417
      %v8488 = vadd.f32 %v8206, %v8419
      %v8489 = vadd.f32 %v8207, %v8422
      %v8490 = vadd.f32 %v8208, %v8424
      %v8491 = vadd.f32 %v8209, %v8427
      %v8492 = vadd.f32 %v8210, %v8429
      %v8493 = vadd.f32 %v8211, %v8432
      %v8494 = vadd.f32 %v8212, %v8434
      %v8495 = vadd.f32 %v8213, %v8437
      %v8496 = vadd.f32 %v8214, %v8439
      %v8497 = vadd.f32 %v8215, %v8442
      %v8498 = vadd.f32 %v8216, %v8444
      %v8499 = vadd.f32 %v8217, %v8447
      %v8500 = vadd.f32 %v8218, %v8449
      %v8501 = vadd.f32 %v8219, %v8452
      %v8502 = vadd.f32 %v8220, %v8454
      %v8503 = vadd.f32 %v8221, %v8457
      %v8504 = vadd.f32 %v8222, %v8459
      %v8505 = vadd.f32 %v8223, %v8462
      %v8506 = vadd.f32 %v8224, %v8464
      %v8507 = vadd.f32 %v8225, %v8467
      %v8508 = vadd.f32 %v8226, %v8469
      %v8509 = vadd.f32 %v8227, %v8472
      %v8510 = vadd.f32 %v8228, %v8474
      %v8511 = vadd.f32 %v8229, %v8477
      %v8512 = vadd.f32 %v8230, %v8479
      %v8513 = vld [vmem:[%s7580 + $0x8] sm:$0xf]
      %v8514 = vld [vmem:[%s7580 + $0xc] sm:$0xf]
      %v8515 = vld [vmem:[%s7580 + $0x10] sm:$0x1]
      %v8516 = vld [vmem:[%s7580 + $0x1c] sm:$0xf]
      %v8517 = vld [vmem:[%s7580 + $0x20] sm:$0xf]
      %v8518 = vld [vmem:[%s7580 + $0x24] sm:$0x1]
      %v8519 = vld [vmem:[%s7580 + $0x30] sm:$0xf]
      %v8520 = vld [vmem:[%s7580 + $0x34] sm:$0xf]
      %v8521 = vld [vmem:[%s7580 + $0x38] sm:$0x1]
      %v8522 = vld [vmem:[%s7580 + $0x44] sm:$0xf]
      %v8523 = vld [vmem:[%s7580 + $0x48] sm:$0xf]
      %v8524 = vld [vmem:[%s7580 + $0x4c] sm:$0x1]
      %v8525 = vld [vmem:[%s7580 + $0x58] sm:$0xf]
      %v8526 = vld [vmem:[%s7580 + $0x5c] sm:$0xf]
      %v8527 = vld [vmem:[%s7580 + $0x60] sm:$0x1]
      %v8528 = vld [vmem:[%s7580 + $0x6c] sm:$0xf]
      %v8529 = vld [vmem:[%s7580 + $0x70] sm:$0xf]
      %v8530 = vld [vmem:[%s7580 + $0x74] sm:$0x1]
      %v8531 = vld [vmem:[%s7580 + $0x80] sm:$0xf]
      %v8532 = vld [vmem:[%s7580 + $0x84] sm:$0xf]
      %v8533 = vld [vmem:[%s7580 + $0x88] sm:$0x1]
      %v8534 = vld [vmem:[%s7580 + $0x94] sm:$0xf]
      %v8535 = vld [vmem:[%s7580 + $0x98] sm:$0xf]
      %v8536 = vld [vmem:[%s7580 + $0x9c] sm:$0x1]
      %v8537 = vld [vmem:[%s7580 + $0xa8] sm:$0xf]
      %v8538 = vld [vmem:[%s7580 + $0xac] sm:$0xf]
      %v8539 = vld [vmem:[%s7580 + $0xb0] sm:$0x1]
      %v8540 = vld [vmem:[%s7580 + $0xbc] sm:$0xf]
      %v8541 = vld [vmem:[%s7580 + $0xc0] sm:$0xf]
      %v8542 = vld [vmem:[%s7580 + $0xc4] sm:$0x1]
      %v8543 = vld [vmem:[%s7580 + $0xd0] sm:$0xf]
      %v8544 = vld [vmem:[%s7580 + $0xd4] sm:$0xf]
      %v8545 = vld [vmem:[%s7580 + $0xd8] sm:$0x1]
      %v8546 = vld [vmem:[%s7580 + $0xe4] sm:$0xf]
      %v8547 = vld [vmem:[%s7580 + $0xe8] sm:$0xf]
      %v8548 = vld [vmem:[%s7580 + $0xec] sm:$0x1]
      %v8549 = vld [vmem:[%s7580 + $0xf8] sm:$0xf]
      %v8550 = vld [vmem:[%s7580 + $0xfc] sm:$0xf]
      %v8551 = vld [vmem:[%s7580 + $0x100] sm:$0x1]
      %v8552 = vld [vmem:[%s7580 + $0x10c] sm:$0xf]
      %v8553 = vld [vmem:[%s7580 + $0x110] sm:$0xf]
      %v8554 = vld [vmem:[%s7580 + $0x114] sm:$0x1]
      %v8555 = vld [vmem:[%s7580 + $0x120] sm:$0xf]
      %v8556 = vld [vmem:[%s7580 + $0x124] sm:$0xf]
      %v8557 = vld [vmem:[%s7580 + $0x128] sm:$0x1]
      %v8558 = vld [vmem:[%s7580 + $0x134] sm:$0xf]
      %v8559 = vld [vmem:[%s7580 + $0x138] sm:$0xf]
      %v8560 = vld [vmem:[%s7580 + $0x13c] sm:$0x1]
      %v8562 = vshrl.u32 %v8513, 16
      %v8564 = vrot.slane %v8562, 4
      %v8565 = vshll.u32 %v8513, 16
      %v8567 = vrot.slane %v8565, 5
      %v8568 = vor.u32 %v8564, %v8567
      %v8569 = vrot.slane %v8568, 4
      %v8571 = vshll.u32 %v8514, 16
      %v8573 = vrot.slane %v8571, 5
      %v8574 = vsel %vm331, %v8569, %v8573
      %v8575 = vshrl.u32 %v8514, 16
      %v8577 = vrot.slane %v8575, 4
      %v8578 = vor.u32 %v8577, %v8573
      %v8579 = vrot.slane %v8578, 4
      %v8581 = vshll.u32 %v8515, 16
      %v8583 = vrot.slane %v8581, 5
      %v8584 = vsel %vm331, %v8579, %v8583
      %v8586 = vshrl.u32 %v8516, 16
      %v8588 = vrot.slane %v8586, 4
      %v8589 = vshll.u32 %v8516, 16
      %v8591 = vrot.slane %v8589, 5
      %v8592 = vor.u32 %v8588, %v8591
      %v8593 = vrot.slane %v8592, 4
      %v8595 = vshll.u32 %v8517, 16
      %v8597 = vrot.slane %v8595, 5
      %v8598 = vsel %vm331, %v8593, %v8597
      %v8599 = vshrl.u32 %v8517, 16
      %v8601 = vrot.slane %v8599, 4
      %v8602 = vor.u32 %v8601, %v8597
      %v8603 = vrot.slane %v8602, 4
      %v8605 = vshll.u32 %v8518, 16
      %v8607 = vrot.slane %v8605, 5
      %v8608 = vsel %vm331, %v8603, %v8607
      %v8610 = vshrl.u32 %v8519, 16
      %v8612 = vrot.slane %v8610, 4
      %v8613 = vshll.u32 %v8519, 16
      %v8615 = vrot.slane %v8613, 5
      %v8616 = vor.u32 %v8612, %v8615
      %v8617 = vrot.slane %v8616, 4
      %v8619 = vshll.u32 %v8520, 16
      %v8621 = vrot.slane %v8619, 5
      %v8622 = vsel %vm331, %v8617, %v8621
      %v8623 = vshrl.u32 %v8520, 16
      %v8625 = vrot.slane %v8623, 4
      %v8626 = vor.u32 %v8625, %v8621
      %v8627 = vrot.slane %v8626, 4
      %v8629 = vshll.u32 %v8521, 16
      %v8631 = vrot.slane %v8629, 5
      %v8632 = vsel %vm331, %v8627, %v8631
      %v8634 = vshrl.u32 %v8522, 16
      %v8636 = vrot.slane %v8634, 4
      %v8637 = vshll.u32 %v8522, 16
      %v8639 = vrot.slane %v8637, 5
      %v8640 = vor.u32 %v8636, %v8639
      %v8641 = vrot.slane %v8640, 4
      %v8643 = vshll.u32 %v8523, 16
      %v8645 = vrot.slane %v8643, 5
      %v8646 = vsel %vm331, %v8641, %v8645
      %v8647 = vshrl.u32 %v8523, 16
      %v8649 = vrot.slane %v8647, 4
      %v8650 = vor.u32 %v8649, %v8645
      %v8651 = vrot.slane %v8650, 4
      %v8653 = vshll.u32 %v8524, 16
      %v8655 = vrot.slane %v8653, 5
      %v8656 = vsel %vm331, %v8651, %v8655
      %v8658 = vshrl.u32 %v8525, 16
      %v8660 = vrot.slane %v8658, 4
      %v8661 = vshll.u32 %v8525, 16
      %v8663 = vrot.slane %v8661, 5
      %v8664 = vor.u32 %v8660, %v8663
      %v8665 = vrot.slane %v8664, 4
      %v8667 = vshll.u32 %v8526, 16
      %v8669 = vrot.slane %v8667, 5
      %v8670 = vsel %vm331, %v8665, %v8669
      %v8671 = vshrl.u32 %v8526, 16
      %v8673 = vrot.slane %v8671, 4
      %v8674 = vor.u32 %v8673, %v8669
      %v8675 = vrot.slane %v8674, 4
      %v8677 = vshll.u32 %v8527, 16
      %v8679 = vrot.slane %v8677, 5
      %v8680 = vsel %vm331, %v8675, %v8679
      %v8682 = vshrl.u32 %v8528, 16
      %v8684 = vrot.slane %v8682, 4
      %v8685 = vshll.u32 %v8528, 16
      %v8687 = vrot.slane %v8685, 5
      %v8688 = vor.u32 %v8684, %v8687
      %v8689 = vrot.slane %v8688, 4
      %v8691 = vshll.u32 %v8529, 16
      %v8693 = vrot.slane %v8691, 5
      %v8694 = vsel %vm331, %v8689, %v8693
      %v8695 = vshrl.u32 %v8529, 16
      %v8697 = vrot.slane %v8695, 4
      %v8698 = vor.u32 %v8697, %v8693
      %v8699 = vrot.slane %v8698, 4
      %v8701 = vshll.u32 %v8530, 16
      %v8703 = vrot.slane %v8701, 5
      %v8704 = vsel %vm331, %v8699, %v8703
      %v8706 = vshrl.u32 %v8531, 16
      %v8708 = vrot.slane %v8706, 4
      %v8709 = vshll.u32 %v8531, 16
      %v8711 = vrot.slane %v8709, 5
      %v8712 = vor.u32 %v8708, %v8711
      %v8713 = vrot.slane %v8712, 4
      %v8715 = vshll.u32 %v8532, 16
      %v8717 = vrot.slane %v8715, 5
      %v8718 = vsel %vm331, %v8713, %v8717
      %v8719 = vshrl.u32 %v8532, 16
      %v8721 = vrot.slane %v8719, 4
      %v8722 = vor.u32 %v8721, %v8717
      %v8723 = vrot.slane %v8722, 4
      %v8725 = vshll.u32 %v8533, 16
      %v8727 = vrot.slane %v8725, 5
      %v8728 = vsel %vm331, %v8723, %v8727
      %v8730 = vshrl.u32 %v8534, 16
      %v8732 = vrot.slane %v8730, 4
      %v8733 = vshll.u32 %v8534, 16
      %v8735 = vrot.slane %v8733, 5
      %v8736 = vor.u32 %v8732, %v8735
      %v8737 = vrot.slane %v8736, 4
      %v8739 = vshll.u32 %v8535, 16
      %v8741 = vrot.slane %v8739, 5
      %v8742 = vsel %vm331, %v8737, %v8741
      %v8743 = vshrl.u32 %v8535, 16
      %v8745 = vrot.slane %v8743, 4
      %v8746 = vor.u32 %v8745, %v8741
      %v8747 = vrot.slane %v8746, 4
      %v8749 = vshll.u32 %v8536, 16
      %v8751 = vrot.slane %v8749, 5
      %v8752 = vsel %vm331, %v8747, %v8751
      %v8754 = vshrl.u32 %v8537, 16
      %v8756 = vrot.slane %v8754, 4
      %v8757 = vshll.u32 %v8537, 16
      %v8759 = vrot.slane %v8757, 5
      %v8760 = vor.u32 %v8756, %v8759
      %v8761 = vrot.slane %v8760, 4
      %v8763 = vshll.u32 %v8538, 16
      %v8765 = vrot.slane %v8763, 5
      %v8766 = vsel %vm331, %v8761, %v8765
      %v8767 = vshrl.u32 %v8538, 16
      %v8769 = vrot.slane %v8767, 4
      %v8770 = vor.u32 %v8769, %v8765
      %v8771 = vrot.slane %v8770, 4
      %v8773 = vshll.u32 %v8539, 16
      %v8775 = vrot.slane %v8773, 5
      %v8776 = vsel %vm331, %v8771, %v8775
      %v8778 = vshrl.u32 %v8540, 16
      %v8780 = vrot.slane %v8778, 4
      %v8781 = vshll.u32 %v8540, 16
      %v8783 = vrot.slane %v8781, 5
      %v8784 = vor.u32 %v8780, %v8783
      %v8785 = vrot.slane %v8784, 4
      %v8787 = vshll.u32 %v8541, 16
      %v8789 = vrot.slane %v8787, 5
      %v8790 = vsel %vm331, %v8785, %v8789
      %v8791 = vshrl.u32 %v8541, 16
      %v8793 = vrot.slane %v8791, 4
      %v8794 = vor.u32 %v8793, %v8789
      %v8795 = vrot.slane %v8794, 4
      %v8797 = vshll.u32 %v8542, 16
      %v8799 = vrot.slane %v8797, 5
      %v8800 = vsel %vm331, %v8795, %v8799
      %v8802 = vshrl.u32 %v8543, 16
      %v8804 = vrot.slane %v8802, 4
      %v8805 = vshll.u32 %v8543, 16
      %v8807 = vrot.slane %v8805, 5
      %v8808 = vor.u32 %v8804, %v8807
      %v8809 = vrot.slane %v8808, 4
      %v8811 = vshll.u32 %v8544, 16
      %v8813 = vrot.slane %v8811, 5
      %v8814 = vsel %vm331, %v8809, %v8813
      %v8815 = vshrl.u32 %v8544, 16
      %v8817 = vrot.slane %v8815, 4
      %v8818 = vor.u32 %v8817, %v8813
      %v8819 = vrot.slane %v8818, 4
      %v8821 = vshll.u32 %v8545, 16
      %v8823 = vrot.slane %v8821, 5
      %v8824 = vsel %vm331, %v8819, %v8823
      %v8826 = vshrl.u32 %v8546, 16
      %v8828 = vrot.slane %v8826, 4
      %v8829 = vshll.u32 %v8546, 16
      %v8831 = vrot.slane %v8829, 5
      %v8832 = vor.u32 %v8828, %v8831
      %v8833 = vrot.slane %v8832, 4
      %v8835 = vshll.u32 %v8547, 16
      %v8837 = vrot.slane %v8835, 5
      %v8838 = vsel %vm331, %v8833, %v8837
      %v8839 = vshrl.u32 %v8547, 16
      %v8841 = vrot.slane %v8839, 4
      %v8842 = vor.u32 %v8841, %v8837
      %v8843 = vrot.slane %v8842, 4
      %v8845 = vshll.u32 %v8548, 16
      %v8847 = vrot.slane %v8845, 5
      %v8848 = vsel %vm331, %v8843, %v8847
      %v8850 = vshrl.u32 %v8549, 16
      %v8852 = vrot.slane %v8850, 4
      %v8853 = vshll.u32 %v8549, 16
      %v8855 = vrot.slane %v8853, 5
      %v8856 = vor.u32 %v8852, %v8855
      %v8857 = vrot.slane %v8856, 4
      %v8859 = vshll.u32 %v8550, 16
      %v8861 = vrot.slane %v8859, 5
      %v8862 = vsel %vm331, %v8857, %v8861
      %v8863 = vshrl.u32 %v8550, 16
      %v8865 = vrot.slane %v8863, 4
      %v8866 = vor.u32 %v8865, %v8861
      %v8867 = vrot.slane %v8866, 4
      %v8869 = vshll.u32 %v8551, 16
      %v8871 = vrot.slane %v8869, 5
      %v8872 = vsel %vm331, %v8867, %v8871
      %v8874 = vshrl.u32 %v8552, 16
      %v8876 = vrot.slane %v8874, 4
      %v8877 = vshll.u32 %v8552, 16
      %v8879 = vrot.slane %v8877, 5
      %v8880 = vor.u32 %v8876, %v8879
      %v8881 = vrot.slane %v8880, 4
      %v8883 = vshll.u32 %v8553, 16
      %v8885 = vrot.slane %v8883, 5
      %v8886 = vsel %vm331, %v8881, %v8885
      %v8887 = vshrl.u32 %v8553, 16
      %v8889 = vrot.slane %v8887, 4
      %v8890 = vor.u32 %v8889, %v8885
      %v8891 = vrot.slane %v8890, 4
      %v8893 = vshll.u32 %v8554, 16
      %v8895 = vrot.slane %v8893, 5
      %v8896 = vsel %vm331, %v8891, %v8895
      %v8898 = vshrl.u32 %v8555, 16
      %v8900 = vrot.slane %v8898, 4
      %v8901 = vshll.u32 %v8555, 16
      %v8903 = vrot.slane %v8901, 5
      %v8904 = vor.u32 %v8900, %v8903
      %v8905 = vrot.slane %v8904, 4
      %v8907 = vshll.u32 %v8556, 16
      %v8909 = vrot.slane %v8907, 5
      %v8910 = vsel %vm331, %v8905, %v8909
      %v8911 = vshrl.u32 %v8556, 16
      %v8913 = vrot.slane %v8911, 4
      %v8914 = vor.u32 %v8913, %v8909
      %v8915 = vrot.slane %v8914, 4
      %v8917 = vshll.u32 %v8557, 16
      %v8919 = vrot.slane %v8917, 5
      %v8920 = vsel %vm331, %v8915, %v8919
      %v8922 = vshrl.u32 %v8558, 16
      %v8924 = vrot.slane %v8922, 4
      %v8925 = vshll.u32 %v8558, 16
      %v8927 = vrot.slane %v8925, 5
      %v8928 = vor.u32 %v8924, %v8927
      %v8929 = vrot.slane %v8928, 4
      %v8931 = vshll.u32 %v8559, 16
      %v8933 = vrot.slane %v8931, 5
      %v8934 = vsel %vm331, %v8929, %v8933
      %v8935 = vshrl.u32 %v8559, 16
      %v8937 = vrot.slane %v8935, 4
      %v8938 = vor.u32 %v8937, %v8933
      %v8939 = vrot.slane %v8938, 4
      %v8941 = vshll.u32 %v8560, 16
      %v8943 = vrot.slane %v8941, 5
      %v8944 = vsel %vm331, %v8939, %v8943
      %s8945 = scalar_lea.vmem %s3, 512
      %v8946 = vld [vmem:[%s8945] sm:$0xf]
      %v8947 = vld [vmem:[%s8945 + $0x4] sm:$0xf]
      %v8948 = vld [vmem:[%s8945 + $0x8] sm:$0xf]
      %v8949 = vld [vmem:[%s8945 + $0xc] sm:$0xf]
      %v8950 = vld [vmem:[%s8945 + $0x10] sm:$0xf]
      %v8951 = vld [vmem:[%s8945 + $0x14] sm:$0xf]
      %v8952 = vld [vmem:[%s8945 + $0x18] sm:$0xf]
      %v8953 = vld [vmem:[%s8945 + $0x1c] sm:$0xf]
      %v8954 = vld [vmem:[%s8945 + $0x20] sm:$0xf]
      %v8955 = vld [vmem:[%s8945 + $0x24] sm:$0xf]
      %v8956 = vld [vmem:[%s8945 + $0x28] sm:$0xf]
      %v8957 = vld [vmem:[%s8945 + $0x2c] sm:$0xf]
      %v8958 = vld [vmem:[%s8945 + $0x30] sm:$0xf]
      %v8959 = vld [vmem:[%s8945 + $0x34] sm:$0xf]
      %v8960 = vld [vmem:[%s8945 + $0x38] sm:$0xf]
      %v8961 = vld [vmem:[%s8945 + $0x3c] sm:$0xf]
      %v8962 = vunpack.c.l.b16 %v8574
      %v8963 = vunpack.c.l.b16 %v8584
      %v8964 = vunpack.c.l.b16 %v8598
      %v8965 = vunpack.c.l.b16 %v8608
      %v8966 = vunpack.c.l.b16 %v8622
      %v8967 = vunpack.c.l.b16 %v8632
      %v8968 = vunpack.c.l.b16 %v8646
      %v8969 = vunpack.c.l.b16 %v8656
      %v8970 = vunpack.c.l.b16 %v8670
      %v8971 = vunpack.c.l.b16 %v8680
      %v8972 = vunpack.c.l.b16 %v8694
      %v8973 = vunpack.c.l.b16 %v8704
      %v8974 = vunpack.c.l.b16 %v8718
      %v8975 = vunpack.c.l.b16 %v8728
      %v8976 = vunpack.c.l.b16 %v8742
      %v8977 = vunpack.c.l.b16 %v8752
      %v8978 = vunpack.c.l.b16 %v8766
      %v8979 = vunpack.c.l.b16 %v8776
      %v8980 = vunpack.c.l.b16 %v8790
      %v8981 = vunpack.c.l.b16 %v8800
      %v8982 = vunpack.c.l.b16 %v8814
      %v8983 = vunpack.c.l.b16 %v8824
      %v8984 = vunpack.c.l.b16 %v8838
      %v8985 = vunpack.c.l.b16 %v8848
      %v8986 = vunpack.c.l.b16 %v8862
      %v8987 = vunpack.c.l.b16 %v8872
      %v8988 = vunpack.c.l.b16 %v8886
      %v8989 = vunpack.c.l.b16 %v8896
      %v8990 = vunpack.c.l.b16 %v8910
      %v8991 = vunpack.c.l.b16 %v8920
      %v8992 = vunpack.c.l.b16 %v8934
      %v8993 = vunpack.c.l.b16 %v8944
      %v8994 = vpack.c.b16 %v8963, %v8962
      %v8995 = vpack.c.b16 %v8965, %v8964
      %v8996 = vpack.c.b16 %v8967, %v8966
      %v8997 = vpack.c.b16 %v8969, %v8968
      %v8998 = vpack.c.b16 %v8971, %v8970
      %v8999 = vpack.c.b16 %v8973, %v8972
      %v9000 = vpack.c.b16 %v8975, %v8974
      %v9001 = vpack.c.b16 %v8977, %v8976
      %v9002 = vpack.c.b16 %v8979, %v8978
      %v9003 = vpack.c.b16 %v8981, %v8980
      %v9004 = vpack.c.b16 %v8983, %v8982
      %v9005 = vpack.c.b16 %v8985, %v8984
      %v9006 = vpack.c.b16 %v8987, %v8986
      %v9007 = vpack.c.b16 %v8989, %v8988
      %v9008 = vpack.c.b16 %v8991, %v8990
      %v9009 = vpack.c.b16 %v8993, %v8992
      %v9042 = vunpack.c.l.b16 %v8946
      %v9043 = vunpack.c.l.b16 %v8947
      %v9044 = vunpack.c.l.b16 %v8948
      %v9045 = vunpack.c.l.b16 %v8949
      %v9046 = vunpack.c.l.b16 %v8950
      %v9047 = vunpack.c.l.b16 %v8951
      %v9048 = vunpack.c.l.b16 %v8952
      %v9049 = vunpack.c.l.b16 %v8953
      %v9050 = vunpack.c.l.b16 %v8954
      %v9051 = vunpack.c.l.b16 %v8955
      %v9052 = vunpack.c.l.b16 %v8956
      %v9053 = vunpack.c.l.b16 %v8957
      %v9054 = vunpack.c.l.b16 %v8958
      %v9055 = vunpack.c.l.b16 %v8959
      %v9056 = vunpack.c.l.b16 %v8960
      %v9057 = vunpack.c.l.b16 %v8961
      %v9058 = vpack.c.b16 %v9043, %v9042
      %v9059 = vpack.c.b16 %v9045, %v9044
      %v9060 = vpack.c.b16 %v9047, %v9046
      %v9061 = vpack.c.b16 %v9049, %v9048
      %v9062 = vpack.c.b16 %v9051, %v9050
      %v9063 = vpack.c.b16 %v9053, %v9052
      %v9064 = vpack.c.b16 %v9055, %v9054
      %v9065 = vpack.c.b16 %v9057, %v9056
      %9074 = vmatpush.bf16.msra.mxu0 %v9065
      %9075 = vmatpush.bf16.msra.mxu0 %v9064
      %9076 = vmatpush.bf16.msra.mxu0 %v9063
      %9077 = vmatpush.bf16.msra.mxu0 %v9062
      %9078 = vmatpush.bf16.msra.mxu0 %v9061
      %9079 = vmatpush.bf16.msra.mxu0 %v9060
      %9080 = vmatpush.bf16.msra.mxu0 %v9059
      %9081 = vmatpush.bf16.msra.mxu0 %v9058
      %9082 = vmatmul.bf16.gmra.mxu0 %v8994
      %v9083 = vpop.f32.mrf.mxu0
      %v9084 = vadd.f32 0.0, %v9083
      %v9085 = vpop.f32.mrf.mxu0
      %v9086 = vadd.f32 0.0, %v9085
      %9087 = vmatmul.bf16.gmra.mxu0 %v8995
      %v9088 = vpop.f32.mrf.mxu0
      %v9089 = vadd.f32 0.0, %v9088
      %v9090 = vpop.f32.mrf.mxu0
      %v9091 = vadd.f32 0.0, %v9090
      %9092 = vmatmul.bf16.gmra.mxu0 %v8996
      %v9093 = vpop.f32.mrf.mxu0
      %v9094 = vadd.f32 0.0, %v9093
      %v9095 = vpop.f32.mrf.mxu0
      %v9096 = vadd.f32 0.0, %v9095
      %9097 = vmatmul.bf16.gmra.mxu0 %v8997
      %v9098 = vpop.f32.mrf.mxu0
      %v9099 = vadd.f32 0.0, %v9098
      %v9100 = vpop.f32.mrf.mxu0
      %v9101 = vadd.f32 0.0, %v9100
      %9102 = vmatmul.bf16.gmra.mxu0 %v8998
      %v9103 = vpop.f32.mrf.mxu0
      %v9104 = vadd.f32 0.0, %v9103
      %v9105 = vpop.f32.mrf.mxu0
      %v9106 = vadd.f32 0.0, %v9105
      %9107 = vmatmul.bf16.gmra.mxu0 %v8999
      %v9108 = vpop.f32.mrf.mxu0
      %v9109 = vadd.f32 0.0, %v9108
      %v9110 = vpop.f32.mrf.mxu0
      %v9111 = vadd.f32 0.0, %v9110
      %9112 = vmatmul.bf16.gmra.mxu0 %v9000
      %v9113 = vpop.f32.mrf.mxu0
      %v9114 = vadd.f32 0.0, %v9113
      %v9115 = vpop.f32.mrf.mxu0
      %v9116 = vadd.f32 0.0, %v9115
      %9117 = vmatmul.bf16.gmra.mxu0 %v9001
      %v9118 = vpop.f32.mrf.mxu0
      %v9119 = vadd.f32 0.0, %v9118
      %v9120 = vpop.f32.mrf.mxu0
      %v9121 = vadd.f32 0.0, %v9120
      %9122 = vmatmul.bf16.gmra.mxu0 %v9002
      %v9123 = vpop.f32.mrf.mxu0
      %v9124 = vadd.f32 0.0, %v9123
      %v9125 = vpop.f32.mrf.mxu0
      %v9126 = vadd.f32 0.0, %v9125
      %9127 = vmatmul.bf16.gmra.mxu0 %v9003
      %v9128 = vpop.f32.mrf.mxu0
      %v9129 = vadd.f32 0.0, %v9128
      %v9130 = vpop.f32.mrf.mxu0
      %v9131 = vadd.f32 0.0, %v9130
      %9132 = vmatmul.bf16.gmra.mxu0 %v9004
      %v9133 = vpop.f32.mrf.mxu0
      %v9134 = vadd.f32 0.0, %v9133
      %v9135 = vpop.f32.mrf.mxu0
      %v9136 = vadd.f32 0.0, %v9135
      %9137 = vmatmul.bf16.gmra.mxu0 %v9005
      %v9138 = vpop.f32.mrf.mxu0
      %v9139 = vadd.f32 0.0, %v9138
      %v9140 = vpop.f32.mrf.mxu0
      %v9141 = vadd.f32 0.0, %v9140
      %9142 = vmatmul.bf16.gmra.mxu0 %v9006
      %v9143 = vpop.f32.mrf.mxu0
      %v9144 = vadd.f32 0.0, %v9143
      %v9145 = vpop.f32.mrf.mxu0
      %v9146 = vadd.f32 0.0, %v9145
      %9147 = vmatmul.bf16.gmra.mxu0 %v9007
      %v9148 = vpop.f32.mrf.mxu0
      %v9149 = vadd.f32 0.0, %v9148
      %v9150 = vpop.f32.mrf.mxu0
      %v9151 = vadd.f32 0.0, %v9150
      %9152 = vmatmul.bf16.gmra.mxu0 %v9008
      %v9153 = vpop.f32.mrf.mxu0
      %v9154 = vadd.f32 0.0, %v9153
      %v9155 = vpop.f32.mrf.mxu0
      %v9156 = vadd.f32 0.0, %v9155
      %9157 = vmatmul.bf16.gmra.mxu0 %v9009
      %v9158 = vpop.f32.mrf.mxu0
      %v9159 = vadd.f32 0.0, %v9158
      %v9160 = vpop.f32.mrf.mxu0
      %v9161 = vadd.f32 0.0, %v9160
      %9162 = vdwg.mxu0
      %v9163 = vadd.f32 %v8481, %v9084
      %v9164 = vadd.f32 %v8482, %v9086
      %v9165 = vadd.f32 %v8483, %v9089
      %v9166 = vadd.f32 %v8484, %v9091
      %v9167 = vadd.f32 %v8485, %v9094
      %v9168 = vadd.f32 %v8486, %v9096
      %v9169 = vadd.f32 %v8487, %v9099
      %v9170 = vadd.f32 %v8488, %v9101
      %v9171 = vadd.f32 %v8489, %v9104
      %v9172 = vadd.f32 %v8490, %v9106
      %v9173 = vadd.f32 %v8491, %v9109
      %v9174 = vadd.f32 %v8492, %v9111
      %v9175 = vadd.f32 %v8493, %v9114
      %v9176 = vadd.f32 %v8494, %v9116
      %v9177 = vadd.f32 %v8495, %v9119
      %v9178 = vadd.f32 %v8496, %v9121
      %v9179 = vadd.f32 %v8497, %v9124
      %v9180 = vadd.f32 %v8498, %v9126
      %v9181 = vadd.f32 %v8499, %v9129
      %v9182 = vadd.f32 %v8500, %v9131
      %v9183 = vadd.f32 %v8501, %v9134
      %v9184 = vadd.f32 %v8502, %v9136
      %v9185 = vadd.f32 %v8503, %v9139
      %v9186 = vadd.f32 %v8504, %v9141
      %v9187 = vadd.f32 %v8505, %v9144
      %v9188 = vadd.f32 %v8506, %v9146
      %v9189 = vadd.f32 %v8507, %v9149
      %v9190 = vadd.f32 %v8508, %v9151
      %v9191 = vadd.f32 %v8509, %v9154
      %v9192 = vadd.f32 %v8510, %v9156
      %v9193 = vadd.f32 %v8511, %v9159
      %v9194 = vadd.f32 %v8512, %v9161
      %v9195 = vld [vmem:[%s4] sm:$0x1]
      %v9197 = vperm.slane %v9195, 0
      %v9199 = vadd.f32 %v9163, %v9197
      %v9200 = vadd.f32 %v9164, %v9197
      %v9201 = vadd.f32 %v9165, %v9197
      %v9202 = vadd.f32 %v9166, %v9197
      %v9203 = vadd.f32 %v9167, %v9197
      %v9204 = vadd.f32 %v9168, %v9197
      %v9205 = vadd.f32 %v9169, %v9197
      %v9206 = vadd.f32 %v9170, %v9197
      %v9207 = vadd.f32 %v9171, %v9197
      %v9208 = vadd.f32 %v9172, %v9197
      %v9209 = vadd.f32 %v9173, %v9197
      %v9210 = vadd.f32 %v9174, %v9197
      %v9211 = vadd.f32 %v9175, %v9197
      %v9212 = vadd.f32 %v9176, %v9197
      %v9213 = vadd.f32 %v9177, %v9197
      %v9214 = vadd.f32 %v9178, %v9197
      %v9215 = vadd.f32 %v9179, %v9197
      %v9216 = vadd.f32 %v9180, %v9197
      %v9217 = vadd.f32 %v9181, %v9197
      %v9218 = vadd.f32 %v9182, %v9197
      %v9219 = vadd.f32 %v9183, %v9197
      %v9220 = vadd.f32 %v9184, %v9197
      %v9221 = vadd.f32 %v9185, %v9197
      %v9222 = vadd.f32 %v9186, %v9197
      %v9223 = vadd.f32 %v9187, %v9197
      %v9224 = vadd.f32 %v9188, %v9197
      %v9225 = vadd.f32 %v9189, %v9197
      %v9226 = vadd.f32 %v9190, %v9197
      %v9227 = vadd.f32 %v9191, %v9197
      %v9228 = vadd.f32 %v9192, %v9197
      %v9229 = vadd.f32 %v9193, %v9197
      %v9230 = vadd.f32 %v9194, %v9197
      %v9231 = vld [vmem:[%s1513] sm:$0xf]
      %v9232 = vld [vmem:[%s1513 + $0x4] sm:$0xf]
      %v9233 = vld [vmem:[%s1513 + $0x8] sm:$0x1]
      %v9234 = vld [vmem:[%s1513 + $0xc] sm:$0xf]
      %v9235 = vld [vmem:[%s1513 + $0x10] sm:$0xf]
      %v9236 = vld [vmem:[%s1513 + $0x14] sm:$0x1]
      %v9237 = vld [vmem:[%s1513 + $0x18] sm:$0xf]
      %v9238 = vld [vmem:[%s1513 + $0x1c] sm:$0xf]
      %v9239 = vld [vmem:[%s1513 + $0x20] sm:$0x1]
      %v9240 = vld [vmem:[%s1513 + $0x24] sm:$0xf]
      %v9241 = vld [vmem:[%s1513 + $0x28] sm:$0xf]
      %v9242 = vld [vmem:[%s1513 + $0x2c] sm:$0x1]
      %v9243 = vld [vmem:[%s1513 + $0x30] sm:$0xf]
      %v9244 = vld [vmem:[%s1513 + $0x34] sm:$0xf]
      %v9245 = vld [vmem:[%s1513 + $0x38] sm:$0x1]
      %v9246 = vld [vmem:[%s1513 + $0x3c] sm:$0xf]
      %v9247 = vld [vmem:[%s1513 + $0x40] sm:$0xf]
      %v9248 = vld [vmem:[%s1513 + $0x44] sm:$0x1]
      %v9249 = vld [vmem:[%s1513 + $0x48] sm:$0xf]
      %v9250 = vld [vmem:[%s1513 + $0x4c] sm:$0xf]
      %v9251 = vld [vmem:[%s1513 + $0x50] sm:$0x1]
      %v9252 = vld [vmem:[%s1513 + $0x54] sm:$0xf]
      %v9253 = vld [vmem:[%s1513 + $0x58] sm:$0xf]
      %v9254 = vld [vmem:[%s1513 + $0x5c] sm:$0x1]
      %v9255 = vld [vmem:[%s1513 + $0x60] sm:$0xf]
      %v9256 = vld [vmem:[%s1513 + $0x64] sm:$0xf]
      %v9257 = vld [vmem:[%s1513 + $0x68] sm:$0x1]
      %v9258 = vld [vmem:[%s1513 + $0x6c] sm:$0xf]
      %v9259 = vld [vmem:[%s1513 + $0x70] sm:$0xf]
      %v9260 = vld [vmem:[%s1513 + $0x74] sm:$0x1]
      %v9261 = vld [vmem:[%s1513 + $0x78] sm:$0xf]
      %v9262 = vld [vmem:[%s1513 + $0x7c] sm:$0xf]
      %v9263 = vld [vmem:[%s1513 + $0x80] sm:$0x1]
      %v9264 = vld [vmem:[%s1513 + $0x84] sm:$0xf]
      %v9265 = vld [vmem:[%s1513 + $0x88] sm:$0xf]
      %v9266 = vld [vmem:[%s1513 + $0x8c] sm:$0x1]
      %v9267 = vld [vmem:[%s1513 + $0x90] sm:$0xf]
      %v9268 = vld [vmem:[%s1513 + $0x94] sm:$0xf]
      %v9269 = vld [vmem:[%s1513 + $0x98] sm:$0x1]
      %v9270 = vld [vmem:[%s1513 + $0x9c] sm:$0xf]
      %v9271 = vld [vmem:[%s1513 + $0xa0] sm:$0xf]
      %v9272 = vld [vmem:[%s1513 + $0xa4] sm:$0x1]
      %v9273 = vld [vmem:[%s1513 + $0xa8] sm:$0xf]
      %v9274 = vld [vmem:[%s1513 + $0xac] sm:$0xf]
      %v9275 = vld [vmem:[%s1513 + $0xb0] sm:$0x1]
      %v9276 = vld [vmem:[%s1513 + $0xb4] sm:$0xf]
      %v9277 = vld [vmem:[%s1513 + $0xb8] sm:$0xf]
      %v9278 = vld [vmem:[%s1513 + $0xbc] sm:$0x1]
      %v9280 = vshrl.u32 %v9231, 16
      %v9282 = vrot.slane %v9280, 4
      %v9283 = vshll.u32 %v9231, 16
      %v9285 = vrot.slane %v9283, 5
      %v9286 = vor.u32 %v9282, %v9285
      %v9287 = vrot.slane %v9286, 4
      %v9289 = vshll.u32 %v9232, 16
      %v9291 = vrot.slane %v9289, 5
      %v9292 = vsel %vm331, %v9287, %v9291
      %v9293 = vshrl.u32 %v9232, 16
      %v9295 = vrot.slane %v9293, 4
      %v9296 = vor.u32 %v9295, %v9291
      %v9297 = vrot.slane %v9296, 4
      %v9299 = vshll.u32 %v9233, 16
      %v9301 = vrot.slane %v9299, 5
      %v9302 = vsel %vm331, %v9297, %v9301
      %v9304 = vshrl.u32 %v9234, 16
      %v9306 = vrot.slane %v9304, 4
      %v9307 = vshll.u32 %v9234, 16
      %v9309 = vrot.slane %v9307, 5
      %v9310 = vor.u32 %v9306, %v9309
      %v9311 = vrot.slane %v9310, 4
      %v9313 = vshll.u32 %v9235, 16
      %v9315 = vrot.slane %v9313, 5
      %v9316 = vsel %vm331, %v9311, %v9315
      %v9317 = vshrl.u32 %v9235, 16
      %v9319 = vrot.slane %v9317, 4
      %v9320 = vor.u32 %v9319, %v9315
      %v9321 = vrot.slane %v9320, 4
      %v9323 = vshll.u32 %v9236, 16
      %v9325 = vrot.slane %v9323, 5
      %v9326 = vsel %vm331, %v9321, %v9325
      %v9328 = vshrl.u32 %v9237, 16
      %v9330 = vrot.slane %v9328, 4
      %v9331 = vshll.u32 %v9237, 16
      %v9333 = vrot.slane %v9331, 5
      %v9334 = vor.u32 %v9330, %v9333
      %v9335 = vrot.slane %v9334, 4
      %v9337 = vshll.u32 %v9238, 16
      %v9339 = vrot.slane %v9337, 5
      %v9340 = vsel %vm331, %v9335, %v9339
      %v9341 = vshrl.u32 %v9238, 16
      %v9343 = vrot.slane %v9341, 4
      %v9344 = vor.u32 %v9343, %v9339
      %v9345 = vrot.slane %v9344, 4
      %v9347 = vshll.u32 %v9239, 16
      %v9349 = vrot.slane %v9347, 5
      %v9350 = vsel %vm331, %v9345, %v9349
      %v9352 = vshrl.u32 %v9240, 16
      %v9354 = vrot.slane %v9352, 4
      %v9355 = vshll.u32 %v9240, 16
      %v9357 = vrot.slane %v9355, 5
      %v9358 = vor.u32 %v9354, %v9357
      %v9359 = vrot.slane %v9358, 4
      %v9361 = vshll.u32 %v9241, 16
      %v9363 = vrot.slane %v9361, 5
      %v9364 = vsel %vm331, %v9359, %v9363
      %v9365 = vshrl.u32 %v9241, 16
      %v9367 = vrot.slane %v9365, 4
      %v9368 = vor.u32 %v9367, %v9363
      %v9369 = vrot.slane %v9368, 4
      %v9371 = vshll.u32 %v9242, 16
      %v9373 = vrot.slane %v9371, 5
      %v9374 = vsel %vm331, %v9369, %v9373
      %v9376 = vshrl.u32 %v9243, 16
      %v9378 = vrot.slane %v9376, 4
      %v9379 = vshll.u32 %v9243, 16
      %v9381 = vrot.slane %v9379, 5
      %v9382 = vor.u32 %v9378, %v9381
      %v9383 = vrot.slane %v9382, 4
      %v9385 = vshll.u32 %v9244, 16
      %v9387 = vrot.slane %v9385, 5
      %v9388 = vsel %vm331, %v9383, %v9387
      %v9389 = vshrl.u32 %v9244, 16
      %v9391 = vrot.slane %v9389, 4
      %v9392 = vor.u32 %v9391, %v9387
      %v9393 = vrot.slane %v9392, 4
      %v9395 = vshll.u32 %v9245, 16
      %v9397 = vrot.slane %v9395, 5
      %v9398 = vsel %vm331, %v9393, %v9397
      %v9400 = vshrl.u32 %v9246, 16
      %v9402 = vrot.slane %v9400, 4
      %v9403 = vshll.u32 %v9246, 16
      %v9405 = vrot.slane %v9403, 5
      %v9406 = vor.u32 %v9402, %v9405
      %v9407 = vrot.slane %v9406, 4
      %v9409 = vshll.u32 %v9247, 16
      %v9411 = vrot.slane %v9409, 5
      %v9412 = vsel %vm331, %v9407, %v9411
      %v9413 = vshrl.u32 %v9247, 16
      %v9415 = vrot.slane %v9413, 4
      %v9416 = vor.u32 %v9415, %v9411
      %v9417 = vrot.slane %v9416, 4
      %v9419 = vshll.u32 %v9248, 16
      %v9421 = vrot.slane %v9419, 5
      %v9422 = vsel %vm331, %v9417, %v9421
      %v9424 = vshrl.u32 %v9249, 16
      %v9426 = vrot.slane %v9424, 4
      %v9427 = vshll.u32 %v9249, 16
      %v9429 = vrot.slane %v9427, 5
      %v9430 = vor.u32 %v9426, %v9429
      %v9431 = vrot.slane %v9430, 4
      %v9433 = vshll.u32 %v9250, 16
      %v9435 = vrot.slane %v9433, 5
      %v9436 = vsel %vm331, %v9431, %v9435
      %v9437 = vshrl.u32 %v9250, 16
      %v9439 = vrot.slane %v9437, 4
      %v9440 = vor.u32 %v9439, %v9435
      %v9441 = vrot.slane %v9440, 4
      %v9443 = vshll.u32 %v9251, 16
      %v9445 = vrot.slane %v9443, 5
      %v9446 = vsel %vm331, %v9441, %v9445
      %v9448 = vshrl.u32 %v9252, 16
      %v9450 = vrot.slane %v9448, 4
      %v9451 = vshll.u32 %v9252, 16
      %v9453 = vrot.slane %v9451, 5
      %v9454 = vor.u32 %v9450, %v9453
      %v9455 = vrot.slane %v9454, 4
      %v9457 = vshll.u32 %v9253, 16
      %v9459 = vrot.slane %v9457, 5
      %v9460 = vsel %vm331, %v9455, %v9459
      %v9461 = vshrl.u32 %v9253, 16
      %v9463 = vrot.slane %v9461, 4
      %v9464 = vor.u32 %v9463, %v9459
      %v9465 = vrot.slane %v9464, 4
      %v9467 = vshll.u32 %v9254, 16
      %v9469 = vrot.slane %v9467, 5
      %v9470 = vsel %vm331, %v9465, %v9469
      %v9472 = vshrl.u32 %v9255, 16
      %v9474 = vrot.slane %v9472, 4
      %v9475 = vshll.u32 %v9255, 16
      %v9477 = vrot.slane %v9475, 5
      %v9478 = vor.u32 %v9474, %v9477
      %v9479 = vrot.slane %v9478, 4
      %v9481 = vshll.u32 %v9256, 16
      %v9483 = vrot.slane %v9481, 5
      %v9484 = vsel %vm331, %v9479, %v9483
      %v9485 = vshrl.u32 %v9256, 16
      %v9487 = vrot.slane %v9485, 4
      %v9488 = vor.u32 %v9487, %v9483
      %v9489 = vrot.slane %v9488, 4
      %v9491 = vshll.u32 %v9257, 16
      %v9493 = vrot.slane %v9491, 5
      %v9494 = vsel %vm331, %v9489, %v9493
      %v9496 = vshrl.u32 %v9258, 16
      %v9498 = vrot.slane %v9496, 4
      %v9499 = vshll.u32 %v9258, 16
      %v9501 = vrot.slane %v9499, 5
      %v9502 = vor.u32 %v9498, %v9501
      %v9503 = vrot.slane %v9502, 4
      %v9505 = vshll.u32 %v9259, 16
      %v9507 = vrot.slane %v9505, 5
      %v9508 = vsel %vm331, %v9503, %v9507
      %v9509 = vshrl.u32 %v9259, 16
      %v9511 = vrot.slane %v9509, 4
      %v9512 = vor.u32 %v9511, %v9507
      %v9513 = vrot.slane %v9512, 4
      %v9515 = vshll.u32 %v9260, 16
      %v9517 = vrot.slane %v9515, 5
      %v9518 = vsel %vm331, %v9513, %v9517
      %v9520 = vshrl.u32 %v9261, 16
      %v9522 = vrot.slane %v9520, 4
      %v9523 = vshll.u32 %v9261, 16
      %v9525 = vrot.slane %v9523, 5
      %v9526 = vor.u32 %v9522, %v9525
      %v9527 = vrot.slane %v9526, 4
      %v9529 = vshll.u32 %v9262, 16
      %v9531 = vrot.slane %v9529, 5
      %v9532 = vsel %vm331, %v9527, %v9531
      %v9533 = vshrl.u32 %v9262, 16
      %v9535 = vrot.slane %v9533, 4
      %v9536 = vor.u32 %v9535, %v9531
      %v9537 = vrot.slane %v9536, 4
      %v9539 = vshll.u32 %v9263, 16
      %v9541 = vrot.slane %v9539, 5
      %v9542 = vsel %vm331, %v9537, %v9541
      %v9544 = vshrl.u32 %v9264, 16
      %v9546 = vrot.slane %v9544, 4
      %v9547 = vshll.u32 %v9264, 16
      %v9549 = vrot.slane %v9547, 5
      %v9550 = vor.u32 %v9546, %v9549
      %v9551 = vrot.slane %v9550, 4
      %v9553 = vshll.u32 %v9265, 16
      %v9555 = vrot.slane %v9553, 5
      %v9556 = vsel %vm331, %v9551, %v9555
      %v9557 = vshrl.u32 %v9265, 16
      %v9559 = vrot.slane %v9557, 4
      %v9560 = vor.u32 %v9559, %v9555
      %v9561 = vrot.slane %v9560, 4
      %v9563 = vshll.u32 %v9266, 16
      %v9565 = vrot.slane %v9563, 5
      %v9566 = vsel %vm331, %v9561, %v9565
      %v9568 = vshrl.u32 %v9267, 16
      %v9570 = vrot.slane %v9568, 4
      %v9571 = vshll.u32 %v9267, 16
      %v9573 = vrot.slane %v9571, 5
      %v9574 = vor.u32 %v9570, %v9573
      %v9575 = vrot.slane %v9574, 4
      %v9577 = vshll.u32 %v9268, 16
      %v9579 = vrot.slane %v9577, 5
      %v9580 = vsel %vm331, %v9575, %v9579
      %v9581 = vshrl.u32 %v9268, 16
      %v9583 = vrot.slane %v9581, 4
      %v9584 = vor.u32 %v9583, %v9579
      %v9585 = vrot.slane %v9584, 4
      %v9587 = vshll.u32 %v9269, 16
      %v9589 = vrot.slane %v9587, 5
      %v9590 = vsel %vm331, %v9585, %v9589
      %v9592 = vshrl.u32 %v9270, 16
      %v9594 = vrot.slane %v9592, 4
      %v9595 = vshll.u32 %v9270, 16
      %v9597 = vrot.slane %v9595, 5
      %v9598 = vor.u32 %v9594, %v9597
      %v9599 = vrot.slane %v9598, 4
      %v9601 = vshll.u32 %v9271, 16
      %v9603 = vrot.slane %v9601, 5
      %v9604 = vsel %vm331, %v9599, %v9603
      %v9605 = vshrl.u32 %v9271, 16
      %v9607 = vrot.slane %v9605, 4
      %v9608 = vor.u32 %v9607, %v9603
      %v9609 = vrot.slane %v9608, 4
      %v9611 = vshll.u32 %v9272, 16
      %v9613 = vrot.slane %v9611, 5
      %v9614 = vsel %vm331, %v9609, %v9613
      %v9616 = vshrl.u32 %v9273, 16
      %v9618 = vrot.slane %v9616, 4
      %v9619 = vshll.u32 %v9273, 16
      %v9621 = vrot.slane %v9619, 5
      %v9622 = vor.u32 %v9618, %v9621
      %v9623 = vrot.slane %v9622, 4
      %v9625 = vshll.u32 %v9274, 16
      %v9627 = vrot.slane %v9625, 5
      %v9628 = vsel %vm331, %v9623, %v9627
      %v9629 = vshrl.u32 %v9274, 16
      %v9631 = vrot.slane %v9629, 4
      %v9632 = vor.u32 %v9631, %v9627
      %v9633 = vrot.slane %v9632, 4
      %v9635 = vshll.u32 %v9275, 16
      %v9637 = vrot.slane %v9635, 5
      %v9638 = vsel %vm331, %v9633, %v9637
      %v9640 = vshrl.u32 %v9276, 16
      %v9642 = vrot.slane %v9640, 4
      %v9643 = vshll.u32 %v9276, 16
      %v9645 = vrot.slane %v9643, 5
      %v9646 = vor.u32 %v9642, %v9645
      %v9647 = vrot.slane %v9646, 4
      %v9649 = vshll.u32 %v9277, 16
      %v9651 = vrot.slane %v9649, 5
      %v9652 = vsel %vm331, %v9647, %v9651
      %v9653 = vshrl.u32 %v9277, 16
      %v9655 = vrot.slane %v9653, 4
      %v9656 = vor.u32 %v9655, %v9651
      %v9657 = vrot.slane %v9656, 4
      %v9659 = vshll.u32 %v9278, 16
      %v9661 = vrot.slane %v9659, 5
      %v9662 = vsel %vm331, %v9657, %v9661
      %v9663 = vld [vmem:[%s5] sm:$0x3]
      %v9664 = vunpack.c.l.b16 %v9292
      %v9665 = vunpack.c.l.b16 %v9302
      %v9666 = vunpack.c.l.b16 %v9316
      %v9667 = vunpack.c.l.b16 %v9326
      %v9668 = vunpack.c.l.b16 %v9340
      %v9669 = vunpack.c.l.b16 %v9350
      %v9670 = vunpack.c.l.b16 %v9364
      %v9671 = vunpack.c.l.b16 %v9374
      %v9672 = vunpack.c.l.b16 %v9388
      %v9673 = vunpack.c.l.b16 %v9398
      %v9674 = vunpack.c.l.b16 %v9412
      %v9675 = vunpack.c.l.b16 %v9422
      %v9676 = vunpack.c.l.b16 %v9436
      %v9677 = vunpack.c.l.b16 %v9446
      %v9678 = vunpack.c.l.b16 %v9460
      %v9679 = vunpack.c.l.b16 %v9470
      %v9680 = vunpack.c.l.b16 %v9484
      %v9681 = vunpack.c.l.b16 %v9494
      %v9682 = vunpack.c.l.b16 %v9508
      %v9683 = vunpack.c.l.b16 %v9518
      %v9684 = vunpack.c.l.b16 %v9532
      %v9685 = vunpack.c.l.b16 %v9542
      %v9686 = vunpack.c.l.b16 %v9556
      %v9687 = vunpack.c.l.b16 %v9566
      %v9688 = vunpack.c.l.b16 %v9580
      %v9689 = vunpack.c.l.b16 %v9590
      %v9690 = vunpack.c.l.b16 %v9604
      %v9691 = vunpack.c.l.b16 %v9614
      %v9692 = vunpack.c.l.b16 %v9628
      %v9693 = vunpack.c.l.b16 %v9638
      %v9694 = vunpack.c.l.b16 %v9652
      %v9695 = vunpack.c.l.b16 %v9662
      %v9696 = vpack.c.b16 %v9665, %v9664
      %v9697 = vpack.c.b16 %v9667, %v9666
      %v9698 = vpack.c.b16 %v9669, %v9668
      %v9699 = vpack.c.b16 %v9671, %v9670
      %v9700 = vpack.c.b16 %v9673, %v9672
      %v9701 = vpack.c.b16 %v9675, %v9674
      %v9702 = vpack.c.b16 %v9677, %v9676
      %v9703 = vpack.c.b16 %v9679, %v9678
      %v9704 = vpack.c.b16 %v9681, %v9680
      %v9705 = vpack.c.b16 %v9683, %v9682
      %v9706 = vpack.c.b16 %v9685, %v9684
      %v9707 = vpack.c.b16 %v9687, %v9686
      %v9708 = vpack.c.b16 %v9689, %v9688
      %v9709 = vpack.c.b16 %v9691, %v9690
      %v9710 = vpack.c.b16 %v9693, %v9692
      %v9711 = vpack.c.b16 %v9695, %v9694
      %v9713 = vsel %vm766, %v9696, 0
      %v9716 = vsel %vm766, %v9697, 0
      %v9719 = vsel %vm766, %v9698, 0
      %v9722 = vsel %vm766, %v9699, 0
      %v9725 = vsel %vm766, %v9700, 0
      %v9728 = vsel %vm766, %v9701, 0
      %v9731 = vsel %vm766, %v9702, 0
      %v9734 = vsel %vm766, %v9703, 0
      %v9737 = vsel %vm766, %v9704, 0
      %v9740 = vsel %vm766, %v9705, 0
      %v9743 = vsel %vm766, %v9706, 0
      %v9746 = vsel %vm766, %v9707, 0
      %v9749 = vsel %vm766, %v9708, 0
      %v9752 = vsel %vm766, %v9709, 0
      %v9755 = vsel %vm766, %v9710, 0
      %v9758 = vsel %vm766, %v9711, 0
      %v9761 = vsel %vm815, %v9663, 0
      %9763 = vmatpush.bf16.msra.mxu0 0
      %9764 = vmatpush.bf16.msra.mxu0 0
      %9765 = vmatpush.bf16.msra.mxu0 0
      %9766 = vmatpush.bf16.msra.mxu0 0
      %9767 = vmatpush.bf16.msra.mxu0 0
      %9768 = vmatpush.bf16.msra.mxu0 0
      %9769 = vmatpush.bf16.msra.mxu0 0
      %9770 = vmatpush.bf16.msra.mxu0 %v9761
      %9771 = vmatmul.bf16.gmra.mxu0 %v9713
      %v9772 = vpop.f32.mrf.mxu0
      %v9773 = vadd.f32 0.0, %v9772
      %v9774 = vpop.f32.mrf.mxu0
      %v9775 = vadd.f32 0.0, %v9774
      %9776 = vmatmul.bf16.gmra.mxu0 %v9716
      %v9777 = vpop.f32.mrf.mxu0
      %v9778 = vadd.f32 0.0, %v9777
      %v9779 = vpop.f32.mrf.mxu0
      %v9780 = vadd.f32 0.0, %v9779
      %9781 = vmatmul.bf16.gmra.mxu0 %v9719
      %v9782 = vpop.f32.mrf.mxu0
      %v9783 = vadd.f32 0.0, %v9782
      %v9784 = vpop.f32.mrf.mxu0
      %v9785 = vadd.f32 0.0, %v9784
      %9786 = vmatmul.bf16.gmra.mxu0 %v9722
      %v9787 = vpop.f32.mrf.mxu0
      %v9788 = vadd.f32 0.0, %v9787
      %v9789 = vpop.f32.mrf.mxu0
      %v9790 = vadd.f32 0.0, %v9789
      %9791 = vmatmul.bf16.gmra.mxu0 %v9725
      %v9792 = vpop.f32.mrf.mxu0
      %v9793 = vadd.f32 0.0, %v9792
      %v9794 = vpop.f32.mrf.mxu0
      %v9795 = vadd.f32 0.0, %v9794
      %9796 = vmatmul.bf16.gmra.mxu0 %v9728
      %v9797 = vpop.f32.mrf.mxu0
      %v9798 = vadd.f32 0.0, %v9797
      %v9799 = vpop.f32.mrf.mxu0
      %v9800 = vadd.f32 0.0, %v9799
      %9801 = vmatmul.bf16.gmra.mxu0 %v9731
      %v9802 = vpop.f32.mrf.mxu0
      %v9803 = vadd.f32 0.0, %v9802
      %v9804 = vpop.f32.mrf.mxu0
      %v9805 = vadd.f32 0.0, %v9804
      %9806 = vmatmul.bf16.gmra.mxu0 %v9734
      %v9807 = vpop.f32.mrf.mxu0
      %v9808 = vadd.f32 0.0, %v9807
      %v9809 = vpop.f32.mrf.mxu0
      %v9810 = vadd.f32 0.0, %v9809
      %9811 = vmatmul.bf16.gmra.mxu0 %v9737
      %v9812 = vpop.f32.mrf.mxu0
      %v9813 = vadd.f32 0.0, %v9812
      %v9814 = vpop.f32.mrf.mxu0
      %v9815 = vadd.f32 0.0, %v9814
      %9816 = vmatmul.bf16.gmra.mxu0 %v9740
      %v9817 = vpop.f32.mrf.mxu0
      %v9818 = vadd.f32 0.0, %v9817
      %v9819 = vpop.f32.mrf.mxu0
      %v9820 = vadd.f32 0.0, %v9819
      %9821 = vmatmul.bf16.gmra.mxu0 %v9743
      %v9822 = vpop.f32.mrf.mxu0
      %v9823 = vadd.f32 0.0, %v9822
      %v9824 = vpop.f32.mrf.mxu0
      %v9825 = vadd.f32 0.0, %v9824
      %9826 = vmatmul.bf16.gmra.mxu0 %v9746
      %v9827 = vpop.f32.mrf.mxu0
      %v9828 = vadd.f32 0.0, %v9827
      %v9829 = vpop.f32.mrf.mxu0
      %v9830 = vadd.f32 0.0, %v9829
      %9831 = vmatmul.bf16.gmra.mxu0 %v9749
      %v9832 = vpop.f32.mrf.mxu0
      %v9833 = vadd.f32 0.0, %v9832
      %v9834 = vpop.f32.mrf.mxu0
      %v9835 = vadd.f32 0.0, %v9834
      %9836 = vmatmul.bf16.gmra.mxu0 %v9752
      %v9837 = vpop.f32.mrf.mxu0
      %v9838 = vadd.f32 0.0, %v9837
      %v9839 = vpop.f32.mrf.mxu0
      %v9840 = vadd.f32 0.0, %v9839
      %9841 = vmatmul.bf16.gmra.mxu0 %v9755
      %v9842 = vpop.f32.mrf.mxu0
      %v9843 = vadd.f32 0.0, %v9842
      %v9844 = vpop.f32.mrf.mxu0
      %v9845 = vadd.f32 0.0, %v9844
      %9846 = vmatmul.bf16.gmra.mxu0 %v9758
      %v9847 = vpop.f32.mrf.mxu0
      %v9848 = vadd.f32 0.0, %v9847
      %v9849 = vpop.f32.mrf.mxu0
      %v9850 = vadd.f32 0.0, %v9849
      %9851 = vdwg.mxu0
      %v9852 = vadd.f32 %v9199, %v9773
      %v9853 = vadd.f32 %v9200, %v9775
      %v9854 = vadd.f32 %v9201, %v9778
      %v9855 = vadd.f32 %v9202, %v9780
      %v9856 = vadd.f32 %v9203, %v9783
      %v9857 = vadd.f32 %v9204, %v9785
      %v9858 = vadd.f32 %v9205, %v9788
      %v9859 = vadd.f32 %v9206, %v9790
      %v9860 = vadd.f32 %v9207, %v9793
      %v9861 = vadd.f32 %v9208, %v9795
      %v9862 = vadd.f32 %v9209, %v9798
      %v9863 = vadd.f32 %v9210, %v9800
      %v9864 = vadd.f32 %v9211, %v9803
      %v9865 = vadd.f32 %v9212, %v9805
      %v9866 = vadd.f32 %v9213, %v9808
      %v9867 = vadd.f32 %v9214, %v9810
      %v9868 = vadd.f32 %v9215, %v9813
      %v9869 = vadd.f32 %v9216, %v9815
      %v9870 = vadd.f32 %v9217, %v9818
      %v9871 = vadd.f32 %v9218, %v9820
      %v9872 = vadd.f32 %v9219, %v9823
      %v9873 = vadd.f32 %v9220, %v9825
      %v9874 = vadd.f32 %v9221, %v9828
      %v9875 = vadd.f32 %v9222, %v9830
      %v9876 = vadd.f32 %v9223, %v9833
      %v9877 = vadd.f32 %v9224, %v9835
      %v9878 = vadd.f32 %v9225, %v9838
      %v9879 = vadd.f32 %v9226, %v9840
      %v9880 = vadd.f32 %v9227, %v9843
      %v9881 = vadd.f32 %v9228, %v9845
      %v9882 = vadd.f32 %v9229, %v9848
      %v9883 = vadd.f32 %v9230, %v9850
      %v9884 = vld [vmem:[%s6] sm:$0x1]
      %v9886 = vperm.slane %v9884, 0
      %v9888 = vadd.f32 %v9852, %v9886
      %v9889 = vadd.f32 %v9853, %v9886
      %v9890 = vadd.f32 %v9854, %v9886
      %v9891 = vadd.f32 %v9855, %v9886
      %v9892 = vadd.f32 %v9856, %v9886
      %v9893 = vadd.f32 %v9857, %v9886
      %v9894 = vadd.f32 %v9858, %v9886
      %v9895 = vadd.f32 %v9859, %v9886
      %v9896 = vadd.f32 %v9860, %v9886
      %v9897 = vadd.f32 %v9861, %v9886
      %v9898 = vadd.f32 %v9862, %v9886
      %v9899 = vadd.f32 %v9863, %v9886
      %v9900 = vadd.f32 %v9864, %v9886
      %v9901 = vadd.f32 %v9865, %v9886
      %v9902 = vadd.f32 %v9866, %v9886
      %v9903 = vadd.f32 %v9867, %v9886
      %v9904 = vadd.f32 %v9868, %v9886
      %v9905 = vadd.f32 %v9869, %v9886
      %v9906 = vadd.f32 %v9870, %v9886
      %v9907 = vadd.f32 %v9871, %v9886
      %v9908 = vadd.f32 %v9872, %v9886
      %v9909 = vadd.f32 %v9873, %v9886
      %v9910 = vadd.f32 %v9874, %v9886
      %v9911 = vadd.f32 %v9875, %v9886
      %v9912 = vadd.f32 %v9876, %v9886
      %v9913 = vadd.f32 %v9877, %v9886
      %v9914 = vadd.f32 %v9878, %v9886
      %v9915 = vadd.f32 %v9879, %v9886
      %v9916 = vadd.f32 %v9880, %v9886
      %v9917 = vadd.f32 %v9881, %v9886
      %v9918 = vadd.f32 %v9882, %v9886
      %v9919 = vadd.f32 %v9883, %v9886
      %v9920 = vmax.f32 %v9888, 0.0
      %v9921 = vmax.f32 %v9889, 0.0
      %v9922 = vmax.f32 %v9890, 0.0
      %v9923 = vmax.f32 %v9891, 0.0
      %v9924 = vmax.f32 %v9892, 0.0
      %v9925 = vmax.f32 %v9893, 0.0
      %v9926 = vmax.f32 %v9894, 0.0
      %v9927 = vmax.f32 %v9895, 0.0
      %v9928 = vmax.f32 %v9896, 0.0
      %v9929 = vmax.f32 %v9897, 0.0
      %v9930 = vmax.f32 %v9898, 0.0
      %v9931 = vmax.f32 %v9899, 0.0
      %v9932 = vmax.f32 %v9900, 0.0
      %v9933 = vmax.f32 %v9901, 0.0
      %v9934 = vmax.f32 %v9902, 0.0
      %v9935 = vmax.f32 %v9903, 0.0
      %v9936 = vmax.f32 %v9904, 0.0
      %v9937 = vmax.f32 %v9905, 0.0
      %v9938 = vmax.f32 %v9906, 0.0
      %v9939 = vmax.f32 %v9907, 0.0
      %v9940 = vmax.f32 %v9908, 0.0
      %v9941 = vmax.f32 %v9909, 0.0
      %v9942 = vmax.f32 %v9910, 0.0
      %v9943 = vmax.f32 %v9911, 0.0
      %v9944 = vmax.f32 %v9912, 0.0
      %v9945 = vmax.f32 %v9913, 0.0
      %v9946 = vmax.f32 %v9914, 0.0
      %v9947 = vmax.f32 %v9915, 0.0
      %v9948 = vmax.f32 %v9916, 0.0
      %v9949 = vmax.f32 %v9917, 0.0
      %v9950 = vmax.f32 %v9918, 0.0
      %v9951 = vmax.f32 %v9919, 0.0
      %9952 = vst [vmem:[%s278] sm:$0xff] %v9920
      %9953 = vst [vmem:[%s278 + $0x8] sm:$0xff] %v9921
      %9954 = vst [vmem:[%s278 + $0x10] sm:$0xff] %v9922
      %9955 = vst [vmem:[%s278 + $0x18] sm:$0xff] %v9923
      %9956 = vst [vmem:[%s278 + $0x20] sm:$0xff] %v9924
      %9957 = vst [vmem:[%s278 + $0x28] sm:$0xff] %v9925
      %9958 = vst [vmem:[%s278 + $0x30] sm:$0xff] %v9926
      %9959 = vst [vmem:[%s278 + $0x38] sm:$0xff] %v9927
      %9960 = vst [vmem:[%s278 + $0x40] sm:$0xff] %v9928
      %9961 = vst [vmem:[%s278 + $0x48] sm:$0xff] %v9929
      %9962 = vst [vmem:[%s278 + $0x50] sm:$0xff] %v9930
      %9963 = vst [vmem:[%s278 + $0x58] sm:$0xff] %v9931
      %9964 = vst [vmem:[%s278 + $0x60] sm:$0xff] %v9932
      %9965 = vst [vmem:[%s278 + $0x68] sm:$0xff] %v9933
      %9966 = vst [vmem:[%s278 + $0x70] sm:$0xff] %v9934
      %9967 = vst [vmem:[%s278 + $0x78] sm:$0xff] %v9935
      %9968 = vst [vmem:[%s278 + $0x80] sm:$0xff] %v9936
      %9969 = vst [vmem:[%s278 + $0x88] sm:$0xff] %v9937
      %9970 = vst [vmem:[%s278 + $0x90] sm:$0xff] %v9938
      %9971 = vst [vmem:[%s278 + $0x98] sm:$0xff] %v9939
      %9972 = vst [vmem:[%s278 + $0xa0] sm:$0xff] %v9940
      %9973 = vst [vmem:[%s278 + $0xa8] sm:$0xff] %v9941
      %9974 = vst [vmem:[%s278 + $0xb0] sm:$0xff] %v9942
      %9975 = vst [vmem:[%s278 + $0xb8] sm:$0xff] %v9943
      %9976 = vst [vmem:[%s278 + $0xc0] sm:$0xff] %v9944
      %9977 = vst [vmem:[%s278 + $0xc8] sm:$0xff] %v9945
      %9978 = vst [vmem:[%s278 + $0xd0] sm:$0xff] %v9946
      %9979 = vst [vmem:[%s278 + $0xd8] sm:$0xff] %v9947
      %9980 = vst [vmem:[%s278 + $0xe0] sm:$0xff] %v9948
      %9981 = vst [vmem:[%s278 + $0xe8] sm:$0xff] %v9949
      %9982 = vst [vmem:[%s278 + $0xf0] sm:$0xff] %v9950
      %9983 = vst [vmem:[%s278 + $0xf8] sm:$0xff] %v9951
      %p9984 = scmp.lt.s32.totalorder %s18, 1
      %s9985 = scalar_select %p9984, %s18, 1
      %s9986 = smul.addr %s9985, 32
      %s9987 = smul.addr %s9986, 8
      %s9988 = scalar_lea.vmem %s7, %s9987
      // Predicated region
      $region49: #{conv_block_forward.1} parent=47 // pred_check
        %p9989 = pneg %p188
      $region50: #{conv_block_forward.1} parent=47 // pred_check_branch
        %9991 = sbr.rel (%p9989) target = $region52
      $region51: #{conv_block_forward.1} parent=47 // pred_region
        _
      $region52: #{conv_block_forward.1} parent=47 // pred_fallthru
        _
    $region48: #{conv_block_forward.1} parent=5 // pred_fallthru
      _
    %p9992 = scmp.le.s32.totalorder 2, %s13
    // Predicated region
    $region53: #{conv_block_forward.1} parent=5 // pred_check
      %p9993 = pneg %p9992
    $region54: #{conv_block_forward.1} parent=5 // pred_check_branch
      %9995 = sbr.rel (%p9993) target = $region56
    $region55: #{conv_block_forward.1} parent=5 // pred_region
      %s9996 = ssub.s32 %s13, 2
      // Predicated region
      $region57: #{conv_block_forward.1} parent=55 // pred_check
        %p9997 = pneg %p194
      $region58: #{conv_block_forward.1} parent=55 // pred_check_branch
        %9999 = sbr.rel (%p9997) target = $region60
      $region59: #{conv_block_forward.1} parent=55 // pred_region
        %p10000 = scmp.lt.s32.totalorder %s19, 1
        %s10001 = scalar_select %p10000, %s19, 1
        %s10002 = smul.addr %s10001, 32
        %s10003 = smul.addr %s10002, 8
        %s10004 = scalar_lea.vmem %s7, %s10003
      $region60: #{conv_block_forward.1} parent=55 // pred_fallthru
        _
    $region56: #{conv_block_forward.1} parent=5 // pred_fallthru
      _
  $region6: #{conv_block_forward.1} parent=0 // loop_footer
    %s17 = sadd.s32 1, %s13
  $region7: #{conv_block_forward.1} parent=0 // loop_footer_branch
    %12 = sbr.rel target = $region3
  $region8: #{conv_block_forward.1} parent=0 // loop_exit
    _

</llo_original>
